<compile_context>
chip_gen: v7x
topology: tpu7x:2x2x1
jax: 0.10.0
libtpu: 0.0.40
codegen_flags: <defaults>
</compile_context>

<pallas_src>
import functools

import jax
import jax.numpy as jnp
from jax.experimental import pallas as pl
from jax.experimental.pallas import tpu as pltpu

_INV_SQRT2 = 0.7071067811865475
_GELU_C0 = 0.7978845608028654      # sqrt(2/pi)
_GELU_C1 = 0.044715
_LN_EPS = 1e-5                     # PyTorch nn.LayerNorm default


def _layernorm_f32(x):
    """Single-pass LayerNorm statistics: var = E[x^2] - mu^2 (affine folded
    into the downstream weights host-side)."""
    mu = jnp.mean(x, axis=-1, keepdims=True)
    ms = jnp.mean(x * x, axis=-1, keepdims=True)
    var = jnp.maximum(ms - mu * mu, 0.0)
    return (x - mu) * jax.lax.rsqrt(var + _LN_EPS)


def _focalnet_block_kernel(x_ref,
                           wmod_ref, bmod_ref,
                           w1_ref, b1_ref,
                           w2_ref, b2_ref,
                           o_ref,
                           *, gelu_dtype, exact_gelu):
    # TODO(synk): MBConv / Attention / ShiftViTBlock / MixShiftBlock / DropPath
    # definitions are not provided in the source module; they are treated as
    # identity (DropPath is nn.Identity anyway since drop_path=0.0).

    x = x_ref[...].astype(jnp.float32)                  # (TM, C) shortcut rows

    # ---- norm1 (affine gamma/beta pre-folded into wmod/bmod) ----
    xn = _layernorm_f32(x)

    # ---- fused FocalModulation: proj∘f collapsed into one CxC map ----
    # bf16 operands into the MXU, f32 accumulation.
    mod = jnp.dot(xn.astype(wmod_ref.dtype), wmod_ref[...],
                  preferred_element_type=jnp.float32) + bmod_ref[...]

    # ---- first residual (gamma_1 = 1.0, drop_path = identity) ----
    y = x + mod

    # ---- norm2 (affine pre-folded into w1/b1) ----
    yn = _layernorm_f32(y)

    # ---- Mlp: fc1 -> GELU -> fc2 ----
    h1 = jnp.dot(yn.astype(w1_ref.dtype), w1_ref[...],
                 preferred_element_type=jnp.float32) + b1_ref[...]

    if exact_gelu:
        # Exact erf GELU (torch.nn.GELU default), f32.  VALU-heavy; use only
        # when bit-parity matters or on v5e with gelu_dtype=f32.
        g = 0.5 * h1 * (1.0 + jax.lax.erf(h1 * _INV_SQRT2))
    else:
        # tanh-approx GELU: tanh goes to the EUP (separate bundle slot), and
        # the gate is evaluated in `gelu_dtype` (bf16 on v6e/v7x) to halve the
        # elementwise work over the (TM, hidden) tensor.
        h = h1.astype(gelu_dtype)
        c0 = jnp.asarray(_GELU_C0, gelu_dtype)
        c1 = jnp.asarray(_GELU_C1, gelu_dtype)
        half = jnp.asarray(0.5, gelu_dtype)
        one = jnp.asarray(1.0, gelu_dtype)
        g = half * h * (one + jnp.tanh(c0 * (h + c1 * h * h * h)))

    h2 = jnp.dot(g.astype(w2_ref.dtype), w2_ref[...],
                 preferred_element_type=jnp.float32) + b2_ref[...]

    # ---- second residual (gamma_2 = 1.0) ----
    o_ref[...] = (y + h2).astype(o_ref.dtype)


def fuse_params(raw_params, mm_dtype=jnp.bfloat16):
    """Host-side algebraic fusion (exact in infinite precision).

    - modulation: proj(f(.)) is a pure linear map (identity branches between
      f and proj), so collapse to W_mod = fw @ pw, b_mod = fb @ pw + pb.
    - fold LayerNorm affine into the following linear:
      (xhat*g + b) @ W + c  ==  xhat @ (g[:,None]*W) + (b @ W + c).
    Weight matrices are cast to `mm_dtype` (bf16 default; fp8 is an option on
    v7x) for the MXU; biases stay f32.
    """
    (n1g, n1b, fw, fb, pw, pb, n2g, n2b, w1, b1, w2, b2) = raw_params
    f32 = jnp.float32

    w_fp = fw.astype(f32) @ pw.astype(f32)                      # (C, C)
    b_fp = fb.astype(f32) @ pw.astype(f32) + pb.astype(f32)     # (1, C)
    wmod = n1g.astype(f32).reshape(-1, 1) * w_fp
    bmod = n1b.astype(f32) @ w_fp + b_fp

    w1f = n2g.astype(f32).reshape(-1, 1) * w1.astype(f32)       # (C, Hd)
    b1f = n2b.astype(f32) @ w1.astype(f32) + b1.astype(f32)     # (1, Hd)

    return (wmod.astype(mm_dtype), bmod,
            w1f.astype(mm_dtype), b1f,
            w2.astype(mm_dtype), b2.astype(f32))


def focalnet_block(x, raw_params, *,
                   tm=256,
                   mm_dtype=jnp.bfloat16,
                   gelu_dtype=jnp.bfloat16,
                   exact_gelu=False,
                   vmem_limit_bytes=32 * 1024 * 1024):
    """x: (B, L, C) with L = 14*14 = 196 and C = 256 (as in the module).

    tm: fixed row tile (default 256 = multiple of 128; keeps the MXU M axis
        full, lets BlockSpec double-buffer the activation DMA, bounds VMEM on
        v7x and gives >=2 grid steps so both v7x TensorCores are used).
    gelu_dtype / exact_gelu: use (jnp.float32, True) on v5e or when erf
        bit-parity with torch is required; default (bf16, tanh-approx) is the
        fast path on v6e/v7x.
    """
    B, L, C = x.shape
    N = B * L

    fused = fuse_params(raw_params, mm_dtype)
    wmod, bmod, w1, b1, w2, b2 = fused
    hidden = w1.shape[1]

    # Fixed row tile; never larger than the (8-rounded) row count.
    tm = int(min(tm, -(-N // 8) * 8))
    tm = -(-tm // 8) * 8
    n_tiles = -(-N // tm)
    n_pad = n_tiles * tm

    xf = x.reshape(N, C)
    if n_pad != N:
        xf = jnp.pad(xf, ((0, n_pad - N), (0, 0)))

    row_spec = pl.BlockSpec((tm, C), lambda i: (i, 0))

    def full_spec(a):
        # full-array block, resident across all grid steps (constant index map)
        return pl.BlockSpec(a.shape, lambda i: (0,) * a.ndim)

    itemsize = jnp.dtype(x.dtype).itemsize
    weight_bytes = sum(int(a.size) * jnp.dtype(a.dtype).itemsize for a in fused)
    cost = pl.CostEstimate(
        flops=int(2 * n_pad * (C * C + 2 * C * hidden)),
        transcendentals=int(n_pad * hidden),            # tanh/erf over hidden
        bytes_accessed=int(2 * n_pad * C * itemsize + weight_bytes),
    )

    kernel = functools.partial(_focalnet_block_kernel,
                               gelu_dtype=gelu_dtype,
                               exact_gelu=exact_gelu)

    out = pl.pallas_call(
        kernel,
        out_shape=jax.ShapeDtypeStruct((n_pad, C), x.dtype),
        grid_spec=pltpu.PrefetchScalarGridSpec(
            num_scalar_prefetch=0,
            grid=(n_tiles,),
            in_specs=[row_spec] + [full_spec(a) for a in fused],
            out_specs=row_spec,
        ),
        compiler_params=pltpu.CompilerParams(
            dimension_semantics=("parallel",),
            vmem_limit_bytes=vmem_limit_bytes,
        ),
        cost_estimate=cost,
    )(xf, *fused)

    return out[:N].reshape(B, L, C)


def focalnet_block_ref(x, raw_params):
    """Pure-JAX f32 reference of the same block math (identity branches,
    exact erf GELU) for correctness checking."""
    (n1g, n1b, fw, fb, pw, pb, n2g, n2b, w1, b1, w2, b2) = raw_params
    B, L, C = x.shape
    xf = x.reshape(B * L, C).astype(jnp.float32)

    def ln(v, g, b):
        mu = jnp.mean(v, -1, keepdims=True)
        var = jnp.mean((v - mu) ** 2, -1, keepdims=True)
        return (v - mu) * jax.lax.rsqrt(var + _LN_EPS) * g + b

    xn = ln(xf, n1g, n1b)
    mod = (xn @ fw + fb) @ pw + pb      # attn / mix treated as identity
    y = xf + mod
    yn = ln(y, n2g, n2b)
    h1 = yn @ w1 + b1
    g = 0.5 * h1 * (1.0 + jax.lax.erf(h1 * _INV_SQRT2))
    out = y + (g @ w2 + b2)
    return out.reshape(B, L, C)


def init_params(key, dim=256, mlp_ratio=4.0, dtype=jnp.float32):
    """Deterministic synthetic parameters matching the module's shapes."""
    hidden = int(dim * mlp_ratio)

    def linear(k, fan_in, fan_out):
        kw, kb = jax.random.split(k)
        bound = fan_in ** -0.5
        w = jax.random.uniform(kw, (fan_in, fan_out), dtype, -bound, bound)
        b = jax.random.uniform(kb, (1, fan_out), dtype, -bound, bound)
        return w, b

    ks = jax.random.split(key, 4)
    fw, fb = linear(ks[0], dim, 2 * dim)        # modulation.f : C -> 2C
    pw, pb = linear(ks[1], 2 * dim, dim)        # modulation.proj : 2C -> C
    w1, b1 = linear(ks[2], dim, hidden)         # mlp.fc1
    w2, b2 = linear(ks[3], hidden, dim)         # mlp.fc2

    n1g = jnp.ones((1, dim), dtype)             # norm1 (PyTorch default init)
    n1b = jnp.zeros((1, dim), dtype)
    n2g = jnp.ones((1, dim), dtype)             # norm2
    n2b = jnp.zeros((1, dim), dtype)

    return (n1g, n1b, fw, fb, pw, pb, n2g, n2b, w1, b1, w2, b2)


if __name__ == "__main__":
    key = jax.random.PRNGKey(0)
    kx, kp = jax.random.split(key)

    # Shapes implied by the module: H = W = 14, dim = 256 (hard-coded in
    # FocalModulation via q.view(B, 256, 14, 14)); small batch B = 2.
    B, H, W, dim = 2, 14, 14, 256
    L = H * W
    x = jax.random.normal(kx, (B, L, dim), dtype=jnp.float32)

    params = init_params(kp, dim=dim, mlp_ratio=4.0)
    ref = focalnet_block_ref(x, params)

    # Fast path (v6e/v7x): bf16 MXU + bf16 tanh-approx GELU, tm=256 tiles.
    out_fast = jax.block_until_ready(focalnet_block(x, params))
    # Conservative path (v5e / bit-parity): f32 exact-erf GELU, bf16 MXU.
    out_exact = jax.block_until_ready(
        focalnet_block(x, params, gelu_dtype=jnp.float32, exact_gelu=True))

    assert out_fast.shape == (B, L, dim)
    assert out_exact.shape == (B, L, dim)
    assert bool(jnp.all(jnp.isfinite(out_fast)))
    assert bool(jnp.all(jnp.isfinite(out_exact)))
    # bf16 MXU operands -> bf16-appropriate tolerances vs. the f32 reference.
    assert bool(jnp.allclose(out_exact, ref, atol=5e-2, rtol=5e-2))
    assert bool(jnp.allclose(out_fast, ref, atol=7e-2, rtol=7e-2))
    print("KERNEL_OK")
</pallas_src>

<mosaic_0001>
module attributes {stable_mosaic.version = 11 : i64} {
  func.func @_focalnet_block_kernel(%arg0: i32, %arg1: memref<256x256xf32, #tpu.memory_space<vmem>>, %arg2: memref<256x256xbf16, #tpu.memory_space<vmem>>, %arg3: memref<1x256xf32, #tpu.memory_space<vmem>>, %arg4: memref<256x1024xbf16, #tpu.memory_space<vmem>>, %arg5: memref<1x1024xf32, #tpu.memory_space<vmem>>, %arg6: memref<1024x256xbf16, #tpu.memory_space<vmem>>, %arg7: memref<1x256xf32, #tpu.memory_space<vmem>>, %arg8: memref<256x256xf32, #tpu.memory_space<vmem>>) attributes {dimension_semantics = [#tpu.dimension_semantics<parallel>], iteration_bounds = array<i64: 2>, scalar_prefetch = 0 : i64, scratch_operands = 0 : i64, tpu.core_type = #tpu.core_type<tc>, window_params = [{transform_indices = @transform_0, window_bounds = array<i64: 256, 256>}, {pipeline_mode = #tpu.pipeline_mode<synchronous>, transform_indices = @transform_1, window_bounds = array<i64: 256, 256>}, {pipeline_mode = #tpu.pipeline_mode<synchronous>, transform_indices = @transform_2, window_bounds = array<i64: 1, 256>}, {pipeline_mode = #tpu.pipeline_mode<synchronous>, transform_indices = @transform_3, window_bounds = array<i64: 256, 1024>}, {pipeline_mode = #tpu.pipeline_mode<synchronous>, transform_indices = @transform_4, window_bounds = array<i64: 1, 1024>}, {pipeline_mode = #tpu.pipeline_mode<synchronous>, transform_indices = @transform_5, window_bounds = array<i64: 1024, 256>}, {pipeline_mode = #tpu.pipeline_mode<synchronous>, transform_indices = @transform_6, window_bounds = array<i64: 1, 256>}, {transform_indices = @transform_7, window_bounds = array<i64: 256, 256>}]} {
    %c0 = arith.constant 0 : index
    %c0_0 = arith.constant 0 : index
    %0 = vector.load %arg1[%c0, %c0_0] : memref<256x256xf32, #tpu.memory_space<vmem>>, vector<256x256xf32>
    %cst = arith.constant dense<0.000000e+00> : vector<256xf32>
    %1 = vector.multi_reduction <add>, %0, %cst [1] : vector<256x256xf32> to vector<256xf32>
    %2 = vector.shape_cast %1 : vector<256xf32> to vector<256x1xf32>
    %cst_1 = arith.constant 2.560000e+02 : f32
    %3 = vector.broadcast %cst_1 : f32 to vector<256x1xf32>
    %4 = arith.divf %2, %3 : vector<256x1xf32>
    %5 = arith.mulf %0, %0 : vector<256x256xf32>
    %cst_2 = arith.constant dense<0.000000e+00> : vector<256xf32>
    %6 = vector.multi_reduction <add>, %5, %cst_2 [1] : vector<256x256xf32> to vector<256xf32>
    %7 = vector.shape_cast %6 : vector<256xf32> to vector<256x1xf32>
    %cst_3 = arith.constant 2.560000e+02 : f32
    %8 = vector.broadcast %cst_3 : f32 to vector<256x1xf32>
    %9 = arith.divf %7, %8 : vector<256x1xf32>
    %10 = arith.mulf %4, %4 : vector<256x1xf32>
    %11 = arith.subf %9, %10 : vector<256x1xf32>
    %cst_4 = arith.constant 0.000000e+00 : f32
    %12 = vector.broadcast %cst_4 : f32 to vector<256x1xf32>
    %13 = arith.maximumf %11, %12 : vector<256x1xf32>
    %14 = vector.broadcast %4 : vector<256x1xf32> to vector<256x256xf32>
    %15 = arith.subf %0, %14 : vector<256x256xf32>
    %cst_5 = arith.constant 9.99999974E-6 : f32
    %16 = vector.broadcast %cst_5 : f32 to vector<256x1xf32>
    %17 = arith.addf %13, %16 : vector<256x1xf32>
    %18 = math.rsqrt %17 : vector<256x1xf32>
    %19 = vector.broadcast %18 : vector<256x1xf32> to vector<256x256xf32>
    %20 = arith.mulf %15, %19 : vector<256x256xf32>
    %21 = arith.truncf %20 : vector<256x256xf32> to vector<256x256xbf16>
    %c0_6 = arith.constant 0 : index
    %c0_7 = arith.constant 0 : index
    %22 = vector.load %arg2[%c0_6, %c0_7] : memref<256x256xbf16, #tpu.memory_space<vmem>>, vector<256x256xbf16>
    %cst_8 = arith.constant dense<0.000000e+00> : vector<256x256xf32>
    %23 = tpu.matmul %21, %22, %cst_8 {dimension_numbers = #tpu.dot_dimension_numbers<[1], [0], [0], [1], [0, 0, 1, 1], [], []>} : vector<256x256xbf16>, vector<256x256xbf16>, vector<256x256xf32> -> vector<256x256xf32>
    %c0_9 = arith.constant 0 : index
    %c0_10 = arith.constant 0 : index
    %24 = vector.load %arg3[%c0_9, %c0_10] : memref<1x256xf32, #tpu.memory_space<vmem>>, vector<1x256xf32>
    %25 = vector.broadcast %24 : vector<1x256xf32> to vector<256x256xf32>
    %26 = arith.addf %23, %25 : vector<256x256xf32>
    %27 = arith.addf %0, %26 : vector<256x256xf32>
    %cst_11 = arith.constant dense<0.000000e+00> : vector<256xf32>
    %28 = vector.multi_reduction <add>, %27, %cst_11 [1] : vector<256x256xf32> to vector<256xf32>
    %29 = vector.shape_cast %28 : vector<256xf32> to vector<256x1xf32>
    %cst_12 = arith.constant 2.560000e+02 : f32
    %30 = vector.broadcast %cst_12 : f32 to vector<256x1xf32>
    %31 = arith.divf %29, %30 : vector<256x1xf32>
    %32 = arith.mulf %27, %27 : vector<256x256xf32>
    %cst_13 = arith.constant dense<0.000000e+00> : vector<256xf32>
    %33 = vector.multi_reduction <add>, %32, %cst_13 [1] : vector<256x256xf32> to vector<256xf32>
    %34 = vector.shape_cast %33 : vector<256xf32> to vector<256x1xf32>
    %cst_14 = arith.constant 2.560000e+02 : f32
    %35 = vector.broadcast %cst_14 : f32 to vector<256x1xf32>
    %36 = arith.divf %34, %35 : vector<256x1xf32>
    %37 = arith.mulf %31, %31 : vector<256x1xf32>
    %38 = arith.subf %36, %37 : vector<256x1xf32>
    %cst_15 = arith.constant 0.000000e+00 : f32
    %39 = vector.broadcast %cst_15 : f32 to vector<256x1xf32>
    %40 = arith.maximumf %38, %39 : vector<256x1xf32>
    %41 = vector.broadcast %31 : vector<256x1xf32> to vector<256x256xf32>
    %42 = arith.subf %27, %41 : vector<256x256xf32>
    %cst_16 = arith.constant 9.99999974E-6 : f32
    %43 = vector.broadcast %cst_16 : f32 to vector<256x1xf32>
    %44 = arith.addf %40, %43 : vector<256x1xf32>
    %45 = math.rsqrt %44 : vector<256x1xf32>
    %46 = vector.broadcast %45 : vector<256x1xf32> to vector<256x256xf32>
    %47 = arith.mulf %42, %46 : vector<256x256xf32>
    %48 = arith.truncf %47 : vector<256x256xf32> to vector<256x256xbf16>
    %c0_17 = arith.constant 0 : index
    %c0_18 = arith.constant 0 : index
    %49 = vector.load %arg4[%c0_17, %c0_18] : memref<256x1024xbf16, #tpu.memory_space<vmem>>, vector<256x1024xbf16>
    %cst_19 = arith.constant dense<0.000000e+00> : vector<256x1024xf32>
    %50 = tpu.matmul %48, %49, %cst_19 {dimension_numbers = #tpu.dot_dimension_numbers<[1], [0], [0], [1], [0, 0, 1, 1], [], []>} : vector<256x256xbf16>, vector<256x1024xbf16>, vector<256x1024xf32> -> vector<256x1024xf32>
    %c0_20 = arith.constant 0 : index
    %c0_21 = arith.constant 0 : index
    %51 = vector.load %arg5[%c0_20, %c0_21] : memref<1x1024xf32, #tpu.memory_space<vmem>>, vector<1x1024xf32>
    %52 = vector.broadcast %51 : vector<1x1024xf32> to vector<256x1024xf32>
    %53 = arith.addf %50, %52 : vector<256x1024xf32>
    %54 = arith.truncf %53 : vector<256x1024xf32> to vector<256x1024xbf16>
    %cst_22 = arith.constant 5.000000e-01 : bf16
    %55 = vector.broadcast %cst_22 : bf16 to vector<256x1024xbf16>
    %56 = arith.mulf %55, %54 : vector<256x1024xbf16>
    %cst_23 = arith.constant 4.467770e-02 : bf16
    %57 = vector.broadcast %cst_23 : bf16 to vector<256x1024xbf16>
    %58 = arith.mulf %57, %54 : vector<256x1024xbf16>
    %59 = arith.mulf %58, %54 : vector<256x1024xbf16>
    %60 = arith.mulf %59, %54 : vector<256x1024xbf16>
    %61 = arith.addf %54, %60 : vector<256x1024xbf16>
    %cst_24 = arith.constant 7.968750e-01 : bf16
    %62 = vector.broadcast %cst_24 : bf16 to vector<256x1024xbf16>
    %63 = arith.mulf %62, %61 : vector<256x1024xbf16>
    %64 = math.tanh %63 : vector<256x1024xbf16>
    %cst_25 = arith.constant 1.000000e+00 : bf16
    %65 = vector.broadcast %cst_25 : bf16 to vector<256x1024xbf16>
    %66 = arith.addf %65, %64 : vector<256x1024xbf16>
    %67 = arith.mulf %56, %66 : vector<256x1024xbf16>
    %c0_26 = arith.constant 0 : index
    %c0_27 = arith.constant 0 : index
    %68 = vector.load %arg6[%c0_26, %c0_27] : memref<1024x256xbf16, #tpu.memory_space<vmem>>, vector<1024x256xbf16>
    %cst_28 = arith.constant dense<0.000000e+00> : vector<256x256xf32>
    %69 = tpu.matmul %67, %68, %cst_28 {dimension_numbers = #tpu.dot_dimension_numbers<[1], [0], [0], [1], [0, 0, 1, 1], [], []>} : vector<256x1024xbf16>, vector<1024x256xbf16>, vector<256x256xf32> -> vector<256x256xf32>
    %c0_29 = arith.constant 0 : index
    %c0_30 = arith.constant 0 : index
    %70 = vector.load %arg7[%c0_29, %c0_30] : memref<1x256xf32, #tpu.memory_space<vmem>>, vector<1x256xf32>
    %71 = vector.broadcast %70 : vector<1x256xf32> to vector<256x256xf32>
    %72 = arith.addf %69, %71 : vector<256x256xf32>
    %73 = arith.addf %27, %72 : vector<256x256xf32>
    %c0_31 = arith.constant 0 : index
    %c0_32 = arith.constant 0 : index
    %74 = vector.load %arg8[%c0_31, %c0_32] : memref<256x256xf32, #tpu.memory_space<vmem>>, vector<256x256xf32>
    tpu.vector_store %arg8[%c0_31, %c0_32], %73 {strides = array<i32>} : memref<256x256xf32, #tpu.memory_space<vmem>>, vector<256x256xf32>,
    return
  }
  func.func @transform_0(%arg0: i32) -> (i32, i32) {
    %c0_i32 = arith.constant 0 : i32
    %c0_i32_0 = arith.constant 0 : i32
    return %arg0, %c0_i32 : i32, i32
  }
  func.func @transform_1(%arg0: i32) -> (i32, i32) {
    %c0_i32 = arith.constant 0 : i32
    %c0_i32_0 = arith.constant 0 : i32
    %c0_i32_1 = arith.constant 0 : i32
    return %c0_i32, %c0_i32_0 : i32, i32
  }
  func.func @transform_2(%arg0: i32) -> (i32, i32) {
    %c0_i32 = arith.constant 0 : i32
    %c0_i32_0 = arith.constant 0 : i32
    %c0_i32_1 = arith.constant 0 : i32
    return %c0_i32, %c0_i32_0 : i32, i32
  }
  func.func @transform_3(%arg0: i32) -> (i32, i32) {
    %c0_i32 = arith.constant 0 : i32
    %c0_i32_0 = arith.constant 0 : i32
    %c0_i32_1 = arith.constant 0 : i32
    return %c0_i32, %c0_i32_0 : i32, i32
  }
  func.func @transform_4(%arg0: i32) -> (i32, i32) {
    %c0_i32 = arith.constant 0 : i32
    %c0_i32_0 = arith.constant 0 : i32
    %c0_i32_1 = arith.constant 0 : i32
    return %c0_i32, %c0_i32_0 : i32, i32
  }
  func.func @transform_5(%arg0: i32) -> (i32, i32) {
    %c0_i32 = arith.constant 0 : i32
    %c0_i32_0 = arith.constant 0 : i32
    %c0_i32_1 = arith.constant 0 : i32
    return %c0_i32, %c0_i32_0 : i32, i32
  }
  func.func @transform_6(%arg0: i32) -> (i32, i32) {
    %c0_i32 = arith.constant 0 : i32
    %c0_i32_0 = arith.constant 0 : i32
    %c0_i32_1 = arith.constant 0 : i32
    return %c0_i32, %c0_i32_0 : i32, i32
  }
  func.func @transform_7(%arg0: i32) -> (i32, i32) {
    %c0_i32 = arith.constant 0 : i32
    %c0_i32_0 = arith.constant 0 : i32
    return %arg0, %c0_i32 : i32, i32
  }
}

</mosaic_0001>

<llo_original>
// kernel: tpu_custom_call.1
$region0: #{tpu_custom_call.1}
  #allocation0 [shape = 'u32[]', space=smem, size = 0x4, offset = 0x4, fixed_abs, tag = 'smem constant byte address 0x4 - core index']
  #allocation1 [shape = 'u32[144,128]{1,0:T(1,128)}', space=vmem, size = 0x12000, scoped, tag = 'internal scratch']
  %s0 = inlined_call_operand.hbm [shape: f32[512,256], index: 0, kind: input, shape index: {}]
  %s1 = inlined_call_operand.hbm [shape: bf16[256,256], index: 1, kind: input, shape index: {}]
  %s2 = inlined_call_operand.vmem [shape: f32[1,256], index: 2, kind: input, shape index: {}]
  %s3 = inlined_call_operand.hbm [shape: bf16[256,1024], index: 3, kind: input, shape index: {}]
  %s4 = inlined_call_operand.vmem [shape: f32[1,1024], index: 4, kind: input, shape index: {}]
  %s5 = inlined_call_operand.hbm [shape: bf16[1024,256], index: 5, kind: input, shape index: {}]
  %s6 = inlined_call_operand.vmem [shape: f32[1,256], index: 6, kind: input, shape index: {}]
  %s7 = inlined_call_operand.hbm [shape: f32[512,256], index: 7, kind: output, shape index: {}]
  %s8 = sld [smem:[#allocation0]]
  $region77: #{tpu_custom_call.1} parent=0
    _
  %s10 = ssub.s32 1, %s8
  %s11 = scalar_select 0, %s10, %s8
  $region1: #{tpu_custom_call.1} parent=0
    #allocation2 [shape = 'u8[524288]{0}', space=vmem, size = 0x80000, scoped, tag = 'input window, operand 0']
    #allocation3 [shape = 's32[2]{0}', space=sflag, size = 0x8, scoped, tag = 'scoped memory for tpu_custom_call.1']
    #allocation4 [shape = 's32[2]{0}', space=sflag, size = 0x8, scoped, tag = 'scoped memory for tpu_custom_call.1']
    #allocation5 [shape = 'u8[131072]{0}', space=vmem, size = 0x20000, scoped, tag = 'input window, operand 1, single buffered']
    #allocation6 [shape = 's32[1]{0}', space=sflag, size = 0x4, scoped, tag = 'scoped memory for tpu_custom_call.1']
    #allocation7 [shape = 'u8[524288]{0}', space=vmem, size = 0x80000, scoped, tag = 'input window, operand 3, single buffered']
    #allocation8 [shape = 'u8[524288]{0}', space=vmem, size = 0x80000, scoped, tag = 'input window, operand 5, single buffered']
    #allocation9 [shape = 's32[1]{0}', space=sflag, size = 0x4, scoped, tag = 'scoped memory for tpu_custom_call.1']
    #allocation10 [shape = 'u8[524288]{0}', space=vmem, size = 0x80000, scoped, tag = 'output window, operand 0']
    %12 = vsyncpa [#allocation3], 0
    %s13 = scalar_lea.sflag [#allocation3], 1
    %14 = vsyncpa %s13, 0
    %15 = vsyncpa [#allocation6], 0
    %16 = vsyncpa [#allocation9], 0
    %17 = vsyncpa [#allocation4], 0
    %s18 = scalar_lea.sflag [#allocation4], 1
    %19 = vsyncpa %s18, 0
    loop: start=0, step=1, limit=4
    $region2: #{tpu_custom_call.1} parent=1 // loop_pre_header
      _
    $region3: #{tpu_custom_call.1} parent=1 // loop_header
      %s21 = sphi 0, %s25
      %p22 = scmp.ge.s32.totalorder %s21, 4
      %s31 = sphi 0, %s33
      %s34 = sphi 0, %s31
      %s35 = sphi 0, %s34
      %s51 = sphi 0, %s35
      %s55 = sphi 0, %s55
      %s57 = sphi 0, %s55
      %s58 = sphi 0, %s57
      %s72 = sphi 0, %s58
      %s76 = sphi 0, %s76
      %s78 = sphi 0, %s76
      %s79 = sphi 0, %s78
      %s93 = sphi 0, %s79
      %s97 = sphi 0, %s97
      %s99 = sphi 0, %s97
      %s100 = sphi 0, %s99
      %s114 = sphi 0, %s100
      %s118 = sphi 0, %s118
      %s120 = sphi 0, %s118
      %s121 = sphi 0, %s120
      %s135 = sphi 0, %s121
      %s139 = sphi 0, %s139
      %s141 = sphi 0, %s139
      %s142 = sphi 0, %s141
      %s156 = sphi 0, %s142
      %s160 = sphi 0, %s160
      %s162 = sphi 0, %s160
      %s163 = sphi 0, %s162
      %s177 = sphi 0, %s163
      %s183 = sphi 0, %s185
      %s186 = sphi 0, %s183
      %s187 = sphi 0, %s186
      %s203 = sphi 0, %s187
    $region4: #{tpu_custom_call.1} parent=1 // loop_header_branch
      %24 = sbr.rel (%p22) target = $region8
    $region5: #{tpu_custom_call.1} parent=1 // loop_body
      %s26 = ssub.s32 %s21, 1
      %s27 = ssub.s32 %s21, 2
      %s28 = sadd.s32 %s21, 1
      %s29 = ssub.s32 %s21, %s28
      %p30 = scmp.eq.s32.totalorder %s29, 0
      %s32 = sadd.s32 %s31, 1
      %s33 = scalar_select %p30, %s31, %s32
      %p36 = pneg %p30
      %p37 = scmp.eq.s32.totalorder %s21, 1
      %p38 = por %p36, %p37
      %p39 = scmp.ne.s32.totalorder %s31, %s34
      %p40 = scmp.eq.s32.totalorder %s21, 0
      %p41 = por %p39, %p40
      %p42 = scmp.ne.s32.totalorder %s31, %s34
      %p43 = scmp.eq.s32.totalorder %s26, 1
      %p44 = por %p42, %p43
      %p45 = scmp.ne.s32.totalorder %s34, %s35
      %p46 = scmp.eq.s32.totalorder %s26, 0
      %p47 = por %p45, %p46
      %p48 = scmp.ne.s32.totalorder %s34, %s35
      %p49 = scmp.eq.s32.totalorder %s27, 1
      %p50 = por %p48, %p49
      %p52 = scmp.ne.s32.totalorder %s35, %s51
      %p53 = scmp.eq.s32.totalorder %s27, 0
      %p54 = por %p52, %p53
      %s56 = sadd.s32 %s55, 1
      %p59 = scmp.eq.s32.totalorder %s21, 1
      %p60 = scmp.ne.s32.totalorder %s55, %s57
      %p61 = scmp.eq.s32.totalorder %s21, 0
      %p62 = por %p60, %p61
      %p63 = scmp.ne.s32.totalorder %s55, %s57
      %p64 = scmp.eq.s32.totalorder %s26, 1
      %p65 = por %p63, %p64
      %p66 = scmp.ne.s32.totalorder %s57, %s58
      %p67 = scmp.eq.s32.totalorder %s26, 0
      %p68 = por %p66, %p67
      %p69 = scmp.ne.s32.totalorder %s57, %s58
      %p70 = scmp.eq.s32.totalorder %s27, 1
      %p71 = por %p69, %p70
      %p73 = scmp.ne.s32.totalorder %s58, %s72
      %p74 = scmp.eq.s32.totalorder %s27, 0
      %p75 = por %p73, %p74
      %s77 = sadd.s32 %s76, 1
      %p80 = scmp.eq.s32.totalorder %s21, 1
      %p81 = scmp.ne.s32.totalorder %s76, %s78
      %p82 = scmp.eq.s32.totalorder %s21, 0
      %p83 = por %p81, %p82
      %p84 = scmp.ne.s32.totalorder %s76, %s78
      %p85 = scmp.eq.s32.totalorder %s26, 1
      %p86 = por %p84, %p85
      %p87 = scmp.ne.s32.totalorder %s78, %s79
      %p88 = scmp.eq.s32.totalorder %s26, 0
      %p89 = por %p87, %p88
      %p90 = scmp.ne.s32.totalorder %s78, %s79
      %p91 = scmp.eq.s32.totalorder %s27, 1
      %p92 = por %p90, %p91
      %p94 = scmp.ne.s32.totalorder %s79, %s93
      %p95 = scmp.eq.s32.totalorder %s27, 0
      %p96 = por %p94, %p95
      %s98 = sadd.s32 %s97, 1
      %p101 = scmp.eq.s32.totalorder %s21, 1
      %p102 = scmp.ne.s32.totalorder %s97, %s99
      %p103 = scmp.eq.s32.totalorder %s21, 0
      %p104 = por %p102, %p103
      %p105 = scmp.ne.s32.totalorder %s97, %s99
      %p106 = scmp.eq.s32.totalorder %s26, 1
      %p107 = por %p105, %p106
      %p108 = scmp.ne.s32.totalorder %s99, %s100
      %p109 = scmp.eq.s32.totalorder %s26, 0
      %p110 = por %p108, %p109
      %p111 = scmp.ne.s32.totalorder %s99, %s100
      %p112 = scmp.eq.s32.totalorder %s27, 1
      %p113 = por %p111, %p112
      %p115 = scmp.ne.s32.totalorder %s100, %s114
      %p116 = scmp.eq.s32.totalorder %s27, 0
      %p117 = por %p115, %p116
      %s119 = sadd.s32 %s118, 1
      %p122 = scmp.eq.s32.totalorder %s21, 1
      %p123 = scmp.ne.s32.totalorder %s118, %s120
      %p124 = scmp.eq.s32.totalorder %s21, 0
      %p125 = por %p123, %p124
      %p126 = scmp.ne.s32.totalorder %s118, %s120
      %p127 = scmp.eq.s32.totalorder %s26, 1
      %p128 = por %p126, %p127
      %p129 = scmp.ne.s32.totalorder %s120, %s121
      %p130 = scmp.eq.s32.totalorder %s26, 0
      %p131 = por %p129, %p130
      %p132 = scmp.ne.s32.totalorder %s120, %s121
      %p133 = scmp.eq.s32.totalorder %s27, 1
      %p134 = por %p132, %p133
      %p136 = scmp.ne.s32.totalorder %s121, %s135
      %p137 = scmp.eq.s32.totalorder %s27, 0
      %p138 = por %p136, %p137
      %s140 = sadd.s32 %s139, 1
      %p143 = scmp.eq.s32.totalorder %s21, 1
      %p144 = scmp.ne.s32.totalorder %s139, %s141
      %p145 = scmp.eq.s32.totalorder %s21, 0
      %p146 = por %p144, %p145
      %p147 = scmp.ne.s32.totalorder %s139, %s141
      %p148 = scmp.eq.s32.totalorder %s26, 1
      %p149 = por %p147, %p148
      %p150 = scmp.ne.s32.totalorder %s141, %s142
      %p151 = scmp.eq.s32.totalorder %s26, 0
      %p152 = por %p150, %p151
      %p153 = scmp.ne.s32.totalorder %s141, %s142
      %p154 = scmp.eq.s32.totalorder %s27, 1
      %p155 = por %p153, %p154
      %p157 = scmp.ne.s32.totalorder %s142, %s156
      %p158 = scmp.eq.s32.totalorder %s27, 0
      %p159 = por %p157, %p158
      %s161 = sadd.s32 %s160, 1
      %p164 = scmp.eq.s32.totalorder %s21, 1
      %p165 = scmp.ne.s32.totalorder %s160, %s162
      %p166 = scmp.eq.s32.totalorder %s21, 0
      %p167 = por %p165, %p166
      %p168 = scmp.ne.s32.totalorder %s160, %s162
      %p169 = scmp.eq.s32.totalorder %s26, 1
      %p170 = por %p168, %p169
      %p171 = scmp.ne.s32.totalorder %s162, %s163
      %p172 = scmp.eq.s32.totalorder %s26, 0
      %p173 = por %p171, %p172
      %p174 = scmp.ne.s32.totalorder %s162, %s163
      %p175 = scmp.eq.s32.totalorder %s27, 1
      %p176 = por %p174, %p175
      %p178 = scmp.ne.s32.totalorder %s163, %s177
      %p179 = scmp.eq.s32.totalorder %s27, 0
      %p180 = por %p178, %p179
      %s181 = ssub.s32 %s21, %s28
      %p182 = scmp.eq.s32.totalorder %s181, 0
      %s184 = sadd.s32 %s183, 1
      %s185 = scalar_select %p182, %s183, %s184
      %p188 = pneg %p182
      %p189 = scmp.eq.s32.totalorder %s21, 1
      %p190 = por %p188, %p189
      %p191 = scmp.ne.s32.totalorder %s183, %s186
      %p192 = scmp.eq.s32.totalorder %s21, 0
      %p193 = por %p191, %p192
      %p194 = scmp.ne.s32.totalorder %s183, %s186
      %p195 = scmp.eq.s32.totalorder %s26, 1
      %p196 = por %p194, %p195
      %p197 = scmp.ne.s32.totalorder %s186, %s187
      %p198 = scmp.eq.s32.totalorder %s26, 0
      %p199 = por %p197, %p198
      %p200 = scmp.ne.s32.totalorder %s186, %s187
      %p201 = scmp.eq.s32.totalorder %s27, 1
      %p202 = por %p200, %p201
      %p204 = scmp.ne.s32.totalorder %s187, %s203
      %p205 = scmp.eq.s32.totalorder %s27, 0
      %p206 = por %p204, %p205
      %p207 = scmp.le.s32.totalorder 1, %s21
      %p208 = scmp.lt.s32.totalorder %s21, 3
      %p209 = pnand %p207, %p208
      %p210 = pneg %p209
      // Predicated region
      $region9: #{tpu_custom_call.1} parent=5 // pred_check
        _
      $region10: #{tpu_custom_call.1} parent=5 // pred_check_branch
        %212 = sbr.rel (%p209) target = $region12
      $region11: #{tpu_custom_call.1} parent=5 // pred_region
        %s213 = ssub.s32 %s21, 1
        // Predicated region
        $region13: #{tpu_custom_call.1} parent=11 // pred_check
          %p214 = pneg %p68
        $region14: #{tpu_custom_call.1} parent=11 // pred_check_branch
          %216 = sbr.rel (%p214) target = $region16
        $region15: #{tpu_custom_call.1} parent=11 // pred_region
          %s218 = ssub.s32 4096, 4096
          %219 = vsyncadd [#allocation6], %s218
          %s220 = sshll.u32 [#allocation5], 4
          %s221 = int_to_ptr.vmem [resolvable:$true] %s220
          %226 = dma.hbm_to_vmem [thread:$0]  %s1, 4096, %s221, [#allocation6], 128, 128, 8
        $region16: #{tpu_custom_call.1} parent=11 // pred_fallthru
          _
        // Predicated region
        $region17: #{tpu_custom_call.1} parent=11 // pred_check
          %p227 = pneg %p89
        $region18: #{tpu_custom_call.1} parent=11 // pred_check_branch
          %229 = sbr.rel (%p227) target = $region20
        $region19: #{tpu_custom_call.1} parent=11 // pred_region
          _
        $region20: #{tpu_custom_call.1} parent=11 // pred_fallthru
          _
        // Predicated region
        $region21: #{tpu_custom_call.1} parent=11 // pred_check
          %p230 = pneg %p110
        $region22: #{tpu_custom_call.1} parent=11 // pred_check_branch
          %232 = sbr.rel (%p230) target = $region24
        $region23: #{tpu_custom_call.1} parent=11 // pred_region
          %s234 = ssub.s32 16384, 16384
          %235 = vsyncadd [#allocation6], %s234
          %s236 = sshll.u32 [#allocation7], 4
          %s237 = int_to_ptr.vmem [resolvable:$true] %s236
          %242 = dma.hbm_to_vmem [thread:$0]  %s3, 16384, %s237, [#allocation6], 512, 512, 32
        $region24: #{tpu_custom_call.1} parent=11 // pred_fallthru
          _
        // Predicated region
        $region25: #{tpu_custom_call.1} parent=11 // pred_check
          %p243 = pneg %p131
        $region26: #{tpu_custom_call.1} parent=11 // pred_check_branch
          %245 = sbr.rel (%p243) target = $region28
        $region27: #{tpu_custom_call.1} parent=11 // pred_region
          _
        $region28: #{tpu_custom_call.1} parent=11 // pred_fallthru
          _
        // Predicated region
        $region29: #{tpu_custom_call.1} parent=11 // pred_check
          %p246 = pneg %p152
        $region30: #{tpu_custom_call.1} parent=11 // pred_check_branch
          %248 = sbr.rel (%p246) target = $region32
        $region31: #{tpu_custom_call.1} parent=11 // pred_region
          %s250 = ssub.s32 16384, 16384
          %251 = vsyncadd [#allocation9], %s250
          %s252 = sshll.u32 [#allocation8], 4
          %s253 = int_to_ptr.vmem [resolvable:$true] %s252
          %258 = dma.hbm_to_vmem [thread:$0]  %s5, 16384, %s253, [#allocation9], 128, 128, 8
        $region32: #{tpu_custom_call.1} parent=11 // pred_fallthru
          _
        // Predicated region
        $region33: #{tpu_custom_call.1} parent=11 // pred_check
          %p259 = pneg %p173
        $region34: #{tpu_custom_call.1} parent=11 // pred_check_branch
          %261 = sbr.rel (%p259) target = $region36
        $region35: #{tpu_custom_call.1} parent=11 // pred_region
          _
        $region36: #{tpu_custom_call.1} parent=11 // pred_fallthru
          _
      $region12: #{tpu_custom_call.1} parent=5 // pred_fallthru
        _
      %p262 = scmp.lt.s32.totalorder %s21, 2
      // Predicated region
      $region37: #{tpu_custom_call.1} parent=5 // pred_check
        %p263 = pneg %p262
      $region38: #{tpu_custom_call.1} parent=5 // pred_check_branch
        %265 = sbr.rel (%p263) target = $region40
      $region39: #{tpu_custom_call.1} parent=5 // pred_region
        // Predicated region
        $region41: #{tpu_custom_call.1} parent=39 // pred_check
          %p266 = pneg %p41
        $region42: #{tpu_custom_call.1} parent=39 // pred_check_branch
          %268 = sbr.rel (%p266) target = $region44
        $region43: #{tpu_custom_call.1} parent=39 // pred_region
          %s269 = sand.u32 %s31, 1
          %s270 = scalar_lea.sflag [#allocation3], %s269
          %s271 = sand.u32 %s31, 1
          %s272 = smul.addr %s271, 512
          %s273 = scalar_lea.vmem [#allocation2], %s272
          %s274 = smul.u32 32, %s21
          %s276 = ssub.s32 8192, 8192
          %277 = vsyncadd %s270, %s276
          %s278 = smul.addr %s274, 2
          %s279 = smul.addr %s278, 128
          %s280 = scalar_lea.hbm %s0, %s279
          %s281 = sshll.u32 %s273, 4
          %s282 = int_to_ptr.vmem [resolvable:$true] %s281
          %287 = dma.hbm_to_vmem [thread:$0]  %s280, 8192, %s282, %s270, 256, 256, 16
        $region44: #{tpu_custom_call.1} parent=39 // pred_fallthru
          _
      $region40: #{tpu_custom_call.1} parent=5 // pred_fallthru
        _
      %p288 = scmp.le.s32.totalorder 1, %s21
      %p289 = scmp.lt.s32.totalorder %s21, 3
      %p290 = pnand %p288, %p289
      %p291 = pneg %p290
      // Predicated region
      $region45: #{tpu_custom_call.1} parent=5 // pred_check
        _
      $region46: #{tpu_custom_call.1} parent=5 // pred_check_branch
        %293 = sbr.rel (%p290) target = $region48
      $region47: #{tpu_custom_call.1} parent=5 // pred_region
        %s294 = ssub.s32 %s21, 1
        %s295 = sand.u32 %s34, 1
        %s296 = scalar_lea.sflag [#allocation3], %s295
        %s297 = sand.u32 %s34, 1
        %s298 = smul.addr %s297, 512
        %s299 = scalar_lea.vmem [#allocation2], %s298
        // Predicated region
        $region49: #{tpu_custom_call.1} parent=47 // pred_check
          %p300 = pneg %p47
        $region50: #{tpu_custom_call.1} parent=47 // pred_check_branch
          %302 = sbr.rel (%p300) target = $region52
        $region51: #{tpu_custom_call.1} parent=47 // pred_region
          %303 = dma.done %s296, 8192
        $region52: #{tpu_custom_call.1} parent=47 // pred_fallthru
          _
        // Predicated region
        $region53: #{tpu_custom_call.1} parent=47 // pred_check
          %p304 = pneg %p68
        $region54: #{tpu_custom_call.1} parent=47 // pred_check_branch
          %306 = sbr.rel (%p304) target = $region56
        $region55: #{tpu_custom_call.1} parent=47 // pred_region
          %307 = dma.done [#allocation6], 4096
        $region56: #{tpu_custom_call.1} parent=47 // pred_fallthru
          _
        // Predicated region
        $region57: #{tpu_custom_call.1} parent=47 // pred_check
          %p308 = pneg %p110
        $region58: #{tpu_custom_call.1} parent=47 // pred_check_branch
          %310 = sbr.rel (%p308) target = $region60
        $region59: #{tpu_custom_call.1} parent=47 // pred_region
          %311 = dma.done [#allocation6], 16384
        $region60: #{tpu_custom_call.1} parent=47 // pred_fallthru
          _
        // Predicated region
        $region61: #{tpu_custom_call.1} parent=47 // pred_check
          %p312 = pneg %p152
        $region62: #{tpu_custom_call.1} parent=47 // pred_check_branch
          %314 = sbr.rel (%p312) target = $region64
        $region63: #{tpu_custom_call.1} parent=47 // pred_region
          %315 = dma.done [#allocation9], 16384
        $region64: #{tpu_custom_call.1} parent=47 // pred_fallthru
          _
        %s316 = sand.u32 %s34, 1
        %s317 = scalar_lea.sflag [#allocation3], %s316
        %s318 = sand.u32 %s34, 1
        %s319 = smul.addr %s318, 512
        %s320 = scalar_lea.vmem [#allocation2], %s319
        %p321 = pneg %p47
        %p322 = pneg %p44
        %p323 = pneg %p68
        %p324 = pneg %p65
        %p325 = pneg %p89
        %p326 = pneg %p86
        %p327 = pneg %p110
        %p328 = pneg %p107
        %p329 = pneg %p131
        %p330 = pneg %p128
        %p331 = pneg %p152
        %p332 = pneg %p149
        %p333 = pneg %p173
        %p334 = pneg %p170
        %p335 = pneg %p199
        %p336 = pneg %p196
        %s337 = sand.u32 %s186, 1
        %s338 = scalar_lea.sflag [#allocation4], %s337
        %s339 = sand.u32 %s186, 1
        %s340 = smul.addr %s339, 512
        %s341 = scalar_lea.vmem [#allocation10], %s340
        %s342 = smul.u32 32, %s26
        %s343 = smul.u32 32, %s26
        %v348 = vld [vmem:[%s299] sm:$0xff]
        %v349 = vld [vmem:[%s299 + $0x8] sm:$0xff]
        %v350 = vld [vmem:[%s299 + $0x10] sm:$0xff]
        %v351 = vld [vmem:[%s299 + $0x18] sm:$0xff]
        %v352 = vld [vmem:[%s299 + $0x20] sm:$0xff]
        %v353 = vld [vmem:[%s299 + $0x28] sm:$0xff]
        %v354 = vld [vmem:[%s299 + $0x30] sm:$0xff]
        %v355 = vld [vmem:[%s299 + $0x38] sm:$0xff]
        %v356 = vld [vmem:[%s299 + $0x40] sm:$0xff]
        %v357 = vld [vmem:[%s299 + $0x48] sm:$0xff]
        %v358 = vld [vmem:[%s299 + $0x50] sm:$0xff]
        %v359 = vld [vmem:[%s299 + $0x58] sm:$0xff]
        %v360 = vld [vmem:[%s299 + $0x60] sm:$0xff]
        %v361 = vld [vmem:[%s299 + $0x68] sm:$0xff]
        %v362 = vld [vmem:[%s299 + $0x70] sm:$0xff]
        %v363 = vld [vmem:[%s299 + $0x78] sm:$0xff]
        %v364 = vld [vmem:[%s299 + $0x80] sm:$0xff]
        %v365 = vld [vmem:[%s299 + $0x88] sm:$0xff]
        %v366 = vld [vmem:[%s299 + $0x90] sm:$0xff]
        %v367 = vld [vmem:[%s299 + $0x98] sm:$0xff]
        %v368 = vld [vmem:[%s299 + $0xa0] sm:$0xff]
        %v369 = vld [vmem:[%s299 + $0xa8] sm:$0xff]
        %v370 = vld [vmem:[%s299 + $0xb0] sm:$0xff]
        %v371 = vld [vmem:[%s299 + $0xb8] sm:$0xff]
        %v372 = vld [vmem:[%s299 + $0xc0] sm:$0xff]
        %v373 = vld [vmem:[%s299 + $0xc8] sm:$0xff]
        %v374 = vld [vmem:[%s299 + $0xd0] sm:$0xff]
        %v375 = vld [vmem:[%s299 + $0xd8] sm:$0xff]
        %v376 = vld [vmem:[%s299 + $0xe0] sm:$0xff]
        %v377 = vld [vmem:[%s299 + $0xe8] sm:$0xff]
        %v378 = vld [vmem:[%s299 + $0xf0] sm:$0xff]
        %v379 = vld [vmem:[%s299 + $0xf8] sm:$0xff]
        %v380 = vld [vmem:[%s299 + $0x100] sm:$0xff]
        %v381 = vld [vmem:[%s299 + $0x108] sm:$0xff]
        %v382 = vld [vmem:[%s299 + $0x110] sm:$0xff]
        %v383 = vld [vmem:[%s299 + $0x118] sm:$0xff]
        %v384 = vld [vmem:[%s299 + $0x120] sm:$0xff]
        %v385 = vld [vmem:[%s299 + $0x128] sm:$0xff]
        %v386 = vld [vmem:[%s299 + $0x130] sm:$0xff]
        %v387 = vld [vmem:[%s299 + $0x138] sm:$0xff]
        %v388 = vld [vmem:[%s299 + $0x140] sm:$0xff]
        %v389 = vld [vmem:[%s299 + $0x148] sm:$0xff]
        %v390 = vld [vmem:[%s299 + $0x150] sm:$0xff]
        %v391 = vld [vmem:[%s299 + $0x158] sm:$0xff]
        %v392 = vld [vmem:[%s299 + $0x160] sm:$0xff]
        %v393 = vld [vmem:[%s299 + $0x168] sm:$0xff]
        %v394 = vld [vmem:[%s299 + $0x170] sm:$0xff]
        %v395 = vld [vmem:[%s299 + $0x178] sm:$0xff]
        %v396 = vld [vmem:[%s299 + $0x180] sm:$0xff]
        %v397 = vld [vmem:[%s299 + $0x188] sm:$0xff]
        %v398 = vld [vmem:[%s299 + $0x190] sm:$0xff]
        %v399 = vld [vmem:[%s299 + $0x198] sm:$0xff]
        %v400 = vld [vmem:[%s299 + $0x1a0] sm:$0xff]
        %v401 = vld [vmem:[%s299 + $0x1a8] sm:$0xff]
        %v402 = vld [vmem:[%s299 + $0x1b0] sm:$0xff]
        %v403 = vld [vmem:[%s299 + $0x1b8] sm:$0xff]
        %v404 = vld [vmem:[%s299 + $0x1c0] sm:$0xff]
        %v405 = vld [vmem:[%s299 + $0x1c8] sm:$0xff]
        %v406 = vld [vmem:[%s299 + $0x1d0] sm:$0xff]
        %v407 = vld [vmem:[%s299 + $0x1d8] sm:$0xff]
        %v408 = vld [vmem:[%s299 + $0x1e0] sm:$0xff]
        %v409 = vld [vmem:[%s299 + $0x1e8] sm:$0xff]
        %v410 = vld [vmem:[%s299 + $0x1f0] sm:$0xff]
        %v411 = vld [vmem:[%s299 + $0x1f8] sm:$0xff]
        %v412 = vadd.f32 %v348, %v349
        %413 = vadd.xlane.f32.xlu0 %v412
        %v414 = vpop.xlane.xlu0 %413
        %v415 = vadd.f32 %v350, %v351
        %416 = vadd.xlane.f32.xlu0 %v415
        %v417 = vpop.xlane.xlu0 %416
        %v418 = vadd.f32 %v352, %v353
        %419 = vadd.xlane.f32.xlu0 %v418
        %v420 = vpop.xlane.xlu0 %419
        %v421 = vadd.f32 %v354, %v355
        %422 = vadd.xlane.f32.xlu0 %v421
        %v423 = vpop.xlane.xlu0 %422
        %v424 = vadd.f32 %v356, %v357
        %425 = vadd.xlane.f32.xlu0 %v424
        %v426 = vpop.xlane.xlu0 %425
        %v427 = vadd.f32 %v358, %v359
        %428 = vadd.xlane.f32.xlu0 %v427
        %v429 = vpop.xlane.xlu0 %428
        %v430 = vadd.f32 %v360, %v361
        %431 = vadd.xlane.f32.xlu0 %v430
        %v432 = vpop.xlane.xlu0 %431
        %v433 = vadd.f32 %v362, %v363
        %434 = vadd.xlane.f32.xlu0 %v433
        %v435 = vpop.xlane.xlu0 %434
        %v436 = vadd.f32 %v364, %v365
        %437 = vadd.xlane.f32.xlu0 %v436
        %v438 = vpop.xlane.xlu0 %437
        %v439 = vadd.f32 %v366, %v367
        %440 = vadd.xlane.f32.xlu0 %v439
        %v441 = vpop.xlane.xlu0 %440
        %v442 = vadd.f32 %v368, %v369
        %443 = vadd.xlane.f32.xlu0 %v442
        %v444 = vpop.xlane.xlu0 %443
        %v445 = vadd.f32 %v370, %v371
        %446 = vadd.xlane.f32.xlu0 %v445
        %v447 = vpop.xlane.xlu0 %446
        %v448 = vadd.f32 %v372, %v373
        %449 = vadd.xlane.f32.xlu0 %v448
        %v450 = vpop.xlane.xlu0 %449
        %v451 = vadd.f32 %v374, %v375
        %452 = vadd.xlane.f32.xlu0 %v451
        %v453 = vpop.xlane.xlu0 %452
        %v454 = vadd.f32 %v376, %v377
        %455 = vadd.xlane.f32.xlu0 %v454
        %v456 = vpop.xlane.xlu0 %455
        %v457 = vadd.f32 %v378, %v379
        %458 = vadd.xlane.f32.xlu0 %v457
        %v459 = vpop.xlane.xlu0 %458
        %v460 = vadd.f32 %v380, %v381
        %461 = vadd.xlane.f32.xlu0 %v460
        %v462 = vpop.xlane.xlu0 %461
        %v463 = vadd.f32 %v382, %v383
        %464 = vadd.xlane.f32.xlu0 %v463
        %v465 = vpop.xlane.xlu0 %464
        %v466 = vadd.f32 %v384, %v385
        %467 = vadd.xlane.f32.xlu0 %v466
        %v468 = vpop.xlane.xlu0 %467
        %v469 = vadd.f32 %v386, %v387
        %470 = vadd.xlane.f32.xlu0 %v469
        %v471 = vpop.xlane.xlu0 %470
        %v472 = vadd.f32 %v388, %v389
        %473 = vadd.xlane.f32.xlu0 %v472
        %v474 = vpop.xlane.xlu0 %473
        %v475 = vadd.f32 %v390, %v391
        %476 = vadd.xlane.f32.xlu0 %v475
        %v477 = vpop.xlane.xlu0 %476
        %v478 = vadd.f32 %v392, %v393
        %479 = vadd.xlane.f32.xlu0 %v478
        %v480 = vpop.xlane.xlu0 %479
        %v481 = vadd.f32 %v394, %v395
        %482 = vadd.xlane.f32.xlu0 %v481
        %v483 = vpop.xlane.xlu0 %482
        %v484 = vadd.f32 %v396, %v397
        %485 = vadd.xlane.f32.xlu0 %v484
        %v486 = vpop.xlane.xlu0 %485
        %v487 = vadd.f32 %v398, %v399
        %488 = vadd.xlane.f32.xlu0 %v487
        %v489 = vpop.xlane.xlu0 %488
        %v490 = vadd.f32 %v400, %v401
        %491 = vadd.xlane.f32.xlu0 %v490
        %v492 = vpop.xlane.xlu0 %491
        %v493 = vadd.f32 %v402, %v403
        %494 = vadd.xlane.f32.xlu0 %v493
        %v495 = vpop.xlane.xlu0 %494
        %v496 = vadd.f32 %v404, %v405
        %497 = vadd.xlane.f32.xlu0 %v496
        %v498 = vpop.xlane.xlu0 %497
        %v499 = vadd.f32 %v406, %v407
        %500 = vadd.xlane.f32.xlu0 %v499
        %v501 = vpop.xlane.xlu0 %500
        %v502 = vadd.f32 %v408, %v409
        %503 = vadd.xlane.f32.xlu0 %v502
        %v504 = vpop.xlane.xlu0 %503
        %v505 = vadd.f32 %v410, %v411
        %506 = vadd.xlane.f32.xlu0 %v505
        %v507 = vpop.xlane.xlu0 %506
        %v508 = vrcp.pop 256.0
        %v509 = vmul.f32 %v414, %v508
        %v510 = vmul.f32 %v417, %v508
        %v511 = vmul.f32 %v420, %v508
        %v512 = vmul.f32 %v423, %v508
        %v513 = vmul.f32 %v426, %v508
        %v514 = vmul.f32 %v429, %v508
        %v515 = vmul.f32 %v432, %v508
        %v516 = vmul.f32 %v435, %v508
        %v517 = vmul.f32 %v438, %v508
        %v518 = vmul.f32 %v441, %v508
        %v519 = vmul.f32 %v444, %v508
        %v520 = vmul.f32 %v447, %v508
        %v521 = vmul.f32 %v450, %v508
        %v522 = vmul.f32 %v453, %v508
        %v523 = vmul.f32 %v456, %v508
        %v524 = vmul.f32 %v459, %v508
        %v525 = vmul.f32 %v462, %v508
        %v526 = vmul.f32 %v465, %v508
        %v527 = vmul.f32 %v468, %v508
        %v528 = vmul.f32 %v471, %v508
        %v529 = vmul.f32 %v474, %v508
        %v530 = vmul.f32 %v477, %v508
        %v531 = vmul.f32 %v480, %v508
        %v532 = vmul.f32 %v483, %v508
        %v533 = vmul.f32 %v486, %v508
        %v534 = vmul.f32 %v489, %v508
        %v535 = vmul.f32 %v492, %v508
        %v536 = vmul.f32 %v495, %v508
        %v537 = vmul.f32 %v498, %v508
        %v538 = vmul.f32 %v501, %v508
        %v539 = vmul.f32 %v504, %v508
        %v540 = vmul.f32 %v507, %v508
        %v541 = vmul.f32 %v348, %v348
        %v542 = vmul.f32 %v349, %v349
        %v543 = vmul.f32 %v350, %v350
        %v544 = vmul.f32 %v351, %v351
        %v545 = vmul.f32 %v352, %v352
        %v546 = vmul.f32 %v353, %v353
        %v547 = vmul.f32 %v354, %v354
        %v548 = vmul.f32 %v355, %v355
        %v549 = vmul.f32 %v356, %v356
        %v550 = vmul.f32 %v357, %v357
        %v551 = vmul.f32 %v358, %v358
        %v552 = vmul.f32 %v359, %v359
        %v553 = vmul.f32 %v360, %v360
        %v554 = vmul.f32 %v361, %v361
        %v555 = vmul.f32 %v362, %v362
        %v556 = vmul.f32 %v363, %v363
        %v557 = vmul.f32 %v364, %v364
        %v558 = vmul.f32 %v365, %v365
        %v559 = vmul.f32 %v366, %v366
        %v560 = vmul.f32 %v367, %v367
        %v561 = vmul.f32 %v368, %v368
        %v562 = vmul.f32 %v369, %v369
        %v563 = vmul.f32 %v370, %v370
        %v564 = vmul.f32 %v371, %v371
        %v565 = vmul.f32 %v372, %v372
        %v566 = vmul.f32 %v373, %v373
        %v567 = vmul.f32 %v374, %v374
        %v568 = vmul.f32 %v375, %v375
        %v569 = vmul.f32 %v376, %v376
        %v570 = vmul.f32 %v377, %v377
        %v571 = vmul.f32 %v378, %v378
        %v572 = vmul.f32 %v379, %v379
        %v573 = vmul.f32 %v380, %v380
        %v574 = vmul.f32 %v381, %v381
        %v575 = vmul.f32 %v382, %v382
        %v576 = vmul.f32 %v383, %v383
        %v577 = vmul.f32 %v384, %v384
        %v578 = vmul.f32 %v385, %v385
        %v579 = vmul.f32 %v386, %v386
        %v580 = vmul.f32 %v387, %v387
        %v581 = vmul.f32 %v388, %v388
        %v582 = vmul.f32 %v389, %v389
        %v583 = vmul.f32 %v390, %v390
        %v584 = vmul.f32 %v391, %v391
        %v585 = vmul.f32 %v392, %v392
        %v586 = vmul.f32 %v393, %v393
        %v587 = vmul.f32 %v394, %v394
        %v588 = vmul.f32 %v395, %v395
        %v589 = vmul.f32 %v396, %v396
        %v590 = vmul.f32 %v397, %v397
        %v591 = vmul.f32 %v398, %v398
        %v592 = vmul.f32 %v399, %v399
        %v593 = vmul.f32 %v400, %v400
        %v594 = vmul.f32 %v401, %v401
        %v595 = vmul.f32 %v402, %v402
        %v596 = vmul.f32 %v403, %v403
        %v597 = vmul.f32 %v404, %v404
        %v598 = vmul.f32 %v405, %v405
        %v599 = vmul.f32 %v406, %v406
        %v600 = vmul.f32 %v407, %v407
        %v601 = vmul.f32 %v408, %v408
        %v602 = vmul.f32 %v409, %v409
        %v603 = vmul.f32 %v410, %v410
        %v604 = vmul.f32 %v411, %v411
        %v605 = vadd.f32 %v541, %v542
        %606 = vadd.xlane.f32.xlu0 %v605
        %v607 = vpop.xlane.xlu0 %606
        %v608 = vadd.f32 %v543, %v544
        %609 = vadd.xlane.f32.xlu0 %v608
        %v610 = vpop.xlane.xlu0 %609
        %v611 = vadd.f32 %v545, %v546
        %612 = vadd.xlane.f32.xlu0 %v611
        %v613 = vpop.xlane.xlu0 %612
        %v614 = vadd.f32 %v547, %v548
        %615 = vadd.xlane.f32.xlu0 %v614
        %v616 = vpop.xlane.xlu0 %615
        %v617 = vadd.f32 %v549, %v550
        %618 = vadd.xlane.f32.xlu0 %v617
        %v619 = vpop.xlane.xlu0 %618
        %v620 = vadd.f32 %v551, %v552
        %621 = vadd.xlane.f32.xlu0 %v620
        %v622 = vpop.xlane.xlu0 %621
        %v623 = vadd.f32 %v553, %v554
        %624 = vadd.xlane.f32.xlu0 %v623
        %v625 = vpop.xlane.xlu0 %624
        %v626 = vadd.f32 %v555, %v556
        %627 = vadd.xlane.f32.xlu0 %v626
        %v628 = vpop.xlane.xlu0 %627
        %v629 = vadd.f32 %v557, %v558
        %630 = vadd.xlane.f32.xlu0 %v629
        %v631 = vpop.xlane.xlu0 %630
        %v632 = vadd.f32 %v559, %v560
        %633 = vadd.xlane.f32.xlu0 %v632
        %v634 = vpop.xlane.xlu0 %633
        %v635 = vadd.f32 %v561, %v562
        %636 = vadd.xlane.f32.xlu0 %v635
        %v637 = vpop.xlane.xlu0 %636
        %v638 = vadd.f32 %v563, %v564
        %639 = vadd.xlane.f32.xlu0 %v638
        %v640 = vpop.xlane.xlu0 %639
        %v641 = vadd.f32 %v565, %v566
        %642 = vadd.xlane.f32.xlu0 %v641
        %v643 = vpop.xlane.xlu0 %642
        %v644 = vadd.f32 %v567, %v568
        %645 = vadd.xlane.f32.xlu0 %v644
        %v646 = vpop.xlane.xlu0 %645
        %v647 = vadd.f32 %v569, %v570
        %648 = vadd.xlane.f32.xlu0 %v647
        %v649 = vpop.xlane.xlu0 %648
        %v650 = vadd.f32 %v571, %v572
        %651 = vadd.xlane.f32.xlu0 %v650
        %v652 = vpop.xlane.xlu0 %651
        %v653 = vadd.f32 %v573, %v574
        %654 = vadd.xlane.f32.xlu0 %v653
        %v655 = vpop.xlane.xlu0 %654
        %v656 = vadd.f32 %v575, %v576
        %657 = vadd.xlane.f32.xlu0 %v656
        %v658 = vpop.xlane.xlu0 %657
        %v659 = vadd.f32 %v577, %v578
        %660 = vadd.xlane.f32.xlu0 %v659
        %v661 = vpop.xlane.xlu0 %660
        %v662 = vadd.f32 %v579, %v580
        %663 = vadd.xlane.f32.xlu0 %v662
        %v664 = vpop.xlane.xlu0 %663
        %v665 = vadd.f32 %v581, %v582
        %666 = vadd.xlane.f32.xlu0 %v665
        %v667 = vpop.xlane.xlu0 %666
        %v668 = vadd.f32 %v583, %v584
        %669 = vadd.xlane.f32.xlu0 %v668
        %v670 = vpop.xlane.xlu0 %669
        %v671 = vadd.f32 %v585, %v586
        %672 = vadd.xlane.f32.xlu0 %v671
        %v673 = vpop.xlane.xlu0 %672
        %v674 = vadd.f32 %v587, %v588
        %675 = vadd.xlane.f32.xlu0 %v674
        %v676 = vpop.xlane.xlu0 %675
        %v677 = vadd.f32 %v589, %v590
        %678 = vadd.xlane.f32.xlu0 %v677
        %v679 = vpop.xlane.xlu0 %678
        %v680 = vadd.f32 %v591, %v592
        %681 = vadd.xlane.f32.xlu0 %v680
        %v682 = vpop.xlane.xlu0 %681
        %v683 = vadd.f32 %v593, %v594
        %684 = vadd.xlane.f32.xlu0 %v683
        %v685 = vpop.xlane.xlu0 %684
        %v686 = vadd.f32 %v595, %v596
        %687 = vadd.xlane.f32.xlu0 %v686
        %v688 = vpop.xlane.xlu0 %687
        %v689 = vadd.f32 %v597, %v598
        %690 = vadd.xlane.f32.xlu0 %v689
        %v691 = vpop.xlane.xlu0 %690
        %v692 = vadd.f32 %v599, %v600
        %693 = vadd.xlane.f32.xlu0 %v692
        %v694 = vpop.xlane.xlu0 %693
        %v695 = vadd.f32 %v601, %v602
        %696 = vadd.xlane.f32.xlu0 %v695
        %v697 = vpop.xlane.xlu0 %696
        %v698 = vadd.f32 %v603, %v604
        %699 = vadd.xlane.f32.xlu0 %v698
        %v700 = vpop.xlane.xlu0 %699
        %v701 = vmul.f32 %v607, %v508
        %v702 = vmul.f32 %v610, %v508
        %v703 = vmul.f32 %v613, %v508
        %v704 = vmul.f32 %v616, %v508
        %v705 = vmul.f32 %v619, %v508
        %v706 = vmul.f32 %v622, %v508
        %v707 = vmul.f32 %v625, %v508
        %v708 = vmul.f32 %v628, %v508
        %v709 = vmul.f32 %v631, %v508
        %v710 = vmul.f32 %v634, %v508
        %v711 = vmul.f32 %v637, %v508
        %v712 = vmul.f32 %v640, %v508
        %v713 = vmul.f32 %v643, %v508
        %v714 = vmul.f32 %v646, %v508
        %v715 = vmul.f32 %v649, %v508
        %v716 = vmul.f32 %v652, %v508
        %v717 = vmul.f32 %v655, %v508
        %v718 = vmul.f32 %v658, %v508
        %v719 = vmul.f32 %v661, %v508
        %v720 = vmul.f32 %v664, %v508
        %v721 = vmul.f32 %v667, %v508
        %v722 = vmul.f32 %v670, %v508
        %v723 = vmul.f32 %v673, %v508
        %v724 = vmul.f32 %v676, %v508
        %v725 = vmul.f32 %v679, %v508
        %v726 = vmul.f32 %v682, %v508
        %v727 = vmul.f32 %v685, %v508
        %v728 = vmul.f32 %v688, %v508
        %v729 = vmul.f32 %v691, %v508
        %v730 = vmul.f32 %v694, %v508
        %v731 = vmul.f32 %v697, %v508
        %v732 = vmul.f32 %v700, %v508
        %v733 = vmul.f32 %v509, %v509
        %v734 = vmul.f32 %v510, %v510
        %v735 = vmul.f32 %v511, %v511
        %v736 = vmul.f32 %v512, %v512
        %v737 = vmul.f32 %v513, %v513
        %v738 = vmul.f32 %v514, %v514
        %v739 = vmul.f32 %v515, %v515
        %v740 = vmul.f32 %v516, %v516
        %v741 = vmul.f32 %v517, %v517
        %v742 = vmul.f32 %v518, %v518
        %v743 = vmul.f32 %v519, %v519
        %v744 = vmul.f32 %v520, %v520
        %v745 = vmul.f32 %v521, %v521
        %v746 = vmul.f32 %v522, %v522
        %v747 = vmul.f32 %v523, %v523
        %v748 = vmul.f32 %v524, %v524
        %v749 = vmul.f32 %v525, %v525
        %v750 = vmul.f32 %v526, %v526
        %v751 = vmul.f32 %v527, %v527
        %v752 = vmul.f32 %v528, %v528
        %v753 = vmul.f32 %v529, %v529
        %v754 = vmul.f32 %v530, %v530
        %v755 = vmul.f32 %v531, %v531
        %v756 = vmul.f32 %v532, %v532
        %v757 = vmul.f32 %v533, %v533
        %v758 = vmul.f32 %v534, %v534
        %v759 = vmul.f32 %v535, %v535
        %v760 = vmul.f32 %v536, %v536
        %v761 = vmul.f32 %v537, %v537
        %v762 = vmul.f32 %v538, %v538
        %v763 = vmul.f32 %v539, %v539
        %v764 = vmul.f32 %v540, %v540
        %v765 = vsub.f32 %v701, %v733
        %v766 = vsub.f32 %v702, %v734
        %v767 = vsub.f32 %v703, %v735
        %v768 = vsub.f32 %v704, %v736
        %v769 = vsub.f32 %v705, %v737
        %v770 = vsub.f32 %v706, %v738
        %v771 = vsub.f32 %v707, %v739
        %v772 = vsub.f32 %v708, %v740
        %v773 = vsub.f32 %v709, %v741
        %v774 = vsub.f32 %v710, %v742
        %v775 = vsub.f32 %v711, %v743
        %v776 = vsub.f32 %v712, %v744
        %v777 = vsub.f32 %v713, %v745
        %v778 = vsub.f32 %v714, %v746
        %v779 = vsub.f32 %v715, %v747
        %v780 = vsub.f32 %v716, %v748
        %v781 = vsub.f32 %v717, %v749
        %v782 = vsub.f32 %v718, %v750
        %v783 = vsub.f32 %v719, %v751
        %v784 = vsub.f32 %v720, %v752
        %v785 = vsub.f32 %v721, %v753
        %v786 = vsub.f32 %v722, %v754
        %v787 = vsub.f32 %v723, %v755
        %v788 = vsub.f32 %v724, %v756
        %v789 = vsub.f32 %v725, %v757
        %v790 = vsub.f32 %v726, %v758
        %v791 = vsub.f32 %v727, %v759
        %v792 = vsub.f32 %v728, %v760
        %v793 = vsub.f32 %v729, %v761
        %v794 = vsub.f32 %v730, %v762
        %v795 = vsub.f32 %v731, %v763
        %v796 = vsub.f32 %v732, %v764
        %v797 = vmax.f32 %v765, 0.0
        %v798 = vmax.f32 %v766, 0.0
        %v799 = vmax.f32 %v767, 0.0
        %v800 = vmax.f32 %v768, 0.0
        %v801 = vmax.f32 %v769, 0.0
        %v802 = vmax.f32 %v770, 0.0
        %v803 = vmax.f32 %v771, 0.0
        %v804 = vmax.f32 %v772, 0.0
        %v805 = vmax.f32 %v773, 0.0
        %v806 = vmax.f32 %v774, 0.0
        %v807 = vmax.f32 %v775, 0.0
        %v808 = vmax.f32 %v776, 0.0
        %v809 = vmax.f32 %v777, 0.0
        %v810 = vmax.f32 %v778, 0.0
        %v811 = vmax.f32 %v779, 0.0
        %v812 = vmax.f32 %v780, 0.0
        %v813 = vmax.f32 %v781, 0.0
        %v814 = vmax.f32 %v782, 0.0
        %v815 = vmax.f32 %v783, 0.0
        %v816 = vmax.f32 %v784, 0.0
        %v817 = vmax.f32 %v785, 0.0
        %v818 = vmax.f32 %v786, 0.0
        %v819 = vmax.f32 %v787, 0.0
        %v820 = vmax.f32 %v788, 0.0
        %v821 = vmax.f32 %v789, 0.0
        %v822 = vmax.f32 %v790, 0.0
        %v823 = vmax.f32 %v791, 0.0
        %v824 = vmax.f32 %v792, 0.0
        %v825 = vmax.f32 %v793, 0.0
        %v826 = vmax.f32 %v794, 0.0
        %v827 = vmax.f32 %v795, 0.0
        %v828 = vmax.f32 %v796, 0.0
        %v829 = vsub.f32 %v348, %v509
        %v830 = vsub.f32 %v349, %v509
        %v831 = vsub.f32 %v350, %v510
        %v832 = vsub.f32 %v351, %v510
        %v833 = vsub.f32 %v352, %v511
        %v834 = vsub.f32 %v353, %v511
        %v835 = vsub.f32 %v354, %v512
        %v836 = vsub.f32 %v355, %v512
        %v837 = vsub.f32 %v356, %v513
        %v838 = vsub.f32 %v357, %v513
        %v839 = vsub.f32 %v358, %v514
        %v840 = vsub.f32 %v359, %v514
        %v841 = vsub.f32 %v360, %v515
        %v842 = vsub.f32 %v361, %v515
        %v843 = vsub.f32 %v362, %v516
        %v844 = vsub.f32 %v363, %v516
        %v845 = vsub.f32 %v364, %v517
        %v846 = vsub.f32 %v365, %v517
        %v847 = vsub.f32 %v366, %v518
        %v848 = vsub.f32 %v367, %v518
        %v849 = vsub.f32 %v368, %v519
        %v850 = vsub.f32 %v369, %v519
        %v851 = vsub.f32 %v370, %v520
        %v852 = vsub.f32 %v371, %v520
        %v853 = vsub.f32 %v372, %v521
        %v854 = vsub.f32 %v373, %v521
        %v855 = vsub.f32 %v374, %v522
        %v856 = vsub.f32 %v375, %v522
        %v857 = vsub.f32 %v376, %v523
        %v858 = vsub.f32 %v377, %v523
        %v859 = vsub.f32 %v378, %v524
        %v860 = vsub.f32 %v379, %v524
        %v861 = vsub.f32 %v380, %v525
        %v862 = vsub.f32 %v381, %v525
        %v863 = vsub.f32 %v382, %v526
        %v864 = vsub.f32 %v383, %v526
        %v865 = vsub.f32 %v384, %v527
        %v866 = vsub.f32 %v385, %v527
        %v867 = vsub.f32 %v386, %v528
        %v868 = vsub.f32 %v387, %v528
        %v869 = vsub.f32 %v388, %v529
        %v870 = vsub.f32 %v389, %v529
        %v871 = vsub.f32 %v390, %v530
        %v872 = vsub.f32 %v391, %v530
        %v873 = vsub.f32 %v392, %v531
        %v874 = vsub.f32 %v393, %v531
        %v875 = vsub.f32 %v394, %v532
        %v876 = vsub.f32 %v395, %v532
        %v877 = vsub.f32 %v396, %v533
        %v878 = vsub.f32 %v397, %v533
        %v879 = vsub.f32 %v398, %v534
        %v880 = vsub.f32 %v399, %v534
        %v881 = vsub.f32 %v400, %v535
        %v882 = vsub.f32 %v401, %v535
        %v883 = vsub.f32 %v402, %v536
        %v884 = vsub.f32 %v403, %v536
        %v885 = vsub.f32 %v404, %v537
        %v886 = vsub.f32 %v405, %v537
        %v887 = vsub.f32 %v406, %v538
        %v888 = vsub.f32 %v407, %v538
        %v889 = vsub.f32 %v408, %v539
        %v890 = vsub.f32 %v409, %v539
        %v891 = vsub.f32 %v410, %v540
        %v892 = vsub.f32 %v411, %v540
        %v893 = vadd.f32 %v797, 1e-05
        %v894 = vadd.f32 %v798, 1e-05
        %v895 = vadd.f32 %v799, 1e-05
        %v896 = vadd.f32 %v800, 1e-05
        %v897 = vadd.f32 %v801, 1e-05
        %v898 = vadd.f32 %v802, 1e-05
        %v899 = vadd.f32 %v803, 1e-05
        %v900 = vadd.f32 %v804, 1e-05
        %v901 = vadd.f32 %v805, 1e-05
        %v902 = vadd.f32 %v806, 1e-05
        %v903 = vadd.f32 %v807, 1e-05
        %v904 = vadd.f32 %v808, 1e-05
        %v905 = vadd.f32 %v809, 1e-05
        %v906 = vadd.f32 %v810, 1e-05
        %v907 = vadd.f32 %v811, 1e-05
        %v908 = vadd.f32 %v812, 1e-05
        %v909 = vadd.f32 %v813, 1e-05
        %v910 = vadd.f32 %v814, 1e-05
        %v911 = vadd.f32 %v815, 1e-05
        %v912 = vadd.f32 %v816, 1e-05
        %v913 = vadd.f32 %v817, 1e-05
        %v914 = vadd.f32 %v818, 1e-05
        %v915 = vadd.f32 %v819, 1e-05
        %v916 = vadd.f32 %v820, 1e-05
        %v917 = vadd.f32 %v821, 1e-05
        %v918 = vadd.f32 %v822, 1e-05
        %v919 = vadd.f32 %v823, 1e-05
        %v920 = vadd.f32 %v824, 1e-05
        %v921 = vadd.f32 %v825, 1e-05
        %v922 = vadd.f32 %v826, 1e-05
        %v923 = vadd.f32 %v827, 1e-05
        %v924 = vadd.f32 %v828, 1e-05
        %v925 = vrsqrt.pop %v893
        %v926 = vrsqrt.pop %v894
        %v927 = vrsqrt.pop %v895
        %v928 = vrsqrt.pop %v896
        %v929 = vrsqrt.pop %v897
        %v930 = vrsqrt.pop %v898
        %v931 = vrsqrt.pop %v899
        %v932 = vrsqrt.pop %v900
        %v933 = vrsqrt.pop %v901
        %v934 = vrsqrt.pop %v902
        %v935 = vrsqrt.pop %v903
        %v936 = vrsqrt.pop %v904
        %v937 = vrsqrt.pop %v905
        %v938 = vrsqrt.pop %v906
        %v939 = vrsqrt.pop %v907
        %v940 = vrsqrt.pop %v908
        %v941 = vrsqrt.pop %v909
        %v942 = vrsqrt.pop %v910
        %v943 = vrsqrt.pop %v911
        %v944 = vrsqrt.pop %v912
        %v945 = vrsqrt.pop %v913
        %v946 = vrsqrt.pop %v914
        %v947 = vrsqrt.pop %v915
        %v948 = vrsqrt.pop %v916
        %v949 = vrsqrt.pop %v917
        %v950 = vrsqrt.pop %v918
        %v951 = vrsqrt.pop %v919
        %v952 = vrsqrt.pop %v920
        %v953 = vrsqrt.pop %v921
        %v954 = vrsqrt.pop %v922
        %v955 = vrsqrt.pop %v923
        %v956 = vrsqrt.pop %v924
        %v957 = vmul.f32 %v829, %v925
        %v958 = vmul.f32 %v830, %v925
        %v959 = vmul.f32 %v831, %v926
        %v960 = vmul.f32 %v832, %v926
        %v961 = vmul.f32 %v833, %v927
        %v962 = vmul.f32 %v834, %v927
        %v963 = vmul.f32 %v835, %v928
        %v964 = vmul.f32 %v836, %v928
        %v965 = vmul.f32 %v837, %v929
        %v966 = vmul.f32 %v838, %v929
        %v967 = vmul.f32 %v839, %v930
        %v968 = vmul.f32 %v840, %v930
        %v969 = vmul.f32 %v841, %v931
        %v970 = vmul.f32 %v842, %v931
        %v971 = vmul.f32 %v843, %v932
        %v972 = vmul.f32 %v844, %v932
        %v973 = vmul.f32 %v845, %v933
        %v974 = vmul.f32 %v846, %v933
        %v975 = vmul.f32 %v847, %v934
        %v976 = vmul.f32 %v848, %v934
        %v977 = vmul.f32 %v849, %v935
        %v978 = vmul.f32 %v850, %v935
        %v979 = vmul.f32 %v851, %v936
        %v980 = vmul.f32 %v852, %v936
        %v981 = vmul.f32 %v853, %v937
        %v982 = vmul.f32 %v854, %v937
        %v983 = vmul.f32 %v855, %v938
        %v984 = vmul.f32 %v856, %v938
        %v985 = vmul.f32 %v857, %v939
        %v986 = vmul.f32 %v858, %v939
        %v987 = vmul.f32 %v859, %v940
        %v988 = vmul.f32 %v860, %v940
        %v989 = vmul.f32 %v861, %v941
        %v990 = vmul.f32 %v862, %v941
        %v991 = vmul.f32 %v863, %v942
        %v992 = vmul.f32 %v864, %v942
        %v993 = vmul.f32 %v865, %v943
        %v994 = vmul.f32 %v866, %v943
        %v995 = vmul.f32 %v867, %v944
        %v996 = vmul.f32 %v868, %v944
        %v997 = vmul.f32 %v869, %v945
        %v998 = vmul.f32 %v870, %v945
        %v999 = vmul.f32 %v871, %v946
        %v1000 = vmul.f32 %v872, %v946
        %v1001 = vmul.f32 %v873, %v947
        %v1002 = vmul.f32 %v874, %v947
        %v1003 = vmul.f32 %v875, %v948
        %v1004 = vmul.f32 %v876, %v948
        %v1005 = vmul.f32 %v877, %v949
        %v1006 = vmul.f32 %v878, %v949
        %v1007 = vmul.f32 %v879, %v950
        %v1008 = vmul.f32 %v880, %v950
        %v1009 = vmul.f32 %v881, %v951
        %v1010 = vmul.f32 %v882, %v951
        %v1011 = vmul.f32 %v883, %v952
        %v1012 = vmul.f32 %v884, %v952
        %v1013 = vmul.f32 %v885, %v953
        %v1014 = vmul.f32 %v886, %v953
        %v1015 = vmul.f32 %v887, %v954
        %v1016 = vmul.f32 %v888, %v954
        %v1017 = vmul.f32 %v889, %v955
        %v1018 = vmul.f32 %v890, %v955
        %v1019 = vmul.f32 %v891, %v956
        %v1020 = vmul.f32 %v892, %v956
        %v1021 = vpack.c.bf16 %v959, %v957
        %v1022 = vpack.c.bf16 %v960, %v958
        %v1023 = vpack.c.bf16 %v963, %v961
        %v1024 = vpack.c.bf16 %v964, %v962
        %v1025 = vpack.c.bf16 %v967, %v965
        %v1026 = vpack.c.bf16 %v968, %v966
        %v1027 = vpack.c.bf16 %v971, %v969
        %v1028 = vpack.c.bf16 %v972, %v970
        %v1029 = vpack.c.bf16 %v975, %v973
        %v1030 = vpack.c.bf16 %v976, %v974
        %v1031 = vpack.c.bf16 %v979, %v977
        %v1032 = vpack.c.bf16 %v980, %v978
        %v1033 = vpack.c.bf16 %v983, %v981
        %v1034 = vpack.c.bf16 %v984, %v982
        %v1035 = vpack.c.bf16 %v987, %v985
        %v1036 = vpack.c.bf16 %v988, %v986
        %v1037 = vpack.c.bf16 %v991, %v989
        %v1038 = vpack.c.bf16 %v992, %v990
        %v1039 = vpack.c.bf16 %v995, %v993
        %v1040 = vpack.c.bf16 %v996, %v994
        %v1041 = vpack.c.bf16 %v999, %v997
        %v1042 = vpack.c.bf16 %v1000, %v998
        %v1043 = vpack.c.bf16 %v1003, %v1001
        %v1044 = vpack.c.bf16 %v1004, %v1002
        %v1045 = vpack.c.bf16 %v1007, %v1005
        %v1046 = vpack.c.bf16 %v1008, %v1006
        %v1047 = vpack.c.bf16 %v1011, %v1009
        %v1048 = vpack.c.bf16 %v1012, %v1010
        %v1049 = vpack.c.bf16 %v1015, %v1013
        %v1050 = vpack.c.bf16 %v1016, %v1014
        %v1051 = vpack.c.bf16 %v1019, %v1017
        %v1052 = vpack.c.bf16 %v1020, %v1018
        %v1053 = vld [vmem:[#allocation5] sm:$0xff]
        %v1054 = vld [vmem:[#allocation5 + $0x8] sm:$0xff]
        %v1055 = vld [vmem:[#allocation5 + $0x10] sm:$0xff]
        %v1056 = vld [vmem:[#allocation5 + $0x18] sm:$0xff]
        %v1057 = vld [vmem:[#allocation5 + $0x20] sm:$0xff]
        %v1058 = vld [vmem:[#allocation5 + $0x28] sm:$0xff]
        %v1059 = vld [vmem:[#allocation5 + $0x30] sm:$0xff]
        %v1060 = vld [vmem:[#allocation5 + $0x38] sm:$0xff]
        %v1061 = vld [vmem:[#allocation5 + $0x40] sm:$0xff]
        %v1062 = vld [vmem:[#allocation5 + $0x48] sm:$0xff]
        %v1063 = vld [vmem:[#allocation5 + $0x50] sm:$0xff]
        %v1064 = vld [vmem:[#allocation5 + $0x58] sm:$0xff]
        %v1065 = vld [vmem:[#allocation5 + $0x60] sm:$0xff]
        %v1066 = vld [vmem:[#allocation5 + $0x68] sm:$0xff]
        %v1067 = vld [vmem:[#allocation5 + $0x70] sm:$0xff]
        %v1068 = vld [vmem:[#allocation5 + $0x78] sm:$0xff]
        %v1069 = vld [vmem:[#allocation5 + $0x80] sm:$0xff]
        %v1070 = vld [vmem:[#allocation5 + $0x88] sm:$0xff]
        %v1071 = vld [vmem:[#allocation5 + $0x90] sm:$0xff]
        %v1072 = vld [vmem:[#allocation5 + $0x98] sm:$0xff]
        %v1073 = vld [vmem:[#allocation5 + $0xa0] sm:$0xff]
        %v1074 = vld [vmem:[#allocation5 + $0xa8] sm:$0xff]
        %v1075 = vld [vmem:[#allocation5 + $0xb0] sm:$0xff]
        %v1076 = vld [vmem:[#allocation5 + $0xb8] sm:$0xff]
        %v1077 = vld [vmem:[#allocation5 + $0xc0] sm:$0xff]
        %v1078 = vld [vmem:[#allocation5 + $0xc8] sm:$0xff]
        %v1079 = vld [vmem:[#allocation5 + $0xd0] sm:$0xff]
        %v1080 = vld [vmem:[#allocation5 + $0xd8] sm:$0xff]
        %v1081 = vld [vmem:[#allocation5 + $0xe0] sm:$0xff]
        %v1082 = vld [vmem:[#allocation5 + $0xe8] sm:$0xff]
        %v1083 = vld [vmem:[#allocation5 + $0xf0] sm:$0xff]
        %v1084 = vld [vmem:[#allocation5 + $0xf8] sm:$0xff]
        %v1085 = vld [vmem:[%s2] sm:$0x3]
        %v1087 = vlaneseq
        %v1088 = vshrl.u32 %v1087, 7
        %v1089 = vsub.s32 0, %v1088
        %v1090 = vrot.slane %v1085, %v1089
        %v1091 = vlaneseq
        %v1092 = vshrl.u32 %v1091, 7
        %v1093 = vsub.s32 1, %v1092
        %v1094 = vrot.slane %v1085, %v1093
        %v1129 = vunpack.c.l.b16 %v1053
        %v1130 = vunpack.c.h.b16 %v1053
        %v1131 = vunpack.c.l.b16 %v1054
        %v1132 = vunpack.c.h.b16 %v1054
        %v1133 = vunpack.c.l.b16 %v1055
        %v1134 = vunpack.c.h.b16 %v1055
        %v1135 = vunpack.c.l.b16 %v1056
        %v1136 = vunpack.c.h.b16 %v1056
        %v1137 = vunpack.c.l.b16 %v1057
        %v1138 = vunpack.c.h.b16 %v1057
        %v1139 = vunpack.c.l.b16 %v1058
        %v1140 = vunpack.c.h.b16 %v1058
        %v1141 = vunpack.c.l.b16 %v1059
        %v1142 = vunpack.c.h.b16 %v1059
        %v1143 = vunpack.c.l.b16 %v1060
        %v1144 = vunpack.c.h.b16 %v1060
        %v1145 = vunpack.c.l.b16 %v1061
        %v1146 = vunpack.c.h.b16 %v1061
        %v1147 = vunpack.c.l.b16 %v1062
        %v1148 = vunpack.c.h.b16 %v1062
        %v1149 = vunpack.c.l.b16 %v1063
        %v1150 = vunpack.c.h.b16 %v1063
        %v1151 = vunpack.c.l.b16 %v1064
        %v1152 = vunpack.c.h.b16 %v1064
        %v1153 = vunpack.c.l.b16 %v1065
        %v1154 = vunpack.c.h.b16 %v1065
        %v1155 = vunpack.c.l.b16 %v1066
        %v1156 = vunpack.c.h.b16 %v1066
        %v1157 = vunpack.c.l.b16 %v1067
        %v1158 = vunpack.c.h.b16 %v1067
        %v1159 = vunpack.c.l.b16 %v1068
        %v1160 = vunpack.c.h.b16 %v1068
        %v1161 = vunpack.c.l.b16 %v1069
        %v1162 = vunpack.c.h.b16 %v1069
        %v1163 = vunpack.c.l.b16 %v1070
        %v1164 = vunpack.c.h.b16 %v1070
        %v1165 = vunpack.c.l.b16 %v1071
        %v1166 = vunpack.c.h.b16 %v1071
        %v1167 = vunpack.c.l.b16 %v1072
        %v1168 = vunpack.c.h.b16 %v1072
        %v1169 = vunpack.c.l.b16 %v1073
        %v1170 = vunpack.c.h.b16 %v1073
        %v1171 = vunpack.c.l.b16 %v1074
        %v1172 = vunpack.c.h.b16 %v1074
        %v1173 = vunpack.c.l.b16 %v1075
        %v1174 = vunpack.c.h.b16 %v1075
        %v1175 = vunpack.c.l.b16 %v1076
        %v1176 = vunpack.c.h.b16 %v1076
        %v1177 = vunpack.c.l.b16 %v1077
        %v1178 = vunpack.c.h.b16 %v1077
        %v1179 = vunpack.c.l.b16 %v1078
        %v1180 = vunpack.c.h.b16 %v1078
        %v1181 = vunpack.c.l.b16 %v1079
        %v1182 = vunpack.c.h.b16 %v1079
        %v1183 = vunpack.c.l.b16 %v1080
        %v1184 = vunpack.c.h.b16 %v1080
        %v1185 = vunpack.c.l.b16 %v1081
        %v1186 = vunpack.c.h.b16 %v1081
        %v1187 = vunpack.c.l.b16 %v1082
        %v1188 = vunpack.c.h.b16 %v1082
        %v1189 = vunpack.c.l.b16 %v1083
        %v1190 = vunpack.c.h.b16 %v1083
        %v1191 = vunpack.c.l.b16 %v1084
        %v1192 = vunpack.c.h.b16 %v1084
        %v1193 = vpack.c.b16 %v1131, %v1129
        %v1194 = vpack.c.b16 %v1132, %v1130
        %v1195 = vpack.c.b16 %v1135, %v1133
        %v1196 = vpack.c.b16 %v1136, %v1134
        %v1197 = vpack.c.b16 %v1139, %v1137
        %v1198 = vpack.c.b16 %v1140, %v1138
        %v1199 = vpack.c.b16 %v1143, %v1141
        %v1200 = vpack.c.b16 %v1144, %v1142
        %v1201 = vpack.c.b16 %v1147, %v1145
        %v1202 = vpack.c.b16 %v1148, %v1146
        %v1203 = vpack.c.b16 %v1151, %v1149
        %v1204 = vpack.c.b16 %v1152, %v1150
        %v1205 = vpack.c.b16 %v1155, %v1153
        %v1206 = vpack.c.b16 %v1156, %v1154
        %v1207 = vpack.c.b16 %v1159, %v1157
        %v1208 = vpack.c.b16 %v1160, %v1158
        %v1209 = vpack.c.b16 %v1163, %v1161
        %v1210 = vpack.c.b16 %v1164, %v1162
        %v1211 = vpack.c.b16 %v1167, %v1165
        %v1212 = vpack.c.b16 %v1168, %v1166
        %v1213 = vpack.c.b16 %v1171, %v1169
        %v1214 = vpack.c.b16 %v1172, %v1170
        %v1215 = vpack.c.b16 %v1175, %v1173
        %v1216 = vpack.c.b16 %v1176, %v1174
        %v1217 = vpack.c.b16 %v1179, %v1177
        %v1218 = vpack.c.b16 %v1180, %v1178
        %v1219 = vpack.c.b16 %v1183, %v1181
        %v1220 = vpack.c.b16 %v1184, %v1182
        %v1221 = vpack.c.b16 %v1187, %v1185
        %v1222 = vpack.c.b16 %v1188, %v1186
        %v1223 = vpack.c.b16 %v1191, %v1189
        %v1224 = vpack.c.b16 %v1192, %v1190
        %1257 = vmatprep.subr.bf16.mxu0 %v1194
        %1258 = vmatpush1.bf16.msra.mxu0 %v1193
        %1259 = vmatprep.subr.bf16.mxu0 %v1196
        %1260 = vmatpush1.bf16.msra.mxu0 %v1195
        %1261 = vmatprep.subr.bf16.mxu0 %v1198
        %1262 = vmatpush1.bf16.msra.mxu0 %v1197
        %1263 = vmatprep.subr.bf16.mxu0 %v1200
        %1264 = vmatpush1.bf16.msra.mxu0 %v1199
        %1265 = vmatprep.subr.bf16.mxu0 %v1202
        %1266 = vmatpush1.bf16.msra.mxu0 %v1201
        %1267 = vmatprep.subr.bf16.mxu0 %v1204
        %1268 = vmatpush1.bf16.msra.mxu0 %v1203
        %1269 = vmatprep.subr.bf16.mxu0 %v1206
        %1270 = vmatpush1.bf16.msra.mxu0 %v1205
        %1271 = vmatprep.subr.bf16.mxu0 %v1208
        %1272 = vmatpush1.bf16.msra.mxu0 %v1207
        %1273 = vmatprep.subr.bf16.mxu0 %v1210
        %1274 = vmatpush1.bf16.msra.mxu0 %v1209
        %1275 = vmatprep.subr.bf16.mxu0 %v1212
        %1276 = vmatpush1.bf16.msra.mxu0 %v1211
        %1277 = vmatprep.subr.bf16.mxu0 %v1214
        %1278 = vmatpush1.bf16.msra.mxu0 %v1213
        %1279 = vmatprep.subr.bf16.mxu0 %v1216
        %1280 = vmatpush1.bf16.msra.mxu0 %v1215
        %1281 = vmatprep.subr.bf16.mxu0 %v1218
        %1282 = vmatpush1.bf16.msra.mxu0 %v1217
        %1283 = vmatprep.subr.bf16.mxu0 %v1220
        %1284 = vmatpush1.bf16.msra.mxu0 %v1219
        %1285 = vmatprep.subr.bf16.mxu0 %v1222
        %1286 = vmatpush1.bf16.msra.mxu0 %v1221
        %1287 = vmatprep.subr.bf16.mxu0 %v1224
        %1288 = vmatpush1.bf16.msra.mxu0 %v1223
        %1289 = vmatprep.mubr.bf16.mxu0 %v1022
        %1290 = vmatmul.mubr.bf16.gmra.mrb[0].mxu0 %v1021
        %v1291 = vpop.f32.mrb[0].mxu0
        %v1292 = vadd.f32 %v1090, %v1291
        %v1293 = vpop.f32.mrb[0].mxu0
        %v1294 = vadd.f32 %v1094, %v1293
        %v1295 = vpop.f32.mrb[0].mxu0
        %v1296 = vadd.f32 %v1090, %v1295
        %v1297 = vpop.f32.mrb[0].mxu0
        %v1298 = vadd.f32 %v1094, %v1297
        %1299 = vmatprep.mubr.bf16.mxu0 %v1024
        %1300 = vmatmul.mubr.bf16.gmra.mrb[0].mxu0 %v1023
        %v1301 = vpop.f32.mrb[0].mxu0
        %v1302 = vadd.f32 %v1090, %v1301
        %v1303 = vpop.f32.mrb[0].mxu0
        %v1304 = vadd.f32 %v1094, %v1303
        %v1305 = vpop.f32.mrb[0].mxu0
        %v1306 = vadd.f32 %v1090, %v1305
        %v1307 = vpop.f32.mrb[0].mxu0
        %v1308 = vadd.f32 %v1094, %v1307
        %1309 = vmatprep.mubr.bf16.mxu0 %v1026
        %1310 = vmatmul.mubr.bf16.gmra.mrb[0].mxu0 %v1025
        %v1311 = vpop.f32.mrb[0].mxu0
        %v1312 = vadd.f32 %v1090, %v1311
        %v1313 = vpop.f32.mrb[0].mxu0
        %v1314 = vadd.f32 %v1094, %v1313
        %v1315 = vpop.f32.mrb[0].mxu0
        %v1316 = vadd.f32 %v1090, %v1315
        %v1317 = vpop.f32.mrb[0].mxu0
        %v1318 = vadd.f32 %v1094, %v1317
        %1319 = vmatprep.mubr.bf16.mxu0 %v1028
        %1320 = vmatmul.mubr.bf16.gmra.mrb[0].mxu0 %v1027
        %v1321 = vpop.f32.mrb[0].mxu0
        %v1322 = vadd.f32 %v1090, %v1321
        %v1323 = vpop.f32.mrb[0].mxu0
        %v1324 = vadd.f32 %v1094, %v1323
        %v1325 = vpop.f32.mrb[0].mxu0
        %v1326 = vadd.f32 %v1090, %v1325
        %v1327 = vpop.f32.mrb[0].mxu0
        %v1328 = vadd.f32 %v1094, %v1327
        %1329 = vmatprep.mubr.bf16.mxu0 %v1030
        %1330 = vmatmul.mubr.bf16.gmra.mrb[0].mxu0 %v1029
        %v1331 = vpop.f32.mrb[0].mxu0
        %v1332 = vadd.f32 %v1090, %v1331
        %v1333 = vpop.f32.mrb[0].mxu0
        %v1334 = vadd.f32 %v1094, %v1333
        %v1335 = vpop.f32.mrb[0].mxu0
        %v1336 = vadd.f32 %v1090, %v1335
        %v1337 = vpop.f32.mrb[0].mxu0
        %v1338 = vadd.f32 %v1094, %v1337
        %1339 = vmatprep.mubr.bf16.mxu0 %v1032
        %1340 = vmatmul.mubr.bf16.gmra.mrb[0].mxu0 %v1031
        %v1341 = vpop.f32.mrb[0].mxu0
        %v1342 = vadd.f32 %v1090, %v1341
        %v1343 = vpop.f32.mrb[0].mxu0
        %v1344 = vadd.f32 %v1094, %v1343
        %v1345 = vpop.f32.mrb[0].mxu0
        %v1346 = vadd.f32 %v1090, %v1345
        %v1347 = vpop.f32.mrb[0].mxu0
        %v1348 = vadd.f32 %v1094, %v1347
        %1349 = vmatprep.mubr.bf16.mxu0 %v1034
        %1350 = vmatmul.mubr.bf16.gmra.mrb[0].mxu0 %v1033
        %v1351 = vpop.f32.mrb[0].mxu0
        %v1352 = vadd.f32 %v1090, %v1351
        %v1353 = vpop.f32.mrb[0].mxu0
        %v1354 = vadd.f32 %v1094, %v1353
        %v1355 = vpop.f32.mrb[0].mxu0
        %v1356 = vadd.f32 %v1090, %v1355
        %v1357 = vpop.f32.mrb[0].mxu0
        %v1358 = vadd.f32 %v1094, %v1357
        %1359 = vmatprep.mubr.bf16.mxu0 %v1036
        %1360 = vmatmul.mubr.bf16.gmra.mrb[0].mxu0 %v1035
        %v1361 = vpop.f32.mrb[0].mxu0
        %v1362 = vadd.f32 %v1090, %v1361
        %v1363 = vpop.f32.mrb[0].mxu0
        %v1364 = vadd.f32 %v1094, %v1363
        %v1365 = vpop.f32.mrb[0].mxu0
        %v1366 = vadd.f32 %v1090, %v1365
        %v1367 = vpop.f32.mrb[0].mxu0
        %v1368 = vadd.f32 %v1094, %v1367
        %1369 = vmatprep.mubr.bf16.mxu0 %v1038
        %1370 = vmatmul.mubr.bf16.gmra.mrb[0].mxu0 %v1037
        %v1371 = vpop.f32.mrb[0].mxu0
        %v1372 = vadd.f32 %v1090, %v1371
        %v1373 = vpop.f32.mrb[0].mxu0
        %v1374 = vadd.f32 %v1094, %v1373
        %v1375 = vpop.f32.mrb[0].mxu0
        %v1376 = vadd.f32 %v1090, %v1375
        %v1377 = vpop.f32.mrb[0].mxu0
        %v1378 = vadd.f32 %v1094, %v1377
        %1379 = vmatprep.mubr.bf16.mxu0 %v1040
        %1380 = vmatmul.mubr.bf16.gmra.mrb[0].mxu0 %v1039
        %v1381 = vpop.f32.mrb[0].mxu0
        %v1382 = vadd.f32 %v1090, %v1381
        %v1383 = vpop.f32.mrb[0].mxu0
        %v1384 = vadd.f32 %v1094, %v1383
        %v1385 = vpop.f32.mrb[0].mxu0
        %v1386 = vadd.f32 %v1090, %v1385
        %v1387 = vpop.f32.mrb[0].mxu0
        %v1388 = vadd.f32 %v1094, %v1387
        %1389 = vmatprep.mubr.bf16.mxu0 %v1042
        %1390 = vmatmul.mubr.bf16.gmra.mrb[0].mxu0 %v1041
        %v1391 = vpop.f32.mrb[0].mxu0
        %v1392 = vadd.f32 %v1090, %v1391
        %v1393 = vpop.f32.mrb[0].mxu0
        %v1394 = vadd.f32 %v1094, %v1393
        %v1395 = vpop.f32.mrb[0].mxu0
        %v1396 = vadd.f32 %v1090, %v1395
        %v1397 = vpop.f32.mrb[0].mxu0
        %v1398 = vadd.f32 %v1094, %v1397
        %1399 = vmatprep.mubr.bf16.mxu0 %v1044
        %1400 = vmatmul.mubr.bf16.gmra.mrb[0].mxu0 %v1043
        %v1401 = vpop.f32.mrb[0].mxu0
        %v1402 = vadd.f32 %v1090, %v1401
        %v1403 = vpop.f32.mrb[0].mxu0
        %v1404 = vadd.f32 %v1094, %v1403
        %v1405 = vpop.f32.mrb[0].mxu0
        %v1406 = vadd.f32 %v1090, %v1405
        %v1407 = vpop.f32.mrb[0].mxu0
        %v1408 = vadd.f32 %v1094, %v1407
        %1409 = vmatprep.mubr.bf16.mxu0 %v1046
        %1410 = vmatmul.mubr.bf16.gmra.mrb[0].mxu0 %v1045
        %v1411 = vpop.f32.mrb[0].mxu0
        %v1412 = vadd.f32 %v1090, %v1411
        %v1413 = vpop.f32.mrb[0].mxu0
        %v1414 = vadd.f32 %v1094, %v1413
        %v1415 = vpop.f32.mrb[0].mxu0
        %v1416 = vadd.f32 %v1090, %v1415
        %v1417 = vpop.f32.mrb[0].mxu0
        %v1418 = vadd.f32 %v1094, %v1417
        %1419 = vmatprep.mubr.bf16.mxu0 %v1048
        %1420 = vmatmul.mubr.bf16.gmra.mrb[0].mxu0 %v1047
        %v1421 = vpop.f32.mrb[0].mxu0
        %v1422 = vadd.f32 %v1090, %v1421
        %v1423 = vpop.f32.mrb[0].mxu0
        %v1424 = vadd.f32 %v1094, %v1423
        %v1425 = vpop.f32.mrb[0].mxu0
        %v1426 = vadd.f32 %v1090, %v1425
        %v1427 = vpop.f32.mrb[0].mxu0
        %v1428 = vadd.f32 %v1094, %v1427
        %1429 = vmatprep.mubr.bf16.mxu0 %v1050
        %1430 = vmatmul.mubr.bf16.gmra.mrb[0].mxu0 %v1049
        %v1431 = vpop.f32.mrb[0].mxu0
        %v1432 = vadd.f32 %v1090, %v1431
        %v1433 = vpop.f32.mrb[0].mxu0
        %v1434 = vadd.f32 %v1094, %v1433
        %v1435 = vpop.f32.mrb[0].mxu0
        %v1436 = vadd.f32 %v1090, %v1435
        %v1437 = vpop.f32.mrb[0].mxu0
        %v1438 = vadd.f32 %v1094, %v1437
        %1439 = vmatprep.mubr.bf16.mxu0 %v1052
        %1440 = vmatmul.mubr.bf16.gmra.mrb[0].mxu0 %v1051
        %v1441 = vpop.f32.mrb[0].mxu0
        %v1442 = vadd.f32 %v1090, %v1441
        %v1443 = vpop.f32.mrb[0].mxu0
        %v1444 = vadd.f32 %v1094, %v1443
        %v1445 = vpop.f32.mrb[0].mxu0
        %v1446 = vadd.f32 %v1090, %v1445
        %v1447 = vpop.f32.mrb[0].mxu0
        %v1448 = vadd.f32 %v1094, %v1447
        %1449 = vdwg.mxu0
        %v1450 = vadd.f32 %v348, %v1292
        %v1451 = vadd.f32 %v349, %v1294
        %v1452 = vadd.f32 %v350, %v1296
        %v1453 = vadd.f32 %v351, %v1298
        %v1454 = vadd.f32 %v352, %v1302
        %v1455 = vadd.f32 %v353, %v1304
        %v1456 = vadd.f32 %v354, %v1306
        %v1457 = vadd.f32 %v355, %v1308
        %v1458 = vadd.f32 %v356, %v1312
        %v1459 = vadd.f32 %v357, %v1314
        %v1460 = vadd.f32 %v358, %v1316
        %v1461 = vadd.f32 %v359, %v1318
        %v1462 = vadd.f32 %v360, %v1322
        %v1463 = vadd.f32 %v361, %v1324
        %v1464 = vadd.f32 %v362, %v1326
        %v1465 = vadd.f32 %v363, %v1328
        %v1466 = vadd.f32 %v364, %v1332
        %v1467 = vadd.f32 %v365, %v1334
        %v1468 = vadd.f32 %v366, %v1336
        %v1469 = vadd.f32 %v367, %v1338
        %v1470 = vadd.f32 %v368, %v1342
        %v1471 = vadd.f32 %v369, %v1344
        %v1472 = vadd.f32 %v370, %v1346
        %v1473 = vadd.f32 %v371, %v1348
        %v1474 = vadd.f32 %v372, %v1352
        %v1475 = vadd.f32 %v373, %v1354
        %v1476 = vadd.f32 %v374, %v1356
        %v1477 = vadd.f32 %v375, %v1358
        %v1478 = vadd.f32 %v376, %v1362
        %v1479 = vadd.f32 %v377, %v1364
        %v1480 = vadd.f32 %v378, %v1366
        %v1481 = vadd.f32 %v379, %v1368
        %v1482 = vadd.f32 %v380, %v1372
        %v1483 = vadd.f32 %v381, %v1374
        %v1484 = vadd.f32 %v382, %v1376
        %v1485 = vadd.f32 %v383, %v1378
        %v1486 = vadd.f32 %v384, %v1382
        %v1487 = vadd.f32 %v385, %v1384
        %v1488 = vadd.f32 %v386, %v1386
        %v1489 = vadd.f32 %v387, %v1388
        %v1490 = vadd.f32 %v388, %v1392
        %v1491 = vadd.f32 %v389, %v1394
        %v1492 = vadd.f32 %v390, %v1396
        %v1493 = vadd.f32 %v391, %v1398
        %v1494 = vadd.f32 %v392, %v1402
        %v1495 = vadd.f32 %v393, %v1404
        %v1496 = vadd.f32 %v394, %v1406
        %v1497 = vadd.f32 %v395, %v1408
        %v1498 = vadd.f32 %v396, %v1412
        %v1499 = vadd.f32 %v397, %v1414
        %v1500 = vadd.f32 %v398, %v1416
        %v1501 = vadd.f32 %v399, %v1418
        %v1502 = vadd.f32 %v400, %v1422
        %v1503 = vadd.f32 %v401, %v1424
        %v1504 = vadd.f32 %v402, %v1426
        %v1505 = vadd.f32 %v403, %v1428
        %v1506 = vadd.f32 %v404, %v1432
        %v1507 = vadd.f32 %v405, %v1434
        %v1508 = vadd.f32 %v406, %v1436
        %v1509 = vadd.f32 %v407, %v1438
        %v1510 = vadd.f32 %v408, %v1442
        %v1511 = vadd.f32 %v409, %v1444
        %v1512 = vadd.f32 %v410, %v1446
        %v1513 = vadd.f32 %v411, %v1448
        %v1514 = vadd.f32 %v1450, %v1451
        %1515 = vadd.xlane.f32.xlu0 %v1514
        %v1516 = vpop.xlane.xlu0 %1515
        %v1517 = vadd.f32 %v1452, %v1453
        %1518 = vadd.xlane.f32.xlu0 %v1517
        %v1519 = vpop.xlane.xlu0 %1518
        %v1520 = vadd.f32 %v1454, %v1455
        %1521 = vadd.xlane.f32.xlu0 %v1520
        %v1522 = vpop.xlane.xlu0 %1521
        %v1523 = vadd.f32 %v1456, %v1457
        %1524 = vadd.xlane.f32.xlu0 %v1523
        %v1525 = vpop.xlane.xlu0 %1524
        %v1526 = vadd.f32 %v1458, %v1459
        %1527 = vadd.xlane.f32.xlu0 %v1526
        %v1528 = vpop.xlane.xlu0 %1527
        %v1529 = vadd.f32 %v1460, %v1461
        %1530 = vadd.xlane.f32.xlu0 %v1529
        %v1531 = vpop.xlane.xlu0 %1530
        %v1532 = vadd.f32 %v1462, %v1463
        %1533 = vadd.xlane.f32.xlu0 %v1532
        %v1534 = vpop.xlane.xlu0 %1533
        %v1535 = vadd.f32 %v1464, %v1465
        %1536 = vadd.xlane.f32.xlu0 %v1535
        %v1537 = vpop.xlane.xlu0 %1536
        %v1538 = vadd.f32 %v1466, %v1467
        %1539 = vadd.xlane.f32.xlu0 %v1538
        %v1540 = vpop.xlane.xlu0 %1539
        %v1541 = vadd.f32 %v1468, %v1469
        %1542 = vadd.xlane.f32.xlu0 %v1541
        %v1543 = vpop.xlane.xlu0 %1542
        %v1544 = vadd.f32 %v1470, %v1471
        %1545 = vadd.xlane.f32.xlu0 %v1544
        %v1546 = vpop.xlane.xlu0 %1545
        %v1547 = vadd.f32 %v1472, %v1473
        %1548 = vadd.xlane.f32.xlu0 %v1547
        %v1549 = vpop.xlane.xlu0 %1548
        %v1550 = vadd.f32 %v1474, %v1475
        %1551 = vadd.xlane.f32.xlu0 %v1550
        %v1552 = vpop.xlane.xlu0 %1551
        %v1553 = vadd.f32 %v1476, %v1477
        %1554 = vadd.xlane.f32.xlu0 %v1553
        %v1555 = vpop.xlane.xlu0 %1554
        %v1556 = vadd.f32 %v1478, %v1479
        %1557 = vadd.xlane.f32.xlu0 %v1556
        %v1558 = vpop.xlane.xlu0 %1557
        %v1559 = vadd.f32 %v1480, %v1481
        %1560 = vadd.xlane.f32.xlu0 %v1559
        %v1561 = vpop.xlane.xlu0 %1560
        %v1562 = vadd.f32 %v1482, %v1483
        %1563 = vadd.xlane.f32.xlu0 %v1562
        %v1564 = vpop.xlane.xlu0 %1563
        %v1565 = vadd.f32 %v1484, %v1485
        %1566 = vadd.xlane.f32.xlu0 %v1565
        %v1567 = vpop.xlane.xlu0 %1566
        %v1568 = vadd.f32 %v1486, %v1487
        %1569 = vadd.xlane.f32.xlu0 %v1568
        %v1570 = vpop.xlane.xlu0 %1569
        %v1571 = vadd.f32 %v1488, %v1489
        %1572 = vadd.xlane.f32.xlu0 %v1571
        %v1573 = vpop.xlane.xlu0 %1572
        %v1574 = vadd.f32 %v1490, %v1491
        %1575 = vadd.xlane.f32.xlu0 %v1574
        %v1576 = vpop.xlane.xlu0 %1575
        %v1577 = vadd.f32 %v1492, %v1493
        %1578 = vadd.xlane.f32.xlu0 %v1577
        %v1579 = vpop.xlane.xlu0 %1578
        %v1580 = vadd.f32 %v1494, %v1495
        %1581 = vadd.xlane.f32.xlu0 %v1580
        %v1582 = vpop.xlane.xlu0 %1581
        %v1583 = vadd.f32 %v1496, %v1497
        %1584 = vadd.xlane.f32.xlu0 %v1583
        %v1585 = vpop.xlane.xlu0 %1584
        %v1586 = vadd.f32 %v1498, %v1499
        %1587 = vadd.xlane.f32.xlu0 %v1586
        %v1588 = vpop.xlane.xlu0 %1587
        %v1589 = vadd.f32 %v1500, %v1501
        %1590 = vadd.xlane.f32.xlu0 %v1589
        %v1591 = vpop.xlane.xlu0 %1590
        %v1592 = vadd.f32 %v1502, %v1503
        %1593 = vadd.xlane.f32.xlu0 %v1592
        %v1594 = vpop.xlane.xlu0 %1593
        %v1595 = vadd.f32 %v1504, %v1505
        %1596 = vadd.xlane.f32.xlu0 %v1595
        %v1597 = vpop.xlane.xlu0 %1596
        %v1598 = vadd.f32 %v1506, %v1507
        %1599 = vadd.xlane.f32.xlu0 %v1598
        %v1600 = vpop.xlane.xlu0 %1599
        %v1601 = vadd.f32 %v1508, %v1509
        %1602 = vadd.xlane.f32.xlu0 %v1601
        %v1603 = vpop.xlane.xlu0 %1602
        %v1604 = vadd.f32 %v1510, %v1511
        %1605 = vadd.xlane.f32.xlu0 %v1604
        %v1606 = vpop.xlane.xlu0 %1605
        %v1607 = vadd.f32 %v1512, %v1513
        %1608 = vadd.xlane.f32.xlu0 %v1607
        %v1609 = vpop.xlane.xlu0 %1608
        %v1610 = vmul.f32 %v1516, %v508
        %v1611 = vmul.f32 %v1519, %v508
        %v1612 = vmul.f32 %v1522, %v508
        %v1613 = vmul.f32 %v1525, %v508
        %v1614 = vmul.f32 %v1528, %v508
        %v1615 = vmul.f32 %v1531, %v508
        %v1616 = vmul.f32 %v1534, %v508
        %v1617 = vmul.f32 %v1537, %v508
        %v1618 = vmul.f32 %v1540, %v508
        %v1619 = vmul.f32 %v1543, %v508
        %v1620 = vmul.f32 %v1546, %v508
        %v1621 = vmul.f32 %v1549, %v508
        %v1622 = vmul.f32 %v1552, %v508
        %v1623 = vmul.f32 %v1555, %v508
        %v1624 = vmul.f32 %v1558, %v508
        %v1625 = vmul.f32 %v1561, %v508
        %v1626 = vmul.f32 %v1564, %v508
        %v1627 = vmul.f32 %v1567, %v508
        %v1628 = vmul.f32 %v1570, %v508
        %v1629 = vmul.f32 %v1573, %v508
        %v1630 = vmul.f32 %v1576, %v508
        %v1631 = vmul.f32 %v1579, %v508
        %v1632 = vmul.f32 %v1582, %v508
        %v1633 = vmul.f32 %v1585, %v508
        %v1634 = vmul.f32 %v1588, %v508
        %v1635 = vmul.f32 %v1591, %v508
        %v1636 = vmul.f32 %v1594, %v508
        %v1637 = vmul.f32 %v1597, %v508
        %v1638 = vmul.f32 %v1600, %v508
        %v1639 = vmul.f32 %v1603, %v508
        %v1640 = vmul.f32 %v1606, %v508
        %v1641 = vmul.f32 %v1609, %v508
        %v1642 = vmul.f32 %v1450, %v1450
        %v1643 = vmul.f32 %v1451, %v1451
        %v1644 = vmul.f32 %v1452, %v1452
        %v1645 = vmul.f32 %v1453, %v1453
        %v1646 = vmul.f32 %v1454, %v1454
        %v1647 = vmul.f32 %v1455, %v1455
        %v1648 = vmul.f32 %v1456, %v1456
        %v1649 = vmul.f32 %v1457, %v1457
        %v1650 = vmul.f32 %v1458, %v1458
        %v1651 = vmul.f32 %v1459, %v1459
        %v1652 = vmul.f32 %v1460, %v1460
        %v1653 = vmul.f32 %v1461, %v1461
        %v1654 = vmul.f32 %v1462, %v1462
        %v1655 = vmul.f32 %v1463, %v1463
        %v1656 = vmul.f32 %v1464, %v1464
        %v1657 = vmul.f32 %v1465, %v1465
        %v1658 = vmul.f32 %v1466, %v1466
        %v1659 = vmul.f32 %v1467, %v1467
        %v1660 = vmul.f32 %v1468, %v1468
        %v1661 = vmul.f32 %v1469, %v1469
        %v1662 = vmul.f32 %v1470, %v1470
        %v1663 = vmul.f32 %v1471, %v1471
        %v1664 = vmul.f32 %v1472, %v1472
        %v1665 = vmul.f32 %v1473, %v1473
        %v1666 = vmul.f32 %v1474, %v1474
        %v1667 = vmul.f32 %v1475, %v1475
        %v1668 = vmul.f32 %v1476, %v1476
        %v1669 = vmul.f32 %v1477, %v1477
        %v1670 = vmul.f32 %v1478, %v1478
        %v1671 = vmul.f32 %v1479, %v1479
        %v1672 = vmul.f32 %v1480, %v1480
        %v1673 = vmul.f32 %v1481, %v1481
        %v1674 = vmul.f32 %v1482, %v1482
        %v1675 = vmul.f32 %v1483, %v1483
        %v1676 = vmul.f32 %v1484, %v1484
        %v1677 = vmul.f32 %v1485, %v1485
        %v1678 = vmul.f32 %v1486, %v1486
        %v1679 = vmul.f32 %v1487, %v1487
        %v1680 = vmul.f32 %v1488, %v1488
        %v1681 = vmul.f32 %v1489, %v1489
        %v1682 = vmul.f32 %v1490, %v1490
        %v1683 = vmul.f32 %v1491, %v1491
        %v1684 = vmul.f32 %v1492, %v1492
        %v1685 = vmul.f32 %v1493, %v1493
        %v1686 = vmul.f32 %v1494, %v1494
        %v1687 = vmul.f32 %v1495, %v1495
        %v1688 = vmul.f32 %v1496, %v1496
        %v1689 = vmul.f32 %v1497, %v1497
        %v1690 = vmul.f32 %v1498, %v1498
        %v1691 = vmul.f32 %v1499, %v1499
        %v1692 = vmul.f32 %v1500, %v1500
        %v1693 = vmul.f32 %v1501, %v1501
        %v1694 = vmul.f32 %v1502, %v1502
        %v1695 = vmul.f32 %v1503, %v1503
        %v1696 = vmul.f32 %v1504, %v1504
        %v1697 = vmul.f32 %v1505, %v1505
        %v1698 = vmul.f32 %v1506, %v1506
        %v1699 = vmul.f32 %v1507, %v1507
        %v1700 = vmul.f32 %v1508, %v1508
        %v1701 = vmul.f32 %v1509, %v1509
        %v1702 = vmul.f32 %v1510, %v1510
        %v1703 = vmul.f32 %v1511, %v1511
        %v1704 = vmul.f32 %v1512, %v1512
        %v1705 = vmul.f32 %v1513, %v1513
        %v1706 = vadd.f32 %v1642, %v1643
        %1707 = vadd.xlane.f32.xlu0 %v1706
        %v1708 = vpop.xlane.xlu0 %1707
        %v1709 = vadd.f32 %v1644, %v1645
        %1710 = vadd.xlane.f32.xlu0 %v1709
        %v1711 = vpop.xlane.xlu0 %1710
        %v1712 = vadd.f32 %v1646, %v1647
        %1713 = vadd.xlane.f32.xlu0 %v1712
        %v1714 = vpop.xlane.xlu0 %1713
        %v1715 = vadd.f32 %v1648, %v1649
        %1716 = vadd.xlane.f32.xlu0 %v1715
        %v1717 = vpop.xlane.xlu0 %1716
        %v1718 = vadd.f32 %v1650, %v1651
        %1719 = vadd.xlane.f32.xlu0 %v1718
        %v1720 = vpop.xlane.xlu0 %1719
        %v1721 = vadd.f32 %v1652, %v1653
        %1722 = vadd.xlane.f32.xlu0 %v1721
        %v1723 = vpop.xlane.xlu0 %1722
        %v1724 = vadd.f32 %v1654, %v1655
        %1725 = vadd.xlane.f32.xlu0 %v1724
        %v1726 = vpop.xlane.xlu0 %1725
        %v1727 = vadd.f32 %v1656, %v1657
        %1728 = vadd.xlane.f32.xlu0 %v1727
        %v1729 = vpop.xlane.xlu0 %1728
        %v1730 = vadd.f32 %v1658, %v1659
        %1731 = vadd.xlane.f32.xlu0 %v1730
        %v1732 = vpop.xlane.xlu0 %1731
        %v1733 = vadd.f32 %v1660, %v1661
        %1734 = vadd.xlane.f32.xlu0 %v1733
        %v1735 = vpop.xlane.xlu0 %1734
        %v1736 = vadd.f32 %v1662, %v1663
        %1737 = vadd.xlane.f32.xlu0 %v1736
        %v1738 = vpop.xlane.xlu0 %1737
        %v1739 = vadd.f32 %v1664, %v1665
        %1740 = vadd.xlane.f32.xlu0 %v1739
        %v1741 = vpop.xlane.xlu0 %1740
        %v1742 = vadd.f32 %v1666, %v1667
        %1743 = vadd.xlane.f32.xlu0 %v1742
        %v1744 = vpop.xlane.xlu0 %1743
        %v1745 = vadd.f32 %v1668, %v1669
        %1746 = vadd.xlane.f32.xlu0 %v1745
        %v1747 = vpop.xlane.xlu0 %1746
        %v1748 = vadd.f32 %v1670, %v1671
        %1749 = vadd.xlane.f32.xlu0 %v1748
        %v1750 = vpop.xlane.xlu0 %1749
        %v1751 = vadd.f32 %v1672, %v1673
        %1752 = vadd.xlane.f32.xlu0 %v1751
        %v1753 = vpop.xlane.xlu0 %1752
        %v1754 = vadd.f32 %v1674, %v1675
        %1755 = vadd.xlane.f32.xlu0 %v1754
        %v1756 = vpop.xlane.xlu0 %1755
        %v1757 = vadd.f32 %v1676, %v1677
        %1758 = vadd.xlane.f32.xlu0 %v1757
        %v1759 = vpop.xlane.xlu0 %1758
        %v1760 = vadd.f32 %v1678, %v1679
        %1761 = vadd.xlane.f32.xlu0 %v1760
        %v1762 = vpop.xlane.xlu0 %1761
        %v1763 = vadd.f32 %v1680, %v1681
        %1764 = vadd.xlane.f32.xlu0 %v1763
        %v1765 = vpop.xlane.xlu0 %1764
        %v1766 = vadd.f32 %v1682, %v1683
        %1767 = vadd.xlane.f32.xlu0 %v1766
        %v1768 = vpop.xlane.xlu0 %1767
        %v1769 = vadd.f32 %v1684, %v1685
        %1770 = vadd.xlane.f32.xlu0 %v1769
        %v1771 = vpop.xlane.xlu0 %1770
        %v1772 = vadd.f32 %v1686, %v1687
        %1773 = vadd.xlane.f32.xlu0 %v1772
        %v1774 = vpop.xlane.xlu0 %1773
        %v1775 = vadd.f32 %v1688, %v1689
        %1776 = vadd.xlane.f32.xlu0 %v1775
        %v1777 = vpop.xlane.xlu0 %1776
        %v1778 = vadd.f32 %v1690, %v1691
        %1779 = vadd.xlane.f32.xlu0 %v1778
        %v1780 = vpop.xlane.xlu0 %1779
        %v1781 = vadd.f32 %v1692, %v1693
        %1782 = vadd.xlane.f32.xlu0 %v1781
        %v1783 = vpop.xlane.xlu0 %1782
        %v1784 = vadd.f32 %v1694, %v1695
        %1785 = vadd.xlane.f32.xlu0 %v1784
        %v1786 = vpop.xlane.xlu0 %1785
        %v1787 = vadd.f32 %v1696, %v1697
        %1788 = vadd.xlane.f32.xlu0 %v1787
        %v1789 = vpop.xlane.xlu0 %1788
        %v1790 = vadd.f32 %v1698, %v1699
        %1791 = vadd.xlane.f32.xlu0 %v1790
        %v1792 = vpop.xlane.xlu0 %1791
        %v1793 = vadd.f32 %v1700, %v1701
        %1794 = vadd.xlane.f32.xlu0 %v1793
        %v1795 = vpop.xlane.xlu0 %1794
        %v1796 = vadd.f32 %v1702, %v1703
        %1797 = vadd.xlane.f32.xlu0 %v1796
        %v1798 = vpop.xlane.xlu0 %1797
        %v1799 = vadd.f32 %v1704, %v1705
        %1800 = vadd.xlane.f32.xlu0 %v1799
        %v1801 = vpop.xlane.xlu0 %1800
        %v1802 = vmul.f32 %v1708, %v508
        %v1803 = vmul.f32 %v1711, %v508
        %v1804 = vmul.f32 %v1714, %v508
        %v1805 = vmul.f32 %v1717, %v508
        %v1806 = vmul.f32 %v1720, %v508
        %v1807 = vmul.f32 %v1723, %v508
        %v1808 = vmul.f32 %v1726, %v508
        %v1809 = vmul.f32 %v1729, %v508
        %v1810 = vmul.f32 %v1732, %v508
        %v1811 = vmul.f32 %v1735, %v508
        %v1812 = vmul.f32 %v1738, %v508
        %v1813 = vmul.f32 %v1741, %v508
        %v1814 = vmul.f32 %v1744, %v508
        %v1815 = vmul.f32 %v1747, %v508
        %v1816 = vmul.f32 %v1750, %v508
        %v1817 = vmul.f32 %v1753, %v508
        %v1818 = vmul.f32 %v1756, %v508
        %v1819 = vmul.f32 %v1759, %v508
        %v1820 = vmul.f32 %v1762, %v508
        %v1821 = vmul.f32 %v1765, %v508
        %v1822 = vmul.f32 %v1768, %v508
        %v1823 = vmul.f32 %v1771, %v508
        %v1824 = vmul.f32 %v1774, %v508
        %v1825 = vmul.f32 %v1777, %v508
        %v1826 = vmul.f32 %v1780, %v508
        %v1827 = vmul.f32 %v1783, %v508
        %v1828 = vmul.f32 %v1786, %v508
        %v1829 = vmul.f32 %v1789, %v508
        %v1830 = vmul.f32 %v1792, %v508
        %v1831 = vmul.f32 %v1795, %v508
        %v1832 = vmul.f32 %v1798, %v508
        %v1833 = vmul.f32 %v1801, %v508
        %v1834 = vmul.f32 %v1610, %v1610
        %v1835 = vmul.f32 %v1611, %v1611
        %v1836 = vmul.f32 %v1612, %v1612
        %v1837 = vmul.f32 %v1613, %v1613
        %v1838 = vmul.f32 %v1614, %v1614
        %v1839 = vmul.f32 %v1615, %v1615
        %v1840 = vmul.f32 %v1616, %v1616
        %v1841 = vmul.f32 %v1617, %v1617
        %v1842 = vmul.f32 %v1618, %v1618
        %v1843 = vmul.f32 %v1619, %v1619
        %v1844 = vmul.f32 %v1620, %v1620
        %v1845 = vmul.f32 %v1621, %v1621
        %v1846 = vmul.f32 %v1622, %v1622
        %v1847 = vmul.f32 %v1623, %v1623
        %v1848 = vmul.f32 %v1624, %v1624
        %v1849 = vmul.f32 %v1625, %v1625
        %v1850 = vmul.f32 %v1626, %v1626
        %v1851 = vmul.f32 %v1627, %v1627
        %v1852 = vmul.f32 %v1628, %v1628
        %v1853 = vmul.f32 %v1629, %v1629
        %v1854 = vmul.f32 %v1630, %v1630
        %v1855 = vmul.f32 %v1631, %v1631
        %v1856 = vmul.f32 %v1632, %v1632
        %v1857 = vmul.f32 %v1633, %v1633
        %v1858 = vmul.f32 %v1634, %v1634
        %v1859 = vmul.f32 %v1635, %v1635
        %v1860 = vmul.f32 %v1636, %v1636
        %v1861 = vmul.f32 %v1637, %v1637
        %v1862 = vmul.f32 %v1638, %v1638
        %v1863 = vmul.f32 %v1639, %v1639
        %v1864 = vmul.f32 %v1640, %v1640
        %v1865 = vmul.f32 %v1641, %v1641
        %v1866 = vsub.f32 %v1802, %v1834
        %v1867 = vsub.f32 %v1803, %v1835
        %v1868 = vsub.f32 %v1804, %v1836
        %v1869 = vsub.f32 %v1805, %v1837
        %v1870 = vsub.f32 %v1806, %v1838
        %v1871 = vsub.f32 %v1807, %v1839
        %v1872 = vsub.f32 %v1808, %v1840
        %v1873 = vsub.f32 %v1809, %v1841
        %v1874 = vsub.f32 %v1810, %v1842
        %v1875 = vsub.f32 %v1811, %v1843
        %v1876 = vsub.f32 %v1812, %v1844
        %v1877 = vsub.f32 %v1813, %v1845
        %v1878 = vsub.f32 %v1814, %v1846
        %v1879 = vsub.f32 %v1815, %v1847
        %v1880 = vsub.f32 %v1816, %v1848
        %v1881 = vsub.f32 %v1817, %v1849
        %v1882 = vsub.f32 %v1818, %v1850
        %v1883 = vsub.f32 %v1819, %v1851
        %v1884 = vsub.f32 %v1820, %v1852
        %v1885 = vsub.f32 %v1821, %v1853
        %v1886 = vsub.f32 %v1822, %v1854
        %v1887 = vsub.f32 %v1823, %v1855
        %v1888 = vsub.f32 %v1824, %v1856
        %v1889 = vsub.f32 %v1825, %v1857
        %v1890 = vsub.f32 %v1826, %v1858
        %v1891 = vsub.f32 %v1827, %v1859
        %v1892 = vsub.f32 %v1828, %v1860
        %v1893 = vsub.f32 %v1829, %v1861
        %v1894 = vsub.f32 %v1830, %v1862
        %v1895 = vsub.f32 %v1831, %v1863
        %v1896 = vsub.f32 %v1832, %v1864
        %v1897 = vsub.f32 %v1833, %v1865
        %v1898 = vmax.f32 %v1866, 0.0
        %v1899 = vmax.f32 %v1867, 0.0
        %v1900 = vmax.f32 %v1868, 0.0
        %v1901 = vmax.f32 %v1869, 0.0
        %v1902 = vmax.f32 %v1870, 0.0
        %v1903 = vmax.f32 %v1871, 0.0
        %v1904 = vmax.f32 %v1872, 0.0
        %v1905 = vmax.f32 %v1873, 0.0
        %v1906 = vmax.f32 %v1874, 0.0
        %v1907 = vmax.f32 %v1875, 0.0
        %v1908 = vmax.f32 %v1876, 0.0
        %v1909 = vmax.f32 %v1877, 0.0
        %v1910 = vmax.f32 %v1878, 0.0
        %v1911 = vmax.f32 %v1879, 0.0
        %v1912 = vmax.f32 %v1880, 0.0
        %v1913 = vmax.f32 %v1881, 0.0
        %v1914 = vmax.f32 %v1882, 0.0
        %v1915 = vmax.f32 %v1883, 0.0
        %v1916 = vmax.f32 %v1884, 0.0
        %v1917 = vmax.f32 %v1885, 0.0
        %v1918 = vmax.f32 %v1886, 0.0
        %v1919 = vmax.f32 %v1887, 0.0
        %v1920 = vmax.f32 %v1888, 0.0
        %v1921 = vmax.f32 %v1889, 0.0
        %v1922 = vmax.f32 %v1890, 0.0
        %v1923 = vmax.f32 %v1891, 0.0
        %v1924 = vmax.f32 %v1892, 0.0
        %v1925 = vmax.f32 %v1893, 0.0
        %v1926 = vmax.f32 %v1894, 0.0
        %v1927 = vmax.f32 %v1895, 0.0
        %v1928 = vmax.f32 %v1896, 0.0
        %v1929 = vmax.f32 %v1897, 0.0
        %v1930 = vsub.f32 %v1450, %v1610
        %v1931 = vsub.f32 %v1451, %v1610
        %v1932 = vsub.f32 %v1452, %v1611
        %v1933 = vsub.f32 %v1453, %v1611
        %v1934 = vsub.f32 %v1454, %v1612
        %v1935 = vsub.f32 %v1455, %v1612
        %v1936 = vsub.f32 %v1456, %v1613
        %v1937 = vsub.f32 %v1457, %v1613
        %v1938 = vsub.f32 %v1458, %v1614
        %v1939 = vsub.f32 %v1459, %v1614
        %v1940 = vsub.f32 %v1460, %v1615
        %v1941 = vsub.f32 %v1461, %v1615
        %v1942 = vsub.f32 %v1462, %v1616
        %v1943 = vsub.f32 %v1463, %v1616
        %v1944 = vsub.f32 %v1464, %v1617
        %v1945 = vsub.f32 %v1465, %v1617
        %v1946 = vsub.f32 %v1466, %v1618
        %v1947 = vsub.f32 %v1467, %v1618
        %v1948 = vsub.f32 %v1468, %v1619
        %v1949 = vsub.f32 %v1469, %v1619
        %v1950 = vsub.f32 %v1470, %v1620
        %v1951 = vsub.f32 %v1471, %v1620
        %v1952 = vsub.f32 %v1472, %v1621
        %v1953 = vsub.f32 %v1473, %v1621
        %v1954 = vsub.f32 %v1474, %v1622
        %v1955 = vsub.f32 %v1475, %v1622
        %v1956 = vsub.f32 %v1476, %v1623
        %v1957 = vsub.f32 %v1477, %v1623
        %v1958 = vsub.f32 %v1478, %v1624
        %v1959 = vsub.f32 %v1479, %v1624
        %v1960 = vsub.f32 %v1480, %v1625
        %v1961 = vsub.f32 %v1481, %v1625
        %v1962 = vsub.f32 %v1482, %v1626
        %v1963 = vsub.f32 %v1483, %v1626
        %v1964 = vsub.f32 %v1484, %v1627
        %v1965 = vsub.f32 %v1485, %v1627
        %v1966 = vsub.f32 %v1486, %v1628
        %v1967 = vsub.f32 %v1487, %v1628
        %v1968 = vsub.f32 %v1488, %v1629
        %v1969 = vsub.f32 %v1489, %v1629
        %v1970 = vsub.f32 %v1490, %v1630
        %v1971 = vsub.f32 %v1491, %v1630
        %v1972 = vsub.f32 %v1492, %v1631
        %v1973 = vsub.f32 %v1493, %v1631
        %v1974 = vsub.f32 %v1494, %v1632
        %v1975 = vsub.f32 %v1495, %v1632
        %v1976 = vsub.f32 %v1496, %v1633
        %v1977 = vsub.f32 %v1497, %v1633
        %v1978 = vsub.f32 %v1498, %v1634
        %v1979 = vsub.f32 %v1499, %v1634
        %v1980 = vsub.f32 %v1500, %v1635
        %v1981 = vsub.f32 %v1501, %v1635
        %v1982 = vsub.f32 %v1502, %v1636
        %v1983 = vsub.f32 %v1503, %v1636
        %v1984 = vsub.f32 %v1504, %v1637
        %v1985 = vsub.f32 %v1505, %v1637
        %v1986 = vsub.f32 %v1506, %v1638
        %v1987 = vsub.f32 %v1507, %v1638
        %v1988 = vsub.f32 %v1508, %v1639
        %v1989 = vsub.f32 %v1509, %v1639
        %v1990 = vsub.f32 %v1510, %v1640
        %v1991 = vsub.f32 %v1511, %v1640
        %v1992 = vsub.f32 %v1512, %v1641
        %v1993 = vsub.f32 %v1513, %v1641
        %v1994 = vadd.f32 %v1898, 1e-05
        %v1995 = vadd.f32 %v1899, 1e-05
        %v1996 = vadd.f32 %v1900, 1e-05
        %v1997 = vadd.f32 %v1901, 1e-05
        %v1998 = vadd.f32 %v1902, 1e-05
        %v1999 = vadd.f32 %v1903, 1e-05
        %v2000 = vadd.f32 %v1904, 1e-05
        %v2001 = vadd.f32 %v1905, 1e-05
        %v2002 = vadd.f32 %v1906, 1e-05
        %v2003 = vadd.f32 %v1907, 1e-05
        %v2004 = vadd.f32 %v1908, 1e-05
        %v2005 = vadd.f32 %v1909, 1e-05
        %v2006 = vadd.f32 %v1910, 1e-05
        %v2007 = vadd.f32 %v1911, 1e-05
        %v2008 = vadd.f32 %v1912, 1e-05
        %v2009 = vadd.f32 %v1913, 1e-05
        %v2010 = vadd.f32 %v1914, 1e-05
        %v2011 = vadd.f32 %v1915, 1e-05
        %v2012 = vadd.f32 %v1916, 1e-05
        %v2013 = vadd.f32 %v1917, 1e-05
        %v2014 = vadd.f32 %v1918, 1e-05
        %v2015 = vadd.f32 %v1919, 1e-05
        %v2016 = vadd.f32 %v1920, 1e-05
        %v2017 = vadd.f32 %v1921, 1e-05
        %v2018 = vadd.f32 %v1922, 1e-05
        %v2019 = vadd.f32 %v1923, 1e-05
        %v2020 = vadd.f32 %v1924, 1e-05
        %v2021 = vadd.f32 %v1925, 1e-05
        %v2022 = vadd.f32 %v1926, 1e-05
        %v2023 = vadd.f32 %v1927, 1e-05
        %v2024 = vadd.f32 %v1928, 1e-05
        %v2025 = vadd.f32 %v1929, 1e-05
        %v2026 = vrsqrt.pop %v1994
        %v2027 = vrsqrt.pop %v1995
        %v2028 = vrsqrt.pop %v1996
        %v2029 = vrsqrt.pop %v1997
        %v2030 = vrsqrt.pop %v1998
        %v2031 = vrsqrt.pop %v1999
        %v2032 = vrsqrt.pop %v2000
        %v2033 = vrsqrt.pop %v2001
        %v2034 = vrsqrt.pop %v2002
        %v2035 = vrsqrt.pop %v2003
        %v2036 = vrsqrt.pop %v2004
        %v2037 = vrsqrt.pop %v2005
        %v2038 = vrsqrt.pop %v2006
        %v2039 = vrsqrt.pop %v2007
        %v2040 = vrsqrt.pop %v2008
        %v2041 = vrsqrt.pop %v2009
        %v2042 = vrsqrt.pop %v2010
        %v2043 = vrsqrt.pop %v2011
        %v2044 = vrsqrt.pop %v2012
        %v2045 = vrsqrt.pop %v2013
        %v2046 = vrsqrt.pop %v2014
        %v2047 = vrsqrt.pop %v2015
        %v2048 = vrsqrt.pop %v2016
        %v2049 = vrsqrt.pop %v2017
        %v2050 = vrsqrt.pop %v2018
        %v2051 = vrsqrt.pop %v2019
        %v2052 = vrsqrt.pop %v2020
        %v2053 = vrsqrt.pop %v2021
        %v2054 = vrsqrt.pop %v2022
        %v2055 = vrsqrt.pop %v2023
        %v2056 = vrsqrt.pop %v2024
        %v2057 = vrsqrt.pop %v2025
        %v2058 = vmul.f32 %v1930, %v2026
        %v2059 = vmul.f32 %v1931, %v2026
        %v2060 = vmul.f32 %v1932, %v2027
        %v2061 = vmul.f32 %v1933, %v2027
        %v2062 = vmul.f32 %v1934, %v2028
        %v2063 = vmul.f32 %v1935, %v2028
        %v2064 = vmul.f32 %v1936, %v2029
        %v2065 = vmul.f32 %v1937, %v2029
        %v2066 = vmul.f32 %v1938, %v2030
        %v2067 = vmul.f32 %v1939, %v2030
        %v2068 = vmul.f32 %v1940, %v2031
        %v2069 = vmul.f32 %v1941, %v2031
        %v2070 = vmul.f32 %v1942, %v2032
        %v2071 = vmul.f32 %v1943, %v2032
        %v2072 = vmul.f32 %v1944, %v2033
        %v2073 = vmul.f32 %v1945, %v2033
        %v2074 = vmul.f32 %v1946, %v2034
        %v2075 = vmul.f32 %v1947, %v2034
        %v2076 = vmul.f32 %v1948, %v2035
        %v2077 = vmul.f32 %v1949, %v2035
        %v2078 = vmul.f32 %v1950, %v2036
        %v2079 = vmul.f32 %v1951, %v2036
        %v2080 = vmul.f32 %v1952, %v2037
        %v2081 = vmul.f32 %v1953, %v2037
        %v2082 = vmul.f32 %v1954, %v2038
        %v2083 = vmul.f32 %v1955, %v2038
        %v2084 = vmul.f32 %v1956, %v2039
        %v2085 = vmul.f32 %v1957, %v2039
        %v2086 = vmul.f32 %v1958, %v2040
        %v2087 = vmul.f32 %v1959, %v2040
        %v2088 = vmul.f32 %v1960, %v2041
        %v2089 = vmul.f32 %v1961, %v2041
        %v2090 = vmul.f32 %v1962, %v2042
        %v2091 = vmul.f32 %v1963, %v2042
        %v2092 = vmul.f32 %v1964, %v2043
        %v2093 = vmul.f32 %v1965, %v2043
        %v2094 = vmul.f32 %v1966, %v2044
        %v2095 = vmul.f32 %v1967, %v2044
        %v2096 = vmul.f32 %v1968, %v2045
        %v2097 = vmul.f32 %v1969, %v2045
        %v2098 = vmul.f32 %v1970, %v2046
        %v2099 = vmul.f32 %v1971, %v2046
        %v2100 = vmul.f32 %v1972, %v2047
        %v2101 = vmul.f32 %v1973, %v2047
        %v2102 = vmul.f32 %v1974, %v2048
        %v2103 = vmul.f32 %v1975, %v2048
        %v2104 = vmul.f32 %v1976, %v2049
        %v2105 = vmul.f32 %v1977, %v2049
        %v2106 = vmul.f32 %v1978, %v2050
        %v2107 = vmul.f32 %v1979, %v2050
        %v2108 = vmul.f32 %v1980, %v2051
        %v2109 = vmul.f32 %v1981, %v2051
        %v2110 = vmul.f32 %v1982, %v2052
        %v2111 = vmul.f32 %v1983, %v2052
        %v2112 = vmul.f32 %v1984, %v2053
        %v2113 = vmul.f32 %v1985, %v2053
        %v2114 = vmul.f32 %v1986, %v2054
        %v2115 = vmul.f32 %v1987, %v2054
        %v2116 = vmul.f32 %v1988, %v2055
        %v2117 = vmul.f32 %v1989, %v2055
        %v2118 = vmul.f32 %v1990, %v2056
        %v2119 = vmul.f32 %v1991, %v2056
        %v2120 = vmul.f32 %v1992, %v2057
        %v2121 = vmul.f32 %v1993, %v2057
        %v2122 = vpack.c.bf16 %v2060, %v2058
        %v2123 = vpack.c.bf16 %v2061, %v2059
        %v2124 = vpack.c.bf16 %v2064, %v2062
        %v2125 = vpack.c.bf16 %v2065, %v2063
        %v2126 = vpack.c.bf16 %v2068, %v2066
        %v2127 = vpack.c.bf16 %v2069, %v2067
        %v2128 = vpack.c.bf16 %v2072, %v2070
        %v2129 = vpack.c.bf16 %v2073, %v2071
        %v2130 = vpack.c.bf16 %v2076, %v2074
        %v2131 = vpack.c.bf16 %v2077, %v2075
        %v2132 = vpack.c.bf16 %v2080, %v2078
        %v2133 = vpack.c.bf16 %v2081, %v2079
        %v2134 = vpack.c.bf16 %v2084, %v2082
        %v2135 = vpack.c.bf16 %v2085, %v2083
        %v2136 = vpack.c.bf16 %v2088, %v2086
        %v2137 = vpack.c.bf16 %v2089, %v2087
        %v2138 = vpack.c.bf16 %v2092, %v2090
        %v2139 = vpack.c.bf16 %v2093, %v2091
        %v2140 = vpack.c.bf16 %v2096, %v2094
        %v2141 = vpack.c.bf16 %v2097, %v2095
        %v2142 = vpack.c.bf16 %v2100, %v2098
        %v2143 = vpack.c.bf16 %v2101, %v2099
        %v2144 = vpack.c.bf16 %v2104, %v2102
        %v2145 = vpack.c.bf16 %v2105, %v2103
        %v2146 = vpack.c.bf16 %v2108, %v2106
        %v2147 = vpack.c.bf16 %v2109, %v2107
        %v2148 = vpack.c.bf16 %v2112, %v2110
        %v2149 = vpack.c.bf16 %v2113, %v2111
        %v2150 = vpack.c.bf16 %v2116, %v2114
        %v2151 = vpack.c.bf16 %v2117, %v2115
        %v2152 = vpack.c.bf16 %v2120, %v2118
        %v2153 = vpack.c.bf16 %v2121, %v2119
        %v2154 = vld [vmem:[#allocation7] sm:$0xff]
        %v2155 = vld [vmem:[#allocation7 + $0x8] sm:$0xff]
        %v2156 = vld [vmem:[#allocation7 + $0x10] sm:$0xff]
        %v2157 = vld [vmem:[#allocation7 + $0x18] sm:$0xff]
        %v2158 = vld [vmem:[#allocation7 + $0x20] sm:$0xff]
        %v2159 = vld [vmem:[#allocation7 + $0x28] sm:$0xff]
        %v2160 = vld [vmem:[#allocation7 + $0x30] sm:$0xff]
        %v2161 = vld [vmem:[#allocation7 + $0x38] sm:$0xff]
        %v2162 = vld [vmem:[#allocation7 + $0x40] sm:$0xff]
        %v2163 = vld [vmem:[#allocation7 + $0x48] sm:$0xff]
        %v2164 = vld [vmem:[#allocation7 + $0x50] sm:$0xff]
        %v2165 = vld [vmem:[#allocation7 + $0x58] sm:$0xff]
        %v2166 = vld [vmem:[#allocation7 + $0x60] sm:$0xff]
        %v2167 = vld [vmem:[#allocation7 + $0x68] sm:$0xff]
        %v2168 = vld [vmem:[#allocation7 + $0x70] sm:$0xff]
        %v2169 = vld [vmem:[#allocation7 + $0x78] sm:$0xff]
        %v2170 = vld [vmem:[#allocation7 + $0x80] sm:$0xff]
        %v2171 = vld [vmem:[#allocation7 + $0x88] sm:$0xff]
        %v2172 = vld [vmem:[#allocation7 + $0x90] sm:$0xff]
        %v2173 = vld [vmem:[#allocation7 + $0x98] sm:$0xff]
        %v2174 = vld [vmem:[#allocation7 + $0xa0] sm:$0xff]
        %v2175 = vld [vmem:[#allocation7 + $0xa8] sm:$0xff]
        %v2176 = vld [vmem:[#allocation7 + $0xb0] sm:$0xff]
        %v2177 = vld [vmem:[#allocation7 + $0xb8] sm:$0xff]
        %v2178 = vld [vmem:[#allocation7 + $0xc0] sm:$0xff]
        %v2179 = vld [vmem:[#allocation7 + $0xc8] sm:$0xff]
        %v2180 = vld [vmem:[#allocation7 + $0xd0] sm:$0xff]
        %v2181 = vld [vmem:[#allocation7 + $0xd8] sm:$0xff]
        %v2182 = vld [vmem:[#allocation7 + $0xe0] sm:$0xff]
        %v2183 = vld [vmem:[#allocation7 + $0xe8] sm:$0xff]
        %v2184 = vld [vmem:[#allocation7 + $0xf0] sm:$0xff]
        %v2185 = vld [vmem:[#allocation7 + $0xf8] sm:$0xff]
        %v2186 = vld [vmem:[#allocation7 + $0x100] sm:$0xff]
        %v2187 = vld [vmem:[#allocation7 + $0x108] sm:$0xff]
        %v2188 = vld [vmem:[#allocation7 + $0x110] sm:$0xff]
        %v2189 = vld [vmem:[#allocation7 + $0x118] sm:$0xff]
        %v2190 = vld [vmem:[#allocation7 + $0x120] sm:$0xff]
        %v2191 = vld [vmem:[#allocation7 + $0x128] sm:$0xff]
        %v2192 = vld [vmem:[#allocation7 + $0x130] sm:$0xff]
        %v2193 = vld [vmem:[#allocation7 + $0x138] sm:$0xff]
        %v2194 = vld [vmem:[#allocation7 + $0x140] sm:$0xff]
        %v2195 = vld [vmem:[#allocation7 + $0x148] sm:$0xff]
        %v2196 = vld [vmem:[#allocation7 + $0x150] sm:$0xff]
        %v2197 = vld [vmem:[#allocation7 + $0x158] sm:$0xff]
        %v2198 = vld [vmem:[#allocation7 + $0x160] sm:$0xff]
        %v2199 = vld [vmem:[#allocation7 + $0x168] sm:$0xff]
        %v2200 = vld [vmem:[#allocation7 + $0x170] sm:$0xff]
        %v2201 = vld [vmem:[#allocation7 + $0x178] sm:$0xff]
        %v2202 = vld [vmem:[#allocation7 + $0x180] sm:$0xff]
        %v2203 = vld [vmem:[#allocation7 + $0x188] sm:$0xff]
        %v2204 = vld [vmem:[#allocation7 + $0x190] sm:$0xff]
        %v2205 = vld [vmem:[#allocation7 + $0x198] sm:$0xff]
        %v2206 = vld [vmem:[#allocation7 + $0x1a0] sm:$0xff]
        %v2207 = vld [vmem:[#allocation7 + $0x1a8] sm:$0xff]
        %v2208 = vld [vmem:[#allocation7 + $0x1b0] sm:$0xff]
        %v2209 = vld [vmem:[#allocation7 + $0x1b8] sm:$0xff]
        %v2210 = vld [vmem:[#allocation7 + $0x1c0] sm:$0xff]
        %v2211 = vld [vmem:[#allocation7 + $0x1c8] sm:$0xff]
        %v2212 = vld [vmem:[#allocation7 + $0x1d0] sm:$0xff]
        %v2213 = vld [vmem:[#allocation7 + $0x1d8] sm:$0xff]
        %v2214 = vld [vmem:[#allocation7 + $0x1e0] sm:$0xff]
        %v2215 = vld [vmem:[#allocation7 + $0x1e8] sm:$0xff]
        %v2216 = vld [vmem:[#allocation7 + $0x1f0] sm:$0xff]
        %v2217 = vld [vmem:[#allocation7 + $0x1f8] sm:$0xff]
        %v2218 = vld [vmem:[#allocation7 + $0x200] sm:$0xff]
        %v2219 = vld [vmem:[#allocation7 + $0x208] sm:$0xff]
        %v2220 = vld [vmem:[#allocation7 + $0x210] sm:$0xff]
        %v2221 = vld [vmem:[#allocation7 + $0x218] sm:$0xff]
        %v2222 = vld [vmem:[#allocation7 + $0x220] sm:$0xff]
        %v2223 = vld [vmem:[#allocation7 + $0x228] sm:$0xff]
        %v2224 = vld [vmem:[#allocation7 + $0x230] sm:$0xff]
        %v2225 = vld [vmem:[#allocation7 + $0x238] sm:$0xff]
        %v2226 = vld [vmem:[#allocation7 + $0x240] sm:$0xff]
        %v2227 = vld [vmem:[#allocation7 + $0x248] sm:$0xff]
        %v2228 = vld [vmem:[#allocation7 + $0x250] sm:$0xff]
        %v2229 = vld [vmem:[#allocation7 + $0x258] sm:$0xff]
        %v2230 = vld [vmem:[#allocation7 + $0x260] sm:$0xff]
        %v2231 = vld [vmem:[#allocation7 + $0x268] sm:$0xff]
        %v2232 = vld [vmem:[#allocation7 + $0x270] sm:$0xff]
        %v2233 = vld [vmem:[#allocation7 + $0x278] sm:$0xff]
        %v2234 = vld [vmem:[#allocation7 + $0x280] sm:$0xff]
        %v2235 = vld [vmem:[#allocation7 + $0x288] sm:$0xff]
        %v2236 = vld [vmem:[#allocation7 + $0x290] sm:$0xff]
        %v2237 = vld [vmem:[#allocation7 + $0x298] sm:$0xff]
        %v2238 = vld [vmem:[#allocation7 + $0x2a0] sm:$0xff]
        %v2239 = vld [vmem:[#allocation7 + $0x2a8] sm:$0xff]
        %v2240 = vld [vmem:[#allocation7 + $0x2b0] sm:$0xff]
        %v2241 = vld [vmem:[#allocation7 + $0x2b8] sm:$0xff]
        %v2242 = vld [vmem:[#allocation7 + $0x2c0] sm:$0xff]
        %v2243 = vld [vmem:[#allocation7 + $0x2c8] sm:$0xff]
        %v2244 = vld [vmem:[#allocation7 + $0x2d0] sm:$0xff]
        %v2245 = vld [vmem:[#allocation7 + $0x2d8] sm:$0xff]
        %v2246 = vld [vmem:[#allocation7 + $0x2e0] sm:$0xff]
        %v2247 = vld [vmem:[#allocation7 + $0x2e8] sm:$0xff]
        %v2248 = vld [vmem:[#allocation7 + $0x2f0] sm:$0xff]
        %v2249 = vld [vmem:[#allocation7 + $0x2f8] sm:$0xff]
        %v2250 = vld [vmem:[#allocation7 + $0x300] sm:$0xff]
        %v2251 = vld [vmem:[#allocation7 + $0x308] sm:$0xff]
        %v2252 = vld [vmem:[#allocation7 + $0x310] sm:$0xff]
        %v2253 = vld [vmem:[#allocation7 + $0x318] sm:$0xff]
        %v2254 = vld [vmem:[#allocation7 + $0x320] sm:$0xff]
        %v2255 = vld [vmem:[#allocation7 + $0x328] sm:$0xff]
        %v2256 = vld [vmem:[#allocation7 + $0x330] sm:$0xff]
        %v2257 = vld [vmem:[#allocation7 + $0x338] sm:$0xff]
        %v2258 = vld [vmem:[#allocation7 + $0x340] sm:$0xff]
        %v2259 = vld [vmem:[#allocation7 + $0x348] sm:$0xff]
        %v2260 = vld [vmem:[#allocation7 + $0x350] sm:$0xff]
        %v2261 = vld [vmem:[#allocation7 + $0x358] sm:$0xff]
        %v2262 = vld [vmem:[#allocation7 + $0x360] sm:$0xff]
        %v2263 = vld [vmem:[#allocation7 + $0x368] sm:$0xff]
        %v2264 = vld [vmem:[#allocation7 + $0x370] sm:$0xff]
        %v2265 = vld [vmem:[#allocation7 + $0x378] sm:$0xff]
        %v2266 = vld [vmem:[#allocation7 + $0x380] sm:$0xff]
        %v2267 = vld [vmem:[#allocation7 + $0x388] sm:$0xff]
        %v2268 = vld [vmem:[#allocation7 + $0x390] sm:$0xff]
        %v2269 = vld [vmem:[#allocation7 + $0x398] sm:$0xff]
        %v2270 = vld [vmem:[#allocation7 + $0x3a0] sm:$0xff]
        %v2271 = vld [vmem:[#allocation7 + $0x3a8] sm:$0xff]
        %v2272 = vld [vmem:[#allocation7 + $0x3b0] sm:$0xff]
        %v2273 = vld [vmem:[#allocation7 + $0x3b8] sm:$0xff]
        %v2274 = vld [vmem:[#allocation7 + $0x3c0] sm:$0xff]
        %v2275 = vld [vmem:[#allocation7 + $0x3c8] sm:$0xff]
        %v2276 = vld [vmem:[#allocation7 + $0x3d0] sm:$0xff]
        %v2277 = vld [vmem:[#allocation7 + $0x3d8] sm:$0xff]
        %v2278 = vld [vmem:[#allocation7 + $0x3e0] sm:$0xff]
        %v2279 = vld [vmem:[#allocation7 + $0x3e8] sm:$0xff]
        %v2280 = vld [vmem:[#allocation7 + $0x3f0] sm:$0xff]
        %v2281 = vld [vmem:[#allocation7 + $0x3f8] sm:$0xff]
        %v2282 = vld [vmem:[%s4] sm:$0xff]
        %v2284 = vlaneseq
        %v2285 = vshrl.u32 %v2284, 7
        %v2286 = vsub.s32 0, %v2285
        %v2287 = vrot.slane %v2282, %v2286
        %v2288 = vlaneseq
        %v2289 = vshrl.u32 %v2288, 7
        %v2290 = vsub.s32 1, %v2289
        %v2291 = vrot.slane %v2282, %v2290
        %v2292 = vlaneseq
        %v2293 = vshrl.u32 %v2292, 7
        %v2294 = vsub.s32 2, %v2293
        %v2295 = vrot.slane %v2282, %v2294
        %v2296 = vlaneseq
        %v2297 = vshrl.u32 %v2296, 7
        %v2298 = vsub.s32 3, %v2297
        %v2299 = vrot.slane %v2282, %v2298
        %v2300 = vlaneseq
        %v2301 = vshrl.u32 %v2300, 7
        %v2302 = vsub.s32 4, %v2301
        %v2303 = vrot.slane %v2282, %v2302
        %v2304 = vlaneseq
        %v2305 = vshrl.u32 %v2304, 7
        %v2306 = vsub.s32 5, %v2305
        %v2307 = vrot.slane %v2282, %v2306
        %v2308 = vlaneseq
        %v2309 = vshrl.u32 %v2308, 7
        %v2310 = vsub.s32 6, %v2309
        %v2311 = vrot.slane %v2282, %v2310
        %v2312 = vlaneseq
        %v2313 = vshrl.u32 %v2312, 7
        %v2314 = vsub.s32 7, %v2313
        %v2315 = vrot.slane %v2282, %v2314
        %v2452 = vunpack.c.l.b16 %v2154
        %v2453 = vunpack.c.h.b16 %v2154
        %v2454 = vunpack.c.l.b16 %v2155
        %v2455 = vunpack.c.h.b16 %v2155
        %v2456 = vunpack.c.l.b16 %v2156
        %v2457 = vunpack.c.h.b16 %v2156
        %v2458 = vunpack.c.l.b16 %v2157
        %v2459 = vunpack.c.h.b16 %v2157
        %v2460 = vunpack.c.l.b16 %v2158
        %v2461 = vunpack.c.h.b16 %v2158
        %v2462 = vunpack.c.l.b16 %v2159
        %v2463 = vunpack.c.h.b16 %v2159
        %v2464 = vunpack.c.l.b16 %v2160
        %v2465 = vunpack.c.h.b16 %v2160
        %v2466 = vunpack.c.l.b16 %v2161
        %v2467 = vunpack.c.h.b16 %v2161
        %v2468 = vunpack.c.l.b16 %v2162
        %v2469 = vunpack.c.h.b16 %v2162
        %v2470 = vunpack.c.l.b16 %v2163
        %v2471 = vunpack.c.h.b16 %v2163
        %v2472 = vunpack.c.l.b16 %v2164
        %v2473 = vunpack.c.h.b16 %v2164
        %v2474 = vunpack.c.l.b16 %v2165
        %v2475 = vunpack.c.h.b16 %v2165
        %v2476 = vunpack.c.l.b16 %v2166
        %v2477 = vunpack.c.h.b16 %v2166
        %v2478 = vunpack.c.l.b16 %v2167
        %v2479 = vunpack.c.h.b16 %v2167
        %v2480 = vunpack.c.l.b16 %v2168
        %v2481 = vunpack.c.h.b16 %v2168
        %v2482 = vunpack.c.l.b16 %v2169
        %v2483 = vunpack.c.h.b16 %v2169
        %v2484 = vunpack.c.l.b16 %v2170
        %v2485 = vunpack.c.h.b16 %v2170
        %v2486 = vunpack.c.l.b16 %v2171
        %v2487 = vunpack.c.h.b16 %v2171
        %v2488 = vunpack.c.l.b16 %v2172
        %v2489 = vunpack.c.h.b16 %v2172
        %v2490 = vunpack.c.l.b16 %v2173
        %v2491 = vunpack.c.h.b16 %v2173
        %v2492 = vunpack.c.l.b16 %v2174
        %v2493 = vunpack.c.h.b16 %v2174
        %v2494 = vunpack.c.l.b16 %v2175
        %v2495 = vunpack.c.h.b16 %v2175
        %v2496 = vunpack.c.l.b16 %v2176
        %v2497 = vunpack.c.h.b16 %v2176
        %v2498 = vunpack.c.l.b16 %v2177
        %v2499 = vunpack.c.h.b16 %v2177
        %v2500 = vunpack.c.l.b16 %v2178
        %v2501 = vunpack.c.h.b16 %v2178
        %v2502 = vunpack.c.l.b16 %v2179
        %v2503 = vunpack.c.h.b16 %v2179
        %v2504 = vunpack.c.l.b16 %v2180
        %v2505 = vunpack.c.h.b16 %v2180
        %v2506 = vunpack.c.l.b16 %v2181
        %v2507 = vunpack.c.h.b16 %v2181
        %v2508 = vunpack.c.l.b16 %v2182
        %v2509 = vunpack.c.h.b16 %v2182
        %v2510 = vunpack.c.l.b16 %v2183
        %v2511 = vunpack.c.h.b16 %v2183
        %v2512 = vunpack.c.l.b16 %v2184
        %v2513 = vunpack.c.h.b16 %v2184
        %v2514 = vunpack.c.l.b16 %v2185
        %v2515 = vunpack.c.h.b16 %v2185
        %v2516 = vunpack.c.l.b16 %v2186
        %v2517 = vunpack.c.h.b16 %v2186
        %v2518 = vunpack.c.l.b16 %v2187
        %v2519 = vunpack.c.h.b16 %v2187
        %v2520 = vunpack.c.l.b16 %v2188
        %v2521 = vunpack.c.h.b16 %v2188
        %v2522 = vunpack.c.l.b16 %v2189
        %v2523 = vunpack.c.h.b16 %v2189
        %v2524 = vunpack.c.l.b16 %v2190
        %v2525 = vunpack.c.h.b16 %v2190
        %v2526 = vunpack.c.l.b16 %v2191
        %v2527 = vunpack.c.h.b16 %v2191
        %v2528 = vunpack.c.l.b16 %v2192
        %v2529 = vunpack.c.h.b16 %v2192
        %v2530 = vunpack.c.l.b16 %v2193
        %v2531 = vunpack.c.h.b16 %v2193
        %v2532 = vunpack.c.l.b16 %v2194
        %v2533 = vunpack.c.h.b16 %v2194
        %v2534 = vunpack.c.l.b16 %v2195
        %v2535 = vunpack.c.h.b16 %v2195
        %v2536 = vunpack.c.l.b16 %v2196
        %v2537 = vunpack.c.h.b16 %v2196
        %v2538 = vunpack.c.l.b16 %v2197
        %v2539 = vunpack.c.h.b16 %v2197
        %v2540 = vunpack.c.l.b16 %v2198
        %v2541 = vunpack.c.h.b16 %v2198
        %v2542 = vunpack.c.l.b16 %v2199
        %v2543 = vunpack.c.h.b16 %v2199
        %v2544 = vunpack.c.l.b16 %v2200
        %v2545 = vunpack.c.h.b16 %v2200
        %v2546 = vunpack.c.l.b16 %v2201
        %v2547 = vunpack.c.h.b16 %v2201
        %v2548 = vunpack.c.l.b16 %v2202
        %v2549 = vunpack.c.h.b16 %v2202
        %v2550 = vunpack.c.l.b16 %v2203
        %v2551 = vunpack.c.h.b16 %v2203
        %v2552 = vunpack.c.l.b16 %v2204
        %v2553 = vunpack.c.h.b16 %v2204
        %v2554 = vunpack.c.l.b16 %v2205
        %v2555 = vunpack.c.h.b16 %v2205
        %v2556 = vunpack.c.l.b16 %v2206
        %v2557 = vunpack.c.h.b16 %v2206
        %v2558 = vunpack.c.l.b16 %v2207
        %v2559 = vunpack.c.h.b16 %v2207
        %v2560 = vunpack.c.l.b16 %v2208
        %v2561 = vunpack.c.h.b16 %v2208
        %v2562 = vunpack.c.l.b16 %v2209
        %v2563 = vunpack.c.h.b16 %v2209
        %v2564 = vunpack.c.l.b16 %v2210
        %v2565 = vunpack.c.h.b16 %v2210
        %v2566 = vunpack.c.l.b16 %v2211
        %v2567 = vunpack.c.h.b16 %v2211
        %v2568 = vunpack.c.l.b16 %v2212
        %v2569 = vunpack.c.h.b16 %v2212
        %v2570 = vunpack.c.l.b16 %v2213
        %v2571 = vunpack.c.h.b16 %v2213
        %v2572 = vunpack.c.l.b16 %v2214
        %v2573 = vunpack.c.h.b16 %v2214
        %v2574 = vunpack.c.l.b16 %v2215
        %v2575 = vunpack.c.h.b16 %v2215
        %v2576 = vunpack.c.l.b16 %v2216
        %v2577 = vunpack.c.h.b16 %v2216
        %v2578 = vunpack.c.l.b16 %v2217
        %v2579 = vunpack.c.h.b16 %v2217
        %v2580 = vunpack.c.l.b16 %v2218
        %v2581 = vunpack.c.h.b16 %v2218
        %v2582 = vunpack.c.l.b16 %v2219
        %v2583 = vunpack.c.h.b16 %v2219
        %v2584 = vunpack.c.l.b16 %v2220
        %v2585 = vunpack.c.h.b16 %v2220
        %v2586 = vunpack.c.l.b16 %v2221
        %v2587 = vunpack.c.h.b16 %v2221
        %v2588 = vunpack.c.l.b16 %v2222
        %v2589 = vunpack.c.h.b16 %v2222
        %v2590 = vunpack.c.l.b16 %v2223
        %v2591 = vunpack.c.h.b16 %v2223
        %v2592 = vunpack.c.l.b16 %v2224
        %v2593 = vunpack.c.h.b16 %v2224
        %v2594 = vunpack.c.l.b16 %v2225
        %v2595 = vunpack.c.h.b16 %v2225
        %v2596 = vunpack.c.l.b16 %v2226
        %v2597 = vunpack.c.h.b16 %v2226
        %v2598 = vunpack.c.l.b16 %v2227
        %v2599 = vunpack.c.h.b16 %v2227
        %v2600 = vunpack.c.l.b16 %v2228
        %v2601 = vunpack.c.h.b16 %v2228
        %v2602 = vunpack.c.l.b16 %v2229
        %v2603 = vunpack.c.h.b16 %v2229
        %v2604 = vunpack.c.l.b16 %v2230
        %v2605 = vunpack.c.h.b16 %v2230
        %v2606 = vunpack.c.l.b16 %v2231
        %v2607 = vunpack.c.h.b16 %v2231
        %v2608 = vunpack.c.l.b16 %v2232
        %v2609 = vunpack.c.h.b16 %v2232
        %v2610 = vunpack.c.l.b16 %v2233
        %v2611 = vunpack.c.h.b16 %v2233
        %v2612 = vunpack.c.l.b16 %v2234
        %v2613 = vunpack.c.h.b16 %v2234
        %v2614 = vunpack.c.l.b16 %v2235
        %v2615 = vunpack.c.h.b16 %v2235
        %v2616 = vunpack.c.l.b16 %v2236
        %v2617 = vunpack.c.h.b16 %v2236
        %v2618 = vunpack.c.l.b16 %v2237
        %v2619 = vunpack.c.h.b16 %v2237
        %v2620 = vunpack.c.l.b16 %v2238
        %v2621 = vunpack.c.h.b16 %v2238
        %v2622 = vunpack.c.l.b16 %v2239
        %v2623 = vunpack.c.h.b16 %v2239
        %v2624 = vunpack.c.l.b16 %v2240
        %v2625 = vunpack.c.h.b16 %v2240
        %v2626 = vunpack.c.l.b16 %v2241
        %v2627 = vunpack.c.h.b16 %v2241
        %v2628 = vunpack.c.l.b16 %v2242
        %v2629 = vunpack.c.h.b16 %v2242
        %v2630 = vunpack.c.l.b16 %v2243
        %v2631 = vunpack.c.h.b16 %v2243
        %v2632 = vunpack.c.l.b16 %v2244
        %v2633 = vunpack.c.h.b16 %v2244
        %v2634 = vunpack.c.l.b16 %v2245
        %v2635 = vunpack.c.h.b16 %v2245
        %v2636 = vunpack.c.l.b16 %v2246
        %v2637 = vunpack.c.h.b16 %v2246
        %v2638 = vunpack.c.l.b16 %v2247
        %v2639 = vunpack.c.h.b16 %v2247
        %v2640 = vunpack.c.l.b16 %v2248
        %v2641 = vunpack.c.h.b16 %v2248
        %v2642 = vunpack.c.l.b16 %v2249
        %v2643 = vunpack.c.h.b16 %v2249
        %v2644 = vunpack.c.l.b16 %v2250
        %v2645 = vunpack.c.h.b16 %v2250
        %v2646 = vunpack.c.l.b16 %v2251
        %v2647 = vunpack.c.h.b16 %v2251
        %v2648 = vunpack.c.l.b16 %v2252
        %v2649 = vunpack.c.h.b16 %v2252
        %v2650 = vunpack.c.l.b16 %v2253
        %v2651 = vunpack.c.h.b16 %v2253
        %v2652 = vunpack.c.l.b16 %v2254
        %v2653 = vunpack.c.h.b16 %v2254
        %v2654 = vunpack.c.l.b16 %v2255
        %v2655 = vunpack.c.h.b16 %v2255
        %v2656 = vunpack.c.l.b16 %v2256
        %v2657 = vunpack.c.h.b16 %v2256
        %v2658 = vunpack.c.l.b16 %v2257
        %v2659 = vunpack.c.h.b16 %v2257
        %v2660 = vunpack.c.l.b16 %v2258
        %v2661 = vunpack.c.h.b16 %v2258
        %v2662 = vunpack.c.l.b16 %v2259
        %v2663 = vunpack.c.h.b16 %v2259
        %v2664 = vunpack.c.l.b16 %v2260
        %v2665 = vunpack.c.h.b16 %v2260
        %v2666 = vunpack.c.l.b16 %v2261
        %v2667 = vunpack.c.h.b16 %v2261
        %v2668 = vunpack.c.l.b16 %v2262
        %v2669 = vunpack.c.h.b16 %v2262
        %v2670 = vunpack.c.l.b16 %v2263
        %v2671 = vunpack.c.h.b16 %v2263
        %v2672 = vunpack.c.l.b16 %v2264
        %v2673 = vunpack.c.h.b16 %v2264
        %v2674 = vunpack.c.l.b16 %v2265
        %v2675 = vunpack.c.h.b16 %v2265
        %v2676 = vunpack.c.l.b16 %v2266
        %v2677 = vunpack.c.h.b16 %v2266
        %v2678 = vunpack.c.l.b16 %v2267
        %v2679 = vunpack.c.h.b16 %v2267
        %v2680 = vunpack.c.l.b16 %v2268
        %v2681 = vunpack.c.h.b16 %v2268
        %v2682 = vunpack.c.l.b16 %v2269
        %v2683 = vunpack.c.h.b16 %v2269
        %v2684 = vunpack.c.l.b16 %v2270
        %v2685 = vunpack.c.h.b16 %v2270
        %v2686 = vunpack.c.l.b16 %v2271
        %v2687 = vunpack.c.h.b16 %v2271
        %v2688 = vunpack.c.l.b16 %v2272
        %v2689 = vunpack.c.h.b16 %v2272
        %v2690 = vunpack.c.l.b16 %v2273
        %v2691 = vunpack.c.h.b16 %v2273
        %v2692 = vunpack.c.l.b16 %v2274
        %v2693 = vunpack.c.h.b16 %v2274
        %v2694 = vunpack.c.l.b16 %v2275
        %v2695 = vunpack.c.h.b16 %v2275
        %v2696 = vunpack.c.l.b16 %v2276
        %v2697 = vunpack.c.h.b16 %v2276
        %v2698 = vunpack.c.l.b16 %v2277
        %v2699 = vunpack.c.h.b16 %v2277
        %v2700 = vunpack.c.l.b16 %v2278
        %v2701 = vunpack.c.h.b16 %v2278
        %v2702 = vunpack.c.l.b16 %v2279
        %v2703 = vunpack.c.h.b16 %v2279
        %v2704 = vunpack.c.l.b16 %v2280
        %v2705 = vunpack.c.h.b16 %v2280
        %v2706 = vunpack.c.l.b16 %v2281
        %v2707 = vunpack.c.h.b16 %v2281
        %v2708 = vpack.c.b16 %v2460, %v2452
        %v2709 = vpack.c.b16 %v2461, %v2453
        %v2710 = vpack.c.b16 %v2462, %v2454
        %v2711 = vpack.c.b16 %v2463, %v2455
        %v2712 = vpack.c.b16 %v2464, %v2456
        %v2713 = vpack.c.b16 %v2465, %v2457
        %v2714 = vpack.c.b16 %v2466, %v2458
        %v2715 = vpack.c.b16 %v2467, %v2459
        %v2716 = vpack.c.b16 %v2476, %v2468
        %v2717 = vpack.c.b16 %v2477, %v2469
        %v2718 = vpack.c.b16 %v2478, %v2470
        %v2719 = vpack.c.b16 %v2479, %v2471
        %v2720 = vpack.c.b16 %v2480, %v2472
        %v2721 = vpack.c.b16 %v2481, %v2473
        %v2722 = vpack.c.b16 %v2482, %v2474
        %v2723 = vpack.c.b16 %v2483, %v2475
        %v2724 = vpack.c.b16 %v2492, %v2484
        %v2725 = vpack.c.b16 %v2493, %v2485
        %v2726 = vpack.c.b16 %v2494, %v2486
        %v2727 = vpack.c.b16 %v2495, %v2487
        %v2728 = vpack.c.b16 %v2496, %v2488
        %v2729 = vpack.c.b16 %v2497, %v2489
        %v2730 = vpack.c.b16 %v2498, %v2490
        %v2731 = vpack.c.b16 %v2499, %v2491
        %v2732 = vpack.c.b16 %v2508, %v2500
        %v2733 = vpack.c.b16 %v2509, %v2501
        %v2734 = vpack.c.b16 %v2510, %v2502
        %v2735 = vpack.c.b16 %v2511, %v2503
        %v2736 = vpack.c.b16 %v2512, %v2504
        %v2737 = vpack.c.b16 %v2513, %v2505
        %v2738 = vpack.c.b16 %v2514, %v2506
        %v2739 = vpack.c.b16 %v2515, %v2507
        %v2740 = vpack.c.b16 %v2524, %v2516
        %v2741 = vpack.c.b16 %v2525, %v2517
        %v2742 = vpack.c.b16 %v2526, %v2518
        %v2743 = vpack.c.b16 %v2527, %v2519
        %v2744 = vpack.c.b16 %v2528, %v2520
        %v2745 = vpack.c.b16 %v2529, %v2521
        %v2746 = vpack.c.b16 %v2530, %v2522
        %v2747 = vpack.c.b16 %v2531, %v2523
        %v2748 = vpack.c.b16 %v2540, %v2532
        %v2749 = vpack.c.b16 %v2541, %v2533
        %v2750 = vpack.c.b16 %v2542, %v2534
        %v2751 = vpack.c.b16 %v2543, %v2535
        %v2752 = vpack.c.b16 %v2544, %v2536
        %v2753 = vpack.c.b16 %v2545, %v2537
        %v2754 = vpack.c.b16 %v2546, %v2538
        %v2755 = vpack.c.b16 %v2547, %v2539
        %v2756 = vpack.c.b16 %v2556, %v2548
        %v2757 = vpack.c.b16 %v2557, %v2549
        %v2758 = vpack.c.b16 %v2558, %v2550
        %v2759 = vpack.c.b16 %v2559, %v2551
        %v2760 = vpack.c.b16 %v2560, %v2552
        %v2761 = vpack.c.b16 %v2561, %v2553
        %v2762 = vpack.c.b16 %v2562, %v2554
        %v2763 = vpack.c.b16 %v2563, %v2555
        %v2764 = vpack.c.b16 %v2572, %v2564
        %v2765 = vpack.c.b16 %v2573, %v2565
        %v2766 = vpack.c.b16 %v2574, %v2566
        %v2767 = vpack.c.b16 %v2575, %v2567
        %v2768 = vpack.c.b16 %v2576, %v2568
        %v2769 = vpack.c.b16 %v2577, %v2569
        %v2770 = vpack.c.b16 %v2578, %v2570
        %v2771 = vpack.c.b16 %v2579, %v2571
        %v2772 = vpack.c.b16 %v2588, %v2580
        %v2773 = vpack.c.b16 %v2589, %v2581
        %v2774 = vpack.c.b16 %v2590, %v2582
        %v2775 = vpack.c.b16 %v2591, %v2583
        %v2776 = vpack.c.b16 %v2592, %v2584
        %v2777 = vpack.c.b16 %v2593, %v2585
        %v2778 = vpack.c.b16 %v2594, %v2586
        %v2779 = vpack.c.b16 %v2595, %v2587
        %v2780 = vpack.c.b16 %v2604, %v2596
        %v2781 = vpack.c.b16 %v2605, %v2597
        %v2782 = vpack.c.b16 %v2606, %v2598
        %v2783 = vpack.c.b16 %v2607, %v2599
        %v2784 = vpack.c.b16 %v2608, %v2600
        %v2785 = vpack.c.b16 %v2609, %v2601
        %v2786 = vpack.c.b16 %v2610, %v2602
        %v2787 = vpack.c.b16 %v2611, %v2603
        %v2788 = vpack.c.b16 %v2620, %v2612
        %v2789 = vpack.c.b16 %v2621, %v2613
        %v2790 = vpack.c.b16 %v2622, %v2614
        %v2791 = vpack.c.b16 %v2623, %v2615
        %v2792 = vpack.c.b16 %v2624, %v2616
        %v2793 = vpack.c.b16 %v2625, %v2617
        %v2794 = vpack.c.b16 %v2626, %v2618
        %v2795 = vpack.c.b16 %v2627, %v2619
        %v2796 = vpack.c.b16 %v2636, %v2628
        %v2797 = vpack.c.b16 %v2637, %v2629
        %v2798 = vpack.c.b16 %v2638, %v2630
        %v2799 = vpack.c.b16 %v2639, %v2631
        %v2800 = vpack.c.b16 %v2640, %v2632
        %v2801 = vpack.c.b16 %v2641, %v2633
        %v2802 = vpack.c.b16 %v2642, %v2634
        %v2803 = vpack.c.b16 %v2643, %v2635
        %v2804 = vpack.c.b16 %v2652, %v2644
        %v2805 = vpack.c.b16 %v2653, %v2645
        %v2806 = vpack.c.b16 %v2654, %v2646
        %v2807 = vpack.c.b16 %v2655, %v2647
        %v2808 = vpack.c.b16 %v2656, %v2648
        %v2809 = vpack.c.b16 %v2657, %v2649
        %v2810 = vpack.c.b16 %v2658, %v2650
        %v2811 = vpack.c.b16 %v2659, %v2651
        %v2812 = vpack.c.b16 %v2668, %v2660
        %v2813 = vpack.c.b16 %v2669, %v2661
        %v2814 = vpack.c.b16 %v2670, %v2662
        %v2815 = vpack.c.b16 %v2671, %v2663
        %v2816 = vpack.c.b16 %v2672, %v2664
        %v2817 = vpack.c.b16 %v2673, %v2665
        %v2818 = vpack.c.b16 %v2674, %v2666
        %v2819 = vpack.c.b16 %v2675, %v2667
        %v2820 = vpack.c.b16 %v2684, %v2676
        %v2821 = vpack.c.b16 %v2685, %v2677
        %v2822 = vpack.c.b16 %v2686, %v2678
        %v2823 = vpack.c.b16 %v2687, %v2679
        %v2824 = vpack.c.b16 %v2688, %v2680
        %v2825 = vpack.c.b16 %v2689, %v2681
        %v2826 = vpack.c.b16 %v2690, %v2682
        %v2827 = vpack.c.b16 %v2691, %v2683
        %v2828 = vpack.c.b16 %v2700, %v2692
        %v2829 = vpack.c.b16 %v2701, %v2693
        %v2830 = vpack.c.b16 %v2702, %v2694
        %v2831 = vpack.c.b16 %v2703, %v2695
        %v2832 = vpack.c.b16 %v2704, %v2696
        %v2833 = vpack.c.b16 %v2705, %v2697
        %v2834 = vpack.c.b16 %v2706, %v2698
        %v2835 = vpack.c.b16 %v2707, %v2699
        %2964 = vmatprep.subr.bf16.mxu0 %v2709
        %2965 = vmatpush1.bf16.msra.mxu0 %v2708
        %2966 = vmatprep.subr.bf16.mxu0 %v2717
        %2967 = vmatpush1.bf16.msra.mxu0 %v2716
        %2968 = vmatprep.subr.bf16.mxu0 %v2725
        %2969 = vmatpush1.bf16.msra.mxu0 %v2724
        %2970 = vmatprep.subr.bf16.mxu0 %v2733
        %2971 = vmatpush1.bf16.msra.mxu0 %v2732
        %2972 = vmatprep.subr.bf16.mxu0 %v2741
        %2973 = vmatpush1.bf16.msra.mxu0 %v2740
        %2974 = vmatprep.subr.bf16.mxu0 %v2749
        %2975 = vmatpush1.bf16.msra.mxu0 %v2748
        %2976 = vmatprep.subr.bf16.mxu0 %v2757
        %2977 = vmatpush1.bf16.msra.mxu0 %v2756
        %2978 = vmatprep.subr.bf16.mxu0 %v2765
        %2979 = vmatpush1.bf16.msra.mxu0 %v2764
        %2980 = vmatprep.subr.bf16.mxu0 %v2773
        %2981 = vmatpush1.bf16.msra.mxu0 %v2772
        %2982 = vmatprep.subr.bf16.mxu0 %v2781
        %2983 = vmatpush1.bf16.msra.mxu0 %v2780
        %2984 = vmatprep.subr.bf16.mxu0 %v2789
        %2985 = vmatpush1.bf16.msra.mxu0 %v2788
        %2986 = vmatprep.subr.bf16.mxu0 %v2797
        %2987 = vmatpush1.bf16.msra.mxu0 %v2796
        %2988 = vmatprep.subr.bf16.mxu0 %v2805
        %2989 = vmatpush1.bf16.msra.mxu0 %v2804
        %2990 = vmatprep.subr.bf16.mxu0 %v2813
        %2991 = vmatpush1.bf16.msra.mxu0 %v2812
        %2992 = vmatprep.subr.bf16.mxu0 %v2821
        %2993 = vmatpush1.bf16.msra.mxu0 %v2820
        %2994 = vmatprep.subr.bf16.mxu0 %v2829
        %2995 = vmatpush1.bf16.msra.mxu0 %v2828
        %2996 = vmatprep.mubr.bf16.mxu0 %v2123
        %2997 = vmatmul.mubr.bf16.gmra.mrb[0].mxu0 %v2122
        %v2998 = vpop.f32.mrb[0].mxu0
        %v2999 = vadd.f32 %v2287, %v2998
        %v3000 = vpop.f32.mrb[0].mxu0
        %v3001 = vadd.f32 %v2291, %v3000
        %v3002 = vpop.f32.mrb[0].mxu0
        %v3003 = vadd.f32 %v2287, %v3002
        %v3004 = vpop.f32.mrb[0].mxu0
        %v3005 = vadd.f32 %v2291, %v3004
        %3006 = vmatprep.mubr.bf16.mxu0 %v2125
        %3007 = vmatmul.mubr.bf16.gmra.mrb[0].mxu0 %v2124
        %v3008 = vpop.f32.mrb[0].mxu0
        %v3009 = vadd.f32 %v2287, %v3008
        %v3010 = vpop.f32.mrb[0].mxu0
        %v3011 = vadd.f32 %v2291, %v3010
        %v3012 = vpop.f32.mrb[0].mxu0
        %v3013 = vadd.f32 %v2287, %v3012
        %v3014 = vpop.f32.mrb[0].mxu0
        %v3015 = vadd.f32 %v2291, %v3014
        %3016 = vmatprep.mubr.bf16.mxu0 %v2127
        %3017 = vmatmul.mubr.bf16.gmra.mrb[0].mxu0 %v2126
        %v3018 = vpop.f32.mrb[0].mxu0
        %v3019 = vadd.f32 %v2287, %v3018
        %v3020 = vpop.f32.mrb[0].mxu0
        %v3021 = vadd.f32 %v2291, %v3020
        %v3022 = vpop.f32.mrb[0].mxu0
        %v3023 = vadd.f32 %v2287, %v3022
        %v3024 = vpop.f32.mrb[0].mxu0
        %v3025 = vadd.f32 %v2291, %v3024
        %3026 = vmatprep.mubr.bf16.mxu0 %v2129
        %3027 = vmatmul.mubr.bf16.gmra.mrb[0].mxu0 %v2128
        %v3028 = vpop.f32.mrb[0].mxu0
        %v3029 = vadd.f32 %v2287, %v3028
        %v3030 = vpop.f32.mrb[0].mxu0
        %v3031 = vadd.f32 %v2291, %v3030
        %v3032 = vpop.f32.mrb[0].mxu0
        %v3033 = vadd.f32 %v2287, %v3032
        %v3034 = vpop.f32.mrb[0].mxu0
        %v3035 = vadd.f32 %v2291, %v3034
        %3036 = vmatprep.mubr.bf16.mxu0 %v2131
        %3037 = vmatmul.mubr.bf16.gmra.mrb[0].mxu0 %v2130
        %v3038 = vpop.f32.mrb[0].mxu0
        %v3039 = vadd.f32 %v2287, %v3038
        %v3040 = vpop.f32.mrb[0].mxu0
        %v3041 = vadd.f32 %v2291, %v3040
        %v3042 = vpop.f32.mrb[0].mxu0
        %v3043 = vadd.f32 %v2287, %v3042
        %v3044 = vpop.f32.mrb[0].mxu0
        %v3045 = vadd.f32 %v2291, %v3044
        %3046 = vmatprep.mubr.bf16.mxu0 %v2133
        %3047 = vmatmul.mubr.bf16.gmra.mrb[0].mxu0 %v2132
        %v3048 = vpop.f32.mrb[0].mxu0
        %v3049 = vadd.f32 %v2287, %v3048
        %v3050 = vpop.f32.mrb[0].mxu0
        %v3051 = vadd.f32 %v2291, %v3050
        %v3052 = vpop.f32.mrb[0].mxu0
        %v3053 = vadd.f32 %v2287, %v3052
        %v3054 = vpop.f32.mrb[0].mxu0
        %v3055 = vadd.f32 %v2291, %v3054
        %3056 = vmatprep.mubr.bf16.mxu0 %v2135
        %3057 = vmatmul.mubr.bf16.gmra.mrb[0].mxu0 %v2134
        %v3058 = vpop.f32.mrb[0].mxu0
        %v3059 = vadd.f32 %v2287, %v3058
        %v3060 = vpop.f32.mrb[0].mxu0
        %v3061 = vadd.f32 %v2291, %v3060
        %v3062 = vpop.f32.mrb[0].mxu0
        %v3063 = vadd.f32 %v2287, %v3062
        %v3064 = vpop.f32.mrb[0].mxu0
        %v3065 = vadd.f32 %v2291, %v3064
        %3066 = vmatprep.mubr.bf16.mxu0 %v2137
        %3067 = vmatmul.mubr.bf16.gmra.mrb[0].mxu0 %v2136
        %v3068 = vpop.f32.mrb[0].mxu0
        %v3069 = vadd.f32 %v2287, %v3068
        %v3070 = vpop.f32.mrb[0].mxu0
        %v3071 = vadd.f32 %v2291, %v3070
        %v3072 = vpop.f32.mrb[0].mxu0
        %v3073 = vadd.f32 %v2287, %v3072
        %v3074 = vpop.f32.mrb[0].mxu0
        %v3075 = vadd.f32 %v2291, %v3074
        %3076 = vmatprep.mubr.bf16.mxu0 %v2139
        %3077 = vmatmul.mubr.bf16.gmra.mrb[0].mxu0 %v2138
        %v3078 = vpop.f32.mrb[0].mxu0
        %v3079 = vadd.f32 %v2287, %v3078
        %v3080 = vpop.f32.mrb[0].mxu0
        %v3081 = vadd.f32 %v2291, %v3080
        %v3082 = vpop.f32.mrb[0].mxu0
        %v3083 = vadd.f32 %v2287, %v3082
        %v3084 = vpop.f32.mrb[0].mxu0
        %v3085 = vadd.f32 %v2291, %v3084
        %3086 = vmatprep.mubr.bf16.mxu0 %v2141
        %3087 = vmatmul.mubr.bf16.gmra.mrb[0].mxu0 %v2140
        %v3088 = vpop.f32.mrb[0].mxu0
        %v3089 = vadd.f32 %v2287, %v3088
        %v3090 = vpop.f32.mrb[0].mxu0
        %v3091 = vadd.f32 %v2291, %v3090
        %v3092 = vpop.f32.mrb[0].mxu0
        %v3093 = vadd.f32 %v2287, %v3092
        %v3094 = vpop.f32.mrb[0].mxu0
        %v3095 = vadd.f32 %v2291, %v3094
        %3096 = vmatprep.mubr.bf16.mxu0 %v2143
        %3097 = vmatmul.mubr.bf16.gmra.mrb[0].mxu0 %v2142
        %v3098 = vpop.f32.mrb[0].mxu0
        %v3099 = vadd.f32 %v2287, %v3098
        %v3100 = vpop.f32.mrb[0].mxu0
        %v3101 = vadd.f32 %v2291, %v3100
        %v3102 = vpop.f32.mrb[0].mxu0
        %v3103 = vadd.f32 %v2287, %v3102
        %v3104 = vpop.f32.mrb[0].mxu0
        %v3105 = vadd.f32 %v2291, %v3104
        %3106 = vmatprep.mubr.bf16.mxu0 %v2145
        %3107 = vmatmul.mubr.bf16.gmra.mrb[0].mxu0 %v2144
        %v3108 = vpop.f32.mrb[0].mxu0
        %v3109 = vadd.f32 %v2287, %v3108
        %v3110 = vpop.f32.mrb[0].mxu0
        %v3111 = vadd.f32 %v2291, %v3110
        %v3112 = vpop.f32.mrb[0].mxu0
        %v3113 = vadd.f32 %v2287, %v3112
        %v3114 = vpop.f32.mrb[0].mxu0
        %v3115 = vadd.f32 %v2291, %v3114
        %3116 = vmatprep.mubr.bf16.mxu0 %v2147
        %3117 = vmatmul.mubr.bf16.gmra.mrb[0].mxu0 %v2146
        %v3118 = vpop.f32.mrb[0].mxu0
        %v3119 = vadd.f32 %v2287, %v3118
        %v3120 = vpop.f32.mrb[0].mxu0
        %v3121 = vadd.f32 %v2291, %v3120
        %v3122 = vpop.f32.mrb[0].mxu0
        %v3123 = vadd.f32 %v2287, %v3122
        %v3124 = vpop.f32.mrb[0].mxu0
        %v3125 = vadd.f32 %v2291, %v3124
        %3126 = vmatprep.mubr.bf16.mxu0 %v2149
        %3127 = vmatmul.mubr.bf16.gmra.mrb[0].mxu0 %v2148
        %v3128 = vpop.f32.mrb[0].mxu0
        %v3129 = vadd.f32 %v2287, %v3128
        %v3130 = vpop.f32.mrb[0].mxu0
        %v3131 = vadd.f32 %v2291, %v3130
        %v3132 = vpop.f32.mrb[0].mxu0
        %v3133 = vadd.f32 %v2287, %v3132
        %v3134 = vpop.f32.mrb[0].mxu0
        %v3135 = vadd.f32 %v2291, %v3134
        %3136 = vmatprep.mubr.bf16.mxu0 %v2151
        %3137 = vmatmul.mubr.bf16.gmra.mrb[0].mxu0 %v2150
        %v3138 = vpop.f32.mrb[0].mxu0
        %v3139 = vadd.f32 %v2287, %v3138
        %v3140 = vpop.f32.mrb[0].mxu0
        %v3141 = vadd.f32 %v2291, %v3140
        %v3142 = vpop.f32.mrb[0].mxu0
        %v3143 = vadd.f32 %v2287, %v3142
        %v3144 = vpop.f32.mrb[0].mxu0
        %v3145 = vadd.f32 %v2291, %v3144
        %3146 = vmatprep.mubr.bf16.mxu0 %v2153
        %3147 = vmatmul.mubr.bf16.gmra.mrb[0].mxu0 %v2152
        %v3148 = vpop.f32.mrb[0].mxu0
        %v3149 = vadd.f32 %v2287, %v3148
        %v3150 = vpop.f32.mrb[0].mxu0
        %v3151 = vadd.f32 %v2291, %v3150
        %v3152 = vpop.f32.mrb[0].mxu0
        %v3153 = vadd.f32 %v2287, %v3152
        %v3154 = vpop.f32.mrb[0].mxu0
        %v3155 = vadd.f32 %v2291, %v3154
        %3156 = vdwg.mxu0
        %3157 = vmatprep.subr.bf16.mxu0 %v2711
        %3158 = vmatpush1.bf16.msra.mxu0 %v2710
        %3159 = vmatprep.subr.bf16.mxu0 %v2719
        %3160 = vmatpush1.bf16.msra.mxu0 %v2718
        %3161 = vmatprep.subr.bf16.mxu0 %v2727
        %3162 = vmatpush1.bf16.msra.mxu0 %v2726
        %3163 = vmatprep.subr.bf16.mxu0 %v2735
        %3164 = vmatpush1.bf16.msra.mxu0 %v2734
        %3165 = vmatprep.subr.bf16.mxu0 %v2743
        %3166 = vmatpush1.bf16.msra.mxu0 %v2742
        %3167 = vmatprep.subr.bf16.mxu0 %v2751
        %3168 = vmatpush1.bf16.msra.mxu0 %v2750
        %3169 = vmatprep.subr.bf16.mxu0 %v2759
        %3170 = vmatpush1.bf16.msra.mxu0 %v2758
        %3171 = vmatprep.subr.bf16.mxu0 %v2767
        %3172 = vmatpush1.bf16.msra.mxu0 %v2766
        %3173 = vmatprep.subr.bf16.mxu0 %v2775
        %3174 = vmatpush1.bf16.msra.mxu0 %v2774
        %3175 = vmatprep.subr.bf16.mxu0 %v2783
        %3176 = vmatpush1.bf16.msra.mxu0 %v2782
        %3177 = vmatprep.subr.bf16.mxu0 %v2791
        %3178 = vmatpush1.bf16.msra.mxu0 %v2790
        %3179 = vmatprep.subr.bf16.mxu0 %v2799
        %3180 = vmatpush1.bf16.msra.mxu0 %v2798
        %3181 = vmatprep.subr.bf16.mxu0 %v2807
        %3182 = vmatpush1.bf16.msra.mxu0 %v2806
        %3183 = vmatprep.subr.bf16.mxu0 %v2815
        %3184 = vmatpush1.bf16.msra.mxu0 %v2814
        %3185 = vmatprep.subr.bf16.mxu0 %v2823
        %3186 = vmatpush1.bf16.msra.mxu0 %v2822
        %3187 = vmatprep.subr.bf16.mxu0 %v2831
        %3188 = vmatpush1.bf16.msra.mxu0 %v2830
        %3189 = vmatprep.mubr.bf16.mxu0 %v2123
        %3190 = vmatmul.mubr.bf16.gmra.mrb[0].mxu0 %v2122
        %v3191 = vpop.f32.mrb[0].mxu0
        %v3192 = vadd.f32 %v2295, %v3191
        %v3193 = vpop.f32.mrb[0].mxu0
        %v3194 = vadd.f32 %v2299, %v3193
        %v3195 = vpop.f32.mrb[0].mxu0
        %v3196 = vadd.f32 %v2295, %v3195
        %v3197 = vpop.f32.mrb[0].mxu0
        %v3198 = vadd.f32 %v2299, %v3197
        %3199 = vmatprep.mubr.bf16.mxu0 %v2125
        %3200 = vmatmul.mubr.bf16.gmra.mrb[0].mxu0 %v2124
        %v3201 = vpop.f32.mrb[0].mxu0
        %v3202 = vadd.f32 %v2295, %v3201
        %v3203 = vpop.f32.mrb[0].mxu0
        %v3204 = vadd.f32 %v2299, %v3203
        %v3205 = vpop.f32.mrb[0].mxu0
        %v3206 = vadd.f32 %v2295, %v3205
        %v3207 = vpop.f32.mrb[0].mxu0
        %v3208 = vadd.f32 %v2299, %v3207
        %3209 = vmatprep.mubr.bf16.mxu0 %v2127
        %3210 = vmatmul.mubr.bf16.gmra.mrb[0].mxu0 %v2126
        %v3211 = vpop.f32.mrb[0].mxu0
        %v3212 = vadd.f32 %v2295, %v3211
        %v3213 = vpop.f32.mrb[0].mxu0
        %v3214 = vadd.f32 %v2299, %v3213
        %v3215 = vpop.f32.mrb[0].mxu0
        %v3216 = vadd.f32 %v2295, %v3215
        %v3217 = vpop.f32.mrb[0].mxu0
        %v3218 = vadd.f32 %v2299, %v3217
        %3219 = vmatprep.mubr.bf16.mxu0 %v2129
        %3220 = vmatmul.mubr.bf16.gmra.mrb[0].mxu0 %v2128
        %v3221 = vpop.f32.mrb[0].mxu0
        %v3222 = vadd.f32 %v2295, %v3221
        %v3223 = vpop.f32.mrb[0].mxu0
        %v3224 = vadd.f32 %v2299, %v3223
        %v3225 = vpop.f32.mrb[0].mxu0
        %v3226 = vadd.f32 %v2295, %v3225
        %v3227 = vpop.f32.mrb[0].mxu0
        %v3228 = vadd.f32 %v2299, %v3227
        %3229 = vmatprep.mubr.bf16.mxu0 %v2131
        %3230 = vmatmul.mubr.bf16.gmra.mrb[0].mxu0 %v2130
        %v3231 = vpop.f32.mrb[0].mxu0
        %v3232 = vadd.f32 %v2295, %v3231
        %v3233 = vpop.f32.mrb[0].mxu0
        %v3234 = vadd.f32 %v2299, %v3233
        %v3235 = vpop.f32.mrb[0].mxu0
        %v3236 = vadd.f32 %v2295, %v3235
        %v3237 = vpop.f32.mrb[0].mxu0
        %v3238 = vadd.f32 %v2299, %v3237
        %3239 = vmatprep.mubr.bf16.mxu0 %v2133
        %3240 = vmatmul.mubr.bf16.gmra.mrb[0].mxu0 %v2132
        %v3241 = vpop.f32.mrb[0].mxu0
        %v3242 = vadd.f32 %v2295, %v3241
        %v3243 = vpop.f32.mrb[0].mxu0
        %v3244 = vadd.f32 %v2299, %v3243
        %v3245 = vpop.f32.mrb[0].mxu0
        %v3246 = vadd.f32 %v2295, %v3245
        %v3247 = vpop.f32.mrb[0].mxu0
        %v3248 = vadd.f32 %v2299, %v3247
        %3249 = vmatprep.mubr.bf16.mxu0 %v2135
        %3250 = vmatmul.mubr.bf16.gmra.mrb[0].mxu0 %v2134
        %v3251 = vpop.f32.mrb[0].mxu0
        %v3252 = vadd.f32 %v2295, %v3251
        %v3253 = vpop.f32.mrb[0].mxu0
        %v3254 = vadd.f32 %v2299, %v3253
        %v3255 = vpop.f32.mrb[0].mxu0
        %v3256 = vadd.f32 %v2295, %v3255
        %v3257 = vpop.f32.mrb[0].mxu0
        %v3258 = vadd.f32 %v2299, %v3257
        %3259 = vmatprep.mubr.bf16.mxu0 %v2137
        %3260 = vmatmul.mubr.bf16.gmra.mrb[0].mxu0 %v2136
        %v3261 = vpop.f32.mrb[0].mxu0
        %v3262 = vadd.f32 %v2295, %v3261
        %v3263 = vpop.f32.mrb[0].mxu0
        %v3264 = vadd.f32 %v2299, %v3263
        %v3265 = vpop.f32.mrb[0].mxu0
        %v3266 = vadd.f32 %v2295, %v3265
        %v3267 = vpop.f32.mrb[0].mxu0
        %v3268 = vadd.f32 %v2299, %v3267
        %3269 = vmatprep.mubr.bf16.mxu0 %v2139
        %3270 = vmatmul.mubr.bf16.gmra.mrb[0].mxu0 %v2138
        %v3271 = vpop.f32.mrb[0].mxu0
        %v3272 = vadd.f32 %v2295, %v3271
        %v3273 = vpop.f32.mrb[0].mxu0
        %v3274 = vadd.f32 %v2299, %v3273
        %v3275 = vpop.f32.mrb[0].mxu0
        %v3276 = vadd.f32 %v2295, %v3275
        %v3277 = vpop.f32.mrb[0].mxu0
        %v3278 = vadd.f32 %v2299, %v3277
        %3279 = vmatprep.mubr.bf16.mxu0 %v2141
        %3280 = vmatmul.mubr.bf16.gmra.mrb[0].mxu0 %v2140
        %v3281 = vpop.f32.mrb[0].mxu0
        %v3282 = vadd.f32 %v2295, %v3281
        %v3283 = vpop.f32.mrb[0].mxu0
        %v3284 = vadd.f32 %v2299, %v3283
        %v3285 = vpop.f32.mrb[0].mxu0
        %v3286 = vadd.f32 %v2295, %v3285
        %v3287 = vpop.f32.mrb[0].mxu0
        %v3288 = vadd.f32 %v2299, %v3287
        %3289 = vmatprep.mubr.bf16.mxu0 %v2143
        %3290 = vmatmul.mubr.bf16.gmra.mrb[0].mxu0 %v2142
        %v3291 = vpop.f32.mrb[0].mxu0
        %v3292 = vadd.f32 %v2295, %v3291
        %v3293 = vpop.f32.mrb[0].mxu0
        %v3294 = vadd.f32 %v2299, %v3293
        %v3295 = vpop.f32.mrb[0].mxu0
        %v3296 = vadd.f32 %v2295, %v3295
        %v3297 = vpop.f32.mrb[0].mxu0
        %v3298 = vadd.f32 %v2299, %v3297
        %3299 = vmatprep.mubr.bf16.mxu0 %v2145
        %3300 = vmatmul.mubr.bf16.gmra.mrb[0].mxu0 %v2144
        %v3301 = vpop.f32.mrb[0].mxu0
        %v3302 = vadd.f32 %v2295, %v3301
        %v3303 = vpop.f32.mrb[0].mxu0
        %v3304 = vadd.f32 %v2299, %v3303
        %v3305 = vpop.f32.mrb[0].mxu0
        %v3306 = vadd.f32 %v2295, %v3305
        %v3307 = vpop.f32.mrb[0].mxu0
        %v3308 = vadd.f32 %v2299, %v3307
        %3309 = vmatprep.mubr.bf16.mxu0 %v2147
        %3310 = vmatmul.mubr.bf16.gmra.mrb[0].mxu0 %v2146
        %v3311 = vpop.f32.mrb[0].mxu0
        %v3312 = vadd.f32 %v2295, %v3311
        %v3313 = vpop.f32.mrb[0].mxu0
        %v3314 = vadd.f32 %v2299, %v3313
        %v3315 = vpop.f32.mrb[0].mxu0
        %v3316 = vadd.f32 %v2295, %v3315
        %v3317 = vpop.f32.mrb[0].mxu0
        %v3318 = vadd.f32 %v2299, %v3317
        %3319 = vmatprep.mubr.bf16.mxu0 %v2149
        %3320 = vmatmul.mubr.bf16.gmra.mrb[0].mxu0 %v2148
        %v3321 = vpop.f32.mrb[0].mxu0
        %v3322 = vadd.f32 %v2295, %v3321
        %v3323 = vpop.f32.mrb[0].mxu0
        %v3324 = vadd.f32 %v2299, %v3323
        %v3325 = vpop.f32.mrb[0].mxu0
        %v3326 = vadd.f32 %v2295, %v3325
        %v3327 = vpop.f32.mrb[0].mxu0
        %v3328 = vadd.f32 %v2299, %v3327
        %3329 = vmatprep.mubr.bf16.mxu0 %v2151
        %3330 = vmatmul.mubr.bf16.gmra.mrb[0].mxu0 %v2150
        %v3331 = vpop.f32.mrb[0].mxu0
        %v3332 = vadd.f32 %v2295, %v3331
        %v3333 = vpop.f32.mrb[0].mxu0
        %v3334 = vadd.f32 %v2299, %v3333
        %v3335 = vpop.f32.mrb[0].mxu0
        %v3336 = vadd.f32 %v2295, %v3335
        %v3337 = vpop.f32.mrb[0].mxu0
        %v3338 = vadd.f32 %v2299, %v3337
        %3339 = vmatprep.mubr.bf16.mxu0 %v2153
        %3340 = vmatmul.mubr.bf16.gmra.mrb[0].mxu0 %v2152
        %v3341 = vpop.f32.mrb[0].mxu0
        %v3342 = vadd.f32 %v2295, %v3341
        %v3343 = vpop.f32.mrb[0].mxu0
        %v3344 = vadd.f32 %v2299, %v3343
        %v3345 = vpop.f32.mrb[0].mxu0
        %v3346 = vadd.f32 %v2295, %v3345
        %v3347 = vpop.f32.mrb[0].mxu0
        %v3348 = vadd.f32 %v2299, %v3347
        %3349 = vdwg.mxu0
        %3350 = vmatprep.subr.bf16.mxu0 %v2713
        %3351 = vmatpush1.bf16.msra.mxu0 %v2712
        %3352 = vmatprep.subr.bf16.mxu0 %v2721
        %3353 = vmatpush1.bf16.msra.mxu0 %v2720
        %3354 = vmatprep.subr.bf16.mxu0 %v2729
        %3355 = vmatpush1.bf16.msra.mxu0 %v2728
        %3356 = vmatprep.subr.bf16.mxu0 %v2737
        %3357 = vmatpush1.bf16.msra.mxu0 %v2736
        %3358 = vmatprep.subr.bf16.mxu0 %v2745
        %3359 = vmatpush1.bf16.msra.mxu0 %v2744
        %3360 = vmatprep.subr.bf16.mxu0 %v2753
        %3361 = vmatpush1.bf16.msra.mxu0 %v2752
        %3362 = vmatprep.subr.bf16.mxu0 %v2761
        %3363 = vmatpush1.bf16.msra.mxu0 %v2760
        %3364 = vmatprep.subr.bf16.mxu0 %v2769
        %3365 = vmatpush1.bf16.msra.mxu0 %v2768
        %3366 = vmatprep.subr.bf16.mxu0 %v2777
        %3367 = vmatpush1.bf16.msra.mxu0 %v2776
        %3368 = vmatprep.subr.bf16.mxu0 %v2785
        %3369 = vmatpush1.bf16.msra.mxu0 %v2784
        %3370 = vmatprep.subr.bf16.mxu0 %v2793
        %3371 = vmatpush1.bf16.msra.mxu0 %v2792
        %3372 = vmatprep.subr.bf16.mxu0 %v2801
        %3373 = vmatpush1.bf16.msra.mxu0 %v2800
        %3374 = vmatprep.subr.bf16.mxu0 %v2809
        %3375 = vmatpush1.bf16.msra.mxu0 %v2808
        %3376 = vmatprep.subr.bf16.mxu0 %v2817
        %3377 = vmatpush1.bf16.msra.mxu0 %v2816
        %3378 = vmatprep.subr.bf16.mxu0 %v2825
        %3379 = vmatpush1.bf16.msra.mxu0 %v2824
        %3380 = vmatprep.subr.bf16.mxu0 %v2833
        %3381 = vmatpush1.bf16.msra.mxu0 %v2832
        %3382 = vmatprep.mubr.bf16.mxu0 %v2123
        %3383 = vmatmul.mubr.bf16.gmra.mrb[0].mxu0 %v2122
        %v3384 = vpop.f32.mrb[0].mxu0
        %v3385 = vadd.f32 %v2303, %v3384
        %v3386 = vpop.f32.mrb[0].mxu0
        %v3387 = vadd.f32 %v2307, %v3386
        %v3388 = vpop.f32.mrb[0].mxu0
        %v3389 = vadd.f32 %v2303, %v3388
        %v3390 = vpop.f32.mrb[0].mxu0
        %v3391 = vadd.f32 %v2307, %v3390
        %3392 = vmatprep.mubr.bf16.mxu0 %v2125
        %3393 = vmatmul.mubr.bf16.gmra.mrb[0].mxu0 %v2124
        %v3394 = vpop.f32.mrb[0].mxu0
        %v3395 = vadd.f32 %v2303, %v3394
        %v3396 = vpop.f32.mrb[0].mxu0
        %v3397 = vadd.f32 %v2307, %v3396
        %v3398 = vpop.f32.mrb[0].mxu0
        %v3399 = vadd.f32 %v2303, %v3398
        %v3400 = vpop.f32.mrb[0].mxu0
        %v3401 = vadd.f32 %v2307, %v3400
        %3402 = vmatprep.mubr.bf16.mxu0 %v2127
        %3403 = vmatmul.mubr.bf16.gmra.mrb[0].mxu0 %v2126
        %v3404 = vpop.f32.mrb[0].mxu0
        %v3405 = vadd.f32 %v2303, %v3404
        %v3406 = vpop.f32.mrb[0].mxu0
        %v3407 = vadd.f32 %v2307, %v3406
        %v3408 = vpop.f32.mrb[0].mxu0
        %v3409 = vadd.f32 %v2303, %v3408
        %v3410 = vpop.f32.mrb[0].mxu0
        %v3411 = vadd.f32 %v2307, %v3410
        %3412 = vmatprep.mubr.bf16.mxu0 %v2129
        %3413 = vmatmul.mubr.bf16.gmra.mrb[0].mxu0 %v2128
        %v3414 = vpop.f32.mrb[0].mxu0
        %v3415 = vadd.f32 %v2303, %v3414
        %v3416 = vpop.f32.mrb[0].mxu0
        %v3417 = vadd.f32 %v2307, %v3416
        %v3418 = vpop.f32.mrb[0].mxu0
        %v3419 = vadd.f32 %v2303, %v3418
        %v3420 = vpop.f32.mrb[0].mxu0
        %v3421 = vadd.f32 %v2307, %v3420
        %3422 = vmatprep.mubr.bf16.mxu0 %v2131
        %3423 = vmatmul.mubr.bf16.gmra.mrb[0].mxu0 %v2130
        %v3424 = vpop.f32.mrb[0].mxu0
        %v3425 = vadd.f32 %v2303, %v3424
        %v3426 = vpop.f32.mrb[0].mxu0
        %v3427 = vadd.f32 %v2307, %v3426
        %v3428 = vpop.f32.mrb[0].mxu0
        %v3429 = vadd.f32 %v2303, %v3428
        %v3430 = vpop.f32.mrb[0].mxu0
        %v3431 = vadd.f32 %v2307, %v3430
        %3432 = vmatprep.mubr.bf16.mxu0 %v2133
        %3433 = vmatmul.mubr.bf16.gmra.mrb[0].mxu0 %v2132
        %v3434 = vpop.f32.mrb[0].mxu0
        %v3435 = vadd.f32 %v2303, %v3434
        %v3436 = vpop.f32.mrb[0].mxu0
        %v3437 = vadd.f32 %v2307, %v3436
        %v3438 = vpop.f32.mrb[0].mxu0
        %v3439 = vadd.f32 %v2303, %v3438
        %v3440 = vpop.f32.mrb[0].mxu0
        %v3441 = vadd.f32 %v2307, %v3440
        %3442 = vmatprep.mubr.bf16.mxu0 %v2135
        %3443 = vmatmul.mubr.bf16.gmra.mrb[0].mxu0 %v2134
        %v3444 = vpop.f32.mrb[0].mxu0
        %v3445 = vadd.f32 %v2303, %v3444
        %v3446 = vpop.f32.mrb[0].mxu0
        %v3447 = vadd.f32 %v2307, %v3446
        %v3448 = vpop.f32.mrb[0].mxu0
        %v3449 = vadd.f32 %v2303, %v3448
        %v3450 = vpop.f32.mrb[0].mxu0
        %v3451 = vadd.f32 %v2307, %v3450
        %3452 = vmatprep.mubr.bf16.mxu0 %v2137
        %3453 = vmatmul.mubr.bf16.gmra.mrb[0].mxu0 %v2136
        %v3454 = vpop.f32.mrb[0].mxu0
        %v3455 = vadd.f32 %v2303, %v3454
        %v3456 = vpop.f32.mrb[0].mxu0
        %v3457 = vadd.f32 %v2307, %v3456
        %v3458 = vpop.f32.mrb[0].mxu0
        %v3459 = vadd.f32 %v2303, %v3458
        %v3460 = vpop.f32.mrb[0].mxu0
        %v3461 = vadd.f32 %v2307, %v3460
        %3462 = vmatprep.mubr.bf16.mxu0 %v2139
        %3463 = vmatmul.mubr.bf16.gmra.mrb[0].mxu0 %v2138
        %v3464 = vpop.f32.mrb[0].mxu0
        %v3465 = vadd.f32 %v2303, %v3464
        %v3466 = vpop.f32.mrb[0].mxu0
        %v3467 = vadd.f32 %v2307, %v3466
        %v3468 = vpop.f32.mrb[0].mxu0
        %v3469 = vadd.f32 %v2303, %v3468
        %v3470 = vpop.f32.mrb[0].mxu0
        %v3471 = vadd.f32 %v2307, %v3470
        %3472 = vmatprep.mubr.bf16.mxu0 %v2141
        %3473 = vmatmul.mubr.bf16.gmra.mrb[0].mxu0 %v2140
        %v3474 = vpop.f32.mrb[0].mxu0
        %v3475 = vadd.f32 %v2303, %v3474
        %v3476 = vpop.f32.mrb[0].mxu0
        %v3477 = vadd.f32 %v2307, %v3476
        %v3478 = vpop.f32.mrb[0].mxu0
        %v3479 = vadd.f32 %v2303, %v3478
        %v3480 = vpop.f32.mrb[0].mxu0
        %v3481 = vadd.f32 %v2307, %v3480
        %3482 = vmatprep.mubr.bf16.mxu0 %v2143
        %3483 = vmatmul.mubr.bf16.gmra.mrb[0].mxu0 %v2142
        %v3484 = vpop.f32.mrb[0].mxu0
        %v3485 = vadd.f32 %v2303, %v3484
        %v3486 = vpop.f32.mrb[0].mxu0
        %v3487 = vadd.f32 %v2307, %v3486
        %v3488 = vpop.f32.mrb[0].mxu0
        %v3489 = vadd.f32 %v2303, %v3488
        %v3490 = vpop.f32.mrb[0].mxu0
        %v3491 = vadd.f32 %v2307, %v3490
        %3492 = vmatprep.mubr.bf16.mxu0 %v2145
        %3493 = vmatmul.mubr.bf16.gmra.mrb[0].mxu0 %v2144
        %v3494 = vpop.f32.mrb[0].mxu0
        %v3495 = vadd.f32 %v2303, %v3494
        %v3496 = vpop.f32.mrb[0].mxu0
        %v3497 = vadd.f32 %v2307, %v3496
        %v3498 = vpop.f32.mrb[0].mxu0
        %v3499 = vadd.f32 %v2303, %v3498
        %v3500 = vpop.f32.mrb[0].mxu0
        %v3501 = vadd.f32 %v2307, %v3500
        %3502 = vmatprep.mubr.bf16.mxu0 %v2147
        %3503 = vmatmul.mubr.bf16.gmra.mrb[0].mxu0 %v2146
        %v3504 = vpop.f32.mrb[0].mxu0
        %v3505 = vadd.f32 %v2303, %v3504
        %v3506 = vpop.f32.mrb[0].mxu0
        %v3507 = vadd.f32 %v2307, %v3506
        %v3508 = vpop.f32.mrb[0].mxu0
        %v3509 = vadd.f32 %v2303, %v3508
        %v3510 = vpop.f32.mrb[0].mxu0
        %v3511 = vadd.f32 %v2307, %v3510
        %3512 = vmatprep.mubr.bf16.mxu0 %v2149
        %3513 = vmatmul.mubr.bf16.gmra.mrb[0].mxu0 %v2148
        %v3514 = vpop.f32.mrb[0].mxu0
        %v3515 = vadd.f32 %v2303, %v3514
        %v3516 = vpop.f32.mrb[0].mxu0
        %v3517 = vadd.f32 %v2307, %v3516
        %v3518 = vpop.f32.mrb[0].mxu0
        %v3519 = vadd.f32 %v2303, %v3518
        %v3520 = vpop.f32.mrb[0].mxu0
        %v3521 = vadd.f32 %v2307, %v3520
        %3522 = vmatprep.mubr.bf16.mxu0 %v2151
        %3523 = vmatmul.mubr.bf16.gmra.mrb[0].mxu0 %v2150
        %v3524 = vpop.f32.mrb[0].mxu0
        %v3525 = vadd.f32 %v2303, %v3524
        %v3526 = vpop.f32.mrb[0].mxu0
        %v3527 = vadd.f32 %v2307, %v3526
        %v3528 = vpop.f32.mrb[0].mxu0
        %v3529 = vadd.f32 %v2303, %v3528
        %v3530 = vpop.f32.mrb[0].mxu0
        %v3531 = vadd.f32 %v2307, %v3530
        %3532 = vmatprep.mubr.bf16.mxu0 %v2153
        %3533 = vmatmul.mubr.bf16.gmra.mrb[0].mxu0 %v2152
        %v3534 = vpop.f32.mrb[0].mxu0
        %v3535 = vadd.f32 %v2303, %v3534
        %v3536 = vpop.f32.mrb[0].mxu0
        %v3537 = vadd.f32 %v2307, %v3536
        %v3538 = vpop.f32.mrb[0].mxu0
        %v3539 = vadd.f32 %v2303, %v3538
        %v3540 = vpop.f32.mrb[0].mxu0
        %v3541 = vadd.f32 %v2307, %v3540
        %3542 = vdwg.mxu0
        %3543 = vmatprep.subr.bf16.mxu0 %v2715
        %3544 = vmatpush1.bf16.msra.mxu0 %v2714
        %3545 = vmatprep.subr.bf16.mxu0 %v2723
        %3546 = vmatpush1.bf16.msra.mxu0 %v2722
        %3547 = vmatprep.subr.bf16.mxu0 %v2731
        %3548 = vmatpush1.bf16.msra.mxu0 %v2730
        %3549 = vmatprep.subr.bf16.mxu0 %v2739
        %3550 = vmatpush1.bf16.msra.mxu0 %v2738
        %3551 = vmatprep.subr.bf16.mxu0 %v2747
        %3552 = vmatpush1.bf16.msra.mxu0 %v2746
        %3553 = vmatprep.subr.bf16.mxu0 %v2755
        %3554 = vmatpush1.bf16.msra.mxu0 %v2754
        %3555 = vmatprep.subr.bf16.mxu0 %v2763
        %3556 = vmatpush1.bf16.msra.mxu0 %v2762
        %3557 = vmatprep.subr.bf16.mxu0 %v2771
        %3558 = vmatpush1.bf16.msra.mxu0 %v2770
        %3559 = vmatprep.subr.bf16.mxu0 %v2779
        %3560 = vmatpush1.bf16.msra.mxu0 %v2778
        %3561 = vmatprep.subr.bf16.mxu0 %v2787
        %3562 = vmatpush1.bf16.msra.mxu0 %v2786
        %3563 = vmatprep.subr.bf16.mxu0 %v2795
        %3564 = vmatpush1.bf16.msra.mxu0 %v2794
        %3565 = vmatprep.subr.bf16.mxu0 %v2803
        %3566 = vmatpush1.bf16.msra.mxu0 %v2802
        %3567 = vmatprep.subr.bf16.mxu0 %v2811
        %3568 = vmatpush1.bf16.msra.mxu0 %v2810
        %3569 = vmatprep.subr.bf16.mxu0 %v2819
        %3570 = vmatpush1.bf16.msra.mxu0 %v2818
        %3571 = vmatprep.subr.bf16.mxu0 %v2827
        %3572 = vmatpush1.bf16.msra.mxu0 %v2826
        %3573 = vmatprep.subr.bf16.mxu0 %v2835
        %3574 = vmatpush1.bf16.msra.mxu0 %v2834
        %3575 = vmatprep.mubr.bf16.mxu0 %v2123
        %3576 = vmatmul.mubr.bf16.gmra.mrb[0].mxu0 %v2122
        %v3577 = vpop.f32.mrb[0].mxu0
        %v3578 = vadd.f32 %v2311, %v3577
        %v3579 = vpop.f32.mrb[0].mxu0
        %v3580 = vadd.f32 %v2315, %v3579
        %v3581 = vpop.f32.mrb[0].mxu0
        %v3582 = vadd.f32 %v2311, %v3581
        %v3583 = vpop.f32.mrb[0].mxu0
        %v3584 = vadd.f32 %v2315, %v3583
        %3585 = vmatprep.mubr.bf16.mxu0 %v2125
        %3586 = vmatmul.mubr.bf16.gmra.mrb[0].mxu0 %v2124
        %v3587 = vpop.f32.mrb[0].mxu0
        %v3588 = vadd.f32 %v2311, %v3587
        %v3589 = vpop.f32.mrb[0].mxu0
        %v3590 = vadd.f32 %v2315, %v3589
        %v3591 = vpop.f32.mrb[0].mxu0
        %v3592 = vadd.f32 %v2311, %v3591
        %v3593 = vpop.f32.mrb[0].mxu0
        %v3594 = vadd.f32 %v2315, %v3593
        %3595 = vmatprep.mubr.bf16.mxu0 %v2127
        %3596 = vmatmul.mubr.bf16.gmra.mrb[0].mxu0 %v2126
        %v3597 = vpop.f32.mrb[0].mxu0
        %v3598 = vadd.f32 %v2311, %v3597
        %v3599 = vpop.f32.mrb[0].mxu0
        %v3600 = vadd.f32 %v2315, %v3599
        %v3601 = vpop.f32.mrb[0].mxu0
        %v3602 = vadd.f32 %v2311, %v3601
        %v3603 = vpop.f32.mrb[0].mxu0
        %v3604 = vadd.f32 %v2315, %v3603
        %3605 = vmatprep.mubr.bf16.mxu0 %v2129
        %3606 = vmatmul.mubr.bf16.gmra.mrb[0].mxu0 %v2128
        %v3607 = vpop.f32.mrb[0].mxu0
        %v3608 = vadd.f32 %v2311, %v3607
        %v3609 = vpop.f32.mrb[0].mxu0
        %v3610 = vadd.f32 %v2315, %v3609
        %v3611 = vpop.f32.mrb[0].mxu0
        %v3612 = vadd.f32 %v2311, %v3611
        %v3613 = vpop.f32.mrb[0].mxu0
        %v3614 = vadd.f32 %v2315, %v3613
        %3615 = vmatprep.mubr.bf16.mxu0 %v2131
        %3616 = vmatmul.mubr.bf16.gmra.mrb[0].mxu0 %v2130
        %v3617 = vpop.f32.mrb[0].mxu0
        %v3618 = vadd.f32 %v2311, %v3617
        %v3619 = vpop.f32.mrb[0].mxu0
        %v3620 = vadd.f32 %v2315, %v3619
        %v3621 = vpop.f32.mrb[0].mxu0
        %v3622 = vadd.f32 %v2311, %v3621
        %v3623 = vpop.f32.mrb[0].mxu0
        %v3624 = vadd.f32 %v2315, %v3623
        %3625 = vmatprep.mubr.bf16.mxu0 %v2133
        %3626 = vmatmul.mubr.bf16.gmra.mrb[0].mxu0 %v2132
        %v3627 = vpop.f32.mrb[0].mxu0
        %v3628 = vadd.f32 %v2311, %v3627
        %v3629 = vpop.f32.mrb[0].mxu0
        %v3630 = vadd.f32 %v2315, %v3629
        %v3631 = vpop.f32.mrb[0].mxu0
        %v3632 = vadd.f32 %v2311, %v3631
        %v3633 = vpop.f32.mrb[0].mxu0
        %v3634 = vadd.f32 %v2315, %v3633
        %3635 = vmatprep.mubr.bf16.mxu0 %v2135
        %3636 = vmatmul.mubr.bf16.gmra.mrb[0].mxu0 %v2134
        %v3637 = vpop.f32.mrb[0].mxu0
        %v3638 = vadd.f32 %v2311, %v3637
        %v3639 = vpop.f32.mrb[0].mxu0
        %v3640 = vadd.f32 %v2315, %v3639
        %v3641 = vpop.f32.mrb[0].mxu0
        %v3642 = vadd.f32 %v2311, %v3641
        %v3643 = vpop.f32.mrb[0].mxu0
        %v3644 = vadd.f32 %v2315, %v3643
        %3645 = vmatprep.mubr.bf16.mxu0 %v2137
        %3646 = vmatmul.mubr.bf16.gmra.mrb[0].mxu0 %v2136
        %v3647 = vpop.f32.mrb[0].mxu0
        %v3648 = vadd.f32 %v2311, %v3647
        %v3649 = vpop.f32.mrb[0].mxu0
        %v3650 = vadd.f32 %v2315, %v3649
        %v3651 = vpop.f32.mrb[0].mxu0
        %v3652 = vadd.f32 %v2311, %v3651
        %v3653 = vpop.f32.mrb[0].mxu0
        %v3654 = vadd.f32 %v2315, %v3653
        %3655 = vmatprep.mubr.bf16.mxu0 %v2139
        %3656 = vmatmul.mubr.bf16.gmra.mrb[0].mxu0 %v2138
        %v3657 = vpop.f32.mrb[0].mxu0
        %v3658 = vadd.f32 %v2311, %v3657
        %v3659 = vpop.f32.mrb[0].mxu0
        %v3660 = vadd.f32 %v2315, %v3659
        %v3661 = vpop.f32.mrb[0].mxu0
        %v3662 = vadd.f32 %v2311, %v3661
        %v3663 = vpop.f32.mrb[0].mxu0
        %v3664 = vadd.f32 %v2315, %v3663
        %3665 = vmatprep.mubr.bf16.mxu0 %v2141
        %3666 = vmatmul.mubr.bf16.gmra.mrb[0].mxu0 %v2140
        %v3667 = vpop.f32.mrb[0].mxu0
        %v3668 = vadd.f32 %v2311, %v3667
        %v3669 = vpop.f32.mrb[0].mxu0
        %v3670 = vadd.f32 %v2315, %v3669
        %v3671 = vpop.f32.mrb[0].mxu0
        %v3672 = vadd.f32 %v2311, %v3671
        %v3673 = vpop.f32.mrb[0].mxu0
        %v3674 = vadd.f32 %v2315, %v3673
        %3675 = vmatprep.mubr.bf16.mxu0 %v2143
        %3676 = vmatmul.mubr.bf16.gmra.mrb[0].mxu0 %v2142
        %v3677 = vpop.f32.mrb[0].mxu0
        %v3678 = vadd.f32 %v2311, %v3677
        %v3679 = vpop.f32.mrb[0].mxu0
        %v3680 = vadd.f32 %v2315, %v3679
        %v3681 = vpop.f32.mrb[0].mxu0
        %v3682 = vadd.f32 %v2311, %v3681
        %v3683 = vpop.f32.mrb[0].mxu0
        %v3684 = vadd.f32 %v2315, %v3683
        %3685 = vmatprep.mubr.bf16.mxu0 %v2145
        %3686 = vmatmul.mubr.bf16.gmra.mrb[0].mxu0 %v2144
        %v3687 = vpop.f32.mrb[0].mxu0
        %v3688 = vadd.f32 %v2311, %v3687
        %v3689 = vpop.f32.mrb[0].mxu0
        %v3690 = vadd.f32 %v2315, %v3689
        %v3691 = vpop.f32.mrb[0].mxu0
        %v3692 = vadd.f32 %v2311, %v3691
        %v3693 = vpop.f32.mrb[0].mxu0
        %v3694 = vadd.f32 %v2315, %v3693
        %3695 = vmatprep.mubr.bf16.mxu0 %v2147
        %3696 = vmatmul.mubr.bf16.gmra.mrb[0].mxu0 %v2146
        %v3697 = vpop.f32.mrb[0].mxu0
        %v3698 = vadd.f32 %v2311, %v3697
        %v3699 = vpop.f32.mrb[0].mxu0
        %v3700 = vadd.f32 %v2315, %v3699
        %v3701 = vpop.f32.mrb[0].mxu0
        %v3702 = vadd.f32 %v2311, %v3701
        %v3703 = vpop.f32.mrb[0].mxu0
        %v3704 = vadd.f32 %v2315, %v3703
        %3705 = vmatprep.mubr.bf16.mxu0 %v2149
        %3706 = vmatmul.mubr.bf16.gmra.mrb[0].mxu0 %v2148
        %v3707 = vpop.f32.mrb[0].mxu0
        %v3708 = vadd.f32 %v2311, %v3707
        %v3709 = vpop.f32.mrb[0].mxu0
        %v3710 = vadd.f32 %v2315, %v3709
        %v3711 = vpop.f32.mrb[0].mxu0
        %v3712 = vadd.f32 %v2311, %v3711
        %v3713 = vpop.f32.mrb[0].mxu0
        %v3714 = vadd.f32 %v2315, %v3713
        %3715 = vmatprep.mubr.bf16.mxu0 %v2151
        %3716 = vmatmul.mubr.bf16.gmra.mrb[0].mxu0 %v2150
        %v3717 = vpop.f32.mrb[0].mxu0
        %v3718 = vadd.f32 %v2311, %v3717
        %v3719 = vpop.f32.mrb[0].mxu0
        %v3720 = vadd.f32 %v2315, %v3719
        %v3721 = vpop.f32.mrb[0].mxu0
        %v3722 = vadd.f32 %v2311, %v3721
        %v3723 = vpop.f32.mrb[0].mxu0
        %v3724 = vadd.f32 %v2315, %v3723
        %3725 = vmatprep.mubr.bf16.mxu0 %v2153
        %3726 = vmatmul.mubr.bf16.gmra.mrb[0].mxu0 %v2152
        %v3727 = vpop.f32.mrb[0].mxu0
        %v3728 = vadd.f32 %v2311, %v3727
        %v3729 = vpop.f32.mrb[0].mxu0
        %v3730 = vadd.f32 %v2315, %v3729
        %v3731 = vpop.f32.mrb[0].mxu0
        %v3732 = vadd.f32 %v2311, %v3731
        %v3733 = vpop.f32.mrb[0].mxu0
        %v3734 = vadd.f32 %v2315, %v3733
        %3735 = vdwg.mxu0
        %v3736 = vpack.c.bf16 %v3003, %v2999
        %v3737 = vpack.c.bf16 %v3005, %v3001
        %v3738 = vpack.c.bf16 %v3196, %v3192
        %v3739 = vpack.c.bf16 %v3198, %v3194
        %v3740 = vpack.c.bf16 %v3389, %v3385
        %v3741 = vpack.c.bf16 %v3391, %v3387
        %v3742 = vpack.c.bf16 %v3582, %v3578
        %v3743 = vpack.c.bf16 %v3584, %v3580
        %v3744 = vpack.c.bf16 %v3013, %v3009
        %v3745 = vpack.c.bf16 %v3015, %v3011
        %v3746 = vpack.c.bf16 %v3206, %v3202
        %v3747 = vpack.c.bf16 %v3208, %v3204
        %v3748 = vpack.c.bf16 %v3399, %v3395
        %v3749 = vpack.c.bf16 %v3401, %v3397
        %v3750 = vpack.c.bf16 %v3592, %v3588
        %v3751 = vpack.c.bf16 %v3594, %v3590
        %v3752 = vpack.c.bf16 %v3023, %v3019
        %v3753 = vpack.c.bf16 %v3025, %v3021
        %v3754 = vpack.c.bf16 %v3216, %v3212
        %v3755 = vpack.c.bf16 %v3218, %v3214
        %v3756 = vpack.c.bf16 %v3409, %v3405
        %v3757 = vpack.c.bf16 %v3411, %v3407
        %v3758 = vpack.c.bf16 %v3602, %v3598
        %v3759 = vpack.c.bf16 %v3604, %v3600
        %v3760 = vpack.c.bf16 %v3033, %v3029
        %v3761 = vpack.c.bf16 %v3035, %v3031
        %v3762 = vpack.c.bf16 %v3226, %v3222
        %v3763 = vpack.c.bf16 %v3228, %v3224
        %v3764 = vpack.c.bf16 %v3419, %v3415
        %v3765 = vpack.c.bf16 %v3421, %v3417
        %v3766 = vpack.c.bf16 %v3612, %v3608
        %v3767 = vpack.c.bf16 %v3614, %v3610
        %v3768 = vpack.c.bf16 %v3043, %v3039
        %v3769 = vpack.c.bf16 %v3045, %v3041
        %v3770 = vpack.c.bf16 %v3236, %v3232
        %v3771 = vpack.c.bf16 %v3238, %v3234
        %v3772 = vpack.c.bf16 %v3429, %v3425
        %v3773 = vpack.c.bf16 %v3431, %v3427
        %v3774 = vpack.c.bf16 %v3622, %v3618
        %v3775 = vpack.c.bf16 %v3624, %v3620
        %v3776 = vpack.c.bf16 %v3053, %v3049
        %v3777 = vpack.c.bf16 %v3055, %v3051
        %v3778 = vpack.c.bf16 %v3246, %v3242
        %v3779 = vpack.c.bf16 %v3248, %v3244
        %v3780 = vpack.c.bf16 %v3439, %v3435
        %v3781 = vpack.c.bf16 %v3441, %v3437
        %v3782 = vpack.c.bf16 %v3632, %v3628
        %v3783 = vpack.c.bf16 %v3634, %v3630
        %v3784 = vpack.c.bf16 %v3063, %v3059
        %v3785 = vpack.c.bf16 %v3065, %v3061
        %v3786 = vpack.c.bf16 %v3256, %v3252
        %v3787 = vpack.c.bf16 %v3258, %v3254
        %v3788 = vpack.c.bf16 %v3449, %v3445
        %v3789 = vpack.c.bf16 %v3451, %v3447
        %v3790 = vpack.c.bf16 %v3642, %v3638
        %v3791 = vpack.c.bf16 %v3644, %v3640
        %v3792 = vpack.c.bf16 %v3073, %v3069
        %v3793 = vpack.c.bf16 %v3075, %v3071
        %v3794 = vpack.c.bf16 %v3266, %v3262
        %v3795 = vpack.c.bf16 %v3268, %v3264
        %v3796 = vpack.c.bf16 %v3459, %v3455
        %v3797 = vpack.c.bf16 %v3461, %v3457
        %v3798 = vpack.c.bf16 %v3652, %v3648
        %v3799 = vpack.c.bf16 %v3654, %v3650
        %v3800 = vpack.c.bf16 %v3083, %v3079
        %v3801 = vpack.c.bf16 %v3085, %v3081
        %v3802 = vpack.c.bf16 %v3276, %v3272
        %v3803 = vpack.c.bf16 %v3278, %v3274
        %v3804 = vpack.c.bf16 %v3469, %v3465
        %v3805 = vpack.c.bf16 %v3471, %v3467
        %v3806 = vpack.c.bf16 %v3662, %v3658
        %v3807 = vpack.c.bf16 %v3664, %v3660
        %v3808 = vpack.c.bf16 %v3093, %v3089
        %v3809 = vpack.c.bf16 %v3095, %v3091
        %v3810 = vpack.c.bf16 %v3286, %v3282
        %v3811 = vpack.c.bf16 %v3288, %v3284
        %v3812 = vpack.c.bf16 %v3479, %v3475
        %v3813 = vpack.c.bf16 %v3481, %v3477
        %v3814 = vpack.c.bf16 %v3672, %v3668
        %v3815 = vpack.c.bf16 %v3674, %v3670
        %v3816 = vpack.c.bf16 %v3103, %v3099
        %v3817 = vpack.c.bf16 %v3105, %v3101
        %v3818 = vpack.c.bf16 %v3296, %v3292
        %v3819 = vpack.c.bf16 %v3298, %v3294
        %v3820 = vpack.c.bf16 %v3489, %v3485
        %v3821 = vpack.c.bf16 %v3491, %v3487
        %v3822 = vpack.c.bf16 %v3682, %v3678
        %v3823 = vpack.c.bf16 %v3684, %v3680
        %v3824 = vpack.c.bf16 %v3113, %v3109
        %v3825 = vpack.c.bf16 %v3115, %v3111
        %v3826 = vpack.c.bf16 %v3306, %v3302
        %v3827 = vpack.c.bf16 %v3308, %v3304
        %v3828 = vpack.c.bf16 %v3499, %v3495
        %v3829 = vpack.c.bf16 %v3501, %v3497
        %v3830 = vpack.c.bf16 %v3692, %v3688
        %v3831 = vpack.c.bf16 %v3694, %v3690
        %v3832 = vpack.c.bf16 %v3123, %v3119
        %v3833 = vpack.c.bf16 %v3125, %v3121
        %v3834 = vpack.c.bf16 %v3316, %v3312
        %v3835 = vpack.c.bf16 %v3318, %v3314
        %v3836 = vpack.c.bf16 %v3509, %v3505
        %v3837 = vpack.c.bf16 %v3511, %v3507
        %v3838 = vpack.c.bf16 %v3702, %v3698
        %v3839 = vpack.c.bf16 %v3704, %v3700
        %v3840 = vpack.c.bf16 %v3133, %v3129
        %v3841 = vpack.c.bf16 %v3135, %v3131
        %v3842 = vpack.c.bf16 %v3326, %v3322
        %v3843 = vpack.c.bf16 %v3328, %v3324
        %v3844 = vpack.c.bf16 %v3519, %v3515
        %v3845 = vpack.c.bf16 %v3521, %v3517
        %v3846 = vpack.c.bf16 %v3712, %v3708
        %v3847 = vpack.c.bf16 %v3714, %v3710
        %v3848 = vpack.c.bf16 %v3143, %v3139
        %v3849 = vpack.c.bf16 %v3145, %v3141
        %v3850 = vpack.c.bf16 %v3336, %v3332
        %v3851 = vpack.c.bf16 %v3338, %v3334
        %v3852 = vpack.c.bf16 %v3529, %v3525
        %v3853 = vpack.c.bf16 %v3531, %v3527
        %v3854 = vpack.c.bf16 %v3722, %v3718
        %v3855 = vpack.c.bf16 %v3724, %v3720
        %v3856 = vpack.c.bf16 %v3153, %v3149
        %v3857 = vpack.c.bf16 %v3155, %v3151
        %v3858 = vpack.c.bf16 %v3346, %v3342
        %v3859 = vpack.c.bf16 %v3348, %v3344
        %v3860 = vpack.c.bf16 %v3539, %v3535
        %v3861 = vpack.c.bf16 %v3541, %v3537
        %v3862 = vpack.c.bf16 %v3732, %v3728
        %v3863 = vpack.c.bf16 %v3734, %v3730
        %v3864 = vmul.bf16 %v3736, 1056980736
        %v3865 = vmul.bf16 %v3737, 1056980736
        %v3866 = vmul.bf16 %v3738, 1056980736
        %v3867 = vmul.bf16 %v3739, 1056980736
        %v3868 = vmul.bf16 %v3740, 1056980736
        %v3869 = vmul.bf16 %v3741, 1056980736
        %v3870 = vmul.bf16 %v3742, 1056980736
        %v3871 = vmul.bf16 %v3743, 1056980736
        %v3872 = vmul.bf16 %v3744, 1056980736
        %v3873 = vmul.bf16 %v3745, 1056980736
        %v3874 = vmul.bf16 %v3746, 1056980736
        %v3875 = vmul.bf16 %v3747, 1056980736
        %v3876 = vmul.bf16 %v3748, 1056980736
        %v3877 = vmul.bf16 %v3749, 1056980736
        %v3878 = vmul.bf16 %v3750, 1056980736
        %v3879 = vmul.bf16 %v3751, 1056980736
        %v3880 = vmul.bf16 %v3752, 1056980736
        %v3881 = vmul.bf16 %v3753, 1056980736
        %v3882 = vmul.bf16 %v3754, 1056980736
        %v3883 = vmul.bf16 %v3755, 1056980736
        %v3884 = vmul.bf16 %v3756, 1056980736
        %v3885 = vmul.bf16 %v3757, 1056980736
        %v3886 = vmul.bf16 %v3758, 1056980736
        %v3887 = vmul.bf16 %v3759, 1056980736
        %v3888 = vmul.bf16 %v3760, 1056980736
        %v3889 = vmul.bf16 %v3761, 1056980736
        %v3890 = vmul.bf16 %v3762, 1056980736
        %v3891 = vmul.bf16 %v3763, 1056980736
        %v3892 = vmul.bf16 %v3764, 1056980736
        %v3893 = vmul.bf16 %v3765, 1056980736
        %v3894 = vmul.bf16 %v3766, 1056980736
        %v3895 = vmul.bf16 %v3767, 1056980736
        %v3896 = vmul.bf16 %v3768, 1056980736
        %v3897 = vmul.bf16 %v3769, 1056980736
        %v3898 = vmul.bf16 %v3770, 1056980736
        %v3899 = vmul.bf16 %v3771, 1056980736
        %v3900 = vmul.bf16 %v3772, 1056980736
        %v3901 = vmul.bf16 %v3773, 1056980736
        %v3902 = vmul.bf16 %v3774, 1056980736
        %v3903 = vmul.bf16 %v3775, 1056980736
        %v3904 = vmul.bf16 %v3776, 1056980736
        %v3905 = vmul.bf16 %v3777, 1056980736
        %v3906 = vmul.bf16 %v3778, 1056980736
        %v3907 = vmul.bf16 %v3779, 1056980736
        %v3908 = vmul.bf16 %v3780, 1056980736
        %v3909 = vmul.bf16 %v3781, 1056980736
        %v3910 = vmul.bf16 %v3782, 1056980736
        %v3911 = vmul.bf16 %v3783, 1056980736
        %v3912 = vmul.bf16 %v3784, 1056980736
        %v3913 = vmul.bf16 %v3785, 1056980736
        %v3914 = vmul.bf16 %v3786, 1056980736
        %v3915 = vmul.bf16 %v3787, 1056980736
        %v3916 = vmul.bf16 %v3788, 1056980736
        %v3917 = vmul.bf16 %v3789, 1056980736
        %v3918 = vmul.bf16 %v3790, 1056980736
        %v3919 = vmul.bf16 %v3791, 1056980736
        %v3920 = vmul.bf16 %v3792, 1056980736
        %v3921 = vmul.bf16 %v3793, 1056980736
        %v3922 = vmul.bf16 %v3794, 1056980736
        %v3923 = vmul.bf16 %v3795, 1056980736
        %v3924 = vmul.bf16 %v3796, 1056980736
        %v3925 = vmul.bf16 %v3797, 1056980736
        %v3926 = vmul.bf16 %v3798, 1056980736
        %v3927 = vmul.bf16 %v3799, 1056980736
        %v3928 = vmul.bf16 %v3800, 1056980736
        %v3929 = vmul.bf16 %v3801, 1056980736
        %v3930 = vmul.bf16 %v3802, 1056980736
        %v3931 = vmul.bf16 %v3803, 1056980736
        %v3932 = vmul.bf16 %v3804, 1056980736
        %v3933 = vmul.bf16 %v3805, 1056980736
        %v3934 = vmul.bf16 %v3806, 1056980736
        %v3935 = vmul.bf16 %v3807, 1056980736
        %v3936 = vmul.bf16 %v3808, 1056980736
        %v3937 = vmul.bf16 %v3809, 1056980736
        %v3938 = vmul.bf16 %v3810, 1056980736
        %v3939 = vmul.bf16 %v3811, 1056980736
        %v3940 = vmul.bf16 %v3812, 1056980736
        %v3941 = vmul.bf16 %v3813, 1056980736
        %v3942 = vmul.bf16 %v3814, 1056980736
        %v3943 = vmul.bf16 %v3815, 1056980736
        %v3944 = vmul.bf16 %v3816, 1056980736
        %v3945 = vmul.bf16 %v3817, 1056980736
        %v3946 = vmul.bf16 %v3818, 1056980736
        %v3947 = vmul.bf16 %v3819, 1056980736
        %v3948 = vmul.bf16 %v3820, 1056980736
        %v3949 = vmul.bf16 %v3821, 1056980736
        %v3950 = vmul.bf16 %v3822, 1056980736
        %v3951 = vmul.bf16 %v3823, 1056980736
        %v3952 = vmul.bf16 %v3824, 1056980736
        %v3953 = vmul.bf16 %v3825, 1056980736
        %v3954 = vmul.bf16 %v3826, 1056980736
        %v3955 = vmul.bf16 %v3827, 1056980736
        %v3956 = vmul.bf16 %v3828, 1056980736
        %v3957 = vmul.bf16 %v3829, 1056980736
        %v3958 = vmul.bf16 %v3830, 1056980736
        %v3959 = vmul.bf16 %v3831, 1056980736
        %v3960 = vmul.bf16 %v3832, 1056980736
        %v3961 = vmul.bf16 %v3833, 1056980736
        %v3962 = vmul.bf16 %v3834, 1056980736
        %v3963 = vmul.bf16 %v3835, 1056980736
        %v3964 = vmul.bf16 %v3836, 1056980736
        %v3965 = vmul.bf16 %v3837, 1056980736
        %v3966 = vmul.bf16 %v3838, 1056980736
        %v3967 = vmul.bf16 %v3839, 1056980736
        %v3968 = vmul.bf16 %v3840, 1056980736
        %v3969 = vmul.bf16 %v3841, 1056980736
        %v3970 = vmul.bf16 %v3842, 1056980736
        %v3971 = vmul.bf16 %v3843, 1056980736
        %v3972 = vmul.bf16 %v3844, 1056980736
        %v3973 = vmul.bf16 %v3845, 1056980736
        %v3974 = vmul.bf16 %v3846, 1056980736
        %v3975 = vmul.bf16 %v3847, 1056980736
        %v3976 = vmul.bf16 %v3848, 1056980736
        %v3977 = vmul.bf16 %v3849, 1056980736
        %v3978 = vmul.bf16 %v3850, 1056980736
        %v3979 = vmul.bf16 %v3851, 1056980736
        %v3980 = vmul.bf16 %v3852, 1056980736
        %v3981 = vmul.bf16 %v3853, 1056980736
        %v3982 = vmul.bf16 %v3854, 1056980736
        %v3983 = vmul.bf16 %v3855, 1056980736
        %v3984 = vmul.bf16 %v3856, 1056980736
        %v3985 = vmul.bf16 %v3857, 1056980736
        %v3986 = vmul.bf16 %v3858, 1056980736
        %v3987 = vmul.bf16 %v3859, 1056980736
        %v3988 = vmul.bf16 %v3860, 1056980736
        %v3989 = vmul.bf16 %v3861, 1056980736
        %v3990 = vmul.bf16 %v3862, 1056980736
        %v3991 = vmul.bf16 %v3863, 1056980736
        %v3992 = vmul.bf16 %v3736, 1027030327
        %v3993 = vmul.bf16 %v3737, 1027030327
        %v3994 = vmul.bf16 %v3738, 1027030327
        %v3995 = vmul.bf16 %v3739, 1027030327
        %v3996 = vmul.bf16 %v3740, 1027030327
        %v3997 = vmul.bf16 %v3741, 1027030327
        %v3998 = vmul.bf16 %v3742, 1027030327
        %v3999 = vmul.bf16 %v3743, 1027030327
        %v4000 = vmul.bf16 %v3744, 1027030327
        %v4001 = vmul.bf16 %v3745, 1027030327
        %v4002 = vmul.bf16 %v3746, 1027030327
        %v4003 = vmul.bf16 %v3747, 1027030327
        %v4004 = vmul.bf16 %v3748, 1027030327
        %v4005 = vmul.bf16 %v3749, 1027030327
        %v4006 = vmul.bf16 %v3750, 1027030327
        %v4007 = vmul.bf16 %v3751, 1027030327
        %v4008 = vmul.bf16 %v3752, 1027030327
        %v4009 = vmul.bf16 %v3753, 1027030327
        %v4010 = vmul.bf16 %v3754, 1027030327
        %v4011 = vmul.bf16 %v3755, 1027030327
        %v4012 = vmul.bf16 %v3756, 1027030327
        %v4013 = vmul.bf16 %v3757, 1027030327
        %v4014 = vmul.bf16 %v3758, 1027030327
        %v4015 = vmul.bf16 %v3759, 1027030327
        %v4016 = vmul.bf16 %v3760, 1027030327
        %v4017 = vmul.bf16 %v3761, 1027030327
        %v4018 = vmul.bf16 %v3762, 1027030327
        %v4019 = vmul.bf16 %v3763, 1027030327
        %v4020 = vmul.bf16 %v3764, 1027030327
        %v4021 = vmul.bf16 %v3765, 1027030327
        %v4022 = vmul.bf16 %v3766, 1027030327
        %v4023 = vmul.bf16 %v3767, 1027030327
        %v4024 = vmul.bf16 %v3768, 1027030327
        %v4025 = vmul.bf16 %v3769, 1027030327
        %v4026 = vmul.bf16 %v3770, 1027030327
        %v4027 = vmul.bf16 %v3771, 1027030327
        %v4028 = vmul.bf16 %v3772, 1027030327
        %v4029 = vmul.bf16 %v3773, 1027030327
        %v4030 = vmul.bf16 %v3774, 1027030327
        %v4031 = vmul.bf16 %v3775, 1027030327
        %v4032 = vmul.bf16 %v3776, 1027030327
        %v4033 = vmul.bf16 %v3777, 1027030327
        %v4034 = vmul.bf16 %v3778, 1027030327
        %v4035 = vmul.bf16 %v3779, 1027030327
        %v4036 = vmul.bf16 %v3780, 1027030327
        %v4037 = vmul.bf16 %v3781, 1027030327
        %v4038 = vmul.bf16 %v3782, 1027030327
        %v4039 = vmul.bf16 %v3783, 1027030327
        %v4040 = vmul.bf16 %v3784, 1027030327
        %v4041 = vmul.bf16 %v3785, 1027030327
        %v4042 = vmul.bf16 %v3786, 1027030327
        %v4043 = vmul.bf16 %v3787, 1027030327
        %v4044 = vmul.bf16 %v3788, 1027030327
        %v4045 = vmul.bf16 %v3789, 1027030327
        %v4046 = vmul.bf16 %v3790, 1027030327
        %v4047 = vmul.bf16 %v3791, 1027030327
        %v4048 = vmul.bf16 %v3792, 1027030327
        %v4049 = vmul.bf16 %v3793, 1027030327
        %v4050 = vmul.bf16 %v3794, 1027030327
        %v4051 = vmul.bf16 %v3795, 1027030327
        %v4052 = vmul.bf16 %v3796, 1027030327
        %v4053 = vmul.bf16 %v3797, 1027030327
        %v4054 = vmul.bf16 %v3798, 1027030327
        %v4055 = vmul.bf16 %v3799, 1027030327
        %v4056 = vmul.bf16 %v3800, 1027030327
        %v4057 = vmul.bf16 %v3801, 1027030327
        %v4058 = vmul.bf16 %v3802, 1027030327
        %v4059 = vmul.bf16 %v3803, 1027030327
        %v4060 = vmul.bf16 %v3804, 1027030327
        %v4061 = vmul.bf16 %v3805, 1027030327
        %v4062 = vmul.bf16 %v3806, 1027030327
        %v4063 = vmul.bf16 %v3807, 1027030327
        %v4064 = vmul.bf16 %v3808, 1027030327
        %v4065 = vmul.bf16 %v3809, 1027030327
        %v4066 = vmul.bf16 %v3810, 1027030327
        %v4067 = vmul.bf16 %v3811, 1027030327
        %v4068 = vmul.bf16 %v3812, 1027030327
        %v4069 = vmul.bf16 %v3813, 1027030327
        %v4070 = vmul.bf16 %v3814, 1027030327
        %v4071 = vmul.bf16 %v3815, 1027030327
        %v4072 = vmul.bf16 %v3816, 1027030327
        %v4073 = vmul.bf16 %v3817, 1027030327
        %v4074 = vmul.bf16 %v3818, 1027030327
        %v4075 = vmul.bf16 %v3819, 1027030327
        %v4076 = vmul.bf16 %v3820, 1027030327
        %v4077 = vmul.bf16 %v3821, 1027030327
        %v4078 = vmul.bf16 %v3822, 1027030327
        %v4079 = vmul.bf16 %v3823, 1027030327
        %v4080 = vmul.bf16 %v3824, 1027030327
        %v4081 = vmul.bf16 %v3825, 1027030327
        %v4082 = vmul.bf16 %v3826, 1027030327
        %v4083 = vmul.bf16 %v3827, 1027030327
        %v4084 = vmul.bf16 %v3828, 1027030327
        %v4085 = vmul.bf16 %v3829, 1027030327
        %v4086 = vmul.bf16 %v3830, 1027030327
        %v4087 = vmul.bf16 %v3831, 1027030327
        %v4088 = vmul.bf16 %v3832, 1027030327
        %v4089 = vmul.bf16 %v3833, 1027030327
        %v4090 = vmul.bf16 %v3834, 1027030327
        %v4091 = vmul.bf16 %v3835, 1027030327
        %v4092 = vmul.bf16 %v3836, 1027030327
        %v4093 = vmul.bf16 %v3837, 1027030327
        %v4094 = vmul.bf16 %v3838, 1027030327
        %v4095 = vmul.bf16 %v3839, 1027030327
        %v4096 = vmul.bf16 %v3840, 1027030327
        %v4097 = vmul.bf16 %v3841, 1027030327
        %v4098 = vmul.bf16 %v3842, 1027030327
        %v4099 = vmul.bf16 %v3843, 1027030327
        %v4100 = vmul.bf16 %v3844, 1027030327
        %v4101 = vmul.bf16 %v3845, 1027030327
        %v4102 = vmul.bf16 %v3846, 1027030327
        %v4103 = vmul.bf16 %v3847, 1027030327
        %v4104 = vmul.bf16 %v3848, 1027030327
        %v4105 = vmul.bf16 %v3849, 1027030327
        %v4106 = vmul.bf16 %v3850, 1027030327
        %v4107 = vmul.bf16 %v3851, 1027030327
        %v4108 = vmul.bf16 %v3852, 1027030327
        %v4109 = vmul.bf16 %v3853, 1027030327
        %v4110 = vmul.bf16 %v3854, 1027030327
        %v4111 = vmul.bf16 %v3855, 1027030327
        %v4112 = vmul.bf16 %v3856, 1027030327
        %v4113 = vmul.bf16 %v3857, 1027030327
        %v4114 = vmul.bf16 %v3858, 1027030327
        %v4115 = vmul.bf16 %v3859, 1027030327
        %v4116 = vmul.bf16 %v3860, 1027030327
        %v4117 = vmul.bf16 %v3861, 1027030327
        %v4118 = vmul.bf16 %v3862, 1027030327
        %v4119 = vmul.bf16 %v3863, 1027030327
        %v4120 = vmul.bf16 %v3992, %v3736
        %v4121 = vmul.bf16 %v3993, %v3737
        %v4122 = vmul.bf16 %v3994, %v3738
        %v4123 = vmul.bf16 %v3995, %v3739
        %v4124 = vmul.bf16 %v3996, %v3740
        %v4125 = vmul.bf16 %v3997, %v3741
        %v4126 = vmul.bf16 %v3998, %v3742
        %v4127 = vmul.bf16 %v3999, %v3743
        %v4128 = vmul.bf16 %v4000, %v3744
        %v4129 = vmul.bf16 %v4001, %v3745
        %v4130 = vmul.bf16 %v4002, %v3746
        %v4131 = vmul.bf16 %v4003, %v3747
        %v4132 = vmul.bf16 %v4004, %v3748
        %v4133 = vmul.bf16 %v4005, %v3749
        %v4134 = vmul.bf16 %v4006, %v3750
        %v4135 = vmul.bf16 %v4007, %v3751
        %v4136 = vmul.bf16 %v4008, %v3752
        %v4137 = vmul.bf16 %v4009, %v3753
        %v4138 = vmul.bf16 %v4010, %v3754
        %v4139 = vmul.bf16 %v4011, %v3755
        %v4140 = vmul.bf16 %v4012, %v3756
        %v4141 = vmul.bf16 %v4013, %v3757
        %v4142 = vmul.bf16 %v4014, %v3758
        %v4143 = vmul.bf16 %v4015, %v3759
        %v4144 = vmul.bf16 %v4016, %v3760
        %v4145 = vmul.bf16 %v4017, %v3761
        %v4146 = vmul.bf16 %v4018, %v3762
        %v4147 = vmul.bf16 %v4019, %v3763
        %v4148 = vmul.bf16 %v4020, %v3764
        %v4149 = vmul.bf16 %v4021, %v3765
        %v4150 = vmul.bf16 %v4022, %v3766
        %v4151 = vmul.bf16 %v4023, %v3767
        %v4152 = vmul.bf16 %v4024, %v3768
        %v4153 = vmul.bf16 %v4025, %v3769
        %v4154 = vmul.bf16 %v4026, %v3770
        %v4155 = vmul.bf16 %v4027, %v3771
        %v4156 = vmul.bf16 %v4028, %v3772
        %v4157 = vmul.bf16 %v4029, %v3773
        %v4158 = vmul.bf16 %v4030, %v3774
        %v4159 = vmul.bf16 %v4031, %v3775
        %v4160 = vmul.bf16 %v4032, %v3776
        %v4161 = vmul.bf16 %v4033, %v3777
        %v4162 = vmul.bf16 %v4034, %v3778
        %v4163 = vmul.bf16 %v4035, %v3779
        %v4164 = vmul.bf16 %v4036, %v3780
        %v4165 = vmul.bf16 %v4037, %v3781
        %v4166 = vmul.bf16 %v4038, %v3782
        %v4167 = vmul.bf16 %v4039, %v3783
        %v4168 = vmul.bf16 %v4040, %v3784
        %v4169 = vmul.bf16 %v4041, %v3785
        %v4170 = vmul.bf16 %v4042, %v3786
        %v4171 = vmul.bf16 %v4043, %v3787
        %v4172 = vmul.bf16 %v4044, %v3788
        %v4173 = vmul.bf16 %v4045, %v3789
        %v4174 = vmul.bf16 %v4046, %v3790
        %v4175 = vmul.bf16 %v4047, %v3791
        %v4176 = vmul.bf16 %v4048, %v3792
        %v4177 = vmul.bf16 %v4049, %v3793
        %v4178 = vmul.bf16 %v4050, %v3794
        %v4179 = vmul.bf16 %v4051, %v3795
        %v4180 = vmul.bf16 %v4052, %v3796
        %v4181 = vmul.bf16 %v4053, %v3797
        %v4182 = vmul.bf16 %v4054, %v3798
        %v4183 = vmul.bf16 %v4055, %v3799
        %v4184 = vmul.bf16 %v4056, %v3800
        %v4185 = vmul.bf16 %v4057, %v3801
        %v4186 = vmul.bf16 %v4058, %v3802
        %v4187 = vmul.bf16 %v4059, %v3803
        %v4188 = vmul.bf16 %v4060, %v3804
        %v4189 = vmul.bf16 %v4061, %v3805
        %v4190 = vmul.bf16 %v4062, %v3806
        %v4191 = vmul.bf16 %v4063, %v3807
        %v4192 = vmul.bf16 %v4064, %v3808
        %v4193 = vmul.bf16 %v4065, %v3809
        %v4194 = vmul.bf16 %v4066, %v3810
        %v4195 = vmul.bf16 %v4067, %v3811
        %v4196 = vmul.bf16 %v4068, %v3812
        %v4197 = vmul.bf16 %v4069, %v3813
        %v4198 = vmul.bf16 %v4070, %v3814
        %v4199 = vmul.bf16 %v4071, %v3815
        %v4200 = vmul.bf16 %v4072, %v3816
        %v4201 = vmul.bf16 %v4073, %v3817
        %v4202 = vmul.bf16 %v4074, %v3818
        %v4203 = vmul.bf16 %v4075, %v3819
        %v4204 = vmul.bf16 %v4076, %v3820
        %v4205 = vmul.bf16 %v4077, %v3821
        %v4206 = vmul.bf16 %v4078, %v3822
        %v4207 = vmul.bf16 %v4079, %v3823
        %v4208 = vmul.bf16 %v4080, %v3824
        %v4209 = vmul.bf16 %v4081, %v3825
        %v4210 = vmul.bf16 %v4082, %v3826
        %v4211 = vmul.bf16 %v4083, %v3827
        %v4212 = vmul.bf16 %v4084, %v3828
        %v4213 = vmul.bf16 %v4085, %v3829
        %v4214 = vmul.bf16 %v4086, %v3830
        %v4215 = vmul.bf16 %v4087, %v3831
        %v4216 = vmul.bf16 %v4088, %v3832
        %v4217 = vmul.bf16 %v4089, %v3833
        %v4218 = vmul.bf16 %v4090, %v3834
        %v4219 = vmul.bf16 %v4091, %v3835
        %v4220 = vmul.bf16 %v4092, %v3836
        %v4221 = vmul.bf16 %v4093, %v3837
        %v4222 = vmul.bf16 %v4094, %v3838
        %v4223 = vmul.bf16 %v4095, %v3839
        %v4224 = vmul.bf16 %v4096, %v3840
        %v4225 = vmul.bf16 %v4097, %v3841
        %v4226 = vmul.bf16 %v4098, %v3842
        %v4227 = vmul.bf16 %v4099, %v3843
        %v4228 = vmul.bf16 %v4100, %v3844
        %v4229 = vmul.bf16 %v4101, %v3845
        %v4230 = vmul.bf16 %v4102, %v3846
        %v4231 = vmul.bf16 %v4103, %v3847
        %v4232 = vmul.bf16 %v4104, %v3848
        %v4233 = vmul.bf16 %v4105, %v3849
        %v4234 = vmul.bf16 %v4106, %v3850
        %v4235 = vmul.bf16 %v4107, %v3851
        %v4236 = vmul.bf16 %v4108, %v3852
        %v4237 = vmul.bf16 %v4109, %v3853
        %v4238 = vmul.bf16 %v4110, %v3854
        %v4239 = vmul.bf16 %v4111, %v3855
        %v4240 = vmul.bf16 %v4112, %v3856
        %v4241 = vmul.bf16 %v4113, %v3857
        %v4242 = vmul.bf16 %v4114, %v3858
        %v4243 = vmul.bf16 %v4115, %v3859
        %v4244 = vmul.bf16 %v4116, %v3860
        %v4245 = vmul.bf16 %v4117, %v3861
        %v4246 = vmul.bf16 %v4118, %v3862
        %v4247 = vmul.bf16 %v4119, %v3863
        %v4248 = vmul.bf16 %v4120, %v3736
        %v4249 = vmul.bf16 %v4121, %v3737
        %v4250 = vmul.bf16 %v4122, %v3738
        %v4251 = vmul.bf16 %v4123, %v3739
        %v4252 = vmul.bf16 %v4124, %v3740
        %v4253 = vmul.bf16 %v4125, %v3741
        %v4254 = vmul.bf16 %v4126, %v3742
        %v4255 = vmul.bf16 %v4127, %v3743
        %v4256 = vmul.bf16 %v4128, %v3744
        %v4257 = vmul.bf16 %v4129, %v3745
        %v4258 = vmul.bf16 %v4130, %v3746
        %v4259 = vmul.bf16 %v4131, %v3747
        %v4260 = vmul.bf16 %v4132, %v3748
        %v4261 = vmul.bf16 %v4133, %v3749
        %v4262 = vmul.bf16 %v4134, %v3750
        %v4263 = vmul.bf16 %v4135, %v3751
        %v4264 = vmul.bf16 %v4136, %v3752
        %v4265 = vmul.bf16 %v4137, %v3753
        %v4266 = vmul.bf16 %v4138, %v3754
        %v4267 = vmul.bf16 %v4139, %v3755
        %v4268 = vmul.bf16 %v4140, %v3756
        %v4269 = vmul.bf16 %v4141, %v3757
        %v4270 = vmul.bf16 %v4142, %v3758
        %v4271 = vmul.bf16 %v4143, %v3759
        %v4272 = vmul.bf16 %v4144, %v3760
        %v4273 = vmul.bf16 %v4145, %v3761
        %v4274 = vmul.bf16 %v4146, %v3762
        %v4275 = vmul.bf16 %v4147, %v3763
        %v4276 = vmul.bf16 %v4148, %v3764
        %v4277 = vmul.bf16 %v4149, %v3765
        %v4278 = vmul.bf16 %v4150, %v3766
        %v4279 = vmul.bf16 %v4151, %v3767
        %v4280 = vmul.bf16 %v4152, %v3768
        %v4281 = vmul.bf16 %v4153, %v3769
        %v4282 = vmul.bf16 %v4154, %v3770
        %v4283 = vmul.bf16 %v4155, %v3771
        %v4284 = vmul.bf16 %v4156, %v3772
        %v4285 = vmul.bf16 %v4157, %v3773
        %v4286 = vmul.bf16 %v4158, %v3774
        %v4287 = vmul.bf16 %v4159, %v3775
        %v4288 = vmul.bf16 %v4160, %v3776
        %v4289 = vmul.bf16 %v4161, %v3777
        %v4290 = vmul.bf16 %v4162, %v3778
        %v4291 = vmul.bf16 %v4163, %v3779
        %v4292 = vmul.bf16 %v4164, %v3780
        %v4293 = vmul.bf16 %v4165, %v3781
        %v4294 = vmul.bf16 %v4166, %v3782
        %v4295 = vmul.bf16 %v4167, %v3783
        %v4296 = vmul.bf16 %v4168, %v3784
        %v4297 = vmul.bf16 %v4169, %v3785
        %v4298 = vmul.bf16 %v4170, %v3786
        %v4299 = vmul.bf16 %v4171, %v3787
        %v4300 = vmul.bf16 %v4172, %v3788
        %v4301 = vmul.bf16 %v4173, %v3789
        %v4302 = vmul.bf16 %v4174, %v3790
        %v4303 = vmul.bf16 %v4175, %v3791
        %v4304 = vmul.bf16 %v4176, %v3792
        %v4305 = vmul.bf16 %v4177, %v3793
        %v4306 = vmul.bf16 %v4178, %v3794
        %v4307 = vmul.bf16 %v4179, %v3795
        %v4308 = vmul.bf16 %v4180, %v3796
        %v4309 = vmul.bf16 %v4181, %v3797
        %v4310 = vmul.bf16 %v4182, %v3798
        %v4311 = vmul.bf16 %v4183, %v3799
        %v4312 = vmul.bf16 %v4184, %v3800
        %v4313 = vmul.bf16 %v4185, %v3801
        %v4314 = vmul.bf16 %v4186, %v3802
        %v4315 = vmul.bf16 %v4187, %v3803
        %v4316 = vmul.bf16 %v4188, %v3804
        %v4317 = vmul.bf16 %v4189, %v3805
        %v4318 = vmul.bf16 %v4190, %v3806
        %v4319 = vmul.bf16 %v4191, %v3807
        %v4320 = vmul.bf16 %v4192, %v3808
        %v4321 = vmul.bf16 %v4193, %v3809
        %v4322 = vmul.bf16 %v4194, %v3810
        %v4323 = vmul.bf16 %v4195, %v3811
        %v4324 = vmul.bf16 %v4196, %v3812
        %v4325 = vmul.bf16 %v4197, %v3813
        %v4326 = vmul.bf16 %v4198, %v3814
        %v4327 = vmul.bf16 %v4199, %v3815
        %v4328 = vmul.bf16 %v4200, %v3816
        %v4329 = vmul.bf16 %v4201, %v3817
        %v4330 = vmul.bf16 %v4202, %v3818
        %v4331 = vmul.bf16 %v4203, %v3819
        %v4332 = vmul.bf16 %v4204, %v3820
        %v4333 = vmul.bf16 %v4205, %v3821
        %v4334 = vmul.bf16 %v4206, %v3822
        %v4335 = vmul.bf16 %v4207, %v3823
        %v4336 = vmul.bf16 %v4208, %v3824
        %v4337 = vmul.bf16 %v4209, %v3825
        %v4338 = vmul.bf16 %v4210, %v3826
        %v4339 = vmul.bf16 %v4211, %v3827
        %v4340 = vmul.bf16 %v4212, %v3828
        %v4341 = vmul.bf16 %v4213, %v3829
        %v4342 = vmul.bf16 %v4214, %v3830
        %v4343 = vmul.bf16 %v4215, %v3831
        %v4344 = vmul.bf16 %v4216, %v3832
        %v4345 = vmul.bf16 %v4217, %v3833
        %v4346 = vmul.bf16 %v4218, %v3834
        %v4347 = vmul.bf16 %v4219, %v3835
        %v4348 = vmul.bf16 %v4220, %v3836
        %v4349 = vmul.bf16 %v4221, %v3837
        %v4350 = vmul.bf16 %v4222, %v3838
        %v4351 = vmul.bf16 %v4223, %v3839
        %v4352 = vmul.bf16 %v4224, %v3840
        %v4353 = vmul.bf16 %v4225, %v3841
        %v4354 = vmul.bf16 %v4226, %v3842
        %v4355 = vmul.bf16 %v4227, %v3843
        %v4356 = vmul.bf16 %v4228, %v3844
        %v4357 = vmul.bf16 %v4229, %v3845
        %v4358 = vmul.bf16 %v4230, %v3846
        %v4359 = vmul.bf16 %v4231, %v3847
        %v4360 = vmul.bf16 %v4232, %v3848
        %v4361 = vmul.bf16 %v4233, %v3849
        %v4362 = vmul.bf16 %v4234, %v3850
        %v4363 = vmul.bf16 %v4235, %v3851
        %v4364 = vmul.bf16 %v4236, %v3852
        %v4365 = vmul.bf16 %v4237, %v3853
        %v4366 = vmul.bf16 %v4238, %v3854
        %v4367 = vmul.bf16 %v4239, %v3855
        %v4368 = vmul.bf16 %v4240, %v3856
        %v4369 = vmul.bf16 %v4241, %v3857
        %v4370 = vmul.bf16 %v4242, %v3858
        %v4371 = vmul.bf16 %v4243, %v3859
        %v4372 = vmul.bf16 %v4244, %v3860
        %v4373 = vmul.bf16 %v4245, %v3861
        %v4374 = vmul.bf16 %v4246, %v3862
        %v4375 = vmul.bf16 %v4247, %v3863
        %v4376 = vadd.bf16 %v3736, %v4248
        %v4377 = vadd.bf16 %v3737, %v4249
        %v4378 = vadd.bf16 %v3738, %v4250
        %v4379 = vadd.bf16 %v3739, %v4251
        %v4380 = vadd.bf16 %v3740, %v4252
        %v4381 = vadd.bf16 %v3741, %v4253
        %v4382 = vadd.bf16 %v3742, %v4254
        %v4383 = vadd.bf16 %v3743, %v4255
        %v4384 = vadd.bf16 %v3744, %v4256
        %v4385 = vadd.bf16 %v3745, %v4257
        %v4386 = vadd.bf16 %v3746, %v4258
        %v4387 = vadd.bf16 %v3747, %v4259
        %v4388 = vadd.bf16 %v3748, %v4260
        %v4389 = vadd.bf16 %v3749, %v4261
        %v4390 = vadd.bf16 %v3750, %v4262
        %v4391 = vadd.bf16 %v3751, %v4263
        %v4392 = vadd.bf16 %v3752, %v4264
        %v4393 = vadd.bf16 %v3753, %v4265
        %v4394 = vadd.bf16 %v3754, %v4266
        %v4395 = vadd.bf16 %v3755, %v4267
        %v4396 = vadd.bf16 %v3756, %v4268
        %v4397 = vadd.bf16 %v3757, %v4269
        %v4398 = vadd.bf16 %v3758, %v4270
        %v4399 = vadd.bf16 %v3759, %v4271
        %v4400 = vadd.bf16 %v3760, %v4272
        %v4401 = vadd.bf16 %v3761, %v4273
        %v4402 = vadd.bf16 %v3762, %v4274
        %v4403 = vadd.bf16 %v3763, %v4275
        %v4404 = vadd.bf16 %v3764, %v4276
        %v4405 = vadd.bf16 %v3765, %v4277
        %v4406 = vadd.bf16 %v3766, %v4278
        %v4407 = vadd.bf16 %v3767, %v4279
        %v4408 = vadd.bf16 %v3768, %v4280
        %v4409 = vadd.bf16 %v3769, %v4281
        %v4410 = vadd.bf16 %v3770, %v4282
        %v4411 = vadd.bf16 %v3771, %v4283
        %v4412 = vadd.bf16 %v3772, %v4284
        %v4413 = vadd.bf16 %v3773, %v4285
        %v4414 = vadd.bf16 %v3774, %v4286
        %v4415 = vadd.bf16 %v3775, %v4287
        %v4416 = vadd.bf16 %v3776, %v4288
        %v4417 = vadd.bf16 %v3777, %v4289
        %v4418 = vadd.bf16 %v3778, %v4290
        %v4419 = vadd.bf16 %v3779, %v4291
        %v4420 = vadd.bf16 %v3780, %v4292
        %v4421 = vadd.bf16 %v3781, %v4293
        %v4422 = vadd.bf16 %v3782, %v4294
        %v4423 = vadd.bf16 %v3783, %v4295
        %v4424 = vadd.bf16 %v3784, %v4296
        %v4425 = vadd.bf16 %v3785, %v4297
        %v4426 = vadd.bf16 %v3786, %v4298
        %v4427 = vadd.bf16 %v3787, %v4299
        %v4428 = vadd.bf16 %v3788, %v4300
        %v4429 = vadd.bf16 %v3789, %v4301
        %v4430 = vadd.bf16 %v3790, %v4302
        %v4431 = vadd.bf16 %v3791, %v4303
        %v4432 = vadd.bf16 %v3792, %v4304
        %v4433 = vadd.bf16 %v3793, %v4305
        %v4434 = vadd.bf16 %v3794, %v4306
        %v4435 = vadd.bf16 %v3795, %v4307
        %v4436 = vadd.bf16 %v3796, %v4308
        %v4437 = vadd.bf16 %v3797, %v4309
        %v4438 = vadd.bf16 %v3798, %v4310
        %v4439 = vadd.bf16 %v3799, %v4311
        %v4440 = vadd.bf16 %v3800, %v4312
        %v4441 = vadd.bf16 %v3801, %v4313
        %v4442 = vadd.bf16 %v3802, %v4314
        %v4443 = vadd.bf16 %v3803, %v4315
        %v4444 = vadd.bf16 %v3804, %v4316
        %v4445 = vadd.bf16 %v3805, %v4317
        %v4446 = vadd.bf16 %v3806, %v4318
        %v4447 = vadd.bf16 %v3807, %v4319
        %v4448 = vadd.bf16 %v3808, %v4320
        %v4449 = vadd.bf16 %v3809, %v4321
        %v4450 = vadd.bf16 %v3810, %v4322
        %v4451 = vadd.bf16 %v3811, %v4323
        %v4452 = vadd.bf16 %v3812, %v4324
        %v4453 = vadd.bf16 %v3813, %v4325
        %v4454 = vadd.bf16 %v3814, %v4326
        %v4455 = vadd.bf16 %v3815, %v4327
        %v4456 = vadd.bf16 %v3816, %v4328
        %v4457 = vadd.bf16 %v3817, %v4329
        %v4458 = vadd.bf16 %v3818, %v4330
        %v4459 = vadd.bf16 %v3819, %v4331
        %v4460 = vadd.bf16 %v3820, %v4332
        %v4461 = vadd.bf16 %v3821, %v4333
        %v4462 = vadd.bf16 %v3822, %v4334
        %v4463 = vadd.bf16 %v3823, %v4335
        %v4464 = vadd.bf16 %v3824, %v4336
        %v4465 = vadd.bf16 %v3825, %v4337
        %v4466 = vadd.bf16 %v3826, %v4338
        %v4467 = vadd.bf16 %v3827, %v4339
        %v4468 = vadd.bf16 %v3828, %v4340
        %v4469 = vadd.bf16 %v3829, %v4341
        %v4470 = vadd.bf16 %v3830, %v4342
        %v4471 = vadd.bf16 %v3831, %v4343
        %v4472 = vadd.bf16 %v3832, %v4344
        %v4473 = vadd.bf16 %v3833, %v4345
        %v4474 = vadd.bf16 %v3834, %v4346
        %v4475 = vadd.bf16 %v3835, %v4347
        %v4476 = vadd.bf16 %v3836, %v4348
        %v4477 = vadd.bf16 %v3837, %v4349
        %v4478 = vadd.bf16 %v3838, %v4350
        %v4479 = vadd.bf16 %v3839, %v4351
        %v4480 = vadd.bf16 %v3840, %v4352
        %v4481 = vadd.bf16 %v3841, %v4353
        %v4482 = vadd.bf16 %v3842, %v4354
        %v4483 = vadd.bf16 %v3843, %v4355
        %v4484 = vadd.bf16 %v3844, %v4356
        %v4485 = vadd.bf16 %v3845, %v4357
        %v4486 = vadd.bf16 %v3846, %v4358
        %v4487 = vadd.bf16 %v3847, %v4359
        %v4488 = vadd.bf16 %v3848, %v4360
        %v4489 = vadd.bf16 %v3849, %v4361
        %v4490 = vadd.bf16 %v3850, %v4362
        %v4491 = vadd.bf16 %v3851, %v4363
        %v4492 = vadd.bf16 %v3852, %v4364
        %v4493 = vadd.bf16 %v3853, %v4365
        %v4494 = vadd.bf16 %v3854, %v4366
        %v4495 = vadd.bf16 %v3855, %v4367
        %v4496 = vadd.bf16 %v3856, %v4368
        %v4497 = vadd.bf16 %v3857, %v4369
        %v4498 = vadd.bf16 %v3858, %v4370
        %v4499 = vadd.bf16 %v3859, %v4371
        %v4500 = vadd.bf16 %v3860, %v4372
        %v4501 = vadd.bf16 %v3861, %v4373
        %v4502 = vadd.bf16 %v3862, %v4374
        %v4503 = vadd.bf16 %v3863, %v4375
        %v4504 = vmul.bf16 %v4376, 1061961548
        %v4505 = vmul.bf16 %v4377, 1061961548
        %v4506 = vmul.bf16 %v4378, 1061961548
        %v4507 = vmul.bf16 %v4379, 1061961548
        %v4508 = vmul.bf16 %v4380, 1061961548
        %v4509 = vmul.bf16 %v4381, 1061961548
        %v4510 = vmul.bf16 %v4382, 1061961548
        %v4511 = vmul.bf16 %v4383, 1061961548
        %v4512 = vmul.bf16 %v4384, 1061961548
        %v4513 = vmul.bf16 %v4385, 1061961548
        %v4514 = vmul.bf16 %v4386, 1061961548
        %v4515 = vmul.bf16 %v4387, 1061961548
        %v4516 = vmul.bf16 %v4388, 1061961548
        %v4517 = vmul.bf16 %v4389, 1061961548
        %v4518 = vmul.bf16 %v4390, 1061961548
        %v4519 = vmul.bf16 %v4391, 1061961548
        %v4520 = vmul.bf16 %v4392, 1061961548
        %v4521 = vmul.bf16 %v4393, 1061961548
        %v4522 = vmul.bf16 %v4394, 1061961548
        %v4523 = vmul.bf16 %v4395, 1061961548
        %v4524 = vmul.bf16 %v4396, 1061961548
        %v4525 = vmul.bf16 %v4397, 1061961548
        %v4526 = vmul.bf16 %v4398, 1061961548
        %v4527 = vmul.bf16 %v4399, 1061961548
        %v4528 = vmul.bf16 %v4400, 1061961548
        %v4529 = vmul.bf16 %v4401, 1061961548
        %v4530 = vmul.bf16 %v4402, 1061961548
        %v4531 = vmul.bf16 %v4403, 1061961548
        %v4532 = vmul.bf16 %v4404, 1061961548
        %v4533 = vmul.bf16 %v4405, 1061961548
        %v4534 = vmul.bf16 %v4406, 1061961548
        %v4535 = vmul.bf16 %v4407, 1061961548
        %v4536 = vmul.bf16 %v4408, 1061961548
        %v4537 = vmul.bf16 %v4409, 1061961548
        %v4538 = vmul.bf16 %v4410, 1061961548
        %v4539 = vmul.bf16 %v4411, 1061961548
        %v4540 = vmul.bf16 %v4412, 1061961548
        %v4541 = vmul.bf16 %v4413, 1061961548
        %v4542 = vmul.bf16 %v4414, 1061961548
        %v4543 = vmul.bf16 %v4415, 1061961548
        %v4544 = vmul.bf16 %v4416, 1061961548
        %v4545 = vmul.bf16 %v4417, 1061961548
        %v4546 = vmul.bf16 %v4418, 1061961548
        %v4547 = vmul.bf16 %v4419, 1061961548
        %v4548 = vmul.bf16 %v4420, 1061961548
        %v4549 = vmul.bf16 %v4421, 1061961548
        %v4550 = vmul.bf16 %v4422, 1061961548
        %v4551 = vmul.bf16 %v4423, 1061961548
        %v4552 = vmul.bf16 %v4424, 1061961548
        %v4553 = vmul.bf16 %v4425, 1061961548
        %v4554 = vmul.bf16 %v4426, 1061961548
        %v4555 = vmul.bf16 %v4427, 1061961548
        %v4556 = vmul.bf16 %v4428, 1061961548
        %v4557 = vmul.bf16 %v4429, 1061961548
        %v4558 = vmul.bf16 %v4430, 1061961548
        %v4559 = vmul.bf16 %v4431, 1061961548
        %v4560 = vmul.bf16 %v4432, 1061961548
        %v4561 = vmul.bf16 %v4433, 1061961548
        %v4562 = vmul.bf16 %v4434, 1061961548
        %v4563 = vmul.bf16 %v4435, 1061961548
        %v4564 = vmul.bf16 %v4436, 1061961548
        %v4565 = vmul.bf16 %v4437, 1061961548
        %v4566 = vmul.bf16 %v4438, 1061961548
        %v4567 = vmul.bf16 %v4439, 1061961548
        %v4568 = vmul.bf16 %v4440, 1061961548
        %v4569 = vmul.bf16 %v4441, 1061961548
        %v4570 = vmul.bf16 %v4442, 1061961548
        %v4571 = vmul.bf16 %v4443, 1061961548
        %v4572 = vmul.bf16 %v4444, 1061961548
        %v4573 = vmul.bf16 %v4445, 1061961548
        %v4574 = vmul.bf16 %v4446, 1061961548
        %v4575 = vmul.bf16 %v4447, 1061961548
        %v4576 = vmul.bf16 %v4448, 1061961548
        %v4577 = vmul.bf16 %v4449, 1061961548
        %v4578 = vmul.bf16 %v4450, 1061961548
        %v4579 = vmul.bf16 %v4451, 1061961548
        %v4580 = vmul.bf16 %v4452, 1061961548
        %v4581 = vmul.bf16 %v4453, 1061961548
        %v4582 = vmul.bf16 %v4454, 1061961548
        %v4583 = vmul.bf16 %v4455, 1061961548
        %v4584 = vmul.bf16 %v4456, 1061961548
        %v4585 = vmul.bf16 %v4457, 1061961548
        %v4586 = vmul.bf16 %v4458, 1061961548
        %v4587 = vmul.bf16 %v4459, 1061961548
        %v4588 = vmul.bf16 %v4460, 1061961548
        %v4589 = vmul.bf16 %v4461, 1061961548
        %v4590 = vmul.bf16 %v4462, 1061961548
        %v4591 = vmul.bf16 %v4463, 1061961548
        %v4592 = vmul.bf16 %v4464, 1061961548
        %v4593 = vmul.bf16 %v4465, 1061961548
        %v4594 = vmul.bf16 %v4466, 1061961548
        %v4595 = vmul.bf16 %v4467, 1061961548
        %v4596 = vmul.bf16 %v4468, 1061961548
        %v4597 = vmul.bf16 %v4469, 1061961548
        %v4598 = vmul.bf16 %v4470, 1061961548
        %v4599 = vmul.bf16 %v4471, 1061961548
        %v4600 = vmul.bf16 %v4472, 1061961548
        %v4601 = vmul.bf16 %v4473, 1061961548
        %v4602 = vmul.bf16 %v4474, 1061961548
        %v4603 = vmul.bf16 %v4475, 1061961548
        %v4604 = vmul.bf16 %v4476, 1061961548
        %v4605 = vmul.bf16 %v4477, 1061961548
        %v4606 = vmul.bf16 %v4478, 1061961548
        %v4607 = vmul.bf16 %v4479, 1061961548
        %v4608 = vmul.bf16 %v4480, 1061961548
        %v4609 = vmul.bf16 %v4481, 1061961548
        %v4610 = vmul.bf16 %v4482, 1061961548
        %v4611 = vmul.bf16 %v4483, 1061961548
        %v4612 = vmul.bf16 %v4484, 1061961548
        %v4613 = vmul.bf16 %v4485, 1061961548
        %v4614 = vmul.bf16 %v4486, 1061961548
        %v4615 = vmul.bf16 %v4487, 1061961548
        %v4616 = vmul.bf16 %v4488, 1061961548
        %v4617 = vmul.bf16 %v4489, 1061961548
        %v4618 = vmul.bf16 %v4490, 1061961548
        %v4619 = vmul.bf16 %v4491, 1061961548
        %v4620 = vmul.bf16 %v4492, 1061961548
        %v4621 = vmul.bf16 %v4493, 1061961548
        %v4622 = vmul.bf16 %v4494, 1061961548
        %v4623 = vmul.bf16 %v4495, 1061961548
        %v4624 = vmul.bf16 %v4496, 1061961548
        %v4625 = vmul.bf16 %v4497, 1061961548
        %v4626 = vmul.bf16 %v4498, 1061961548
        %v4627 = vmul.bf16 %v4499, 1061961548
        %v4628 = vmul.bf16 %v4500, 1061961548
        %v4629 = vmul.bf16 %v4501, 1061961548
        %v4630 = vmul.bf16 %v4502, 1061961548
        %v4631 = vmul.bf16 %v4503, 1061961548
        %v4632 = vtanh.bf16.pop %v4504
        %v4633 = vtanh.bf16.pop %v4505
        %v4634 = vtanh.bf16.pop %v4506
        %v4635 = vtanh.bf16.pop %v4507
        %v4636 = vtanh.bf16.pop %v4508
        %v4637 = vtanh.bf16.pop %v4509
        %v4638 = vtanh.bf16.pop %v4510
        %v4639 = vtanh.bf16.pop %v4511
        %v4640 = vtanh.bf16.pop %v4512
        %v4641 = vtanh.bf16.pop %v4513
        %v4642 = vtanh.bf16.pop %v4514
        %v4643 = vtanh.bf16.pop %v4515
        %v4644 = vtanh.bf16.pop %v4516
        %v4645 = vtanh.bf16.pop %v4517
        %v4646 = vtanh.bf16.pop %v4518
        %v4647 = vtanh.bf16.pop %v4519
        %v4648 = vtanh.bf16.pop %v4520
        %v4649 = vtanh.bf16.pop %v4521
        %v4650 = vtanh.bf16.pop %v4522
        %v4651 = vtanh.bf16.pop %v4523
        %v4652 = vtanh.bf16.pop %v4524
        %v4653 = vtanh.bf16.pop %v4525
        %v4654 = vtanh.bf16.pop %v4526
        %v4655 = vtanh.bf16.pop %v4527
        %v4656 = vtanh.bf16.pop %v4528
        %v4657 = vtanh.bf16.pop %v4529
        %v4658 = vtanh.bf16.pop %v4530
        %v4659 = vtanh.bf16.pop %v4531
        %v4660 = vtanh.bf16.pop %v4532
        %v4661 = vtanh.bf16.pop %v4533
        %v4662 = vtanh.bf16.pop %v4534
        %v4663 = vtanh.bf16.pop %v4535
        %v4664 = vtanh.bf16.pop %v4536
        %v4665 = vtanh.bf16.pop %v4537
        %v4666 = vtanh.bf16.pop %v4538
        %v4667 = vtanh.bf16.pop %v4539
        %v4668 = vtanh.bf16.pop %v4540
        %v4669 = vtanh.bf16.pop %v4541
        %v4670 = vtanh.bf16.pop %v4542
        %v4671 = vtanh.bf16.pop %v4543
        %v4672 = vtanh.bf16.pop %v4544
        %v4673 = vtanh.bf16.pop %v4545
        %v4674 = vtanh.bf16.pop %v4546
        %v4675 = vtanh.bf16.pop %v4547
        %v4676 = vtanh.bf16.pop %v4548
        %v4677 = vtanh.bf16.pop %v4549
        %v4678 = vtanh.bf16.pop %v4550
        %v4679 = vtanh.bf16.pop %v4551
        %v4680 = vtanh.bf16.pop %v4552
        %v4681 = vtanh.bf16.pop %v4553
        %v4682 = vtanh.bf16.pop %v4554
        %v4683 = vtanh.bf16.pop %v4555
        %v4684 = vtanh.bf16.pop %v4556
        %v4685 = vtanh.bf16.pop %v4557
        %v4686 = vtanh.bf16.pop %v4558
        %v4687 = vtanh.bf16.pop %v4559
        %v4688 = vtanh.bf16.pop %v4560
        %v4689 = vtanh.bf16.pop %v4561
        %v4690 = vtanh.bf16.pop %v4562
        %v4691 = vtanh.bf16.pop %v4563
        %v4692 = vtanh.bf16.pop %v4564
        %v4693 = vtanh.bf16.pop %v4565
        %v4694 = vtanh.bf16.pop %v4566
        %v4695 = vtanh.bf16.pop %v4567
        %v4696 = vtanh.bf16.pop %v4568
        %v4697 = vtanh.bf16.pop %v4569
        %v4698 = vtanh.bf16.pop %v4570
        %v4699 = vtanh.bf16.pop %v4571
        %v4700 = vtanh.bf16.pop %v4572
        %v4701 = vtanh.bf16.pop %v4573
        %v4702 = vtanh.bf16.pop %v4574
        %v4703 = vtanh.bf16.pop %v4575
        %v4704 = vtanh.bf16.pop %v4576
        %v4705 = vtanh.bf16.pop %v4577
        %v4706 = vtanh.bf16.pop %v4578
        %v4707 = vtanh.bf16.pop %v4579
        %v4708 = vtanh.bf16.pop %v4580
        %v4709 = vtanh.bf16.pop %v4581
        %v4710 = vtanh.bf16.pop %v4582
        %v4711 = vtanh.bf16.pop %v4583
        %v4712 = vtanh.bf16.pop %v4584
        %v4713 = vtanh.bf16.pop %v4585
        %v4714 = vtanh.bf16.pop %v4586
        %v4715 = vtanh.bf16.pop %v4587
        %v4716 = vtanh.bf16.pop %v4588
        %v4717 = vtanh.bf16.pop %v4589
        %v4718 = vtanh.bf16.pop %v4590
        %v4719 = vtanh.bf16.pop %v4591
        %v4720 = vtanh.bf16.pop %v4592
        %v4721 = vtanh.bf16.pop %v4593
        %v4722 = vtanh.bf16.pop %v4594
        %v4723 = vtanh.bf16.pop %v4595
        %v4724 = vtanh.bf16.pop %v4596
        %v4725 = vtanh.bf16.pop %v4597
        %v4726 = vtanh.bf16.pop %v4598
        %v4727 = vtanh.bf16.pop %v4599
        %v4728 = vtanh.bf16.pop %v4600
        %v4729 = vtanh.bf16.pop %v4601
        %v4730 = vtanh.bf16.pop %v4602
        %v4731 = vtanh.bf16.pop %v4603
        %v4732 = vtanh.bf16.pop %v4604
        %v4733 = vtanh.bf16.pop %v4605
        %v4734 = vtanh.bf16.pop %v4606
        %v4735 = vtanh.bf16.pop %v4607
        %v4736 = vtanh.bf16.pop %v4608
        %v4737 = vtanh.bf16.pop %v4609
        %v4738 = vtanh.bf16.pop %v4610
        %v4739 = vtanh.bf16.pop %v4611
        %v4740 = vtanh.bf16.pop %v4612
        %v4741 = vtanh.bf16.pop %v4613
        %v4742 = vtanh.bf16.pop %v4614
        %v4743 = vtanh.bf16.pop %v4615
        %v4744 = vtanh.bf16.pop %v4616
        %v4745 = vtanh.bf16.pop %v4617
        %v4746 = vtanh.bf16.pop %v4618
        %v4747 = vtanh.bf16.pop %v4619
        %v4748 = vtanh.bf16.pop %v4620
        %v4749 = vtanh.bf16.pop %v4621
        %v4750 = vtanh.bf16.pop %v4622
        %v4751 = vtanh.bf16.pop %v4623
        %v4752 = vtanh.bf16.pop %v4624
        %v4753 = vtanh.bf16.pop %v4625
        %v4754 = vtanh.bf16.pop %v4626
        %v4755 = vtanh.bf16.pop %v4627
        %v4756 = vtanh.bf16.pop %v4628
        %v4757 = vtanh.bf16.pop %v4629
        %v4758 = vtanh.bf16.pop %v4630
        %v4759 = vtanh.bf16.pop %v4631
        %v4760 = vadd.bf16 %v4632, 1065369472
        %v4761 = vadd.bf16 %v4633, 1065369472
        %v4762 = vadd.bf16 %v4634, 1065369472
        %v4763 = vadd.bf16 %v4635, 1065369472
        %v4764 = vadd.bf16 %v4636, 1065369472
        %v4765 = vadd.bf16 %v4637, 1065369472
        %v4766 = vadd.bf16 %v4638, 1065369472
        %v4767 = vadd.bf16 %v4639, 1065369472
        %v4768 = vadd.bf16 %v4640, 1065369472
        %v4769 = vadd.bf16 %v4641, 1065369472
        %v4770 = vadd.bf16 %v4642, 1065369472
        %v4771 = vadd.bf16 %v4643, 1065369472
        %v4772 = vadd.bf16 %v4644, 1065369472
        %v4773 = vadd.bf16 %v4645, 1065369472
        %v4774 = vadd.bf16 %v4646, 1065369472
        %v4775 = vadd.bf16 %v4647, 1065369472
        %v4776 = vadd.bf16 %v4648, 1065369472
        %v4777 = vadd.bf16 %v4649, 1065369472
        %v4778 = vadd.bf16 %v4650, 1065369472
        %v4779 = vadd.bf16 %v4651, 1065369472
        %v4780 = vadd.bf16 %v4652, 1065369472
        %v4781 = vadd.bf16 %v4653, 1065369472
        %v4782 = vadd.bf16 %v4654, 1065369472
        %v4783 = vadd.bf16 %v4655, 1065369472
        %v4784 = vadd.bf16 %v4656, 1065369472
        %v4785 = vadd.bf16 %v4657, 1065369472
        %v4786 = vadd.bf16 %v4658, 1065369472
        %v4787 = vadd.bf16 %v4659, 1065369472
        %v4788 = vadd.bf16 %v4660, 1065369472
        %v4789 = vadd.bf16 %v4661, 1065369472
        %v4790 = vadd.bf16 %v4662, 1065369472
        %v4791 = vadd.bf16 %v4663, 1065369472
        %v4792 = vadd.bf16 %v4664, 1065369472
        %v4793 = vadd.bf16 %v4665, 1065369472
        %v4794 = vadd.bf16 %v4666, 1065369472
        %v4795 = vadd.bf16 %v4667, 1065369472
        %v4796 = vadd.bf16 %v4668, 1065369472
        %v4797 = vadd.bf16 %v4669, 1065369472
        %v4798 = vadd.bf16 %v4670, 1065369472
        %v4799 = vadd.bf16 %v4671, 1065369472
        %v4800 = vadd.bf16 %v4672, 1065369472
        %v4801 = vadd.bf16 %v4673, 1065369472
        %v4802 = vadd.bf16 %v4674, 1065369472
        %v4803 = vadd.bf16 %v4675, 1065369472
        %v4804 = vadd.bf16 %v4676, 1065369472
        %v4805 = vadd.bf16 %v4677, 1065369472
        %v4806 = vadd.bf16 %v4678, 1065369472
        %v4807 = vadd.bf16 %v4679, 1065369472
        %v4808 = vadd.bf16 %v4680, 1065369472
        %v4809 = vadd.bf16 %v4681, 1065369472
        %v4810 = vadd.bf16 %v4682, 1065369472
        %v4811 = vadd.bf16 %v4683, 1065369472
        %v4812 = vadd.bf16 %v4684, 1065369472
        %v4813 = vadd.bf16 %v4685, 1065369472
        %v4814 = vadd.bf16 %v4686, 1065369472
        %v4815 = vadd.bf16 %v4687, 1065369472
        %v4816 = vadd.bf16 %v4688, 1065369472
        %v4817 = vadd.bf16 %v4689, 1065369472
        %v4818 = vadd.bf16 %v4690, 1065369472
        %v4819 = vadd.bf16 %v4691, 1065369472
        %v4820 = vadd.bf16 %v4692, 1065369472
        %v4821 = vadd.bf16 %v4693, 1065369472
        %v4822 = vadd.bf16 %v4694, 1065369472
        %v4823 = vadd.bf16 %v4695, 1065369472
        %v4824 = vadd.bf16 %v4696, 1065369472
        %v4825 = vadd.bf16 %v4697, 1065369472
        %v4826 = vadd.bf16 %v4698, 1065369472
        %v4827 = vadd.bf16 %v4699, 1065369472
        %v4828 = vadd.bf16 %v4700, 1065369472
        %v4829 = vadd.bf16 %v4701, 1065369472
        %v4830 = vadd.bf16 %v4702, 1065369472
        %v4831 = vadd.bf16 %v4703, 1065369472
        %v4832 = vadd.bf16 %v4704, 1065369472
        %v4833 = vadd.bf16 %v4705, 1065369472
        %v4834 = vadd.bf16 %v4706, 1065369472
        %v4835 = vadd.bf16 %v4707, 1065369472
        %v4836 = vadd.bf16 %v4708, 1065369472
        %v4837 = vadd.bf16 %v4709, 1065369472
        %v4838 = vadd.bf16 %v4710, 1065369472
        %v4839 = vadd.bf16 %v4711, 1065369472
        %v4840 = vadd.bf16 %v4712, 1065369472
        %v4841 = vadd.bf16 %v4713, 1065369472
        %v4842 = vadd.bf16 %v4714, 1065369472
        %v4843 = vadd.bf16 %v4715, 1065369472
        %v4844 = vadd.bf16 %v4716, 1065369472
        %v4845 = vadd.bf16 %v4717, 1065369472
        %v4846 = vadd.bf16 %v4718, 1065369472
        %v4847 = vadd.bf16 %v4719, 1065369472
        %v4848 = vadd.bf16 %v4720, 1065369472
        %v4849 = vadd.bf16 %v4721, 1065369472
        %v4850 = vadd.bf16 %v4722, 1065369472
        %v4851 = vadd.bf16 %v4723, 1065369472
        %v4852 = vadd.bf16 %v4724, 1065369472
        %v4853 = vadd.bf16 %v4725, 1065369472
        %v4854 = vadd.bf16 %v4726, 1065369472
        %v4855 = vadd.bf16 %v4727, 1065369472
        %v4856 = vadd.bf16 %v4728, 1065369472
        %v4857 = vadd.bf16 %v4729, 1065369472
        %v4858 = vadd.bf16 %v4730, 1065369472
        %v4859 = vadd.bf16 %v4731, 1065369472
        %v4860 = vadd.bf16 %v4732, 1065369472
        %v4861 = vadd.bf16 %v4733, 1065369472
        %v4862 = vadd.bf16 %v4734, 1065369472
        %v4863 = vadd.bf16 %v4735, 1065369472
        %v4864 = vadd.bf16 %v4736, 1065369472
        %v4865 = vadd.bf16 %v4737, 1065369472
        %v4866 = vadd.bf16 %v4738, 1065369472
        %v4867 = vadd.bf16 %v4739, 1065369472
        %v4868 = vadd.bf16 %v4740, 1065369472
        %v4869 = vadd.bf16 %v4741, 1065369472
        %v4870 = vadd.bf16 %v4742, 1065369472
        %v4871 = vadd.bf16 %v4743, 1065369472
        %v4872 = vadd.bf16 %v4744, 1065369472
        %v4873 = vadd.bf16 %v4745, 1065369472
        %v4874 = vadd.bf16 %v4746, 1065369472
        %v4875 = vadd.bf16 %v4747, 1065369472
        %v4876 = vadd.bf16 %v4748, 1065369472
        %v4877 = vadd.bf16 %v4749, 1065369472
        %v4878 = vadd.bf16 %v4750, 1065369472
        %v4879 = vadd.bf16 %v4751, 1065369472
        %v4880 = vadd.bf16 %v4752, 1065369472
        %v4881 = vadd.bf16 %v4753, 1065369472
        %v4882 = vadd.bf16 %v4754, 1065369472
        %v4883 = vadd.bf16 %v4755, 1065369472
        %v4884 = vadd.bf16 %v4756, 1065369472
        %v4885 = vadd.bf16 %v4757, 1065369472
        %v4886 = vadd.bf16 %v4758, 1065369472
        %v4887 = vadd.bf16 %v4759, 1065369472
        %v4888 = vmul.bf16 %v3864, %v4760
        %v4889 = vmul.bf16 %v3865, %v4761
        %v4890 = vmul.bf16 %v3866, %v4762
        %v4891 = vmul.bf16 %v3867, %v4763
        %v4892 = vmul.bf16 %v3868, %v4764
        %v4893 = vmul.bf16 %v3869, %v4765
        %v4894 = vmul.bf16 %v3870, %v4766
        %v4895 = vmul.bf16 %v3871, %v4767
        %v4896 = vmul.bf16 %v3872, %v4768
        %v4897 = vmul.bf16 %v3873, %v4769
        %v4898 = vmul.bf16 %v3874, %v4770
        %v4899 = vmul.bf16 %v3875, %v4771
        %v4900 = vmul.bf16 %v3876, %v4772
        %v4901 = vmul.bf16 %v3877, %v4773
        %v4902 = vmul.bf16 %v3878, %v4774
        %v4903 = vmul.bf16 %v3879, %v4775
        %v4904 = vmul.bf16 %v3880, %v4776
        %v4905 = vmul.bf16 %v3881, %v4777
        %v4906 = vmul.bf16 %v3882, %v4778
        %v4907 = vmul.bf16 %v3883, %v4779
        %v4908 = vmul.bf16 %v3884, %v4780
        %v4909 = vmul.bf16 %v3885, %v4781
        %v4910 = vmul.bf16 %v3886, %v4782
        %v4911 = vmul.bf16 %v3887, %v4783
        %v4912 = vmul.bf16 %v3888, %v4784
        %v4913 = vmul.bf16 %v3889, %v4785
        %v4914 = vmul.bf16 %v3890, %v4786
        %v4915 = vmul.bf16 %v3891, %v4787
        %v4916 = vmul.bf16 %v3892, %v4788
        %v4917 = vmul.bf16 %v3893, %v4789
        %v4918 = vmul.bf16 %v3894, %v4790
        %v4919 = vmul.bf16 %v3895, %v4791
        %v4920 = vmul.bf16 %v3896, %v4792
        %v4921 = vmul.bf16 %v3897, %v4793
        %v4922 = vmul.bf16 %v3898, %v4794
        %v4923 = vmul.bf16 %v3899, %v4795
        %v4924 = vmul.bf16 %v3900, %v4796
        %v4925 = vmul.bf16 %v3901, %v4797
        %v4926 = vmul.bf16 %v3902, %v4798
        %v4927 = vmul.bf16 %v3903, %v4799
        %v4928 = vmul.bf16 %v3904, %v4800
        %v4929 = vmul.bf16 %v3905, %v4801
        %v4930 = vmul.bf16 %v3906, %v4802
        %v4931 = vmul.bf16 %v3907, %v4803
        %v4932 = vmul.bf16 %v3908, %v4804
        %v4933 = vmul.bf16 %v3909, %v4805
        %v4934 = vmul.bf16 %v3910, %v4806
        %v4935 = vmul.bf16 %v3911, %v4807
        %v4936 = vmul.bf16 %v3912, %v4808
        %v4937 = vmul.bf16 %v3913, %v4809
        %v4938 = vmul.bf16 %v3914, %v4810
        %v4939 = vmul.bf16 %v3915, %v4811
        %v4940 = vmul.bf16 %v3916, %v4812
        %v4941 = vmul.bf16 %v3917, %v4813
        %v4942 = vmul.bf16 %v3918, %v4814
        %v4943 = vmul.bf16 %v3919, %v4815
        %v4944 = vmul.bf16 %v3920, %v4816
        %v4945 = vmul.bf16 %v3921, %v4817
        %v4946 = vmul.bf16 %v3922, %v4818
        %v4947 = vmul.bf16 %v3923, %v4819
        %v4948 = vmul.bf16 %v3924, %v4820
        %v4949 = vmul.bf16 %v3925, %v4821
        %v4950 = vmul.bf16 %v3926, %v4822
        %v4951 = vmul.bf16 %v3927, %v4823
        %v4952 = vmul.bf16 %v3928, %v4824
        %v4953 = vmul.bf16 %v3929, %v4825
        %v4954 = vmul.bf16 %v3930, %v4826
        %v4955 = vmul.bf16 %v3931, %v4827
        %v4956 = vmul.bf16 %v3932, %v4828
        %v4957 = vmul.bf16 %v3933, %v4829
        %v4958 = vmul.bf16 %v3934, %v4830
        %v4959 = vmul.bf16 %v3935, %v4831
        %v4960 = vmul.bf16 %v3936, %v4832
        %v4961 = vmul.bf16 %v3937, %v4833
        %v4962 = vmul.bf16 %v3938, %v4834
        %v4963 = vmul.bf16 %v3939, %v4835
        %v4964 = vmul.bf16 %v3940, %v4836
        %v4965 = vmul.bf16 %v3941, %v4837
        %v4966 = vmul.bf16 %v3942, %v4838
        %v4967 = vmul.bf16 %v3943, %v4839
        %v4968 = vmul.bf16 %v3944, %v4840
        %v4969 = vmul.bf16 %v3945, %v4841
        %v4970 = vmul.bf16 %v3946, %v4842
        %v4971 = vmul.bf16 %v3947, %v4843
        %v4972 = vmul.bf16 %v3948, %v4844
        %v4973 = vmul.bf16 %v3949, %v4845
        %v4974 = vmul.bf16 %v3950, %v4846
        %v4975 = vmul.bf16 %v3951, %v4847
        %v4976 = vmul.bf16 %v3952, %v4848
        %v4977 = vmul.bf16 %v3953, %v4849
        %v4978 = vmul.bf16 %v3954, %v4850
        %v4979 = vmul.bf16 %v3955, %v4851
        %v4980 = vmul.bf16 %v3956, %v4852
        %v4981 = vmul.bf16 %v3957, %v4853
        %v4982 = vmul.bf16 %v3958, %v4854
        %v4983 = vmul.bf16 %v3959, %v4855
        %v4984 = vmul.bf16 %v3960, %v4856
        %v4985 = vmul.bf16 %v3961, %v4857
        %v4986 = vmul.bf16 %v3962, %v4858
        %v4987 = vmul.bf16 %v3963, %v4859
        %v4988 = vmul.bf16 %v3964, %v4860
        %v4989 = vmul.bf16 %v3965, %v4861
        %v4990 = vmul.bf16 %v3966, %v4862
        %v4991 = vmul.bf16 %v3967, %v4863
        %v4992 = vmul.bf16 %v3968, %v4864
        %v4993 = vmul.bf16 %v3969, %v4865
        %v4994 = vmul.bf16 %v3970, %v4866
        %v4995 = vmul.bf16 %v3971, %v4867
        %v4996 = vmul.bf16 %v3972, %v4868
        %v4997 = vmul.bf16 %v3973, %v4869
        %v4998 = vmul.bf16 %v3974, %v4870
        %v4999 = vmul.bf16 %v3975, %v4871
        %v5000 = vmul.bf16 %v3976, %v4872
        %v5001 = vmul.bf16 %v3977, %v4873
        %v5002 = vmul.bf16 %v3978, %v4874
        %v5003 = vmul.bf16 %v3979, %v4875
        %v5004 = vmul.bf16 %v3980, %v4876
        %v5005 = vmul.bf16 %v3981, %v4877
        %v5006 = vmul.bf16 %v3982, %v4878
        %v5007 = vmul.bf16 %v3983, %v4879
        %v5008 = vmul.bf16 %v3984, %v4880
        %v5009 = vmul.bf16 %v3985, %v4881
        %v5010 = vmul.bf16 %v3986, %v4882
        %v5011 = vmul.bf16 %v3987, %v4883
        %v5012 = vmul.bf16 %v3988, %v4884
        %v5013 = vmul.bf16 %v3989, %v4885
        %v5014 = vmul.bf16 %v3990, %v4886
        %v5015 = vmul.bf16 %v3991, %v4887
        %v5016 = vld [vmem:[#allocation8] sm:$0xff]
        %v5017 = vld [vmem:[#allocation8 + $0x8] sm:$0xff]
        %v5018 = vld [vmem:[#allocation8 + $0x10] sm:$0xff]
        %v5019 = vld [vmem:[#allocation8 + $0x18] sm:$0xff]
        %v5020 = vld [vmem:[#allocation8 + $0x20] sm:$0xff]
        %v5021 = vld [vmem:[#allocation8 + $0x28] sm:$0xff]
        %v5022 = vld [vmem:[#allocation8 + $0x30] sm:$0xff]
        %v5023 = vld [vmem:[#allocation8 + $0x38] sm:$0xff]
        %v5024 = vld [vmem:[#allocation8 + $0x40] sm:$0xff]
        %v5025 = vld [vmem:[#allocation8 + $0x48] sm:$0xff]
        %v5026 = vld [vmem:[#allocation8 + $0x50] sm:$0xff]
        %v5027 = vld [vmem:[#allocation8 + $0x58] sm:$0xff]
        %v5028 = vld [vmem:[#allocation8 + $0x60] sm:$0xff]
        %v5029 = vld [vmem:[#allocation8 + $0x68] sm:$0xff]
        %v5030 = vld [vmem:[#allocation8 + $0x70] sm:$0xff]
        %v5031 = vld [vmem:[#allocation8 + $0x78] sm:$0xff]
        %v5032 = vld [vmem:[#allocation8 + $0x80] sm:$0xff]
        %v5033 = vld [vmem:[#allocation8 + $0x88] sm:$0xff]
        %v5034 = vld [vmem:[#allocation8 + $0x90] sm:$0xff]
        %v5035 = vld [vmem:[#allocation8 + $0x98] sm:$0xff]
        %v5036 = vld [vmem:[#allocation8 + $0xa0] sm:$0xff]
        %v5037 = vld [vmem:[#allocation8 + $0xa8] sm:$0xff]
        %v5038 = vld [vmem:[#allocation8 + $0xb0] sm:$0xff]
        %v5039 = vld [vmem:[#allocation8 + $0xb8] sm:$0xff]
        %v5040 = vld [vmem:[#allocation8 + $0xc0] sm:$0xff]
        %v5041 = vld [vmem:[#allocation8 + $0xc8] sm:$0xff]
        %v5042 = vld [vmem:[#allocation8 + $0xd0] sm:$0xff]
        %v5043 = vld [vmem:[#allocation8 + $0xd8] sm:$0xff]
        %v5044 = vld [vmem:[#allocation8 + $0xe0] sm:$0xff]
        %v5045 = vld [vmem:[#allocation8 + $0xe8] sm:$0xff]
        %v5046 = vld [vmem:[#allocation8 + $0xf0] sm:$0xff]
        %v5047 = vld [vmem:[#allocation8 + $0xf8] sm:$0xff]
        %v5048 = vld [vmem:[#allocation8 + $0x100] sm:$0xff]
        %v5049 = vld [vmem:[#allocation8 + $0x108] sm:$0xff]
        %v5050 = vld [vmem:[#allocation8 + $0x110] sm:$0xff]
        %v5051 = vld [vmem:[#allocation8 + $0x118] sm:$0xff]
        %v5052 = vld [vmem:[#allocation8 + $0x120] sm:$0xff]
        %v5053 = vld [vmem:[#allocation8 + $0x128] sm:$0xff]
        %v5054 = vld [vmem:[#allocation8 + $0x130] sm:$0xff]
        %v5055 = vld [vmem:[#allocation8 + $0x138] sm:$0xff]
        %v5056 = vld [vmem:[#allocation8 + $0x140] sm:$0xff]
        %v5057 = vld [vmem:[#allocation8 + $0x148] sm:$0xff]
        %v5058 = vld [vmem:[#allocation8 + $0x150] sm:$0xff]
        %v5059 = vld [vmem:[#allocation8 + $0x158] sm:$0xff]
        %v5060 = vld [vmem:[#allocation8 + $0x160] sm:$0xff]
        %v5061 = vld [vmem:[#allocation8 + $0x168] sm:$0xff]
        %v5062 = vld [vmem:[#allocation8 + $0x170] sm:$0xff]
        %v5063 = vld [vmem:[#allocation8 + $0x178] sm:$0xff]
        %v5064 = vld [vmem:[#allocation8 + $0x180] sm:$0xff]
        %v5065 = vld [vmem:[#allocation8 + $0x188] sm:$0xff]
        %v5066 = vld [vmem:[#allocation8 + $0x190] sm:$0xff]
        %v5067 = vld [vmem:[#allocation8 + $0x198] sm:$0xff]
        %v5068 = vld [vmem:[#allocation8 + $0x1a0] sm:$0xff]
        %v5069 = vld [vmem:[#allocation8 + $0x1a8] sm:$0xff]
        %v5070 = vld [vmem:[#allocation8 + $0x1b0] sm:$0xff]
        %v5071 = vld [vmem:[#allocation8 + $0x1b8] sm:$0xff]
        %v5072 = vld [vmem:[#allocation8 + $0x1c0] sm:$0xff]
        %v5073 = vld [vmem:[#allocation8 + $0x1c8] sm:$0xff]
        %v5074 = vld [vmem:[#allocation8 + $0x1d0] sm:$0xff]
        %v5075 = vld [vmem:[#allocation8 + $0x1d8] sm:$0xff]
        %v5076 = vld [vmem:[#allocation8 + $0x1e0] sm:$0xff]
        %v5077 = vld [vmem:[#allocation8 + $0x1e8] sm:$0xff]
        %v5078 = vld [vmem:[#allocation8 + $0x1f0] sm:$0xff]
        %v5079 = vld [vmem:[#allocation8 + $0x1f8] sm:$0xff]
        %v5080 = vld [vmem:[#allocation8 + $0x200] sm:$0xff]
        %v5081 = vld [vmem:[#allocation8 + $0x208] sm:$0xff]
        %v5082 = vld [vmem:[#allocation8 + $0x210] sm:$0xff]
        %v5083 = vld [vmem:[#allocation8 + $0x218] sm:$0xff]
        %v5084 = vld [vmem:[#allocation8 + $0x220] sm:$0xff]
        %v5085 = vld [vmem:[#allocation8 + $0x228] sm:$0xff]
        %v5086 = vld [vmem:[#allocation8 + $0x230] sm:$0xff]
        %v5087 = vld [vmem:[#allocation8 + $0x238] sm:$0xff]
        %v5088 = vld [vmem:[#allocation8 + $0x240] sm:$0xff]
        %v5089 = vld [vmem:[#allocation8 + $0x248] sm:$0xff]
        %v5090 = vld [vmem:[#allocation8 + $0x250] sm:$0xff]
        %v5091 = vld [vmem:[#allocation8 + $0x258] sm:$0xff]
        %v5092 = vld [vmem:[#allocation8 + $0x260] sm:$0xff]
        %v5093 = vld [vmem:[#allocation8 + $0x268] sm:$0xff]
        %v5094 = vld [vmem:[#allocation8 + $0x270] sm:$0xff]
        %v5095 = vld [vmem:[#allocation8 + $0x278] sm:$0xff]
        %v5096 = vld [vmem:[#allocation8 + $0x280] sm:$0xff]
        %v5097 = vld [vmem:[#allocation8 + $0x288] sm:$0xff]
        %v5098 = vld [vmem:[#allocation8 + $0x290] sm:$0xff]
        %v5099 = vld [vmem:[#allocation8 + $0x298] sm:$0xff]
        %v5100 = vld [vmem:[#allocation8 + $0x2a0] sm:$0xff]
        %v5101 = vld [vmem:[#allocation8 + $0x2a8] sm:$0xff]
        %v5102 = vld [vmem:[#allocation8 + $0x2b0] sm:$0xff]
        %v5103 = vld [vmem:[#allocation8 + $0x2b8] sm:$0xff]
        %v5104 = vld [vmem:[#allocation8 + $0x2c0] sm:$0xff]
        %v5105 = vld [vmem:[#allocation8 + $0x2c8] sm:$0xff]
        %v5106 = vld [vmem:[#allocation8 + $0x2d0] sm:$0xff]
        %v5107 = vld [vmem:[#allocation8 + $0x2d8] sm:$0xff]
        %v5108 = vld [vmem:[#allocation8 + $0x2e0] sm:$0xff]
        %v5109 = vld [vmem:[#allocation8 + $0x2e8] sm:$0xff]
        %v5110 = vld [vmem:[#allocation8 + $0x2f0] sm:$0xff]
        %v5111 = vld [vmem:[#allocation8 + $0x2f8] sm:$0xff]
        %v5112 = vld [vmem:[#allocation8 + $0x300] sm:$0xff]
        %v5113 = vld [vmem:[#allocation8 + $0x308] sm:$0xff]
        %v5114 = vld [vmem:[#allocation8 + $0x310] sm:$0xff]
        %v5115 = vld [vmem:[#allocation8 + $0x318] sm:$0xff]
        %v5116 = vld [vmem:[#allocation8 + $0x320] sm:$0xff]
        %v5117 = vld [vmem:[#allocation8 + $0x328] sm:$0xff]
        %v5118 = vld [vmem:[#allocation8 + $0x330] sm:$0xff]
        %v5119 = vld [vmem:[#allocation8 + $0x338] sm:$0xff]
        %v5120 = vld [vmem:[#allocation8 + $0x340] sm:$0xff]
        %v5121 = vld [vmem:[#allocation8 + $0x348] sm:$0xff]
        %v5122 = vld [vmem:[#allocation8 + $0x350] sm:$0xff]
        %v5123 = vld [vmem:[#allocation8 + $0x358] sm:$0xff]
        %v5124 = vld [vmem:[#allocation8 + $0x360] sm:$0xff]
        %v5125 = vld [vmem:[#allocation8 + $0x368] sm:$0xff]
        %v5126 = vld [vmem:[#allocation8 + $0x370] sm:$0xff]
        %v5127 = vld [vmem:[#allocation8 + $0x378] sm:$0xff]
        %v5128 = vld [vmem:[#allocation8 + $0x380] sm:$0xff]
        %v5129 = vld [vmem:[#allocation8 + $0x388] sm:$0xff]
        %v5130 = vld [vmem:[#allocation8 + $0x390] sm:$0xff]
        %v5131 = vld [vmem:[#allocation8 + $0x398] sm:$0xff]
        %v5132 = vld [vmem:[#allocation8 + $0x3a0] sm:$0xff]
        %v5133 = vld [vmem:[#allocation8 + $0x3a8] sm:$0xff]
        %v5134 = vld [vmem:[#allocation8 + $0x3b0] sm:$0xff]
        %v5135 = vld [vmem:[#allocation8 + $0x3b8] sm:$0xff]
        %v5136 = vld [vmem:[#allocation8 + $0x3c0] sm:$0xff]
        %v5137 = vld [vmem:[#allocation8 + $0x3c8] sm:$0xff]
        %v5138 = vld [vmem:[#allocation8 + $0x3d0] sm:$0xff]
        %v5139 = vld [vmem:[#allocation8 + $0x3d8] sm:$0xff]
        %v5140 = vld [vmem:[#allocation8 + $0x3e0] sm:$0xff]
        %v5141 = vld [vmem:[#allocation8 + $0x3e8] sm:$0xff]
        %v5142 = vld [vmem:[#allocation8 + $0x3f0] sm:$0xff]
        %v5143 = vld [vmem:[#allocation8 + $0x3f8] sm:$0xff]
        %v5144 = vld [vmem:[%s6] sm:$0x3]
        %v5146 = vlaneseq
        %v5147 = vshrl.u32 %v5146, 7
        %v5148 = vsub.s32 0, %v5147
        %v5149 = vrot.slane %v5144, %v5148
        %v5150 = vlaneseq
        %v5151 = vshrl.u32 %v5150, 7
        %v5152 = vsub.s32 1, %v5151
        %v5153 = vrot.slane %v5144, %v5152
        %v5284 = vunpack.c.l.b16 %v5016
        %v5285 = vunpack.c.h.b16 %v5016
        %v5286 = vunpack.c.l.b16 %v5017
        %v5287 = vunpack.c.h.b16 %v5017
        %v5288 = vunpack.c.l.b16 %v5018
        %v5289 = vunpack.c.h.b16 %v5018
        %v5290 = vunpack.c.l.b16 %v5019
        %v5291 = vunpack.c.h.b16 %v5019
        %v5292 = vunpack.c.l.b16 %v5020
        %v5293 = vunpack.c.h.b16 %v5020
        %v5294 = vunpack.c.l.b16 %v5021
        %v5295 = vunpack.c.h.b16 %v5021
        %v5296 = vunpack.c.l.b16 %v5022
        %v5297 = vunpack.c.h.b16 %v5022
        %v5298 = vunpack.c.l.b16 %v5023
        %v5299 = vunpack.c.h.b16 %v5023
        %v5300 = vunpack.c.l.b16 %v5024
        %v5301 = vunpack.c.h.b16 %v5024
        %v5302 = vunpack.c.l.b16 %v5025
        %v5303 = vunpack.c.h.b16 %v5025
        %v5304 = vunpack.c.l.b16 %v5026
        %v5305 = vunpack.c.h.b16 %v5026
        %v5306 = vunpack.c.l.b16 %v5027
        %v5307 = vunpack.c.h.b16 %v5027
        %v5308 = vunpack.c.l.b16 %v5028
        %v5309 = vunpack.c.h.b16 %v5028
        %v5310 = vunpack.c.l.b16 %v5029
        %v5311 = vunpack.c.h.b16 %v5029
        %v5312 = vunpack.c.l.b16 %v5030
        %v5313 = vunpack.c.h.b16 %v5030
        %v5314 = vunpack.c.l.b16 %v5031
        %v5315 = vunpack.c.h.b16 %v5031
        %v5316 = vunpack.c.l.b16 %v5032
        %v5317 = vunpack.c.h.b16 %v5032
        %v5318 = vunpack.c.l.b16 %v5033
        %v5319 = vunpack.c.h.b16 %v5033
        %v5320 = vunpack.c.l.b16 %v5034
        %v5321 = vunpack.c.h.b16 %v5034
        %v5322 = vunpack.c.l.b16 %v5035
        %v5323 = vunpack.c.h.b16 %v5035
        %v5324 = vunpack.c.l.b16 %v5036
        %v5325 = vunpack.c.h.b16 %v5036
        %v5326 = vunpack.c.l.b16 %v5037
        %v5327 = vunpack.c.h.b16 %v5037
        %v5328 = vunpack.c.l.b16 %v5038
        %v5329 = vunpack.c.h.b16 %v5038
        %v5330 = vunpack.c.l.b16 %v5039
        %v5331 = vunpack.c.h.b16 %v5039
        %v5332 = vunpack.c.l.b16 %v5040
        %v5333 = vunpack.c.h.b16 %v5040
        %v5334 = vunpack.c.l.b16 %v5041
        %v5335 = vunpack.c.h.b16 %v5041
        %v5336 = vunpack.c.l.b16 %v5042
        %v5337 = vunpack.c.h.b16 %v5042
        %v5338 = vunpack.c.l.b16 %v5043
        %v5339 = vunpack.c.h.b16 %v5043
        %v5340 = vunpack.c.l.b16 %v5044
        %v5341 = vunpack.c.h.b16 %v5044
        %v5342 = vunpack.c.l.b16 %v5045
        %v5343 = vunpack.c.h.b16 %v5045
        %v5344 = vunpack.c.l.b16 %v5046
        %v5345 = vunpack.c.h.b16 %v5046
        %v5346 = vunpack.c.l.b16 %v5047
        %v5347 = vunpack.c.h.b16 %v5047
        %v5348 = vunpack.c.l.b16 %v5048
        %v5349 = vunpack.c.h.b16 %v5048
        %v5350 = vunpack.c.l.b16 %v5049
        %v5351 = vunpack.c.h.b16 %v5049
        %v5352 = vunpack.c.l.b16 %v5050
        %v5353 = vunpack.c.h.b16 %v5050
        %v5354 = vunpack.c.l.b16 %v5051
        %v5355 = vunpack.c.h.b16 %v5051
        %v5356 = vunpack.c.l.b16 %v5052
        %v5357 = vunpack.c.h.b16 %v5052
        %v5358 = vunpack.c.l.b16 %v5053
        %v5359 = vunpack.c.h.b16 %v5053
        %v5360 = vunpack.c.l.b16 %v5054
        %v5361 = vunpack.c.h.b16 %v5054
        %v5362 = vunpack.c.l.b16 %v5055
        %v5363 = vunpack.c.h.b16 %v5055
        %v5364 = vunpack.c.l.b16 %v5056
        %v5365 = vunpack.c.h.b16 %v5056
        %v5366 = vunpack.c.l.b16 %v5057
        %v5367 = vunpack.c.h.b16 %v5057
        %v5368 = vunpack.c.l.b16 %v5058
        %v5369 = vunpack.c.h.b16 %v5058
        %v5370 = vunpack.c.l.b16 %v5059
        %v5371 = vunpack.c.h.b16 %v5059
        %v5372 = vunpack.c.l.b16 %v5060
        %v5373 = vunpack.c.h.b16 %v5060
        %v5374 = vunpack.c.l.b16 %v5061
        %v5375 = vunpack.c.h.b16 %v5061
        %v5376 = vunpack.c.l.b16 %v5062
        %v5377 = vunpack.c.h.b16 %v5062
        %v5378 = vunpack.c.l.b16 %v5063
        %v5379 = vunpack.c.h.b16 %v5063
        %v5380 = vunpack.c.l.b16 %v5064
        %v5381 = vunpack.c.h.b16 %v5064
        %v5382 = vunpack.c.l.b16 %v5065
        %v5383 = vunpack.c.h.b16 %v5065
        %v5384 = vunpack.c.l.b16 %v5066
        %v5385 = vunpack.c.h.b16 %v5066
        %v5386 = vunpack.c.l.b16 %v5067
        %v5387 = vunpack.c.h.b16 %v5067
        %v5388 = vunpack.c.l.b16 %v5068
        %v5389 = vunpack.c.h.b16 %v5068
        %v5390 = vunpack.c.l.b16 %v5069
        %v5391 = vunpack.c.h.b16 %v5069
        %v5392 = vunpack.c.l.b16 %v5070
        %v5393 = vunpack.c.h.b16 %v5070
        %v5394 = vunpack.c.l.b16 %v5071
        %v5395 = vunpack.c.h.b16 %v5071
        %v5396 = vunpack.c.l.b16 %v5072
        %v5397 = vunpack.c.h.b16 %v5072
        %v5398 = vunpack.c.l.b16 %v5073
        %v5399 = vunpack.c.h.b16 %v5073
        %v5400 = vunpack.c.l.b16 %v5074
        %v5401 = vunpack.c.h.b16 %v5074
        %v5402 = vunpack.c.l.b16 %v5075
        %v5403 = vunpack.c.h.b16 %v5075
        %v5404 = vunpack.c.l.b16 %v5076
        %v5405 = vunpack.c.h.b16 %v5076
        %v5406 = vunpack.c.l.b16 %v5077
        %v5407 = vunpack.c.h.b16 %v5077
        %v5408 = vunpack.c.l.b16 %v5078
        %v5409 = vunpack.c.h.b16 %v5078
        %v5410 = vunpack.c.l.b16 %v5079
        %v5411 = vunpack.c.h.b16 %v5079
        %v5412 = vunpack.c.l.b16 %v5080
        %v5413 = vunpack.c.h.b16 %v5080
        %v5414 = vunpack.c.l.b16 %v5081
        %v5415 = vunpack.c.h.b16 %v5081
        %v5416 = vunpack.c.l.b16 %v5082
        %v5417 = vunpack.c.h.b16 %v5082
        %v5418 = vunpack.c.l.b16 %v5083
        %v5419 = vunpack.c.h.b16 %v5083
        %v5420 = vunpack.c.l.b16 %v5084
        %v5421 = vunpack.c.h.b16 %v5084
        %v5422 = vunpack.c.l.b16 %v5085
        %v5423 = vunpack.c.h.b16 %v5085
        %v5424 = vunpack.c.l.b16 %v5086
        %v5425 = vunpack.c.h.b16 %v5086
        %v5426 = vunpack.c.l.b16 %v5087
        %v5427 = vunpack.c.h.b16 %v5087
        %v5428 = vunpack.c.l.b16 %v5088
        %v5429 = vunpack.c.h.b16 %v5088
        %v5430 = vunpack.c.l.b16 %v5089
        %v5431 = vunpack.c.h.b16 %v5089
        %v5432 = vunpack.c.l.b16 %v5090
        %v5433 = vunpack.c.h.b16 %v5090
        %v5434 = vunpack.c.l.b16 %v5091
        %v5435 = vunpack.c.h.b16 %v5091
        %v5436 = vunpack.c.l.b16 %v5092
        %v5437 = vunpack.c.h.b16 %v5092
        %v5438 = vunpack.c.l.b16 %v5093
        %v5439 = vunpack.c.h.b16 %v5093
        %v5440 = vunpack.c.l.b16 %v5094
        %v5441 = vunpack.c.h.b16 %v5094
        %v5442 = vunpack.c.l.b16 %v5095
        %v5443 = vunpack.c.h.b16 %v5095
        %v5444 = vunpack.c.l.b16 %v5096
        %v5445 = vunpack.c.h.b16 %v5096
        %v5446 = vunpack.c.l.b16 %v5097
        %v5447 = vunpack.c.h.b16 %v5097
        %v5448 = vunpack.c.l.b16 %v5098
        %v5449 = vunpack.c.h.b16 %v5098
        %v5450 = vunpack.c.l.b16 %v5099
        %v5451 = vunpack.c.h.b16 %v5099
        %v5452 = vunpack.c.l.b16 %v5100
        %v5453 = vunpack.c.h.b16 %v5100
        %v5454 = vunpack.c.l.b16 %v5101
        %v5455 = vunpack.c.h.b16 %v5101
        %v5456 = vunpack.c.l.b16 %v5102
        %v5457 = vunpack.c.h.b16 %v5102
        %v5458 = vunpack.c.l.b16 %v5103
        %v5459 = vunpack.c.h.b16 %v5103
        %v5460 = vunpack.c.l.b16 %v5104
        %v5461 = vunpack.c.h.b16 %v5104
        %v5462 = vunpack.c.l.b16 %v5105
        %v5463 = vunpack.c.h.b16 %v5105
        %v5464 = vunpack.c.l.b16 %v5106
        %v5465 = vunpack.c.h.b16 %v5106
        %v5466 = vunpack.c.l.b16 %v5107
        %v5467 = vunpack.c.h.b16 %v5107
        %v5468 = vunpack.c.l.b16 %v5108
        %v5469 = vunpack.c.h.b16 %v5108
        %v5470 = vunpack.c.l.b16 %v5109
        %v5471 = vunpack.c.h.b16 %v5109
        %v5472 = vunpack.c.l.b16 %v5110
        %v5473 = vunpack.c.h.b16 %v5110
        %v5474 = vunpack.c.l.b16 %v5111
        %v5475 = vunpack.c.h.b16 %v5111
        %v5476 = vunpack.c.l.b16 %v5112
        %v5477 = vunpack.c.h.b16 %v5112
        %v5478 = vunpack.c.l.b16 %v5113
        %v5479 = vunpack.c.h.b16 %v5113
        %v5480 = vunpack.c.l.b16 %v5114
        %v5481 = vunpack.c.h.b16 %v5114
        %v5482 = vunpack.c.l.b16 %v5115
        %v5483 = vunpack.c.h.b16 %v5115
        %v5484 = vunpack.c.l.b16 %v5116
        %v5485 = vunpack.c.h.b16 %v5116
        %v5486 = vunpack.c.l.b16 %v5117
        %v5487 = vunpack.c.h.b16 %v5117
        %v5488 = vunpack.c.l.b16 %v5118
        %v5489 = vunpack.c.h.b16 %v5118
        %v5490 = vunpack.c.l.b16 %v5119
        %v5491 = vunpack.c.h.b16 %v5119
        %v5492 = vunpack.c.l.b16 %v5120
        %v5493 = vunpack.c.h.b16 %v5120
        %v5494 = vunpack.c.l.b16 %v5121
        %v5495 = vunpack.c.h.b16 %v5121
        %v5496 = vunpack.c.l.b16 %v5122
        %v5497 = vunpack.c.h.b16 %v5122
        %v5498 = vunpack.c.l.b16 %v5123
        %v5499 = vunpack.c.h.b16 %v5123
        %v5500 = vunpack.c.l.b16 %v5124
        %v5501 = vunpack.c.h.b16 %v5124
        %v5502 = vunpack.c.l.b16 %v5125
        %v5503 = vunpack.c.h.b16 %v5125
        %v5504 = vunpack.c.l.b16 %v5126
        %v5505 = vunpack.c.h.b16 %v5126
        %v5506 = vunpack.c.l.b16 %v5127
        %v5507 = vunpack.c.h.b16 %v5127
        %v5508 = vunpack.c.l.b16 %v5128
        %v5509 = vunpack.c.h.b16 %v5128
        %v5510 = vunpack.c.l.b16 %v5129
        %v5511 = vunpack.c.h.b16 %v5129
        %v5512 = vunpack.c.l.b16 %v5130
        %v5513 = vunpack.c.h.b16 %v5130
        %v5514 = vunpack.c.l.b16 %v5131
        %v5515 = vunpack.c.h.b16 %v5131
        %v5516 = vunpack.c.l.b16 %v5132
        %v5517 = vunpack.c.h.b16 %v5132
        %v5518 = vunpack.c.l.b16 %v5133
        %v5519 = vunpack.c.h.b16 %v5133
        %v5520 = vunpack.c.l.b16 %v5134
        %v5521 = vunpack.c.h.b16 %v5134
        %v5522 = vunpack.c.l.b16 %v5135
        %v5523 = vunpack.c.h.b16 %v5135
        %v5524 = vunpack.c.l.b16 %v5136
        %v5525 = vunpack.c.h.b16 %v5136
        %v5526 = vunpack.c.l.b16 %v5137
        %v5527 = vunpack.c.h.b16 %v5137
        %v5528 = vunpack.c.l.b16 %v5138
        %v5529 = vunpack.c.h.b16 %v5138
        %v5530 = vunpack.c.l.b16 %v5139
        %v5531 = vunpack.c.h.b16 %v5139
        %v5532 = vunpack.c.l.b16 %v5140
        %v5533 = vunpack.c.h.b16 %v5140
        %v5534 = vunpack.c.l.b16 %v5141
        %v5535 = vunpack.c.h.b16 %v5141
        %v5536 = vunpack.c.l.b16 %v5142
        %v5537 = vunpack.c.h.b16 %v5142
        %v5538 = vunpack.c.l.b16 %v5143
        %v5539 = vunpack.c.h.b16 %v5143
        %v5540 = vpack.c.b16 %v5286, %v5284
        %v5541 = vpack.c.b16 %v5287, %v5285
        %v5542 = vpack.c.b16 %v5290, %v5288
        %v5543 = vpack.c.b16 %v5291, %v5289
        %v5544 = vpack.c.b16 %v5294, %v5292
        %v5545 = vpack.c.b16 %v5295, %v5293
        %v5546 = vpack.c.b16 %v5298, %v5296
        %v5547 = vpack.c.b16 %v5299, %v5297
        %v5548 = vpack.c.b16 %v5302, %v5300
        %v5549 = vpack.c.b16 %v5303, %v5301
        %v5550 = vpack.c.b16 %v5306, %v5304
        %v5551 = vpack.c.b16 %v5307, %v5305
        %v5552 = vpack.c.b16 %v5310, %v5308
        %v5553 = vpack.c.b16 %v5311, %v5309
        %v5554 = vpack.c.b16 %v5314, %v5312
        %v5555 = vpack.c.b16 %v5315, %v5313
        %v5556 = vpack.c.b16 %v5318, %v5316
        %v5557 = vpack.c.b16 %v5319, %v5317
        %v5558 = vpack.c.b16 %v5322, %v5320
        %v5559 = vpack.c.b16 %v5323, %v5321
        %v5560 = vpack.c.b16 %v5326, %v5324
        %v5561 = vpack.c.b16 %v5327, %v5325
        %v5562 = vpack.c.b16 %v5330, %v5328
        %v5563 = vpack.c.b16 %v5331, %v5329
        %v5564 = vpack.c.b16 %v5334, %v5332
        %v5565 = vpack.c.b16 %v5335, %v5333
        %v5566 = vpack.c.b16 %v5338, %v5336
        %v5567 = vpack.c.b16 %v5339, %v5337
        %v5568 = vpack.c.b16 %v5342, %v5340
        %v5569 = vpack.c.b16 %v5343, %v5341
        %v5570 = vpack.c.b16 %v5346, %v5344
        %v5571 = vpack.c.b16 %v5347, %v5345
        %v5572 = vpack.c.b16 %v5350, %v5348
        %v5573 = vpack.c.b16 %v5351, %v5349
        %v5574 = vpack.c.b16 %v5354, %v5352
        %v5575 = vpack.c.b16 %v5355, %v5353
        %v5576 = vpack.c.b16 %v5358, %v5356
        %v5577 = vpack.c.b16 %v5359, %v5357
        %v5578 = vpack.c.b16 %v5362, %v5360
        %v5579 = vpack.c.b16 %v5363, %v5361
        %v5580 = vpack.c.b16 %v5366, %v5364
        %v5581 = vpack.c.b16 %v5367, %v5365
        %v5582 = vpack.c.b16 %v5370, %v5368
        %v5583 = vpack.c.b16 %v5371, %v5369
        %v5584 = vpack.c.b16 %v5374, %v5372
        %v5585 = vpack.c.b16 %v5375, %v5373
        %v5586 = vpack.c.b16 %v5378, %v5376
        %v5587 = vpack.c.b16 %v5379, %v5377
        %v5588 = vpack.c.b16 %v5382, %v5380
        %v5589 = vpack.c.b16 %v5383, %v5381
        %v5590 = vpack.c.b16 %v5386, %v5384
        %v5591 = vpack.c.b16 %v5387, %v5385
        %v5592 = vpack.c.b16 %v5390, %v5388
        %v5593 = vpack.c.b16 %v5391, %v5389
        %v5594 = vpack.c.b16 %v5394, %v5392
        %v5595 = vpack.c.b16 %v5395, %v5393
        %v5596 = vpack.c.b16 %v5398, %v5396
        %v5597 = vpack.c.b16 %v5399, %v5397
        %v5598 = vpack.c.b16 %v5402, %v5400
        %v5599 = vpack.c.b16 %v5403, %v5401
        %v5600 = vpack.c.b16 %v5406, %v5404
        %v5601 = vpack.c.b16 %v5407, %v5405
        %v5602 = vpack.c.b16 %v5410, %v5408
        %v5603 = vpack.c.b16 %v5411, %v5409
        %v5604 = vpack.c.b16 %v5414, %v5412
        %v5605 = vpack.c.b16 %v5415, %v5413
        %v5606 = vpack.c.b16 %v5418, %v5416
        %v5607 = vpack.c.b16 %v5419, %v5417
        %v5608 = vpack.c.b16 %v5422, %v5420
        %v5609 = vpack.c.b16 %v5423, %v5421
        %v5610 = vpack.c.b16 %v5426, %v5424
        %v5611 = vpack.c.b16 %v5427, %v5425
        %v5612 = vpack.c.b16 %v5430, %v5428
        %v5613 = vpack.c.b16 %v5431, %v5429
        %v5614 = vpack.c.b16 %v5434, %v5432
        %v5615 = vpack.c.b16 %v5435, %v5433
        %v5616 = vpack.c.b16 %v5438, %v5436
        %v5617 = vpack.c.b16 %v5439, %v5437
        %v5618 = vpack.c.b16 %v5442, %v5440
        %v5619 = vpack.c.b16 %v5443, %v5441
        %v5620 = vpack.c.b16 %v5446, %v5444
        %v5621 = vpack.c.b16 %v5447, %v5445
        %v5622 = vpack.c.b16 %v5450, %v5448
        %v5623 = vpack.c.b16 %v5451, %v5449
        %v5624 = vpack.c.b16 %v5454, %v5452
        %v5625 = vpack.c.b16 %v5455, %v5453
        %v5626 = vpack.c.b16 %v5458, %v5456
        %v5627 = vpack.c.b16 %v5459, %v5457
        %v5628 = vpack.c.b16 %v5462, %v5460
        %v5629 = vpack.c.b16 %v5463, %v5461
        %v5630 = vpack.c.b16 %v5466, %v5464
        %v5631 = vpack.c.b16 %v5467, %v5465
        %v5632 = vpack.c.b16 %v5470, %v5468
        %v5633 = vpack.c.b16 %v5471, %v5469
        %v5634 = vpack.c.b16 %v5474, %v5472
        %v5635 = vpack.c.b16 %v5475, %v5473
        %v5636 = vpack.c.b16 %v5478, %v5476
        %v5637 = vpack.c.b16 %v5479, %v5477
        %v5638 = vpack.c.b16 %v5482, %v5480
        %v5639 = vpack.c.b16 %v5483, %v5481
        %v5640 = vpack.c.b16 %v5486, %v5484
        %v5641 = vpack.c.b16 %v5487, %v5485
        %v5642 = vpack.c.b16 %v5490, %v5488
        %v5643 = vpack.c.b16 %v5491, %v5489
        %v5644 = vpack.c.b16 %v5494, %v5492
        %v5645 = vpack.c.b16 %v5495, %v5493
        %v5646 = vpack.c.b16 %v5498, %v5496
        %v5647 = vpack.c.b16 %v5499, %v5497
        %v5648 = vpack.c.b16 %v5502, %v5500
        %v5649 = vpack.c.b16 %v5503, %v5501
        %v5650 = vpack.c.b16 %v5506, %v5504
        %v5651 = vpack.c.b16 %v5507, %v5505
        %v5652 = vpack.c.b16 %v5510, %v5508
        %v5653 = vpack.c.b16 %v5511, %v5509
        %v5654 = vpack.c.b16 %v5514, %v5512
        %v5655 = vpack.c.b16 %v5515, %v5513
        %v5656 = vpack.c.b16 %v5518, %v5516
        %v5657 = vpack.c.b16 %v5519, %v5517
        %v5658 = vpack.c.b16 %v5522, %v5520
        %v5659 = vpack.c.b16 %v5523, %v5521
        %v5660 = vpack.c.b16 %v5526, %v5524
        %v5661 = vpack.c.b16 %v5527, %v5525
        %v5662 = vpack.c.b16 %v5530, %v5528
        %v5663 = vpack.c.b16 %v5531, %v5529
        %v5664 = vpack.c.b16 %v5534, %v5532
        %v5665 = vpack.c.b16 %v5535, %v5533
        %v5666 = vpack.c.b16 %v5538, %v5536
        %v5667 = vpack.c.b16 %v5539, %v5537
        %5796 = vmatprep.subr.bf16.mxu0 %v5541
        %5797 = vmatpush1.bf16.msra.mxu0 %v5540
        %5798 = vmatprep.subr.bf16.mxu0 %v5543
        %5799 = vmatpush1.bf16.msra.mxu0 %v5542
        %5800 = vmatprep.subr.bf16.mxu0 %v5545
        %5801 = vmatpush1.bf16.msra.mxu0 %v5544
        %5802 = vmatprep.subr.bf16.mxu0 %v5547
        %5803 = vmatpush1.bf16.msra.mxu0 %v5546
        %5804 = vmatprep.subr.bf16.mxu0 %v5549
        %5805 = vmatpush1.bf16.msra.mxu0 %v5548
        %5806 = vmatprep.subr.bf16.mxu0 %v5551
        %5807 = vmatpush1.bf16.msra.mxu0 %v5550
        %5808 = vmatprep.subr.bf16.mxu0 %v5553
        %5809 = vmatpush1.bf16.msra.mxu0 %v5552
        %5810 = vmatprep.subr.bf16.mxu0 %v5555
        %5811 = vmatpush1.bf16.msra.mxu0 %v5554
        %5812 = vmatprep.subr.bf16.mxu0 %v5557
        %5813 = vmatpush1.bf16.msra.mxu0 %v5556
        %5814 = vmatprep.subr.bf16.mxu0 %v5559
        %5815 = vmatpush1.bf16.msra.mxu0 %v5558
        %5816 = vmatprep.subr.bf16.mxu0 %v5561
        %5817 = vmatpush1.bf16.msra.mxu0 %v5560
        %5818 = vmatprep.subr.bf16.mxu0 %v5563
        %5819 = vmatpush1.bf16.msra.mxu0 %v5562
        %5820 = vmatprep.subr.bf16.mxu0 %v5565
        %5821 = vmatpush1.bf16.msra.mxu0 %v5564
        %5822 = vmatprep.subr.bf16.mxu0 %v5567
        %5823 = vmatpush1.bf16.msra.mxu0 %v5566
        %5824 = vmatprep.subr.bf16.mxu0 %v5569
        %5825 = vmatpush1.bf16.msra.mxu0 %v5568
        %5826 = vmatprep.subr.bf16.mxu0 %v5571
        %5827 = vmatpush1.bf16.msra.mxu0 %v5570
        %5828 = vmatprep.mubr.bf16.mxu0 %v4889
        %5829 = vmatmul.mubr.bf16.gmra.mrb[0].mxu0 %v4888
        %v5830 = vpop.f32.mrb[0].mxu0
        %v5831 = vadd.f32 %v5149, %v5830
        %v5832 = vpop.f32.mrb[0].mxu0
        %v5833 = vadd.f32 %v5153, %v5832
        %v5834 = vpop.f32.mrb[0].mxu0
        %v5835 = vadd.f32 %v5149, %v5834
        %v5836 = vpop.f32.mrb[0].mxu0
        %v5837 = vadd.f32 %v5153, %v5836
        %5838 = vmatprep.mubr.bf16.mxu0 %v4897
        %5839 = vmatmul.mubr.bf16.gmra.mrb[0].mxu0 %v4896
        %v5840 = vpop.f32.mrb[0].mxu0
        %v5841 = vadd.f32 %v5149, %v5840
        %v5842 = vpop.f32.mrb[0].mxu0
        %v5843 = vadd.f32 %v5153, %v5842
        %v5844 = vpop.f32.mrb[0].mxu0
        %v5845 = vadd.f32 %v5149, %v5844
        %v5846 = vpop.f32.mrb[0].mxu0
        %v5847 = vadd.f32 %v5153, %v5846
        %5848 = vmatprep.mubr.bf16.mxu0 %v4905
        %5849 = vmatmul.mubr.bf16.gmra.mrb[0].mxu0 %v4904
        %v5850 = vpop.f32.mrb[0].mxu0
        %v5851 = vadd.f32 %v5149, %v5850
        %v5852 = vpop.f32.mrb[0].mxu0
        %v5853 = vadd.f32 %v5153, %v5852
        %v5854 = vpop.f32.mrb[0].mxu0
        %v5855 = vadd.f32 %v5149, %v5854
        %v5856 = vpop.f32.mrb[0].mxu0
        %v5857 = vadd.f32 %v5153, %v5856
        %5858 = vmatprep.mubr.bf16.mxu0 %v4913
        %5859 = vmatmul.mubr.bf16.gmra.mrb[0].mxu0 %v4912
        %v5860 = vpop.f32.mrb[0].mxu0
        %v5861 = vadd.f32 %v5149, %v5860
        %v5862 = vpop.f32.mrb[0].mxu0
        %v5863 = vadd.f32 %v5153, %v5862
        %v5864 = vpop.f32.mrb[0].mxu0
        %v5865 = vadd.f32 %v5149, %v5864
        %v5866 = vpop.f32.mrb[0].mxu0
        %v5867 = vadd.f32 %v5153, %v5866
        %5868 = vmatprep.mubr.bf16.mxu0 %v4921
        %5869 = vmatmul.mubr.bf16.gmra.mrb[0].mxu0 %v4920
        %v5870 = vpop.f32.mrb[0].mxu0
        %v5871 = vadd.f32 %v5149, %v5870
        %v5872 = vpop.f32.mrb[0].mxu0
        %v5873 = vadd.f32 %v5153, %v5872
        %v5874 = vpop.f32.mrb[0].mxu0
        %v5875 = vadd.f32 %v5149, %v5874
        %v5876 = vpop.f32.mrb[0].mxu0
        %v5877 = vadd.f32 %v5153, %v5876
        %5878 = vmatprep.mubr.bf16.mxu0 %v4929
        %5879 = vmatmul.mubr.bf16.gmra.mrb[0].mxu0 %v4928
        %v5880 = vpop.f32.mrb[0].mxu0
        %v5881 = vadd.f32 %v5149, %v5880
        %v5882 = vpop.f32.mrb[0].mxu0
        %v5883 = vadd.f32 %v5153, %v5882
        %v5884 = vpop.f32.mrb[0].mxu0
        %v5885 = vadd.f32 %v5149, %v5884
        %v5886 = vpop.f32.mrb[0].mxu0
        %v5887 = vadd.f32 %v5153, %v5886
        %5888 = vmatprep.mubr.bf16.mxu0 %v4937
        %5889 = vmatmul.mubr.bf16.gmra.mrb[0].mxu0 %v4936
        %v5890 = vpop.f32.mrb[0].mxu0
        %v5891 = vadd.f32 %v5149, %v5890
        %v5892 = vpop.f32.mrb[0].mxu0
        %v5893 = vadd.f32 %v5153, %v5892
        %v5894 = vpop.f32.mrb[0].mxu0
        %v5895 = vadd.f32 %v5149, %v5894
        %v5896 = vpop.f32.mrb[0].mxu0
        %v5897 = vadd.f32 %v5153, %v5896
        %5898 = vmatprep.mubr.bf16.mxu0 %v4945
        %5899 = vmatmul.mubr.bf16.gmra.mrb[0].mxu0 %v4944
        %v5900 = vpop.f32.mrb[0].mxu0
        %v5901 = vadd.f32 %v5149, %v5900
        %v5902 = vpop.f32.mrb[0].mxu0
        %v5903 = vadd.f32 %v5153, %v5902
        %v5904 = vpop.f32.mrb[0].mxu0
        %v5905 = vadd.f32 %v5149, %v5904
        %v5906 = vpop.f32.mrb[0].mxu0
        %v5907 = vadd.f32 %v5153, %v5906
        %5908 = vmatprep.mubr.bf16.mxu0 %v4953
        %5909 = vmatmul.mubr.bf16.gmra.mrb[0].mxu0 %v4952
        %v5910 = vpop.f32.mrb[0].mxu0
        %v5911 = vadd.f32 %v5149, %v5910
        %v5912 = vpop.f32.mrb[0].mxu0
        %v5913 = vadd.f32 %v5153, %v5912
        %v5914 = vpop.f32.mrb[0].mxu0
        %v5915 = vadd.f32 %v5149, %v5914
        %v5916 = vpop.f32.mrb[0].mxu0
        %v5917 = vadd.f32 %v5153, %v5916
        %5918 = vmatprep.mubr.bf16.mxu0 %v4961
        %5919 = vmatmul.mubr.bf16.gmra.mrb[0].mxu0 %v4960
        %v5920 = vpop.f32.mrb[0].mxu0
        %v5921 = vadd.f32 %v5149, %v5920
        %v5922 = vpop.f32.mrb[0].mxu0
        %v5923 = vadd.f32 %v5153, %v5922
        %v5924 = vpop.f32.mrb[0].mxu0
        %v5925 = vadd.f32 %v5149, %v5924
        %v5926 = vpop.f32.mrb[0].mxu0
        %v5927 = vadd.f32 %v5153, %v5926
        %5928 = vmatprep.mubr.bf16.mxu0 %v4969
        %5929 = vmatmul.mubr.bf16.gmra.mrb[0].mxu0 %v4968
        %v5930 = vpop.f32.mrb[0].mxu0
        %v5931 = vadd.f32 %v5149, %v5930
        %v5932 = vpop.f32.mrb[0].mxu0
        %v5933 = vadd.f32 %v5153, %v5932
        %v5934 = vpop.f32.mrb[0].mxu0
        %v5935 = vadd.f32 %v5149, %v5934
        %v5936 = vpop.f32.mrb[0].mxu0
        %v5937 = vadd.f32 %v5153, %v5936
        %5938 = vmatprep.mubr.bf16.mxu0 %v4977
        %5939 = vmatmul.mubr.bf16.gmra.mrb[0].mxu0 %v4976
        %v5940 = vpop.f32.mrb[0].mxu0
        %v5941 = vadd.f32 %v5149, %v5940
        %v5942 = vpop.f32.mrb[0].mxu0
        %v5943 = vadd.f32 %v5153, %v5942
        %v5944 = vpop.f32.mrb[0].mxu0
        %v5945 = vadd.f32 %v5149, %v5944
        %v5946 = vpop.f32.mrb[0].mxu0
        %v5947 = vadd.f32 %v5153, %v5946
        %5948 = vmatprep.mubr.bf16.mxu0 %v4985
        %5949 = vmatmul.mubr.bf16.gmra.mrb[0].mxu0 %v4984
        %v5950 = vpop.f32.mrb[0].mxu0
        %v5951 = vadd.f32 %v5149, %v5950
        %v5952 = vpop.f32.mrb[0].mxu0
        %v5953 = vadd.f32 %v5153, %v5952
        %v5954 = vpop.f32.mrb[0].mxu0
        %v5955 = vadd.f32 %v5149, %v5954
        %v5956 = vpop.f32.mrb[0].mxu0
        %v5957 = vadd.f32 %v5153, %v5956
        %5958 = vmatprep.mubr.bf16.mxu0 %v4993
        %5959 = vmatmul.mubr.bf16.gmra.mrb[0].mxu0 %v4992
        %v5960 = vpop.f32.mrb[0].mxu0
        %v5961 = vadd.f32 %v5149, %v5960
        %v5962 = vpop.f32.mrb[0].mxu0
        %v5963 = vadd.f32 %v5153, %v5962
        %v5964 = vpop.f32.mrb[0].mxu0
        %v5965 = vadd.f32 %v5149, %v5964
        %v5966 = vpop.f32.mrb[0].mxu0
        %v5967 = vadd.f32 %v5153, %v5966
        %5968 = vmatprep.mubr.bf16.mxu0 %v5001
        %5969 = vmatmul.mubr.bf16.gmra.mrb[0].mxu0 %v5000
        %v5970 = vpop.f32.mrb[0].mxu0
        %v5971 = vadd.f32 %v5149, %v5970
        %v5972 = vpop.f32.mrb[0].mxu0
        %v5973 = vadd.f32 %v5153, %v5972
        %v5974 = vpop.f32.mrb[0].mxu0
        %v5975 = vadd.f32 %v5149, %v5974
        %v5976 = vpop.f32.mrb[0].mxu0
        %v5977 = vadd.f32 %v5153, %v5976
        %5978 = vmatprep.mubr.bf16.mxu0 %v5009
        %5979 = vmatmul.mubr.bf16.gmra.mrb[0].mxu0 %v5008
        %v5980 = vpop.f32.mrb[0].mxu0
        %v5981 = vadd.f32 %v5149, %v5980
        %v5982 = vpop.f32.mrb[0].mxu0
        %v5983 = vadd.f32 %v5153, %v5982
        %v5984 = vpop.f32.mrb[0].mxu0
        %v5985 = vadd.f32 %v5149, %v5984
        %v5986 = vpop.f32.mrb[0].mxu0
        %v5987 = vadd.f32 %v5153, %v5986
        %5988 = vdwg.mxu0
        %5989 = vmatprep.subr.bf16.mxu0 %v5573
        %5990 = vmatpush1.bf16.msra.mxu0 %v5572
        %5991 = vmatprep.subr.bf16.mxu0 %v5575
        %5992 = vmatpush1.bf16.msra.mxu0 %v5574
        %5993 = vmatprep.subr.bf16.mxu0 %v5577
        %5994 = vmatpush1.bf16.msra.mxu0 %v5576
        %5995 = vmatprep.subr.bf16.mxu0 %v5579
        %5996 = vmatpush1.bf16.msra.mxu0 %v5578
        %5997 = vmatprep.subr.bf16.mxu0 %v5581
        %5998 = vmatpush1.bf16.msra.mxu0 %v5580
        %5999 = vmatprep.subr.bf16.mxu0 %v5583
        %6000 = vmatpush1.bf16.msra.mxu0 %v5582
        %6001 = vmatprep.subr.bf16.mxu0 %v5585
        %6002 = vmatpush1.bf16.msra.mxu0 %v5584
        %6003 = vmatprep.subr.bf16.mxu0 %v5587
        %6004 = vmatpush1.bf16.msra.mxu0 %v5586
        %6005 = vmatprep.subr.bf16.mxu0 %v5589
        %6006 = vmatpush1.bf16.msra.mxu0 %v5588
        %6007 = vmatprep.subr.bf16.mxu0 %v5591
        %6008 = vmatpush1.bf16.msra.mxu0 %v5590
        %6009 = vmatprep.subr.bf16.mxu0 %v5593
        %6010 = vmatpush1.bf16.msra.mxu0 %v5592
        %6011 = vmatprep.subr.bf16.mxu0 %v5595
        %6012 = vmatpush1.bf16.msra.mxu0 %v5594
        %6013 = vmatprep.subr.bf16.mxu0 %v5597
        %6014 = vmatpush1.bf16.msra.mxu0 %v5596
        %6015 = vmatprep.subr.bf16.mxu0 %v5599
        %6016 = vmatpush1.bf16.msra.mxu0 %v5598
        %6017 = vmatprep.subr.bf16.mxu0 %v5601
        %6018 = vmatpush1.bf16.msra.mxu0 %v5600
        %6019 = vmatprep.subr.bf16.mxu0 %v5603
        %6020 = vmatpush1.bf16.msra.mxu0 %v5602
        %6021 = vmatprep.mubr.bf16.mxu0 %v4891
        %6022 = vmatmul.mubr.bf16.gmra.mrb[0].mxu0 %v4890
        %v6023 = vpop.f32.mrb[0].mxu0
        %v6024 = vadd.f32 %v5831, %v6023
        %v6025 = vpop.f32.mrb[0].mxu0
        %v6026 = vadd.f32 %v5833, %v6025
        %v6027 = vpop.f32.mrb[0].mxu0
        %v6028 = vadd.f32 %v5835, %v6027
        %v6029 = vpop.f32.mrb[0].mxu0
        %v6030 = vadd.f32 %v5837, %v6029
        %6031 = vmatprep.mubr.bf16.mxu0 %v4899
        %6032 = vmatmul.mubr.bf16.gmra.mrb[0].mxu0 %v4898
        %v6033 = vpop.f32.mrb[0].mxu0
        %v6034 = vadd.f32 %v5841, %v6033
        %v6035 = vpop.f32.mrb[0].mxu0
        %v6036 = vadd.f32 %v5843, %v6035
        %v6037 = vpop.f32.mrb[0].mxu0
        %v6038 = vadd.f32 %v5845, %v6037
        %v6039 = vpop.f32.mrb[0].mxu0
        %v6040 = vadd.f32 %v5847, %v6039
        %6041 = vmatprep.mubr.bf16.mxu0 %v4907
        %6042 = vmatmul.mubr.bf16.gmra.mrb[0].mxu0 %v4906
        %v6043 = vpop.f32.mrb[0].mxu0
        %v6044 = vadd.f32 %v5851, %v6043
        %v6045 = vpop.f32.mrb[0].mxu0
        %v6046 = vadd.f32 %v5853, %v6045
        %v6047 = vpop.f32.mrb[0].mxu0
        %v6048 = vadd.f32 %v5855, %v6047
        %v6049 = vpop.f32.mrb[0].mxu0
        %v6050 = vadd.f32 %v5857, %v6049
        %6051 = vmatprep.mubr.bf16.mxu0 %v4915
        %6052 = vmatmul.mubr.bf16.gmra.mrb[0].mxu0 %v4914
        %v6053 = vpop.f32.mrb[0].mxu0
        %v6054 = vadd.f32 %v5861, %v6053
        %v6055 = vpop.f32.mrb[0].mxu0
        %v6056 = vadd.f32 %v5863, %v6055
        %v6057 = vpop.f32.mrb[0].mxu0
        %v6058 = vadd.f32 %v5865, %v6057
        %v6059 = vpop.f32.mrb[0].mxu0
        %v6060 = vadd.f32 %v5867, %v6059
        %6061 = vmatprep.mubr.bf16.mxu0 %v4923
        %6062 = vmatmul.mubr.bf16.gmra.mrb[0].mxu0 %v4922
        %v6063 = vpop.f32.mrb[0].mxu0
        %v6064 = vadd.f32 %v5871, %v6063
        %v6065 = vpop.f32.mrb[0].mxu0
        %v6066 = vadd.f32 %v5873, %v6065
        %v6067 = vpop.f32.mrb[0].mxu0
        %v6068 = vadd.f32 %v5875, %v6067
        %v6069 = vpop.f32.mrb[0].mxu0
        %v6070 = vadd.f32 %v5877, %v6069
        %6071 = vmatprep.mubr.bf16.mxu0 %v4931
        %6072 = vmatmul.mubr.bf16.gmra.mrb[0].mxu0 %v4930
        %v6073 = vpop.f32.mrb[0].mxu0
        %v6074 = vadd.f32 %v5881, %v6073
        %v6075 = vpop.f32.mrb[0].mxu0
        %v6076 = vadd.f32 %v5883, %v6075
        %v6077 = vpop.f32.mrb[0].mxu0
        %v6078 = vadd.f32 %v5885, %v6077
        %v6079 = vpop.f32.mrb[0].mxu0
        %v6080 = vadd.f32 %v5887, %v6079
        %6081 = vmatprep.mubr.bf16.mxu0 %v4939
        %6082 = vmatmul.mubr.bf16.gmra.mrb[0].mxu0 %v4938
        %v6083 = vpop.f32.mrb[0].mxu0
        %v6084 = vadd.f32 %v5891, %v6083
        %v6085 = vpop.f32.mrb[0].mxu0
        %v6086 = vadd.f32 %v5893, %v6085
        %v6087 = vpop.f32.mrb[0].mxu0
        %v6088 = vadd.f32 %v5895, %v6087
        %v6089 = vpop.f32.mrb[0].mxu0
        %v6090 = vadd.f32 %v5897, %v6089
        %6091 = vmatprep.mubr.bf16.mxu0 %v4947
        %6092 = vmatmul.mubr.bf16.gmra.mrb[0].mxu0 %v4946
        %v6093 = vpop.f32.mrb[0].mxu0
        %v6094 = vadd.f32 %v5901, %v6093
        %v6095 = vpop.f32.mrb[0].mxu0
        %v6096 = vadd.f32 %v5903, %v6095
        %v6097 = vpop.f32.mrb[0].mxu0
        %v6098 = vadd.f32 %v5905, %v6097
        %v6099 = vpop.f32.mrb[0].mxu0
        %v6100 = vadd.f32 %v5907, %v6099
        %6101 = vmatprep.mubr.bf16.mxu0 %v4955
        %6102 = vmatmul.mubr.bf16.gmra.mrb[0].mxu0 %v4954
        %v6103 = vpop.f32.mrb[0].mxu0
        %v6104 = vadd.f32 %v5911, %v6103
        %v6105 = vpop.f32.mrb[0].mxu0
        %v6106 = vadd.f32 %v5913, %v6105
        %v6107 = vpop.f32.mrb[0].mxu0
        %v6108 = vadd.f32 %v5915, %v6107
        %v6109 = vpop.f32.mrb[0].mxu0
        %v6110 = vadd.f32 %v5917, %v6109
        %6111 = vmatprep.mubr.bf16.mxu0 %v4963
        %6112 = vmatmul.mubr.bf16.gmra.mrb[0].mxu0 %v4962
        %v6113 = vpop.f32.mrb[0].mxu0
        %v6114 = vadd.f32 %v5921, %v6113
        %v6115 = vpop.f32.mrb[0].mxu0
        %v6116 = vadd.f32 %v5923, %v6115
        %v6117 = vpop.f32.mrb[0].mxu0
        %v6118 = vadd.f32 %v5925, %v6117
        %v6119 = vpop.f32.mrb[0].mxu0
        %v6120 = vadd.f32 %v5927, %v6119
        %6121 = vmatprep.mubr.bf16.mxu0 %v4971
        %6122 = vmatmul.mubr.bf16.gmra.mrb[0].mxu0 %v4970
        %v6123 = vpop.f32.mrb[0].mxu0
        %v6124 = vadd.f32 %v5931, %v6123
        %v6125 = vpop.f32.mrb[0].mxu0
        %v6126 = vadd.f32 %v5933, %v6125
        %v6127 = vpop.f32.mrb[0].mxu0
        %v6128 = vadd.f32 %v5935, %v6127
        %v6129 = vpop.f32.mrb[0].mxu0
        %v6130 = vadd.f32 %v5937, %v6129
        %6131 = vmatprep.mubr.bf16.mxu0 %v4979
        %6132 = vmatmul.mubr.bf16.gmra.mrb[0].mxu0 %v4978
        %v6133 = vpop.f32.mrb[0].mxu0
        %v6134 = vadd.f32 %v5941, %v6133
        %v6135 = vpop.f32.mrb[0].mxu0
        %v6136 = vadd.f32 %v5943, %v6135
        %v6137 = vpop.f32.mrb[0].mxu0
        %v6138 = vadd.f32 %v5945, %v6137
        %v6139 = vpop.f32.mrb[0].mxu0
        %v6140 = vadd.f32 %v5947, %v6139
        %6141 = vmatprep.mubr.bf16.mxu0 %v4987
        %6142 = vmatmul.mubr.bf16.gmra.mrb[0].mxu0 %v4986
        %v6143 = vpop.f32.mrb[0].mxu0
        %v6144 = vadd.f32 %v5951, %v6143
        %v6145 = vpop.f32.mrb[0].mxu0
        %v6146 = vadd.f32 %v5953, %v6145
        %v6147 = vpop.f32.mrb[0].mxu0
        %v6148 = vadd.f32 %v5955, %v6147
        %v6149 = vpop.f32.mrb[0].mxu0
        %v6150 = vadd.f32 %v5957, %v6149
        %6151 = vmatprep.mubr.bf16.mxu0 %v4995
        %6152 = vmatmul.mubr.bf16.gmra.mrb[0].mxu0 %v4994
        %v6153 = vpop.f32.mrb[0].mxu0
        %v6154 = vadd.f32 %v5961, %v6153
        %v6155 = vpop.f32.mrb[0].mxu0
        %v6156 = vadd.f32 %v5963, %v6155
        %v6157 = vpop.f32.mrb[0].mxu0
        %v6158 = vadd.f32 %v5965, %v6157
        %v6159 = vpop.f32.mrb[0].mxu0
        %v6160 = vadd.f32 %v5967, %v6159
        %6161 = vmatprep.mubr.bf16.mxu0 %v5003
        %6162 = vmatmul.mubr.bf16.gmra.mrb[0].mxu0 %v5002
        %v6163 = vpop.f32.mrb[0].mxu0
        %v6164 = vadd.f32 %v5971, %v6163
        %v6165 = vpop.f32.mrb[0].mxu0
        %v6166 = vadd.f32 %v5973, %v6165
        %v6167 = vpop.f32.mrb[0].mxu0
        %v6168 = vadd.f32 %v5975, %v6167
        %v6169 = vpop.f32.mrb[0].mxu0
        %v6170 = vadd.f32 %v5977, %v6169
        %6171 = vmatprep.mubr.bf16.mxu0 %v5011
        %6172 = vmatmul.mubr.bf16.gmra.mrb[0].mxu0 %v5010
        %v6173 = vpop.f32.mrb[0].mxu0
        %v6174 = vadd.f32 %v5981, %v6173
        %v6175 = vpop.f32.mrb[0].mxu0
        %v6176 = vadd.f32 %v5983, %v6175
        %v6177 = vpop.f32.mrb[0].mxu0
        %v6178 = vadd.f32 %v5985, %v6177
        %v6179 = vpop.f32.mrb[0].mxu0
        %v6180 = vadd.f32 %v5987, %v6179
        %6181 = vdwg.mxu0
        %6182 = vmatprep.subr.bf16.mxu0 %v5605
        %6183 = vmatpush1.bf16.msra.mxu0 %v5604
        %6184 = vmatprep.subr.bf16.mxu0 %v5607
        %6185 = vmatpush1.bf16.msra.mxu0 %v5606
        %6186 = vmatprep.subr.bf16.mxu0 %v5609
        %6187 = vmatpush1.bf16.msra.mxu0 %v5608
        %6188 = vmatprep.subr.bf16.mxu0 %v5611
        %6189 = vmatpush1.bf16.msra.mxu0 %v5610
        %6190 = vmatprep.subr.bf16.mxu0 %v5613
        %6191 = vmatpush1.bf16.msra.mxu0 %v5612
        %6192 = vmatprep.subr.bf16.mxu0 %v5615
        %6193 = vmatpush1.bf16.msra.mxu0 %v5614
        %6194 = vmatprep.subr.bf16.mxu0 %v5617
        %6195 = vmatpush1.bf16.msra.mxu0 %v5616
        %6196 = vmatprep.subr.bf16.mxu0 %v5619
        %6197 = vmatpush1.bf16.msra.mxu0 %v5618
        %6198 = vmatprep.subr.bf16.mxu0 %v5621
        %6199 = vmatpush1.bf16.msra.mxu0 %v5620
        %6200 = vmatprep.subr.bf16.mxu0 %v5623
        %6201 = vmatpush1.bf16.msra.mxu0 %v5622
        %6202 = vmatprep.subr.bf16.mxu0 %v5625
        %6203 = vmatpush1.bf16.msra.mxu0 %v5624
        %6204 = vmatprep.subr.bf16.mxu0 %v5627
        %6205 = vmatpush1.bf16.msra.mxu0 %v5626
        %6206 = vmatprep.subr.bf16.mxu0 %v5629
        %6207 = vmatpush1.bf16.msra.mxu0 %v5628
        %6208 = vmatprep.subr.bf16.mxu0 %v5631
        %6209 = vmatpush1.bf16.msra.mxu0 %v5630
        %6210 = vmatprep.subr.bf16.mxu0 %v5633
        %6211 = vmatpush1.bf16.msra.mxu0 %v5632
        %6212 = vmatprep.subr.bf16.mxu0 %v5635
        %6213 = vmatpush1.bf16.msra.mxu0 %v5634
        %6214 = vmatprep.mubr.bf16.mxu0 %v4893
        %6215 = vmatmul.mubr.bf16.gmra.mrb[0].mxu0 %v4892
        %v6216 = vpop.f32.mrb[0].mxu0
        %v6217 = vadd.f32 %v6024, %v6216
        %v6218 = vpop.f32.mrb[0].mxu0
        %v6219 = vadd.f32 %v6026, %v6218
        %v6220 = vpop.f32.mrb[0].mxu0
        %v6221 = vadd.f32 %v6028, %v6220
        %v6222 = vpop.f32.mrb[0].mxu0
        %v6223 = vadd.f32 %v6030, %v6222
        %6224 = vmatprep.mubr.bf16.mxu0 %v4901
        %6225 = vmatmul.mubr.bf16.gmra.mrb[0].mxu0 %v4900
        %v6226 = vpop.f32.mrb[0].mxu0
        %v6227 = vadd.f32 %v6034, %v6226
        %v6228 = vpop.f32.mrb[0].mxu0
        %v6229 = vadd.f32 %v6036, %v6228
        %v6230 = vpop.f32.mrb[0].mxu0
        %v6231 = vadd.f32 %v6038, %v6230
        %v6232 = vpop.f32.mrb[0].mxu0
        %v6233 = vadd.f32 %v6040, %v6232
        %6234 = vmatprep.mubr.bf16.mxu0 %v4909
        %6235 = vmatmul.mubr.bf16.gmra.mrb[0].mxu0 %v4908
        %v6236 = vpop.f32.mrb[0].mxu0
        %v6237 = vadd.f32 %v6044, %v6236
        %v6238 = vpop.f32.mrb[0].mxu0
        %v6239 = vadd.f32 %v6046, %v6238
        %v6240 = vpop.f32.mrb[0].mxu0
        %v6241 = vadd.f32 %v6048, %v6240
        %v6242 = vpop.f32.mrb[0].mxu0
        %v6243 = vadd.f32 %v6050, %v6242
        %6244 = vmatprep.mubr.bf16.mxu0 %v4917
        %6245 = vmatmul.mubr.bf16.gmra.mrb[0].mxu0 %v4916
        %v6246 = vpop.f32.mrb[0].mxu0
        %v6247 = vadd.f32 %v6054, %v6246
        %v6248 = vpop.f32.mrb[0].mxu0
        %v6249 = vadd.f32 %v6056, %v6248
        %v6250 = vpop.f32.mrb[0].mxu0
        %v6251 = vadd.f32 %v6058, %v6250
        %v6252 = vpop.f32.mrb[0].mxu0
        %v6253 = vadd.f32 %v6060, %v6252
        %6254 = vmatprep.mubr.bf16.mxu0 %v4925
        %6255 = vmatmul.mubr.bf16.gmra.mrb[0].mxu0 %v4924
        %v6256 = vpop.f32.mrb[0].mxu0
        %v6257 = vadd.f32 %v6064, %v6256
        %v6258 = vpop.f32.mrb[0].mxu0
        %v6259 = vadd.f32 %v6066, %v6258
        %v6260 = vpop.f32.mrb[0].mxu0
        %v6261 = vadd.f32 %v6068, %v6260
        %v6262 = vpop.f32.mrb[0].mxu0
        %v6263 = vadd.f32 %v6070, %v6262
        %6264 = vmatprep.mubr.bf16.mxu0 %v4933
        %6265 = vmatmul.mubr.bf16.gmra.mrb[0].mxu0 %v4932
        %v6266 = vpop.f32.mrb[0].mxu0
        %v6267 = vadd.f32 %v6074, %v6266
        %v6268 = vpop.f32.mrb[0].mxu0
        %v6269 = vadd.f32 %v6076, %v6268
        %v6270 = vpop.f32.mrb[0].mxu0
        %v6271 = vadd.f32 %v6078, %v6270
        %v6272 = vpop.f32.mrb[0].mxu0
        %v6273 = vadd.f32 %v6080, %v6272
        %6274 = vmatprep.mubr.bf16.mxu0 %v4941
        %6275 = vmatmul.mubr.bf16.gmra.mrb[0].mxu0 %v4940
        %v6276 = vpop.f32.mrb[0].mxu0
        %v6277 = vadd.f32 %v6084, %v6276
        %v6278 = vpop.f32.mrb[0].mxu0
        %v6279 = vadd.f32 %v6086, %v6278
        %v6280 = vpop.f32.mrb[0].mxu0
        %v6281 = vadd.f32 %v6088, %v6280
        %v6282 = vpop.f32.mrb[0].mxu0
        %v6283 = vadd.f32 %v6090, %v6282
        %6284 = vmatprep.mubr.bf16.mxu0 %v4949
        %6285 = vmatmul.mubr.bf16.gmra.mrb[0].mxu0 %v4948
        %v6286 = vpop.f32.mrb[0].mxu0
        %v6287 = vadd.f32 %v6094, %v6286
        %v6288 = vpop.f32.mrb[0].mxu0
        %v6289 = vadd.f32 %v6096, %v6288
        %v6290 = vpop.f32.mrb[0].mxu0
        %v6291 = vadd.f32 %v6098, %v6290
        %v6292 = vpop.f32.mrb[0].mxu0
        %v6293 = vadd.f32 %v6100, %v6292
        %6294 = vmatprep.mubr.bf16.mxu0 %v4957
        %6295 = vmatmul.mubr.bf16.gmra.mrb[0].mxu0 %v4956
        %v6296 = vpop.f32.mrb[0].mxu0
        %v6297 = vadd.f32 %v6104, %v6296
        %v6298 = vpop.f32.mrb[0].mxu0
        %v6299 = vadd.f32 %v6106, %v6298
        %v6300 = vpop.f32.mrb[0].mxu0
        %v6301 = vadd.f32 %v6108, %v6300
        %v6302 = vpop.f32.mrb[0].mxu0
        %v6303 = vadd.f32 %v6110, %v6302
        %6304 = vmatprep.mubr.bf16.mxu0 %v4965
        %6305 = vmatmul.mubr.bf16.gmra.mrb[0].mxu0 %v4964
        %v6306 = vpop.f32.mrb[0].mxu0
        %v6307 = vadd.f32 %v6114, %v6306
        %v6308 = vpop.f32.mrb[0].mxu0
        %v6309 = vadd.f32 %v6116, %v6308
        %v6310 = vpop.f32.mrb[0].mxu0
        %v6311 = vadd.f32 %v6118, %v6310
        %v6312 = vpop.f32.mrb[0].mxu0
        %v6313 = vadd.f32 %v6120, %v6312
        %6314 = vmatprep.mubr.bf16.mxu0 %v4973
        %6315 = vmatmul.mubr.bf16.gmra.mrb[0].mxu0 %v4972
        %v6316 = vpop.f32.mrb[0].mxu0
        %v6317 = vadd.f32 %v6124, %v6316
        %v6318 = vpop.f32.mrb[0].mxu0
        %v6319 = vadd.f32 %v6126, %v6318
        %v6320 = vpop.f32.mrb[0].mxu0
        %v6321 = vadd.f32 %v6128, %v6320
        %v6322 = vpop.f32.mrb[0].mxu0
        %v6323 = vadd.f32 %v6130, %v6322
        %6324 = vmatprep.mubr.bf16.mxu0 %v4981
        %6325 = vmatmul.mubr.bf16.gmra.mrb[0].mxu0 %v4980
        %v6326 = vpop.f32.mrb[0].mxu0
        %v6327 = vadd.f32 %v6134, %v6326
        %v6328 = vpop.f32.mrb[0].mxu0
        %v6329 = vadd.f32 %v6136, %v6328
        %v6330 = vpop.f32.mrb[0].mxu0
        %v6331 = vadd.f32 %v6138, %v6330
        %v6332 = vpop.f32.mrb[0].mxu0
        %v6333 = vadd.f32 %v6140, %v6332
        %6334 = vmatprep.mubr.bf16.mxu0 %v4989
        %6335 = vmatmul.mubr.bf16.gmra.mrb[0].mxu0 %v4988
        %v6336 = vpop.f32.mrb[0].mxu0
        %v6337 = vadd.f32 %v6144, %v6336
        %v6338 = vpop.f32.mrb[0].mxu0
        %v6339 = vadd.f32 %v6146, %v6338
        %v6340 = vpop.f32.mrb[0].mxu0
        %v6341 = vadd.f32 %v6148, %v6340
        %v6342 = vpop.f32.mrb[0].mxu0
        %v6343 = vadd.f32 %v6150, %v6342
        %6344 = vmatprep.mubr.bf16.mxu0 %v4997
        %6345 = vmatmul.mubr.bf16.gmra.mrb[0].mxu0 %v4996
        %v6346 = vpop.f32.mrb[0].mxu0
        %v6347 = vadd.f32 %v6154, %v6346
        %v6348 = vpop.f32.mrb[0].mxu0
        %v6349 = vadd.f32 %v6156, %v6348
        %v6350 = vpop.f32.mrb[0].mxu0
        %v6351 = vadd.f32 %v6158, %v6350
        %v6352 = vpop.f32.mrb[0].mxu0
        %v6353 = vadd.f32 %v6160, %v6352
        %6354 = vmatprep.mubr.bf16.mxu0 %v5005
        %6355 = vmatmul.mubr.bf16.gmra.mrb[0].mxu0 %v5004
        %v6356 = vpop.f32.mrb[0].mxu0
        %v6357 = vadd.f32 %v6164, %v6356
        %v6358 = vpop.f32.mrb[0].mxu0
        %v6359 = vadd.f32 %v6166, %v6358
        %v6360 = vpop.f32.mrb[0].mxu0
        %v6361 = vadd.f32 %v6168, %v6360
        %v6362 = vpop.f32.mrb[0].mxu0
        %v6363 = vadd.f32 %v6170, %v6362
        %6364 = vmatprep.mubr.bf16.mxu0 %v5013
        %6365 = vmatmul.mubr.bf16.gmra.mrb[0].mxu0 %v5012
        %v6366 = vpop.f32.mrb[0].mxu0
        %v6367 = vadd.f32 %v6174, %v6366
        %v6368 = vpop.f32.mrb[0].mxu0
        %v6369 = vadd.f32 %v6176, %v6368
        %v6370 = vpop.f32.mrb[0].mxu0
        %v6371 = vadd.f32 %v6178, %v6370
        %v6372 = vpop.f32.mrb[0].mxu0
        %v6373 = vadd.f32 %v6180, %v6372
        %6374 = vdwg.mxu0
        %6375 = vmatprep.subr.bf16.mxu0 %v5637
        %6376 = vmatpush1.bf16.msra.mxu0 %v5636
        %6377 = vmatprep.subr.bf16.mxu0 %v5639
        %6378 = vmatpush1.bf16.msra.mxu0 %v5638
        %6379 = vmatprep.subr.bf16.mxu0 %v5641
        %6380 = vmatpush1.bf16.msra.mxu0 %v5640
        %6381 = vmatprep.subr.bf16.mxu0 %v5643
        %6382 = vmatpush1.bf16.msra.mxu0 %v5642
        %6383 = vmatprep.subr.bf16.mxu0 %v5645
        %6384 = vmatpush1.bf16.msra.mxu0 %v5644
        %6385 = vmatprep.subr.bf16.mxu0 %v5647
        %6386 = vmatpush1.bf16.msra.mxu0 %v5646
        %6387 = vmatprep.subr.bf16.mxu0 %v5649
        %6388 = vmatpush1.bf16.msra.mxu0 %v5648
        %6389 = vmatprep.subr.bf16.mxu0 %v5651
        %6390 = vmatpush1.bf16.msra.mxu0 %v5650
        %6391 = vmatprep.subr.bf16.mxu0 %v5653
        %6392 = vmatpush1.bf16.msra.mxu0 %v5652
        %6393 = vmatprep.subr.bf16.mxu0 %v5655
        %6394 = vmatpush1.bf16.msra.mxu0 %v5654
        %6395 = vmatprep.subr.bf16.mxu0 %v5657
        %6396 = vmatpush1.bf16.msra.mxu0 %v5656
        %6397 = vmatprep.subr.bf16.mxu0 %v5659
        %6398 = vmatpush1.bf16.msra.mxu0 %v5658
        %6399 = vmatprep.subr.bf16.mxu0 %v5661
        %6400 = vmatpush1.bf16.msra.mxu0 %v5660
        %6401 = vmatprep.subr.bf16.mxu0 %v5663
        %6402 = vmatpush1.bf16.msra.mxu0 %v5662
        %6403 = vmatprep.subr.bf16.mxu0 %v5665
        %6404 = vmatpush1.bf16.msra.mxu0 %v5664
        %6405 = vmatprep.subr.bf16.mxu0 %v5667
        %6406 = vmatpush1.bf16.msra.mxu0 %v5666
        %6407 = vmatprep.mubr.bf16.mxu0 %v4895
        %6408 = vmatmul.mubr.bf16.gmra.mrb[0].mxu0 %v4894
        %v6409 = vpop.f32.mrb[0].mxu0
        %v6410 = vadd.f32 %v6217, %v6409
        %v6411 = vpop.f32.mrb[0].mxu0
        %v6412 = vadd.f32 %v6219, %v6411
        %v6413 = vpop.f32.mrb[0].mxu0
        %v6414 = vadd.f32 %v6221, %v6413
        %v6415 = vpop.f32.mrb[0].mxu0
        %v6416 = vadd.f32 %v6223, %v6415
        %6417 = vmatprep.mubr.bf16.mxu0 %v4903
        %6418 = vmatmul.mubr.bf16.gmra.mrb[0].mxu0 %v4902
        %v6419 = vpop.f32.mrb[0].mxu0
        %v6420 = vadd.f32 %v6227, %v6419
        %v6421 = vpop.f32.mrb[0].mxu0
        %v6422 = vadd.f32 %v6229, %v6421
        %v6423 = vpop.f32.mrb[0].mxu0
        %v6424 = vadd.f32 %v6231, %v6423
        %v6425 = vpop.f32.mrb[0].mxu0
        %v6426 = vadd.f32 %v6233, %v6425
        %6427 = vmatprep.mubr.bf16.mxu0 %v4911
        %6428 = vmatmul.mubr.bf16.gmra.mrb[0].mxu0 %v4910
        %v6429 = vpop.f32.mrb[0].mxu0
        %v6430 = vadd.f32 %v6237, %v6429
        %v6431 = vpop.f32.mrb[0].mxu0
        %v6432 = vadd.f32 %v6239, %v6431
        %v6433 = vpop.f32.mrb[0].mxu0
        %v6434 = vadd.f32 %v6241, %v6433
        %v6435 = vpop.f32.mrb[0].mxu0
        %v6436 = vadd.f32 %v6243, %v6435
        %6437 = vmatprep.mubr.bf16.mxu0 %v4919
        %6438 = vmatmul.mubr.bf16.gmra.mrb[0].mxu0 %v4918
        %v6439 = vpop.f32.mrb[0].mxu0
        %v6440 = vadd.f32 %v6247, %v6439
        %v6441 = vpop.f32.mrb[0].mxu0
        %v6442 = vadd.f32 %v6249, %v6441
        %v6443 = vpop.f32.mrb[0].mxu0
        %v6444 = vadd.f32 %v6251, %v6443
        %v6445 = vpop.f32.mrb[0].mxu0
        %v6446 = vadd.f32 %v6253, %v6445
        %6447 = vmatprep.mubr.bf16.mxu0 %v4927
        %6448 = vmatmul.mubr.bf16.gmra.mrb[0].mxu0 %v4926
        %v6449 = vpop.f32.mrb[0].mxu0
        %v6450 = vadd.f32 %v6257, %v6449
        %v6451 = vpop.f32.mrb[0].mxu0
        %v6452 = vadd.f32 %v6259, %v6451
        %v6453 = vpop.f32.mrb[0].mxu0
        %v6454 = vadd.f32 %v6261, %v6453
        %v6455 = vpop.f32.mrb[0].mxu0
        %v6456 = vadd.f32 %v6263, %v6455
        %6457 = vmatprep.mubr.bf16.mxu0 %v4935
        %6458 = vmatmul.mubr.bf16.gmra.mrb[0].mxu0 %v4934
        %v6459 = vpop.f32.mrb[0].mxu0
        %v6460 = vadd.f32 %v6267, %v6459
        %v6461 = vpop.f32.mrb[0].mxu0
        %v6462 = vadd.f32 %v6269, %v6461
        %v6463 = vpop.f32.mrb[0].mxu0
        %v6464 = vadd.f32 %v6271, %v6463
        %v6465 = vpop.f32.mrb[0].mxu0
        %v6466 = vadd.f32 %v6273, %v6465
        %6467 = vmatprep.mubr.bf16.mxu0 %v4943
        %6468 = vmatmul.mubr.bf16.gmra.mrb[0].mxu0 %v4942
        %v6469 = vpop.f32.mrb[0].mxu0
        %v6470 = vadd.f32 %v6277, %v6469
        %v6471 = vpop.f32.mrb[0].mxu0
        %v6472 = vadd.f32 %v6279, %v6471
        %v6473 = vpop.f32.mrb[0].mxu0
        %v6474 = vadd.f32 %v6281, %v6473
        %v6475 = vpop.f32.mrb[0].mxu0
        %v6476 = vadd.f32 %v6283, %v6475
        %6477 = vmatprep.mubr.bf16.mxu0 %v4951
        %6478 = vmatmul.mubr.bf16.gmra.mrb[0].mxu0 %v4950
        %v6479 = vpop.f32.mrb[0].mxu0
        %v6480 = vadd.f32 %v6287, %v6479
        %v6481 = vpop.f32.mrb[0].mxu0
        %v6482 = vadd.f32 %v6289, %v6481
        %v6483 = vpop.f32.mrb[0].mxu0
        %v6484 = vadd.f32 %v6291, %v6483
        %v6485 = vpop.f32.mrb[0].mxu0
        %v6486 = vadd.f32 %v6293, %v6485
        %6487 = vmatprep.mubr.bf16.mxu0 %v4959
        %6488 = vmatmul.mubr.bf16.gmra.mrb[0].mxu0 %v4958
        %v6489 = vpop.f32.mrb[0].mxu0
        %v6490 = vadd.f32 %v6297, %v6489
        %v6491 = vpop.f32.mrb[0].mxu0
        %v6492 = vadd.f32 %v6299, %v6491
        %v6493 = vpop.f32.mrb[0].mxu0
        %v6494 = vadd.f32 %v6301, %v6493
        %v6495 = vpop.f32.mrb[0].mxu0
        %v6496 = vadd.f32 %v6303, %v6495
        %6497 = vmatprep.mubr.bf16.mxu0 %v4967
        %6498 = vmatmul.mubr.bf16.gmra.mrb[0].mxu0 %v4966
        %v6499 = vpop.f32.mrb[0].mxu0
        %v6500 = vadd.f32 %v6307, %v6499
        %v6501 = vpop.f32.mrb[0].mxu0
        %v6502 = vadd.f32 %v6309, %v6501
        %v6503 = vpop.f32.mrb[0].mxu0
        %v6504 = vadd.f32 %v6311, %v6503
        %v6505 = vpop.f32.mrb[0].mxu0
        %v6506 = vadd.f32 %v6313, %v6505
        %6507 = vmatprep.mubr.bf16.mxu0 %v4975
        %6508 = vmatmul.mubr.bf16.gmra.mrb[0].mxu0 %v4974
        %v6509 = vpop.f32.mrb[0].mxu0
        %v6510 = vadd.f32 %v6317, %v6509
        %v6511 = vpop.f32.mrb[0].mxu0
        %v6512 = vadd.f32 %v6319, %v6511
        %v6513 = vpop.f32.mrb[0].mxu0
        %v6514 = vadd.f32 %v6321, %v6513
        %v6515 = vpop.f32.mrb[0].mxu0
        %v6516 = vadd.f32 %v6323, %v6515
        %6517 = vmatprep.mubr.bf16.mxu0 %v4983
        %6518 = vmatmul.mubr.bf16.gmra.mrb[0].mxu0 %v4982
        %v6519 = vpop.f32.mrb[0].mxu0
        %v6520 = vadd.f32 %v6327, %v6519
        %v6521 = vpop.f32.mrb[0].mxu0
        %v6522 = vadd.f32 %v6329, %v6521
        %v6523 = vpop.f32.mrb[0].mxu0
        %v6524 = vadd.f32 %v6331, %v6523
        %v6525 = vpop.f32.mrb[0].mxu0
        %v6526 = vadd.f32 %v6333, %v6525
        %6527 = vmatprep.mubr.bf16.mxu0 %v4991
        %6528 = vmatmul.mubr.bf16.gmra.mrb[0].mxu0 %v4990
        %v6529 = vpop.f32.mrb[0].mxu0
        %v6530 = vadd.f32 %v6337, %v6529
        %v6531 = vpop.f32.mrb[0].mxu0
        %v6532 = vadd.f32 %v6339, %v6531
        %v6533 = vpop.f32.mrb[0].mxu0
        %v6534 = vadd.f32 %v6341, %v6533
        %v6535 = vpop.f32.mrb[0].mxu0
        %v6536 = vadd.f32 %v6343, %v6535
        %6537 = vmatprep.mubr.bf16.mxu0 %v4999
        %6538 = vmatmul.mubr.bf16.gmra.mrb[0].mxu0 %v4998
        %v6539 = vpop.f32.mrb[0].mxu0
        %v6540 = vadd.f32 %v6347, %v6539
        %v6541 = vpop.f32.mrb[0].mxu0
        %v6542 = vadd.f32 %v6349, %v6541
        %v6543 = vpop.f32.mrb[0].mxu0
        %v6544 = vadd.f32 %v6351, %v6543
        %v6545 = vpop.f32.mrb[0].mxu0
        %v6546 = vadd.f32 %v6353, %v6545
        %6547 = vmatprep.mubr.bf16.mxu0 %v5007
        %6548 = vmatmul.mubr.bf16.gmra.mrb[0].mxu0 %v5006
        %v6549 = vpop.f32.mrb[0].mxu0
        %v6550 = vadd.f32 %v6357, %v6549
        %v6551 = vpop.f32.mrb[0].mxu0
        %v6552 = vadd.f32 %v6359, %v6551
        %v6553 = vpop.f32.mrb[0].mxu0
        %v6554 = vadd.f32 %v6361, %v6553
        %v6555 = vpop.f32.mrb[0].mxu0
        %v6556 = vadd.f32 %v6363, %v6555
        %6557 = vmatprep.mubr.bf16.mxu0 %v5015
        %6558 = vmatmul.mubr.bf16.gmra.mrb[0].mxu0 %v5014
        %v6559 = vpop.f32.mrb[0].mxu0
        %v6560 = vadd.f32 %v6367, %v6559
        %v6561 = vpop.f32.mrb[0].mxu0
        %v6562 = vadd.f32 %v6369, %v6561
        %v6563 = vpop.f32.mrb[0].mxu0
        %v6564 = vadd.f32 %v6371, %v6563
        %v6565 = vpop.f32.mrb[0].mxu0
        %v6566 = vadd.f32 %v6373, %v6565
        %6567 = vdwg.mxu0
        %v6568 = vadd.f32 %v1450, %v6410
        %v6569 = vadd.f32 %v1451, %v6412
        %v6570 = vadd.f32 %v1452, %v6414
        %v6571 = vadd.f32 %v1453, %v6416
        %v6572 = vadd.f32 %v1454, %v6420
        %v6573 = vadd.f32 %v1455, %v6422
        %v6574 = vadd.f32 %v1456, %v6424
        %v6575 = vadd.f32 %v1457, %v6426
        %v6576 = vadd.f32 %v1458, %v6430
        %v6577 = vadd.f32 %v1459, %v6432
        %v6578 = vadd.f32 %v1460, %v6434
        %v6579 = vadd.f32 %v1461, %v6436
        %v6580 = vadd.f32 %v1462, %v6440
        %v6581 = vadd.f32 %v1463, %v6442
        %v6582 = vadd.f32 %v1464, %v6444
        %v6583 = vadd.f32 %v1465, %v6446
        %v6584 = vadd.f32 %v1466, %v6450
        %v6585 = vadd.f32 %v1467, %v6452
        %v6586 = vadd.f32 %v1468, %v6454
        %v6587 = vadd.f32 %v1469, %v6456
        %v6588 = vadd.f32 %v1470, %v6460
        %v6589 = vadd.f32 %v1471, %v6462
        %v6590 = vadd.f32 %v1472, %v6464
        %v6591 = vadd.f32 %v1473, %v6466
        %v6592 = vadd.f32 %v1474, %v6470
        %v6593 = vadd.f32 %v1475, %v6472
        %v6594 = vadd.f32 %v1476, %v6474
        %v6595 = vadd.f32 %v1477, %v6476
        %v6596 = vadd.f32 %v1478, %v6480
        %v6597 = vadd.f32 %v1479, %v6482
        %v6598 = vadd.f32 %v1480, %v6484
        %v6599 = vadd.f32 %v1481, %v6486
        %v6600 = vadd.f32 %v1482, %v6490
        %v6601 = vadd.f32 %v1483, %v6492
        %v6602 = vadd.f32 %v1484, %v6494
        %v6603 = vadd.f32 %v1485, %v6496
        %v6604 = vadd.f32 %v1486, %v6500
        %v6605 = vadd.f32 %v1487, %v6502
        %v6606 = vadd.f32 %v1488, %v6504
        %v6607 = vadd.f32 %v1489, %v6506
        %v6608 = vadd.f32 %v1490, %v6510
        %v6609 = vadd.f32 %v1491, %v6512
        %v6610 = vadd.f32 %v1492, %v6514
        %v6611 = vadd.f32 %v1493, %v6516
        %v6612 = vadd.f32 %v1494, %v6520
        %v6613 = vadd.f32 %v1495, %v6522
        %v6614 = vadd.f32 %v1496, %v6524
        %v6615 = vadd.f32 %v1497, %v6526
        %v6616 = vadd.f32 %v1498, %v6530
        %v6617 = vadd.f32 %v1499, %v6532
        %v6618 = vadd.f32 %v1500, %v6534
        %v6619 = vadd.f32 %v1501, %v6536
        %v6620 = vadd.f32 %v1502, %v6540
        %v6621 = vadd.f32 %v1503, %v6542
        %v6622 = vadd.f32 %v1504, %v6544
        %v6623 = vadd.f32 %v1505, %v6546
        %v6624 = vadd.f32 %v1506, %v6550
        %v6625 = vadd.f32 %v1507, %v6552
        %v6626 = vadd.f32 %v1508, %v6554
        %v6627 = vadd.f32 %v1509, %v6556
        %v6628 = vadd.f32 %v1510, %v6560
        %v6629 = vadd.f32 %v1511, %v6562
        %v6630 = vadd.f32 %v1512, %v6564
        %v6631 = vadd.f32 %v1513, %v6566
        %6632 = vst [vmem:[%s341] sm:$0xff] %v6568
        %6633 = vst [vmem:[%s341 + $0x8] sm:$0xff] %v6569
        %6634 = vst [vmem:[%s341 + $0x10] sm:$0xff] %v6570
        %6635 = vst [vmem:[%s341 + $0x18] sm:$0xff] %v6571
        %6636 = vst [vmem:[%s341 + $0x20] sm:$0xff] %v6572
        %6637 = vst [vmem:[%s341 + $0x28] sm:$0xff] %v6573
        %6638 = vst [vmem:[%s341 + $0x30] sm:$0xff] %v6574
        %6639 = vst [vmem:[%s341 + $0x38] sm:$0xff] %v6575
        %6640 = vst [vmem:[%s341 + $0x40] sm:$0xff] %v6576
        %6641 = vst [vmem:[%s341 + $0x48] sm:$0xff] %v6577
        %6642 = vst [vmem:[%s341 + $0x50] sm:$0xff] %v6578
        %6643 = vst [vmem:[%s341 + $0x58] sm:$0xff] %v6579
        %6644 = vst [vmem:[%s341 + $0x60] sm:$0xff] %v6580
        %6645 = vst [vmem:[%s341 + $0x68] sm:$0xff] %v6581
        %6646 = vst [vmem:[%s341 + $0x70] sm:$0xff] %v6582
        %6647 = vst [vmem:[%s341 + $0x78] sm:$0xff] %v6583
        %6648 = vst [vmem:[%s341 + $0x80] sm:$0xff] %v6584
        %6649 = vst [vmem:[%s341 + $0x88] sm:$0xff] %v6585
        %6650 = vst [vmem:[%s341 + $0x90] sm:$0xff] %v6586
        %6651 = vst [vmem:[%s341 + $0x98] sm:$0xff] %v6587
        %6652 = vst [vmem:[%s341 + $0xa0] sm:$0xff] %v6588
        %6653 = vst [vmem:[%s341 + $0xa8] sm:$0xff] %v6589
        %6654 = vst [vmem:[%s341 + $0xb0] sm:$0xff] %v6590
        %6655 = vst [vmem:[%s341 + $0xb8] sm:$0xff] %v6591
        %6656 = vst [vmem:[%s341 + $0xc0] sm:$0xff] %v6592
        %6657 = vst [vmem:[%s341 + $0xc8] sm:$0xff] %v6593
        %6658 = vst [vmem:[%s341 + $0xd0] sm:$0xff] %v6594
        %6659 = vst [vmem:[%s341 + $0xd8] sm:$0xff] %v6595
        %6660 = vst [vmem:[%s341 + $0xe0] sm:$0xff] %v6596
        %6661 = vst [vmem:[%s341 + $0xe8] sm:$0xff] %v6597
        %6662 = vst [vmem:[%s341 + $0xf0] sm:$0xff] %v6598
        %6663 = vst [vmem:[%s341 + $0xf8] sm:$0xff] %v6599
        %6664 = vst [vmem:[%s341 + $0x100] sm:$0xff] %v6600
        %6665 = vst [vmem:[%s341 + $0x108] sm:$0xff] %v6601
        %6666 = vst [vmem:[%s341 + $0x110] sm:$0xff] %v6602
        %6667 = vst [vmem:[%s341 + $0x118] sm:$0xff] %v6603
        %6668 = vst [vmem:[%s341 + $0x120] sm:$0xff] %v6604
        %6669 = vst [vmem:[%s341 + $0x128] sm:$0xff] %v6605
        %6670 = vst [vmem:[%s341 + $0x130] sm:$0xff] %v6606
        %6671 = vst [vmem:[%s341 + $0x138] sm:$0xff] %v6607
        %6672 = vst [vmem:[%s341 + $0x140] sm:$0xff] %v6608
        %6673 = vst [vmem:[%s341 + $0x148] sm:$0xff] %v6609
        %6674 = vst [vmem:[%s341 + $0x150] sm:$0xff] %v6610
        %6675 = vst [vmem:[%s341 + $0x158] sm:$0xff] %v6611
        %6676 = vst [vmem:[%s341 + $0x160] sm:$0xff] %v6612
        %6677 = vst [vmem:[%s341 + $0x168] sm:$0xff] %v6613
        %6678 = vst [vmem:[%s341 + $0x170] sm:$0xff] %v6614
        %6679 = vst [vmem:[%s341 + $0x178] sm:$0xff] %v6615
        %6680 = vst [vmem:[%s341 + $0x180] sm:$0xff] %v6616
        %6681 = vst [vmem:[%s341 + $0x188] sm:$0xff] %v6617
        %6682 = vst [vmem:[%s341 + $0x190] sm:$0xff] %v6618
        %6683 = vst [vmem:[%s341 + $0x198] sm:$0xff] %v6619
        %6684 = vst [vmem:[%s341 + $0x1a0] sm:$0xff] %v6620
        %6685 = vst [vmem:[%s341 + $0x1a8] sm:$0xff] %v6621
        %6686 = vst [vmem:[%s341 + $0x1b0] sm:$0xff] %v6622
        %6687 = vst [vmem:[%s341 + $0x1b8] sm:$0xff] %v6623
        %6688 = vst [vmem:[%s341 + $0x1c0] sm:$0xff] %v6624
        %6689 = vst [vmem:[%s341 + $0x1c8] sm:$0xff] %v6625
        %6690 = vst [vmem:[%s341 + $0x1d0] sm:$0xff] %v6626
        %6691 = vst [vmem:[%s341 + $0x1d8] sm:$0xff] %v6627
        %6692 = vst [vmem:[%s341 + $0x1e0] sm:$0xff] %v6628
        %6693 = vst [vmem:[%s341 + $0x1e8] sm:$0xff] %v6629
        %6694 = vst [vmem:[%s341 + $0x1f0] sm:$0xff] %v6630
        %6695 = vst [vmem:[%s341 + $0x1f8] sm:$0xff] %v6631
        %s6696 = sand.u32 %s186, 1
        %s6697 = scalar_lea.sflag [#allocation4], %s6696
        %s6698 = sand.u32 %s186, 1
        %s6699 = smul.addr %s6698, 512
        %s6700 = scalar_lea.vmem [#allocation10], %s6699
        // Predicated region
        $region65: #{tpu_custom_call.1} parent=47 // pred_check
          %p6701 = pneg %p196
        $region66: #{tpu_custom_call.1} parent=47 // pred_check_branch
          %6703 = sbr.rel (%p6701) target = $region68
        $region67: #{tpu_custom_call.1} parent=47 // pred_region
          %s6704 = smul.u32 32, %s26
          %s6706 = ssub.s32 8192, 8192
          %6707 = vsyncadd %s6697, %s6706
          %s6708 = smul.addr %s6704, 2
          %s6709 = smul.addr %s6708, 128
          %s6710 = scalar_lea.hbm %s7, %s6709
          %s6711 = sshll.u32 %s6700, 4
          %s6712 = int_to_ptr.vmem [resolvable:$true] %s6711
          %6717 = dma.vmem_to_hbm [thread:$0]  %s6712, 8192, %s6710, %s6697, 256, 256, 16
        $region68: #{tpu_custom_call.1} parent=47 // pred_fallthru
          _
      $region48: #{tpu_custom_call.1} parent=5 // pred_fallthru
        _
      %p6718 = scmp.le.s32.totalorder 2, %s21
      // Predicated region
      $region69: #{tpu_custom_call.1} parent=5 // pred_check
        %p6719 = pneg %p6718
      $region70: #{tpu_custom_call.1} parent=5 // pred_check_branch
        %6721 = sbr.rel (%p6719) target = $region72
      $region71: #{tpu_custom_call.1} parent=5 // pred_region
        %s6722 = ssub.s32 %s21, 2
        // Predicated region
        $region73: #{tpu_custom_call.1} parent=71 // pred_check
          %p6723 = pneg %p202
        $region74: #{tpu_custom_call.1} parent=71 // pred_check_branch
          %6725 = sbr.rel (%p6723) target = $region76
        $region75: #{tpu_custom_call.1} parent=71 // pred_region
          %s6726 = sand.u32 %s187, 1
          %s6727 = scalar_lea.sflag [#allocation4], %s6726
          %s6728 = sand.u32 %s187, 1
          %s6729 = smul.addr %s6728, 512
          %s6730 = scalar_lea.vmem [#allocation10], %s6729
          %6731 = dma.done %s6727, 8192
        $region76: #{tpu_custom_call.1} parent=71 // pred_fallthru
          _
      $region72: #{tpu_custom_call.1} parent=5 // pred_fallthru
        _
    $region6: #{tpu_custom_call.1} parent=1 // loop_footer
      %s25 = sadd.s32 1, %s21
    $region7: #{tpu_custom_call.1} parent=1 // loop_footer_branch
      %20 = sbr.rel target = $region3
    $region8: #{tpu_custom_call.1} parent=1 // loop_exit
      _
    %6732 = vsyncpa [#allocation3], 1
    %s6733 = scalar_lea.sflag [#allocation3], 1
    %6734 = vsyncpa %s6733, 1
    %6735 = vsyncpa [#allocation6], 1
    %6736 = vsyncpa [#allocation9], 1
    %6737 = vsyncpa [#allocation4], 1
    %s6738 = scalar_lea.sflag [#allocation4], 1
    %6739 = vsyncpa %s6738, 1

</llo_original>
